<compile_context>
chip_gen: v7x
topology: tpu7x:2x2x1
jax: 0.10.0
libtpu: 0.0.40
codegen_flags: <defaults>
</compile_context>

<pallas_src>
import math
import functools

import numpy as np
import jax
import jax.numpy as jnp
from jax import lax
from jax.experimental import pallas as pl
from jax.experimental.pallas import tpu as pltpu

_LANE = 128
_SUBLANE = 8


def _round_up(n, m):
    return ((n + m - 1) // m) * m


def _res_conv_block_kernel(x_ref, m_ref, w1_ref, b1_ref, w2_ref, b2_ref, o_ref,
                           *, Wp, is_res, same_channels):
    """One grid step: a stack of zero-padded images laid out as (R, C) rows."""
    R = x_ref.shape[1]
    x = x_ref[0]                                   # (R, Cin_padded), io dtype

    def conv3x3(inp, w_ref_):
        """3x3 'same' conv via 9 shifted (unmasked) matmuls; f32 accumulation.

        Zero padding is already materialised in the rows of `inp`, so interior
        output rows never read across image boundaries and no per-tap masking
        is needed.  Non-interior output rows are garbage and are discarded by
        the wrapper (and re-zeroed before feeding the next conv).
        """
        acc = None
        for kh in range(3):
            for kw in range(3):
                k = kh * 3 + kw
                off = (kh - 1) * Wp + (kw - 1)
                if off == 0:
                    shifted = inp
                else:
                    shifted = pltpu.roll(inp, shift=(-off) % R, axis=0)
                tap = jnp.dot(shifted, w_ref_[k],
                              preferred_element_type=jnp.float32)
                acc = tap if acc is None else acc + tap
        return acc

    inv_sqrt2 = 1.0 / math.sqrt(2.0)

    # conv1 (BN1 scale pre-folded into the taps) + folded bias + exact-erf GELU.
    h1 = conv3x3(x, w1_ref) + b1_ref[...]
    h1 = 0.5 * h1 * (1.0 + lax.erf(h1 * inv_sqrt2))
    # Re-zero the padding ring / filler rows so conv2 sees proper zero padding.
    h1 = h1 * m_ref[...]

    # conv2 + folded bias + GELU.  Cast the GELU output back to the activation
    # dtype so a bf16 model runs the second conv at native MXU rate.
    h2 = conv3x3(h1.astype(x_ref.dtype), w2_ref) + b2_ref[...]
    h2 = 0.5 * h2 * (1.0 + lax.erf(h2 * inv_sqrt2))

    if is_res:
        res = x.astype(jnp.float32) if same_channels else h1
        out = (res + h2) * (1.0 / 1.414)
    else:
        out = h2
    o_ref[0] = out.astype(o_ref.dtype)


@functools.partial(jax.jit, static_argnames=("is_res",))
def residual_conv_block(x, params, *, is_res):
    """Fused forward of ResidualConvBlock.  x: (N, Cin, H, W) PyTorch NCHW."""
    eps = 1e-5
    N, Ci, H, W = x.shape
    Co = params["w1"].shape[0]
    same_channels = (Ci == Co)

    Hp, Wp = H + 2, W + 2                 # zero-padded spatial extent
    Praw = Hp * Wp                        # rows per image (padded image)
    Pp = _round_up(Praw, _SUBLANE)        # sublane-aligned rows per image
    Cip = _round_up(Ci, _LANE)            # lane-dense channel widths
    Cop = _round_up(Co, _LANE)

    # --- batch tiling: stack TB images per grid step (bigger matmuls, fewer
    # --- grid steps) while keeping >=2 steps for megacore and a bounded tile.
    bytes_per_row = Cip * x.dtype.itemsize
    rows_budget = max(Pp, (4 * 1024 * 1024) // bytes_per_row)   # ~4 MiB x-tile
    TB = max(1, min(N, 8, rows_budget // Pp))
    while TB > 1 and (N + TB - 1) // TB < 2:
        TB -= 1
    Npad = _round_up(N, TB)
    Ngrid = Npad // TB
    R = TB * Pp                            # rows per grid step

    # --- layout: NCHW -> zero-padded NHWC rows -> (Ngrid, R, Cip) -------------
    xt = jnp.transpose(x, (0, 2, 3, 1))
    xt = jnp.pad(xt, ((0, Npad - N), (1, 1), (1, 1), (0, Cip - Ci)))
    xt = xt.reshape(Npad, Praw, Cip)
    xt = jnp.pad(xt, ((0, 0), (0, Pp - Praw), (0, 0)))
    xt = xt.reshape(Ngrid, R, Cip)

    # --- interior-row mask (1 = real output pixel, 0 = padding/filler row) ----
    ii = np.arange(Hp)[:, None]
    jj = np.arange(Wp)[None, :]
    interior = ((ii >= 1) & (ii <= H) & (jj >= 1) & (jj <= W)).astype(np.float32)
    interior = np.pad(interior.reshape(Praw), (0, Pp - Praw))
    mask = jnp.asarray(np.tile(interior, TB).reshape(R, 1))

    # --- fold eval-mode BatchNorm into the conv weights / bias ----------------
    def fold(conv_w, conv_b, g, beta, mu, var, cin_p, cout_p):
        co, ci = conv_w.shape[0], conv_w.shape[1]
        scale = g / jnp.sqrt(var + eps)                              # (co,)
        taps = jnp.transpose(conv_w, (2, 3, 1, 0)).reshape(9, ci, co)
        taps = taps * scale[None, None, :]                           # fold scale
        taps = jnp.pad(taps, ((0, 0), (0, cin_p - ci), (0, cout_p - co)))
        taps = taps.astype(x.dtype)
        bias = beta + (conv_b - mu) * scale
        bias = jnp.pad(bias, (0, cout_p - co)).reshape(1, cout_p)
        bias = bias.astype(jnp.float32)
        return taps, bias

    w1_t, b1f = fold(params["w1"], params["b1"], params["g1"], params["beta1"],
                     params["m1"], params["v1"], Cip, Cop)
    w2_t, b2f = fold(params["w2"], params["b2"], params["g2"], params["beta2"],
                     params["m2"], params["v2"], Cop, Cop)

    kernel = functools.partial(_res_conv_block_kernel, Wp=Wp,
                               is_res=is_res, same_channels=same_channels)

    out = pl.pallas_call(
        kernel,
        out_shape=jax.ShapeDtypeStruct((Ngrid, R, Cop), x.dtype),
        grid=(Ngrid,),
        in_specs=[
            pl.BlockSpec((1, R, Cip), lambda n: (n, 0, 0)),    # activations (pipelined)
            pl.BlockSpec((R, 1), lambda n: (0, 0)),            # interior mask (resident)
            pl.BlockSpec((9, Cip, Cop), lambda n: (0, 0, 0)),  # conv1 taps * BN1 scale
            pl.BlockSpec((1, Cop), lambda n: (0, 0)),          # folded BN1 bias
            pl.BlockSpec((9, Cop, Cop), lambda n: (0, 0, 0)),  # conv2 taps * BN2 scale
            pl.BlockSpec((1, Cop), lambda n: (0, 0)),          # folded BN2 bias
        ],
        out_specs=pl.BlockSpec((1, R, Cop), lambda n: (n, 0, 0)),
        compiler_params=pltpu.CompilerParams(
            dimension_semantics=("parallel",),       # megacore sharding on v7x
            vmem_limit_bytes=48 * 1024 * 1024,
        ),
    )(xt, mask, w1_t, b1f, w2_t, b2f)

    # Strip batch/row/channel padding, drop the zero-padding ring, back to NCHW.
    out = out.reshape(Npad, Pp, Cop)[:N, :Praw, :Co]
    out = out.reshape(N, Hp, Wp, Co)[:, 1:H + 1, 1:W + 1, :]
    return jnp.transpose(out, (0, 3, 1, 2))


# ----------------------------------------------------------------------------
# Pure-JAX reference (mirrors the PyTorch module with eval-mode BatchNorm).
# ----------------------------------------------------------------------------
def _reference(x, p, *, is_res, eps=1e-5):
    N, Ci, H, W = x.shape

    def conv3x3(inp, w, b):
        xp = jnp.pad(inp, ((0, 0), (0, 0), (1, 1), (1, 1)))
        out = b[None, :, None, None]
        for kh in range(3):
            for kw in range(3):
                out = out + jnp.einsum(
                    "nchw,oc->nohw", xp[:, :, kh:kh + H, kw:kw + W],
                    w[:, :, kh, kw], precision=lax.Precision.HIGHEST)
        return out

    def stage(inp, w, b, g, beta, m, v):
        y = conv3x3(inp, w, b)
        y = (y - m[None, :, None, None]) * (g / jnp.sqrt(v + eps))[None, :, None, None] \
            + beta[None, :, None, None]
        return 0.5 * y * (1.0 + lax.erf(y / math.sqrt(2.0)))

    x1 = stage(x, p["w1"], p["b1"], p["g1"], p["beta1"], p["m1"], p["v1"])
    x2 = stage(x1, p["w2"], p["b2"], p["g2"], p["beta2"], p["m2"], p["v2"])
    if is_res:
        res = x if x.shape[1] == x2.shape[1] else x1
        return (res + x2) / 1.414
    return x2


def init_params(key, in_channels, out_channels, dtype=jnp.float32):
    ks = jax.random.split(key, 12)

    def u(k, shape, lo, hi):
        return jax.random.uniform(k, shape, dtype, lo, hi)

    bnd1 = 1.0 / math.sqrt(in_channels * 9)
    bnd2 = 1.0 / math.sqrt(out_channels * 9)
    return dict(
        w1=u(ks[0], (out_channels, in_channels, 3, 3), -bnd1, bnd1),
        b1=u(ks[1], (out_channels,), -bnd1, bnd1),
        g1=u(ks[2], (out_channels,), 0.5, 1.5),
        beta1=u(ks[3], (out_channels,), -0.5, 0.5),
        m1=u(ks[4], (out_channels,), -0.5, 0.5),
        v1=u(ks[5], (out_channels,), 0.5, 1.5),
        w2=u(ks[6], (out_channels, out_channels, 3, 3), -bnd2, bnd2),
        b2=u(ks[7], (out_channels,), -bnd2, bnd2),
        g2=u(ks[8], (out_channels,), 0.5, 1.5),
        beta2=u(ks[9], (out_channels,), -0.5, 0.5),
        m2=u(ks[10], (out_channels,), -0.5, 0.5),
        v2=u(ks[11], (out_channels,), 0.5, 1.5),
    )


if __name__ == "__main__":
    key = jax.random.PRNGKey(0)
    kx, kx2, kp1, kp2 = jax.random.split(key, 4)

    N, in_channels, H, W = 2, 4, 16, 16
    x = jax.random.normal(kx, (N, in_channels, H, W), dtype=jnp.float32)
    # Larger batch to exercise the batch-stacking (TB>1) + batch-padding path.
    x5 = jax.random.normal(kx2, (5, in_channels, H, W), dtype=jnp.float32)

    configs = [
        ("is_res, channel change (out = (x1 + x2)/1.414)", x, init_params(kp1, 4, 8), True),
        ("is_res, same channels  (out = (x  + x2)/1.414)", x, init_params(kp2, 4, 4), True),
        ("plain (out = x2)", x, init_params(kp1, 4, 8), False),
        ("is_res, batch-stacked tile", x5, init_params(kp1, 4, 8), True),
    ]
    for name, xi, params, is_res in configs:
        out = jax.block_until_ready(residual_conv_block(xi, params, is_res=is_res))
        ref = _reference(xi, params, is_res=is_res)
        assert out.shape == ref.shape, (name, out.shape, ref.shape)
        err = float(jnp.max(jnp.abs(out - ref)))
        assert err < 3e-4, (name, err)

    print("KERNEL_OK")
</pallas_src>

<mosaic_0001>
module attributes {stable_mosaic.version = 11 : i64} {
  func.func @_res_conv_block_kernel(%arg0: i32, %arg1: memref<1x328x128xf32, #tpu.memory_space<vmem>>, %arg2: memref<328x1xf32, #tpu.memory_space<vmem>>, %arg3: memref<9x128x128xf32, #tpu.memory_space<vmem>>, %arg4: memref<1x128xf32, #tpu.memory_space<vmem>>, %arg5: memref<9x128x128xf32, #tpu.memory_space<vmem>>, %arg6: memref<1x128xf32, #tpu.memory_space<vmem>>, %arg7: memref<1x328x128xf32, #tpu.memory_space<vmem>>) attributes {dimension_semantics = [#tpu.dimension_semantics<parallel>], iteration_bounds = array<i64: 2>, scalar_prefetch = 0 : i64, scratch_operands = 0 : i64, tpu.core_type = #tpu.core_type<tc>, window_params = [{transform_indices = @transform_0, window_bounds = array<i64: 1, 328, 128>}, {pipeline_mode = #tpu.pipeline_mode<synchronous>, transform_indices = @transform_1, window_bounds = array<i64: 328, 1>}, {pipeline_mode = #tpu.pipeline_mode<synchronous>, transform_indices = @transform_2, window_bounds = array<i64: 9, 128, 128>}, {pipeline_mode = #tpu.pipeline_mode<synchronous>, transform_indices = @transform_3, window_bounds = array<i64: 1, 128>}, {pipeline_mode = #tpu.pipeline_mode<synchronous>, transform_indices = @transform_4, window_bounds = array<i64: 9, 128, 128>}, {pipeline_mode = #tpu.pipeline_mode<synchronous>, transform_indices = @transform_5, window_bounds = array<i64: 1, 128>}, {transform_indices = @transform_6, window_bounds = array<i64: 1, 328, 128>}]} {
    %c0 = arith.constant 0 : index
    %c0_0 = arith.constant 0 : index
    %c0_1 = arith.constant 0 : index
    %0 = vector.load %arg1[%c0, %c0_0, %c0_1] : memref<1x328x128xf32, #tpu.memory_space<vmem>>, vector<1x328x128xf32>
    %1 = vector.shape_cast %0 : vector<1x328x128xf32> to vector<328x128xf32>
    %c19_i32 = arith.constant 19 : i32
    %2 = tpu.dynamic_rotate %1 by %c19_i32 dim 0 : vector<328x128xf32>, i32 -> vector<328x128xf32>
    %c0_2 = arith.constant 0 : index
    %c0_3 = arith.constant 0 : index
    %c0_4 = arith.constant 0 : index
    %3 = vector.load %arg3[%c0_2, %c0_3, %c0_4] : memref<9x128x128xf32, #tpu.memory_space<vmem>>, vector<1x128x128xf32>
    %4 = vector.shape_cast %3 : vector<1x128x128xf32> to vector<128x128xf32>
    %cst = arith.constant dense<0.000000e+00> : vector<328x128xf32>
    %5 = tpu.matmul %2, %4, %cst {dimension_numbers = #tpu.dot_dimension_numbers<[1], [0], [0], [1], [0, 0, 1, 1], [], []>} : vector<328x128xf32>, vector<128x128xf32>, vector<328x128xf32> -> vector<328x128xf32>
    %c18_i32 = arith.constant 18 : i32
    %6 = tpu.dynamic_rotate %1 by %c18_i32 dim 0 : vector<328x128xf32>, i32 -> vector<328x128xf32>
    %c1 = arith.constant 1 : index
    %c0_5 = arith.constant 0 : index
    %c0_6 = arith.constant 0 : index
    %7 = vector.load %arg3[%c1, %c0_5, %c0_6] : memref<9x128x128xf32, #tpu.memory_space<vmem>>, vector<1x128x128xf32>
    %8 = vector.shape_cast %7 : vector<1x128x128xf32> to vector<128x128xf32>
    %cst_7 = arith.constant dense<0.000000e+00> : vector<328x128xf32>
    %9 = tpu.matmul %6, %8, %cst_7 {dimension_numbers = #tpu.dot_dimension_numbers<[1], [0], [0], [1], [0, 0, 1, 1], [], []>} : vector<328x128xf32>, vector<128x128xf32>, vector<328x128xf32> -> vector<328x128xf32>
    %10 = arith.addf %5, %9 : vector<328x128xf32>
    %c17_i32 = arith.constant 17 : i32
    %11 = tpu.dynamic_rotate %1 by %c17_i32 dim 0 : vector<328x128xf32>, i32 -> vector<328x128xf32>
    %c2 = arith.constant 2 : index
    %c0_8 = arith.constant 0 : index
    %c0_9 = arith.constant 0 : index
    %12 = vector.load %arg3[%c2, %c0_8, %c0_9] : memref<9x128x128xf32, #tpu.memory_space<vmem>>, vector<1x128x128xf32>
    %13 = vector.shape_cast %12 : vector<1x128x128xf32> to vector<128x128xf32>
    %cst_10 = arith.constant dense<0.000000e+00> : vector<328x128xf32>
    %14 = tpu.matmul %11, %13, %cst_10 {dimension_numbers = #tpu.dot_dimension_numbers<[1], [0], [0], [1], [0, 0, 1, 1], [], []>} : vector<328x128xf32>, vector<128x128xf32>, vector<328x128xf32> -> vector<328x128xf32>
    %15 = arith.addf %10, %14 : vector<328x128xf32>
    %c1_i32 = arith.constant 1 : i32
    %16 = tpu.dynamic_rotate %1 by %c1_i32 dim 0 : vector<328x128xf32>, i32 -> vector<328x128xf32>
    %c3 = arith.constant 3 : index
    %c0_11 = arith.constant 0 : index
    %c0_12 = arith.constant 0 : index
    %17 = vector.load %arg3[%c3, %c0_11, %c0_12] : memref<9x128x128xf32, #tpu.memory_space<vmem>>, vector<1x128x128xf32>
    %18 = vector.shape_cast %17 : vector<1x128x128xf32> to vector<128x128xf32>
    %cst_13 = arith.constant dense<0.000000e+00> : vector<328x128xf32>
    %19 = tpu.matmul %16, %18, %cst_13 {dimension_numbers = #tpu.dot_dimension_numbers<[1], [0], [0], [1], [0, 0, 1, 1], [], []>} : vector<328x128xf32>, vector<128x128xf32>, vector<328x128xf32> -> vector<328x128xf32>
    %20 = arith.addf %15, %19 : vector<328x128xf32>
    %c4 = arith.constant 4 : index
    %c0_14 = arith.constant 0 : index
    %c0_15 = arith.constant 0 : index
    %21 = vector.load %arg3[%c4, %c0_14, %c0_15] : memref<9x128x128xf32, #tpu.memory_space<vmem>>, vector<1x128x128xf32>
    %22 = vector.shape_cast %21 : vector<1x128x128xf32> to vector<128x128xf32>
    %cst_16 = arith.constant dense<0.000000e+00> : vector<328x128xf32>
    %23 = tpu.matmul %1, %22, %cst_16 {dimension_numbers = #tpu.dot_dimension_numbers<[1], [0], [0], [1], [0, 0, 1, 1], [], []>} : vector<328x128xf32>, vector<128x128xf32>, vector<328x128xf32> -> vector<328x128xf32>
    %24 = arith.addf %20, %23 : vector<328x128xf32>
    %c327_i32 = arith.constant 327 : i32
    %25 = tpu.dynamic_rotate %1 by %c327_i32 dim 0 : vector<328x128xf32>, i32 -> vector<328x128xf32>
    %c5 = arith.constant 5 : index
    %c0_17 = arith.constant 0 : index
    %c0_18 = arith.constant 0 : index
    %26 = vector.load %arg3[%c5, %c0_17, %c0_18] : memref<9x128x128xf32, #tpu.memory_space<vmem>>, vector<1x128x128xf32>
    %27 = vector.shape_cast %26 : vector<1x128x128xf32> to vector<128x128xf32>
    %cst_19 = arith.constant dense<0.000000e+00> : vector<328x128xf32>
    %28 = tpu.matmul %25, %27, %cst_19 {dimension_numbers = #tpu.dot_dimension_numbers<[1], [0], [0], [1], [0, 0, 1, 1], [], []>} : vector<328x128xf32>, vector<128x128xf32>, vector<328x128xf32> -> vector<328x128xf32>
    %29 = arith.addf %24, %28 : vector<328x128xf32>
    %c311_i32 = arith.constant 311 : i32
    %30 = tpu.dynamic_rotate %1 by %c311_i32 dim 0 : vector<328x128xf32>, i32 -> vector<328x128xf32>
    %c6 = arith.constant 6 : index
    %c0_20 = arith.constant 0 : index
    %c0_21 = arith.constant 0 : index
    %31 = vector.load %arg3[%c6, %c0_20, %c0_21] : memref<9x128x128xf32, #tpu.memory_space<vmem>>, vector<1x128x128xf32>
    %32 = vector.shape_cast %31 : vector<1x128x128xf32> to vector<128x128xf32>
    %cst_22 = arith.constant dense<0.000000e+00> : vector<328x128xf32>
    %33 = tpu.matmul %30, %32, %cst_22 {dimension_numbers = #tpu.dot_dimension_numbers<[1], [0], [0], [1], [0, 0, 1, 1], [], []>} : vector<328x128xf32>, vector<128x128xf32>, vector<328x128xf32> -> vector<328x128xf32>
    %34 = arith.addf %29, %33 : vector<328x128xf32>
    %c310_i32 = arith.constant 310 : i32
    %35 = tpu.dynamic_rotate %1 by %c310_i32 dim 0 : vector<328x128xf32>, i32 -> vector<328x128xf32>
    %c7 = arith.constant 7 : index
    %c0_23 = arith.constant 0 : index
    %c0_24 = arith.constant 0 : index
    %36 = vector.load %arg3[%c7, %c0_23, %c0_24] : memref<9x128x128xf32, #tpu.memory_space<vmem>>, vector<1x128x128xf32>
    %37 = vector.shape_cast %36 : vector<1x128x128xf32> to vector<128x128xf32>
    %cst_25 = arith.constant dense<0.000000e+00> : vector<328x128xf32>
    %38 = tpu.matmul %35, %37, %cst_25 {dimension_numbers = #tpu.dot_dimension_numbers<[1], [0], [0], [1], [0, 0, 1, 1], [], []>} : vector<328x128xf32>, vector<128x128xf32>, vector<328x128xf32> -> vector<328x128xf32>
    %39 = arith.addf %34, %38 : vector<328x128xf32>
    %c309_i32 = arith.constant 309 : i32
    %40 = tpu.dynamic_rotate %1 by %c309_i32 dim 0 : vector<328x128xf32>, i32 -> vector<328x128xf32>
    %c8 = arith.constant 8 : index
    %c0_26 = arith.constant 0 : index
    %c0_27 = arith.constant 0 : index
    %41 = vector.load %arg3[%c8, %c0_26, %c0_27] : memref<9x128x128xf32, #tpu.memory_space<vmem>>, vector<1x128x128xf32>
    %42 = vector.shape_cast %41 : vector<1x128x128xf32> to vector<128x128xf32>
    %cst_28 = arith.constant dense<0.000000e+00> : vector<328x128xf32>
    %43 = tpu.matmul %40, %42, %cst_28 {dimension_numbers = #tpu.dot_dimension_numbers<[1], [0], [0], [1], [0, 0, 1, 1], [], []>} : vector<328x128xf32>, vector<128x128xf32>, vector<328x128xf32> -> vector<328x128xf32>
    %44 = arith.addf %39, %43 : vector<328x128xf32>
    %c0_29 = arith.constant 0 : index
    %c0_30 = arith.constant 0 : index
    %45 = vector.load %arg4[%c0_29, %c0_30] : memref<1x128xf32, #tpu.memory_space<vmem>>, vector<1x128xf32>
    %46 = vector.broadcast %45 : vector<1x128xf32> to vector<328x128xf32>
    %47 = arith.addf %44, %46 : vector<328x128xf32>
    %cst_31 = arith.constant 5.000000e-01 : f32
    %48 = vector.broadcast %cst_31 : f32 to vector<328x128xf32>
    %49 = arith.mulf %48, %47 : vector<328x128xf32>
    %cst_32 = arith.constant 0.707106769 : f32
    %50 = vector.broadcast %cst_32 : f32 to vector<328x128xf32>
    %51 = arith.mulf %47, %50 : vector<328x128xf32>
    %52 = math.erf %51 : vector<328x128xf32>
    %cst_33 = arith.constant 1.000000e+00 : f32
    %53 = vector.broadcast %cst_33 : f32 to vector<328x128xf32>
    %54 = arith.addf %53, %52 : vector<328x128xf32>
    %55 = arith.mulf %49, %54 : vector<328x128xf32>
    %c0_34 = arith.constant 0 : index
    %c0_35 = arith.constant 0 : index
    %56 = vector.load %arg2[%c0_34, %c0_35] : memref<328x1xf32, #tpu.memory_space<vmem>>, vector<328x1xf32>
    %57 = vector.broadcast %56 : vector<328x1xf32> to vector<328x128xf32>
    %58 = arith.mulf %55, %57 : vector<328x128xf32>
    %c19_i32_36 = arith.constant 19 : i32
    %59 = tpu.dynamic_rotate %58 by %c19_i32_36 dim 0 : vector<328x128xf32>, i32 -> vector<328x128xf32>
    %c0_37 = arith.constant 0 : index
    %c0_38 = arith.constant 0 : index
    %c0_39 = arith.constant 0 : index
    %60 = vector.load %arg5[%c0_37, %c0_38, %c0_39] : memref<9x128x128xf32, #tpu.memory_space<vmem>>, vector<1x128x128xf32>
    %61 = vector.shape_cast %60 : vector<1x128x128xf32> to vector<128x128xf32>
    %cst_40 = arith.constant dense<0.000000e+00> : vector<328x128xf32>
    %62 = tpu.matmul %59, %61, %cst_40 {dimension_numbers = #tpu.dot_dimension_numbers<[1], [0], [0], [1], [0, 0, 1, 1], [], []>} : vector<328x128xf32>, vector<128x128xf32>, vector<328x128xf32> -> vector<328x128xf32>
    %c18_i32_41 = arith.constant 18 : i32
    %63 = tpu.dynamic_rotate %58 by %c18_i32_41 dim 0 : vector<328x128xf32>, i32 -> vector<328x128xf32>
    %c1_42 = arith.constant 1 : index
    %c0_43 = arith.constant 0 : index
    %c0_44 = arith.constant 0 : index
    %64 = vector.load %arg5[%c1_42, %c0_43, %c0_44] : memref<9x128x128xf32, #tpu.memory_space<vmem>>, vector<1x128x128xf32>
    %65 = vector.shape_cast %64 : vector<1x128x128xf32> to vector<128x128xf32>
    %cst_45 = arith.constant dense<0.000000e+00> : vector<328x128xf32>
    %66 = tpu.matmul %63, %65, %cst_45 {dimension_numbers = #tpu.dot_dimension_numbers<[1], [0], [0], [1], [0, 0, 1, 1], [], []>} : vector<328x128xf32>, vector<128x128xf32>, vector<328x128xf32> -> vector<328x128xf32>
    %67 = arith.addf %62, %66 : vector<328x128xf32>
    %c17_i32_46 = arith.constant 17 : i32
    %68 = tpu.dynamic_rotate %58 by %c17_i32_46 dim 0 : vector<328x128xf32>, i32 -> vector<328x128xf32>
    %c2_47 = arith.constant 2 : index
    %c0_48 = arith.constant 0 : index
    %c0_49 = arith.constant 0 : index
    %69 = vector.load %arg5[%c2_47, %c0_48, %c0_49] : memref<9x128x128xf32, #tpu.memory_space<vmem>>, vector<1x128x128xf32>
    %70 = vector.shape_cast %69 : vector<1x128x128xf32> to vector<128x128xf32>
    %cst_50 = arith.constant dense<0.000000e+00> : vector<328x128xf32>
    %71 = tpu.matmul %68, %70, %cst_50 {dimension_numbers = #tpu.dot_dimension_numbers<[1], [0], [0], [1], [0, 0, 1, 1], [], []>} : vector<328x128xf32>, vector<128x128xf32>, vector<328x128xf32> -> vector<328x128xf32>
    %72 = arith.addf %67, %71 : vector<328x128xf32>
    %c1_i32_51 = arith.constant 1 : i32
    %73 = tpu.dynamic_rotate %58 by %c1_i32_51 dim 0 : vector<328x128xf32>, i32 -> vector<328x128xf32>
    %c3_52 = arith.constant 3 : index
    %c0_53 = arith.constant 0 : index
    %c0_54 = arith.constant 0 : index
    %74 = vector.load %arg5[%c3_52, %c0_53, %c0_54] : memref<9x128x128xf32, #tpu.memory_space<vmem>>, vector<1x128x128xf32>
    %75 = vector.shape_cast %74 : vector<1x128x128xf32> to vector<128x128xf32>
    %cst_55 = arith.constant dense<0.000000e+00> : vector<328x128xf32>
    %76 = tpu.matmul %73, %75, %cst_55 {dimension_numbers = #tpu.dot_dimension_numbers<[1], [0], [0], [1], [0, 0, 1, 1], [], []>} : vector<328x128xf32>, vector<128x128xf32>, vector<328x128xf32> -> vector<328x128xf32>
    %77 = arith.addf %72, %76 : vector<328x128xf32>
    %c4_56 = arith.constant 4 : index
    %c0_57 = arith.constant 0 : index
    %c0_58 = arith.constant 0 : index
    %78 = vector.load %arg5[%c4_56, %c0_57, %c0_58] : memref<9x128x128xf32, #tpu.memory_space<vmem>>, vector<1x128x128xf32>
    %79 = vector.shape_cast %78 : vector<1x128x128xf32> to vector<128x128xf32>
    %cst_59 = arith.constant dense<0.000000e+00> : vector<328x128xf32>
    %80 = tpu.matmul %58, %79, %cst_59 {dimension_numbers = #tpu.dot_dimension_numbers<[1], [0], [0], [1], [0, 0, 1, 1], [], []>} : vector<328x128xf32>, vector<128x128xf32>, vector<328x128xf32> -> vector<328x128xf32>
    %81 = arith.addf %77, %80 : vector<328x128xf32>
    %c327_i32_60 = arith.constant 327 : i32
    %82 = tpu.dynamic_rotate %58 by %c327_i32_60 dim 0 : vector<328x128xf32>, i32 -> vector<328x128xf32>
    %c5_61 = arith.constant 5 : index
    %c0_62 = arith.constant 0 : index
    %c0_63 = arith.constant 0 : index
    %83 = vector.load %arg5[%c5_61, %c0_62, %c0_63] : memref<9x128x128xf32, #tpu.memory_space<vmem>>, vector<1x128x128xf32>
    %84 = vector.shape_cast %83 : vector<1x128x128xf32> to vector<128x128xf32>
    %cst_64 = arith.constant dense<0.000000e+00> : vector<328x128xf32>
    %85 = tpu.matmul %82, %84, %cst_64 {dimension_numbers = #tpu.dot_dimension_numbers<[1], [0], [0], [1], [0, 0, 1, 1], [], []>} : vector<328x128xf32>, vector<128x128xf32>, vector<328x128xf32> -> vector<328x128xf32>
    %86 = arith.addf %81, %85 : vector<328x128xf32>
    %c311_i32_65 = arith.constant 311 : i32
    %87 = tpu.dynamic_rotate %58 by %c311_i32_65 dim 0 : vector<328x128xf32>, i32 -> vector<328x128xf32>
    %c6_66 = arith.constant 6 : index
    %c0_67 = arith.constant 0 : index
    %c0_68 = arith.constant 0 : index
    %88 = vector.load %arg5[%c6_66, %c0_67, %c0_68] : memref<9x128x128xf32, #tpu.memory_space<vmem>>, vector<1x128x128xf32>
    %89 = vector.shape_cast %88 : vector<1x128x128xf32> to vector<128x128xf32>
    %cst_69 = arith.constant dense<0.000000e+00> : vector<328x128xf32>
    %90 = tpu.matmul %87, %89, %cst_69 {dimension_numbers = #tpu.dot_dimension_numbers<[1], [0], [0], [1], [0, 0, 1, 1], [], []>} : vector<328x128xf32>, vector<128x128xf32>, vector<328x128xf32> -> vector<328x128xf32>
    %91 = arith.addf %86, %90 : vector<328x128xf32>
    %c310_i32_70 = arith.constant 310 : i32
    %92 = tpu.dynamic_rotate %58 by %c310_i32_70 dim 0 : vector<328x128xf32>, i32 -> vector<328x128xf32>
    %c7_71 = arith.constant 7 : index
    %c0_72 = arith.constant 0 : index
    %c0_73 = arith.constant 0 : index
    %93 = vector.load %arg5[%c7_71, %c0_72, %c0_73] : memref<9x128x128xf32, #tpu.memory_space<vmem>>, vector<1x128x128xf32>
    %94 = vector.shape_cast %93 : vector<1x128x128xf32> to vector<128x128xf32>
    %cst_74 = arith.constant dense<0.000000e+00> : vector<328x128xf32>
    %95 = tpu.matmul %92, %94, %cst_74 {dimension_numbers = #tpu.dot_dimension_numbers<[1], [0], [0], [1], [0, 0, 1, 1], [], []>} : vector<328x128xf32>, vector<128x128xf32>, vector<328x128xf32> -> vector<328x128xf32>
    %96 = arith.addf %91, %95 : vector<328x128xf32>
    %c309_i32_75 = arith.constant 309 : i32
    %97 = tpu.dynamic_rotate %58 by %c309_i32_75 dim 0 : vector<328x128xf32>, i32 -> vector<328x128xf32>
    %c8_76 = arith.constant 8 : index
    %c0_77 = arith.constant 0 : index
    %c0_78 = arith.constant 0 : index
    %98 = vector.load %arg5[%c8_76, %c0_77, %c0_78] : memref<9x128x128xf32, #tpu.memory_space<vmem>>, vector<1x128x128xf32>
    %99 = vector.shape_cast %98 : vector<1x128x128xf32> to vector<128x128xf32>
    %cst_79 = arith.constant dense<0.000000e+00> : vector<328x128xf32>
    %100 = tpu.matmul %97, %99, %cst_79 {dimension_numbers = #tpu.dot_dimension_numbers<[1], [0], [0], [1], [0, 0, 1, 1], [], []>} : vector<328x128xf32>, vector<128x128xf32>, vector<328x128xf32> -> vector<328x128xf32>
    %101 = arith.addf %96, %100 : vector<328x128xf32>
    %c0_80 = arith.constant 0 : index
    %c0_81 = arith.constant 0 : index
    %102 = vector.load %arg6[%c0_80, %c0_81] : memref<1x128xf32, #tpu.memory_space<vmem>>, vector<1x128xf32>
    %103 = vector.broadcast %102 : vector<1x128xf32> to vector<328x128xf32>
    %104 = arith.addf %101, %103 : vector<328x128xf32>
    %cst_82 = arith.constant 5.000000e-01 : f32
    %105 = vector.broadcast %cst_82 : f32 to vector<328x128xf32>
    %106 = arith.mulf %105, %104 : vector<328x128xf32>
    %cst_83 = arith.constant 0.707106769 : f32
    %107 = vector.broadcast %cst_83 : f32 to vector<328x128xf32>
    %108 = arith.mulf %104, %107 : vector<328x128xf32>
    %109 = math.erf %108 : vector<328x128xf32>
    %cst_84 = arith.constant 1.000000e+00 : f32
    %110 = vector.broadcast %cst_84 : f32 to vector<328x128xf32>
    %111 = arith.addf %110, %109 : vector<328x128xf32>
    %112 = arith.mulf %106, %111 : vector<328x128xf32>
    %113 = arith.addf %58, %112 : vector<328x128xf32>
    %cst_85 = arith.constant 0.70721358 : f32
    %114 = vector.broadcast %cst_85 : f32 to vector<328x128xf32>
    %115 = arith.mulf %113, %114 : vector<328x128xf32>
    %c0_86 = arith.constant 0 : index
    %c0_87 = arith.constant 0 : index
    %c0_88 = arith.constant 0 : index
    %116 = vector.load %arg7[%c0_86, %c0_87, %c0_88] : memref<1x328x128xf32, #tpu.memory_space<vmem>>, vector<1x328x128xf32>
    %117 = vector.shape_cast %116 : vector<1x328x128xf32> to vector<328x128xf32>
    %118 = vector.shape_cast %115 : vector<328x128xf32> to vector<1x328x128xf32>
    tpu.vector_store %arg7[%c0_86, %c0_87, %c0_88], %118 {strides = array<i32>} : memref<1x328x128xf32, #tpu.memory_space<vmem>>, vector<1x328x128xf32>,
    return
  }
  func.func @transform_0(%arg0: i32) -> (i32, i32, i32) {
    %c0_i32 = arith.constant 0 : i32
    %c0_i32_0 = arith.constant 0 : i32
    %c0_i32_1 = arith.constant 0 : i32
    return %arg0, %c0_i32, %c0_i32_0 : i32, i32, i32
  }
  func.func @transform_1(%arg0: i32) -> (i32, i32) {
    %c0_i32 = arith.constant 0 : i32
    %c0_i32_0 = arith.constant 0 : i32
    %c0_i32_1 = arith.constant 0 : i32
    return %c0_i32, %c0_i32_0 : i32, i32
  }
  func.func @transform_2(%arg0: i32) -> (i32, i32, i32) {
    %c0_i32 = arith.constant 0 : i32
    %c0_i32_0 = arith.constant 0 : i32
    %c0_i32_1 = arith.constant 0 : i32
    %c0_i32_2 = arith.constant 0 : i32
    return %c0_i32, %c0_i32_0, %c0_i32_1 : i32, i32, i32
  }
  func.func @transform_3(%arg0: i32) -> (i32, i32) {
    %c0_i32 = arith.constant 0 : i32
    %c0_i32_0 = arith.constant 0 : i32
    %c0_i32_1 = arith.constant 0 : i32
    return %c0_i32, %c0_i32_0 : i32, i32
  }
  func.func @transform_4(%arg0: i32) -> (i32, i32, i32) {
    %c0_i32 = arith.constant 0 : i32
    %c0_i32_0 = arith.constant 0 : i32
    %c0_i32_1 = arith.constant 0 : i32
    %c0_i32_2 = arith.constant 0 : i32
    return %c0_i32, %c0_i32_0, %c0_i32_1 : i32, i32, i32
  }
  func.func @transform_5(%arg0: i32) -> (i32, i32) {
    %c0_i32 = arith.constant 0 : i32
    %c0_i32_0 = arith.constant 0 : i32
    %c0_i32_1 = arith.constant 0 : i32
    return %c0_i32, %c0_i32_0 : i32, i32
  }
  func.func @transform_6(%arg0: i32) -> (i32, i32, i32) {
    %c0_i32 = arith.constant 0 : i32
    %c0_i32_0 = arith.constant 0 : i32
    %c0_i32_1 = arith.constant 0 : i32
    return %arg0, %c0_i32, %c0_i32_0 : i32, i32, i32
  }
}

</mosaic_0001>

<llo_original>
// kernel: residual_conv_block.1
$region0: #{residual_conv_block.1}
  #allocation0 [shape = 'u32[]', space=smem, size = 0x4, offset = 0x4, fixed_abs, tag = 'smem constant byte address 0x4 - core index']
  #allocation1 [shape = 'u32[144,128]{1,0:T(1,128)}', space=vmem, size = 0x12000, scoped, tag = 'internal scratch']
  %s0 = inlined_call_operand.vmem [shape: f32[2,328,128], index: 0, kind: input, shape index: {}]
  %s1 = inlined_call_operand.vmem [shape: f32[328,1], index: 1, kind: input, shape index: {}]
  %s2 = inlined_call_operand.vmem [shape: f32[9,128,128], index: 2, kind: input, shape index: {}]
  %s3 = inlined_call_operand.vmem [shape: f32[1,128], index: 3, kind: input, shape index: {}]
  %s4 = inlined_call_operand.vmem [shape: f32[9,128,128], index: 4, kind: input, shape index: {}]
  %s5 = inlined_call_operand.vmem [shape: f32[1,128], index: 5, kind: input, shape index: {}]
  %s6 = inlined_call_operand.vmem [shape: f32[2,328,128], index: 6, kind: output, shape index: {}]
  %s7 = sld [smem:[#allocation0]]
  $region57: #{residual_conv_block.1} parent=0
    _
  %s9 = ssub.s32 1, %s7
  %s10 = scalar_select 0, %s9, %s7
  loop: start=0, step=1, limit=4
  $region2: #{residual_conv_block.1} parent=0 // loop_pre_header
    _
  $region3: #{residual_conv_block.1} parent=0 // loop_header
    %s12 = sphi 0, %s16
    %p13 = scmp.ge.s32.totalorder %s12, 4
    %s22 = sphi 0, %s24
    %s25 = sphi 0, %s22
    %s26 = sphi 0, %s25
    %s42 = sphi 0, %s26
    %s46 = sphi 0, %s46
    %s48 = sphi 0, %s46
    %s49 = sphi 0, %s48
    %s63 = sphi 0, %s49
    %s67 = sphi 0, %s67
    %s69 = sphi 0, %s67
    %s70 = sphi 0, %s69
    %s84 = sphi 0, %s70
    %s88 = sphi 0, %s88
    %s90 = sphi 0, %s88
    %s91 = sphi 0, %s90
    %s105 = sphi 0, %s91
    %s109 = sphi 0, %s109
    %s111 = sphi 0, %s109
    %s112 = sphi 0, %s111
    %s126 = sphi 0, %s112
    %s130 = sphi 0, %s130
    %s132 = sphi 0, %s130
    %s133 = sphi 0, %s132
    %s147 = sphi 0, %s133
    %s153 = sphi 0, %s155
    %s156 = sphi 0, %s153
    %s157 = sphi 0, %s156
    %s173 = sphi 0, %s157
  $region4: #{residual_conv_block.1} parent=0 // loop_header_branch
    %15 = sbr.rel (%p13) target = $region8
  $region5: #{residual_conv_block.1} parent=0 // loop_body
    %s17 = ssub.s32 %s12, 1
    %s18 = ssub.s32 %s12, 2
    %s19 = sadd.s32 %s12, 1
    %s20 = ssub.s32 %s12, %s19
    %p21 = scmp.eq.s32.totalorder %s20, 0
    %s23 = sadd.s32 %s22, 1
    %s24 = scalar_select %p21, %s22, %s23
    %p27 = pneg %p21
    %p28 = scmp.eq.s32.totalorder %s12, 1
    %p29 = por %p27, %p28
    %p30 = scmp.ne.s32.totalorder %s22, %s25
    %p31 = scmp.eq.s32.totalorder %s12, 0
    %p32 = por %p30, %p31
    %p33 = scmp.ne.s32.totalorder %s22, %s25
    %p34 = scmp.eq.s32.totalorder %s17, 1
    %p35 = por %p33, %p34
    %p36 = scmp.ne.s32.totalorder %s25, %s26
    %p37 = scmp.eq.s32.totalorder %s17, 0
    %p38 = por %p36, %p37
    %p39 = scmp.ne.s32.totalorder %s25, %s26
    %p40 = scmp.eq.s32.totalorder %s18, 1
    %p41 = por %p39, %p40
    %p43 = scmp.ne.s32.totalorder %s26, %s42
    %p44 = scmp.eq.s32.totalorder %s18, 0
    %p45 = por %p43, %p44
    %s47 = sadd.s32 %s46, 1
    %p50 = scmp.eq.s32.totalorder %s12, 1
    %p51 = scmp.ne.s32.totalorder %s46, %s48
    %p52 = scmp.eq.s32.totalorder %s12, 0
    %p53 = por %p51, %p52
    %p54 = scmp.ne.s32.totalorder %s46, %s48
    %p55 = scmp.eq.s32.totalorder %s17, 1
    %p56 = por %p54, %p55
    %p57 = scmp.ne.s32.totalorder %s48, %s49
    %p58 = scmp.eq.s32.totalorder %s17, 0
    %p59 = por %p57, %p58
    %p60 = scmp.ne.s32.totalorder %s48, %s49
    %p61 = scmp.eq.s32.totalorder %s18, 1
    %p62 = por %p60, %p61
    %p64 = scmp.ne.s32.totalorder %s49, %s63
    %p65 = scmp.eq.s32.totalorder %s18, 0
    %p66 = por %p64, %p65
    %s68 = sadd.s32 %s67, 1
    %p71 = scmp.eq.s32.totalorder %s12, 1
    %p72 = scmp.ne.s32.totalorder %s67, %s69
    %p73 = scmp.eq.s32.totalorder %s12, 0
    %p74 = por %p72, %p73
    %p75 = scmp.ne.s32.totalorder %s67, %s69
    %p76 = scmp.eq.s32.totalorder %s17, 1
    %p77 = por %p75, %p76
    %p78 = scmp.ne.s32.totalorder %s69, %s70
    %p79 = scmp.eq.s32.totalorder %s17, 0
    %p80 = por %p78, %p79
    %p81 = scmp.ne.s32.totalorder %s69, %s70
    %p82 = scmp.eq.s32.totalorder %s18, 1
    %p83 = por %p81, %p82
    %p85 = scmp.ne.s32.totalorder %s70, %s84
    %p86 = scmp.eq.s32.totalorder %s18, 0
    %p87 = por %p85, %p86
    %s89 = sadd.s32 %s88, 1
    %p92 = scmp.eq.s32.totalorder %s12, 1
    %p93 = scmp.ne.s32.totalorder %s88, %s90
    %p94 = scmp.eq.s32.totalorder %s12, 0
    %p95 = por %p93, %p94
    %p96 = scmp.ne.s32.totalorder %s88, %s90
    %p97 = scmp.eq.s32.totalorder %s17, 1
    %p98 = por %p96, %p97
    %p99 = scmp.ne.s32.totalorder %s90, %s91
    %p100 = scmp.eq.s32.totalorder %s17, 0
    %p101 = por %p99, %p100
    %p102 = scmp.ne.s32.totalorder %s90, %s91
    %p103 = scmp.eq.s32.totalorder %s18, 1
    %p104 = por %p102, %p103
    %p106 = scmp.ne.s32.totalorder %s91, %s105
    %p107 = scmp.eq.s32.totalorder %s18, 0
    %p108 = por %p106, %p107
    %s110 = sadd.s32 %s109, 1
    %p113 = scmp.eq.s32.totalorder %s12, 1
    %p114 = scmp.ne.s32.totalorder %s109, %s111
    %p115 = scmp.eq.s32.totalorder %s12, 0
    %p116 = por %p114, %p115
    %p117 = scmp.ne.s32.totalorder %s109, %s111
    %p118 = scmp.eq.s32.totalorder %s17, 1
    %p119 = por %p117, %p118
    %p120 = scmp.ne.s32.totalorder %s111, %s112
    %p121 = scmp.eq.s32.totalorder %s17, 0
    %p122 = por %p120, %p121
    %p123 = scmp.ne.s32.totalorder %s111, %s112
    %p124 = scmp.eq.s32.totalorder %s18, 1
    %p125 = por %p123, %p124
    %p127 = scmp.ne.s32.totalorder %s112, %s126
    %p128 = scmp.eq.s32.totalorder %s18, 0
    %p129 = por %p127, %p128
    %s131 = sadd.s32 %s130, 1
    %p134 = scmp.eq.s32.totalorder %s12, 1
    %p135 = scmp.ne.s32.totalorder %s130, %s132
    %p136 = scmp.eq.s32.totalorder %s12, 0
    %p137 = por %p135, %p136
    %p138 = scmp.ne.s32.totalorder %s130, %s132
    %p139 = scmp.eq.s32.totalorder %s17, 1
    %p140 = por %p138, %p139
    %p141 = scmp.ne.s32.totalorder %s132, %s133
    %p142 = scmp.eq.s32.totalorder %s17, 0
    %p143 = por %p141, %p142
    %p144 = scmp.ne.s32.totalorder %s132, %s133
    %p145 = scmp.eq.s32.totalorder %s18, 1
    %p146 = por %p144, %p145
    %p148 = scmp.ne.s32.totalorder %s133, %s147
    %p149 = scmp.eq.s32.totalorder %s18, 0
    %p150 = por %p148, %p149
    %s151 = ssub.s32 %s12, %s19
    %p152 = scmp.eq.s32.totalorder %s151, 0
    %s154 = sadd.s32 %s153, 1
    %s155 = scalar_select %p152, %s153, %s154
    %p158 = pneg %p152
    %p159 = scmp.eq.s32.totalorder %s12, 1
    %p160 = por %p158, %p159
    %p161 = scmp.ne.s32.totalorder %s153, %s156
    %p162 = scmp.eq.s32.totalorder %s12, 0
    %p163 = por %p161, %p162
    %p164 = scmp.ne.s32.totalorder %s153, %s156
    %p165 = scmp.eq.s32.totalorder %s17, 1
    %p166 = por %p164, %p165
    %p167 = scmp.ne.s32.totalorder %s156, %s157
    %p168 = scmp.eq.s32.totalorder %s17, 0
    %p169 = por %p167, %p168
    %p170 = scmp.ne.s32.totalorder %s156, %s157
    %p171 = scmp.eq.s32.totalorder %s18, 1
    %p172 = por %p170, %p171
    %p174 = scmp.ne.s32.totalorder %s157, %s173
    %p175 = scmp.eq.s32.totalorder %s18, 0
    %p176 = por %p174, %p175
    %p177 = scmp.le.s32.totalorder 1, %s12
    %p178 = scmp.lt.s32.totalorder %s12, 3
    %p179 = pnand %p177, %p178
    %p180 = pneg %p179
    // Predicated region
    $region9: #{residual_conv_block.1} parent=5 // pred_check
      _
    $region10: #{residual_conv_block.1} parent=5 // pred_check_branch
      %182 = sbr.rel (%p179) target = $region12
    $region11: #{residual_conv_block.1} parent=5 // pred_region
      %s183 = ssub.s32 %s12, 1
      // Predicated region
      $region13: #{residual_conv_block.1} parent=11 // pred_check
        %p184 = pneg %p59
      $region14: #{residual_conv_block.1} parent=11 // pred_check_branch
        %186 = sbr.rel (%p184) target = $region16
      $region15: #{residual_conv_block.1} parent=11 // pred_region
        _
      $region16: #{residual_conv_block.1} parent=11 // pred_fallthru
        _
      // Predicated region
      $region17: #{residual_conv_block.1} parent=11 // pred_check
        %p187 = pneg %p80
      $region18: #{residual_conv_block.1} parent=11 // pred_check_branch
        %189 = sbr.rel (%p187) target = $region20
      $region19: #{residual_conv_block.1} parent=11 // pred_region
        _
      $region20: #{residual_conv_block.1} parent=11 // pred_fallthru
        _
      // Predicated region
      $region21: #{residual_conv_block.1} parent=11 // pred_check
        %p190 = pneg %p101
      $region22: #{residual_conv_block.1} parent=11 // pred_check_branch
        %192 = sbr.rel (%p190) target = $region24
      $region23: #{residual_conv_block.1} parent=11 // pred_region
        _
      $region24: #{residual_conv_block.1} parent=11 // pred_fallthru
        _
      // Predicated region
      $region25: #{residual_conv_block.1} parent=11 // pred_check
        %p193 = pneg %p122
      $region26: #{residual_conv_block.1} parent=11 // pred_check_branch
        %195 = sbr.rel (%p193) target = $region28
      $region27: #{residual_conv_block.1} parent=11 // pred_region
        _
      $region28: #{residual_conv_block.1} parent=11 // pred_fallthru
        _
      // Predicated region
      $region29: #{residual_conv_block.1} parent=11 // pred_check
        %p196 = pneg %p143
      $region30: #{residual_conv_block.1} parent=11 // pred_check_branch
        %198 = sbr.rel (%p196) target = $region32
      $region31: #{residual_conv_block.1} parent=11 // pred_region
        _
      $region32: #{residual_conv_block.1} parent=11 // pred_fallthru
        _
    $region12: #{residual_conv_block.1} parent=5 // pred_fallthru
      _
    %p199 = scmp.lt.s32.totalorder %s12, 2
    // Predicated region
    $region33: #{residual_conv_block.1} parent=5 // pred_check
      %p200 = pneg %p199
    $region34: #{residual_conv_block.1} parent=5 // pred_check_branch
      %202 = sbr.rel (%p200) target = $region36
    $region35: #{residual_conv_block.1} parent=5 // pred_region
      // Predicated region
      $region37: #{residual_conv_block.1} parent=35 // pred_check
        %p203 = pneg %p32
      $region38: #{residual_conv_block.1} parent=35 // pred_check_branch
        %205 = sbr.rel (%p203) target = $region40
      $region39: #{residual_conv_block.1} parent=35 // pred_region
        %p206 = scmp.lt.s32.totalorder %s12, 1
        %s207 = scalar_select %p206, %s12, 1
        %s208 = smul.addr %s207, 41
        %s209 = smul.addr %s208, 8
        %s210 = scalar_lea.vmem %s0, %s209
      $region40: #{residual_conv_block.1} parent=35 // pred_fallthru
        _
    $region36: #{residual_conv_block.1} parent=5 // pred_fallthru
      _
    %p211 = scmp.le.s32.totalorder 1, %s12
    %p212 = scmp.lt.s32.totalorder %s12, 3
    %p213 = pnand %p211, %p212
    %p214 = pneg %p213
    // Predicated region
    $region41: #{residual_conv_block.1} parent=5 // pred_check
      _
    $region42: #{residual_conv_block.1} parent=5 // pred_check_branch
      %216 = sbr.rel (%p213) target = $region44
    $region43: #{residual_conv_block.1} parent=5 // pred_region
      %s217 = ssub.s32 %s12, 1
      %p218 = scmp.lt.s32.totalorder %s17, 1
      %s219 = scalar_select %p218, %s17, 1
      %s220 = smul.addr %s219, 41
      %s221 = smul.addr %s220, 8
      %s222 = scalar_lea.vmem %s0, %s221
      %p223 = pneg %p38
      %p224 = pneg %p35
      %p225 = pneg %p59
      %p226 = pneg %p56
      %p227 = pneg %p80
      %p228 = pneg %p77
      %p229 = pneg %p101
      %p230 = pneg %p98
      %p231 = pneg %p122
      %p232 = pneg %p119
      %p233 = pneg %p143
      %p234 = pneg %p140
      %p235 = pneg %p169
      %p236 = pneg %p166
      %p237 = scmp.lt.s32.totalorder %s17, 1
      %s238 = scalar_select %p237, %s17, 1
      %s239 = smul.addr %s238, 41
      %s240 = smul.addr %s239, 8
      %s241 = scalar_lea.vmem %s6, %s240
      %p242 = scmp.lt.s32.totalorder %s17, 1
      %s243 = scalar_select %p242, %s17, 1
      %s244 = smul.addr %s243, 41
      %s245 = smul.addr %s244, 8
      %s246 = scalar_lea.vmem %s0, %s245
      %p247 = scmp.lt.s32.totalorder %s17, 1
      %s248 = scalar_select %p247, %s17, 1
      %s249 = smul.addr %s248, 41
      %s250 = smul.addr %s249, 8
      %s251 = scalar_lea.vmem %s6, %s250
      %v252 = vld [vmem:[%s246] sm:$0xff]
      %v253 = vld [vmem:[%s246 + $0x8] sm:$0xff]
      %v254 = vld [vmem:[%s246 + $0x10] sm:$0xff]
      %v255 = vld [vmem:[%s246 + $0x18] sm:$0xff]
      %v256 = vld [vmem:[%s246 + $0x20] sm:$0xff]
      %v257 = vld [vmem:[%s246 + $0x28] sm:$0xff]
      %v258 = vld [vmem:[%s246 + $0x30] sm:$0xff]
      %v259 = vld [vmem:[%s246 + $0x38] sm:$0xff]
      %v260 = vld [vmem:[%s246 + $0x40] sm:$0xff]
      %v261 = vld [vmem:[%s246 + $0x48] sm:$0xff]
      %v262 = vld [vmem:[%s246 + $0x50] sm:$0xff]
      %v263 = vld [vmem:[%s246 + $0x58] sm:$0xff]
      %v264 = vld [vmem:[%s246 + $0x60] sm:$0xff]
      %v265 = vld [vmem:[%s246 + $0x68] sm:$0xff]
      %v266 = vld [vmem:[%s246 + $0x70] sm:$0xff]
      %v267 = vld [vmem:[%s246 + $0x78] sm:$0xff]
      %v268 = vld [vmem:[%s246 + $0x80] sm:$0xff]
      %v269 = vld [vmem:[%s246 + $0x88] sm:$0xff]
      %v270 = vld [vmem:[%s246 + $0x90] sm:$0xff]
      %v271 = vld [vmem:[%s246 + $0x98] sm:$0xff]
      %v272 = vld [vmem:[%s246 + $0xa0] sm:$0xff]
      %v273 = vld [vmem:[%s246 + $0xa8] sm:$0xff]
      %v274 = vld [vmem:[%s246 + $0xb0] sm:$0xff]
      %v275 = vld [vmem:[%s246 + $0xb8] sm:$0xff]
      %v276 = vld [vmem:[%s246 + $0xc0] sm:$0xff]
      %v277 = vld [vmem:[%s246 + $0xc8] sm:$0xff]
      %v278 = vld [vmem:[%s246 + $0xd0] sm:$0xff]
      %v279 = vld [vmem:[%s246 + $0xd8] sm:$0xff]
      %v280 = vld [vmem:[%s246 + $0xe0] sm:$0xff]
      %v281 = vld [vmem:[%s246 + $0xe8] sm:$0xff]
      %v282 = vld [vmem:[%s246 + $0xf0] sm:$0xff]
      %v283 = vld [vmem:[%s246 + $0xf8] sm:$0xff]
      %v284 = vld [vmem:[%s246 + $0x100] sm:$0xff]
      %v285 = vld [vmem:[%s246 + $0x108] sm:$0xff]
      %v286 = vld [vmem:[%s246 + $0x110] sm:$0xff]
      %v287 = vld [vmem:[%s246 + $0x118] sm:$0xff]
      %v288 = vld [vmem:[%s246 + $0x120] sm:$0xff]
      %v289 = vld [vmem:[%s246 + $0x128] sm:$0xff]
      %v290 = vld [vmem:[%s246 + $0x130] sm:$0xff]
      %v291 = vld [vmem:[%s246 + $0x138] sm:$0xff]
      %v292 = vld [vmem:[%s246 + $0x140] sm:$0xff]
      %v293 = vrot.slane %v252, 5
      %v294 = vrot.slane %v253, 5
      %v295 = vrot.slane %v254, 5
      %v296 = vrot.slane %v255, 5
      %v297 = vrot.slane %v256, 5
      %v298 = vrot.slane %v257, 5
      %v299 = vrot.slane %v258, 5
      %v300 = vrot.slane %v259, 5
      %v301 = vrot.slane %v260, 5
      %v302 = vrot.slane %v261, 5
      %v303 = vrot.slane %v262, 5
      %v304 = vrot.slane %v263, 5
      %v305 = vrot.slane %v264, 5
      %v306 = vrot.slane %v265, 5
      %v307 = vrot.slane %v266, 5
      %v308 = vrot.slane %v267, 5
      %v309 = vrot.slane %v268, 5
      %v310 = vrot.slane %v269, 5
      %v311 = vrot.slane %v270, 5
      %v312 = vrot.slane %v271, 5
      %v313 = vrot.slane %v272, 5
      %v314 = vrot.slane %v273, 5
      %v315 = vrot.slane %v274, 5
      %v316 = vrot.slane %v275, 5
      %v317 = vrot.slane %v276, 5
      %v318 = vrot.slane %v277, 5
      %v319 = vrot.slane %v278, 5
      %v320 = vrot.slane %v279, 5
      %v321 = vrot.slane %v280, 5
      %v322 = vrot.slane %v281, 5
      %v323 = vrot.slane %v282, 5
      %v324 = vrot.slane %v283, 5
      %v325 = vrot.slane %v284, 5
      %v326 = vrot.slane %v285, 5
      %v327 = vrot.slane %v286, 5
      %v328 = vrot.slane %v287, 5
      %v329 = vrot.slane %v288, 5
      %v330 = vrot.slane %v289, 5
      %v331 = vrot.slane %v290, 5
      %v332 = vrot.slane %v291, 5
      %v333 = vrot.slane %v292, 5
      %v334 = vlaneseq
      %v335 = vshrl.u32 %v334, 7
      %vm336 = vcmp.lt.s32.totalorder %v335, 3
      %v337 = vsel %vm336, %v332, %v333
      %v338 = vsel %vm336, %v331, %v332
      %v339 = vsel %vm336, %v330, %v331
      %v340 = vsel %vm336, %v329, %v330
      %v341 = vsel %vm336, %v328, %v329
      %v342 = vsel %vm336, %v327, %v328
      %v343 = vsel %vm336, %v326, %v327
      %v344 = vsel %vm336, %v325, %v326
      %v345 = vsel %vm336, %v324, %v325
      %v346 = vsel %vm336, %v323, %v324
      %v347 = vsel %vm336, %v322, %v323
      %v348 = vsel %vm336, %v321, %v322
      %v349 = vsel %vm336, %v320, %v321
      %v350 = vsel %vm336, %v319, %v320
      %v351 = vsel %vm336, %v318, %v319
      %v352 = vsel %vm336, %v317, %v318
      %v353 = vsel %vm336, %v316, %v317
      %v354 = vsel %vm336, %v315, %v316
      %v355 = vsel %vm336, %v314, %v315
      %v356 = vsel %vm336, %v313, %v314
      %v357 = vsel %vm336, %v312, %v313
      %v358 = vsel %vm336, %v311, %v312
      %v359 = vsel %vm336, %v310, %v311
      %v360 = vsel %vm336, %v309, %v310
      %v361 = vsel %vm336, %v308, %v309
      %v362 = vsel %vm336, %v307, %v308
      %v363 = vsel %vm336, %v306, %v307
      %v364 = vsel %vm336, %v305, %v306
      %v365 = vsel %vm336, %v304, %v305
      %v366 = vsel %vm336, %v303, %v304
      %v367 = vsel %vm336, %v302, %v303
      %v368 = vsel %vm336, %v301, %v302
      %v369 = vsel %vm336, %v300, %v301
      %v370 = vsel %vm336, %v299, %v300
      %v371 = vsel %vm336, %v298, %v299
      %v372 = vsel %vm336, %v297, %v298
      %v373 = vsel %vm336, %v296, %v297
      %v374 = vsel %vm336, %v295, %v296
      %v375 = vsel %vm336, %v294, %v295
      %v376 = vsel %vm336, %v293, %v294
      %v377 = vsel %vm336, %v333, %v293
      %v378 = vld [vmem:[%s2] sm:$0xff]
      %v379 = vld [vmem:[%s2 + $0x8] sm:$0xff]
      %v380 = vld [vmem:[%s2 + $0x10] sm:$0xff]
      %v381 = vld [vmem:[%s2 + $0x18] sm:$0xff]
      %v382 = vld [vmem:[%s2 + $0x20] sm:$0xff]
      %v383 = vld [vmem:[%s2 + $0x28] sm:$0xff]
      %v384 = vld [vmem:[%s2 + $0x30] sm:$0xff]
      %v385 = vld [vmem:[%s2 + $0x38] sm:$0xff]
      %v386 = vld [vmem:[%s2 + $0x40] sm:$0xff]
      %v387 = vld [vmem:[%s2 + $0x48] sm:$0xff]
      %v388 = vld [vmem:[%s2 + $0x50] sm:$0xff]
      %v389 = vld [vmem:[%s2 + $0x58] sm:$0xff]
      %v390 = vld [vmem:[%s2 + $0x60] sm:$0xff]
      %v391 = vld [vmem:[%s2 + $0x68] sm:$0xff]
      %v392 = vld [vmem:[%s2 + $0x70] sm:$0xff]
      %v393 = vld [vmem:[%s2 + $0x78] sm:$0xff]
      %v394 = vrot.slane %v252, 6
      %v395 = vrot.slane %v253, 6
      %v396 = vrot.slane %v254, 6
      %v397 = vrot.slane %v255, 6
      %v398 = vrot.slane %v256, 6
      %v399 = vrot.slane %v257, 6
      %v400 = vrot.slane %v258, 6
      %v401 = vrot.slane %v259, 6
      %v402 = vrot.slane %v260, 6
      %v403 = vrot.slane %v261, 6
      %v404 = vrot.slane %v262, 6
      %v405 = vrot.slane %v263, 6
      %v406 = vrot.slane %v264, 6
      %v407 = vrot.slane %v265, 6
      %v408 = vrot.slane %v266, 6
      %v409 = vrot.slane %v267, 6
      %v410 = vrot.slane %v268, 6
      %v411 = vrot.slane %v269, 6
      %v412 = vrot.slane %v270, 6
      %v413 = vrot.slane %v271, 6
      %v414 = vrot.slane %v272, 6
      %v415 = vrot.slane %v273, 6
      %v416 = vrot.slane %v274, 6
      %v417 = vrot.slane %v275, 6
      %v418 = vrot.slane %v276, 6
      %v419 = vrot.slane %v277, 6
      %v420 = vrot.slane %v278, 6
      %v421 = vrot.slane %v279, 6
      %v422 = vrot.slane %v280, 6
      %v423 = vrot.slane %v281, 6
      %v424 = vrot.slane %v282, 6
      %v425 = vrot.slane %v283, 6
      %v426 = vrot.slane %v284, 6
      %v427 = vrot.slane %v285, 6
      %v428 = vrot.slane %v286, 6
      %v429 = vrot.slane %v287, 6
      %v430 = vrot.slane %v288, 6
      %v431 = vrot.slane %v289, 6
      %v432 = vrot.slane %v290, 6
      %v433 = vrot.slane %v291, 6
      %v434 = vrot.slane %v292, 6
      %vm435 = vcmp.lt.s32.totalorder %v335, 2
      %v436 = vsel %vm435, %v433, %v434
      %v437 = vsel %vm435, %v432, %v433
      %v438 = vsel %vm435, %v431, %v432
      %v439 = vsel %vm435, %v430, %v431
      %v440 = vsel %vm435, %v429, %v430
      %v441 = vsel %vm435, %v428, %v429
      %v442 = vsel %vm435, %v427, %v428
      %v443 = vsel %vm435, %v426, %v427
      %v444 = vsel %vm435, %v425, %v426
      %v445 = vsel %vm435, %v424, %v425
      %v446 = vsel %vm435, %v423, %v424
      %v447 = vsel %vm435, %v422, %v423
      %v448 = vsel %vm435, %v421, %v422
      %v449 = vsel %vm435, %v420, %v421
      %v450 = vsel %vm435, %v419, %v420
      %v451 = vsel %vm435, %v418, %v419
      %v452 = vsel %vm435, %v417, %v418
      %v453 = vsel %vm435, %v416, %v417
      %v454 = vsel %vm435, %v415, %v416
      %v455 = vsel %vm435, %v414, %v415
      %v456 = vsel %vm435, %v413, %v414
      %v457 = vsel %vm435, %v412, %v413
      %v458 = vsel %vm435, %v411, %v412
      %v459 = vsel %vm435, %v410, %v411
      %v460 = vsel %vm435, %v409, %v410
      %v461 = vsel %vm435, %v408, %v409
      %v462 = vsel %vm435, %v407, %v408
      %v463 = vsel %vm435, %v406, %v407
      %v464 = vsel %vm435, %v405, %v406
      %v465 = vsel %vm435, %v404, %v405
      %v466 = vsel %vm435, %v403, %v404
      %v467 = vsel %vm435, %v402, %v403
      %v468 = vsel %vm435, %v401, %v402
      %v469 = vsel %vm435, %v400, %v401
      %v470 = vsel %vm435, %v399, %v400
      %v471 = vsel %vm435, %v398, %v399
      %v472 = vsel %vm435, %v397, %v398
      %v473 = vsel %vm435, %v396, %v397
      %v474 = vsel %vm435, %v395, %v396
      %v475 = vsel %vm435, %v394, %v395
      %v476 = vsel %vm435, %v434, %v394
      %s477 = scalar_lea.vmem %s2, 128
      %v478 = vld [vmem:[%s477] sm:$0xff]
      %v479 = vld [vmem:[%s477 + $0x8] sm:$0xff]
      %v480 = vld [vmem:[%s477 + $0x10] sm:$0xff]
      %v481 = vld [vmem:[%s477 + $0x18] sm:$0xff]
      %v482 = vld [vmem:[%s477 + $0x20] sm:$0xff]
      %v483 = vld [vmem:[%s477 + $0x28] sm:$0xff]
      %v484 = vld [vmem:[%s477 + $0x30] sm:$0xff]
      %v485 = vld [vmem:[%s477 + $0x38] sm:$0xff]
      %v486 = vld [vmem:[%s477 + $0x40] sm:$0xff]
      %v487 = vld [vmem:[%s477 + $0x48] sm:$0xff]
      %v488 = vld [vmem:[%s477 + $0x50] sm:$0xff]
      %v489 = vld [vmem:[%s477 + $0x58] sm:$0xff]
      %v490 = vld [vmem:[%s477 + $0x60] sm:$0xff]
      %v491 = vld [vmem:[%s477 + $0x68] sm:$0xff]
      %v492 = vld [vmem:[%s477 + $0x70] sm:$0xff]
      %v493 = vld [vmem:[%s477 + $0x78] sm:$0xff]
      %494 = vmatprep.subr.mxu0 0.0
      %495 = vmatpush1.msra.mxu0 %v478
      %496 = vmatprep.subr.mxu0 0.0
      %497 = vmatpush1.msra.mxu0 %v479
      %498 = vmatprep.subr.mxu0 0.0
      %499 = vmatpush1.msra.mxu0 %v480
      %500 = vmatprep.subr.mxu0 0.0
      %501 = vmatpush1.msra.mxu0 %v481
      %502 = vmatprep.subr.mxu0 0.0
      %503 = vmatpush1.msra.mxu0 %v482
      %504 = vmatprep.subr.mxu0 0.0
      %505 = vmatpush1.msra.mxu0 %v483
      %506 = vmatprep.subr.mxu0 0.0
      %507 = vmatpush1.msra.mxu0 %v484
      %508 = vmatprep.subr.mxu0 0.0
      %509 = vmatpush1.msra.mxu0 %v485
      %510 = vmatprep.subr.mxu0 0.0
      %511 = vmatpush1.msra.mxu0 %v486
      %512 = vmatprep.subr.mxu0 0.0
      %513 = vmatpush1.msra.mxu0 %v487
      %514 = vmatprep.subr.mxu0 0.0
      %515 = vmatpush1.msra.mxu0 %v488
      %516 = vmatprep.subr.mxu0 0.0
      %517 = vmatpush1.msra.mxu0 %v489
      %518 = vmatprep.subr.mxu0 0.0
      %519 = vmatpush1.msra.mxu0 %v490
      %520 = vmatprep.subr.mxu0 0.0
      %521 = vmatpush1.msra.mxu0 %v491
      %522 = vmatprep.subr.mxu0 0.0
      %523 = vmatpush1.msra.mxu0 %v492
      %524 = vmatprep.subr.mxu0 0.0
      %525 = vmatpush1.msra.mxu0 %v493
      %526 = vmatprep.subr.mxu0 0.0
      %527 = vmatpush1.msra.mxu0 0.0
      %528 = vmatprep.subr.mxu0 0.0
      %529 = vmatpush1.msra.mxu0 0.0
      %530 = vmatprep.subr.mxu0 0.0
      %531 = vmatpush1.msra.mxu0 0.0
      %532 = vmatprep.subr.mxu0 0.0
      %533 = vmatpush1.msra.mxu0 0.0
      %534 = vmatprep.subr.mxu0 0.0
      %535 = vmatpush1.msra.mxu0 0.0
      %536 = vmatprep.subr.mxu0 0.0
      %537 = vmatpush1.msra.mxu0 0.0
      %538 = vmatprep.subr.mxu0 0.0
      %539 = vmatpush1.msra.mxu0 0.0
      %540 = vmatprep.subr.mxu0 0.0
      %541 = vmatpush1.msra.mxu0 0.0
      %542 = vmatprep.subr.mxu0 0.0
      %543 = vmatpush1.msra.mxu0 0.0
      %544 = vmatprep.subr.mxu0 0.0
      %545 = vmatpush1.msra.mxu0 0.0
      %546 = vmatprep.subr.mxu0 0.0
      %547 = vmatpush1.msra.mxu0 0.0
      %548 = vmatprep.subr.mxu0 0.0
      %549 = vmatpush1.msra.mxu0 0.0
      %550 = vmatprep.subr.mxu0 0.0
      %551 = vmatpush1.msra.mxu0 0.0
      %552 = vmatprep.subr.mxu0 0.0
      %553 = vmatpush1.msra.mxu0 0.0
      %554 = vmatprep.subr.mxu0 0.0
      %555 = vmatpush1.msra.mxu0 0.0
      %556 = vmatprep.subr.mxu0 0.0
      %557 = vmatpush1.msra.mxu0 0.0
      %558 = vmatprep.mubr.f32.mxu0 0.0
      %559 = vmatmul.mubr.f32.gmra.mrb[0].mxu0 %v437
      %v560 = vpop.f32.mrb[0].mxu0
      %v561 = vadd.f32 0.0, %v560
      %v562 = vpop.f32.mrb[0].mxu0
      %563 = vmatprep.mubr.f32.mxu0 0.0
      %564 = vmatmul.mubr.f32.gmra.mrb[0].mxu0 %v436
      %v565 = vpop.f32.mrb[0].mxu0
      %v566 = vadd.f32 0.0, %v565
      %v567 = vpop.f32.mrb[0].mxu0
      %568 = vmatprep.mubr.f32.mxu0 0.0
      %569 = vmatmul.mubr.f32.gmra.mrb[0].mxu0 %v476
      %v570 = vpop.f32.mrb[0].mxu0
      %v571 = vadd.f32 0.0, %v570
      %v572 = vpop.f32.mrb[0].mxu0
      %573 = vmatprep.mubr.f32.mxu0 0.0
      %574 = vmatmul.mubr.f32.gmra.mrb[0].mxu0 %v475
      %v575 = vpop.f32.mrb[0].mxu0
      %v576 = vadd.f32 0.0, %v575
      %v577 = vpop.f32.mrb[0].mxu0
      %578 = vmatprep.mubr.f32.mxu0 0.0
      %579 = vmatmul.mubr.f32.gmra.mrb[0].mxu0 %v474
      %v580 = vpop.f32.mrb[0].mxu0
      %v581 = vadd.f32 0.0, %v580
      %v582 = vpop.f32.mrb[0].mxu0
      %583 = vmatprep.mubr.f32.mxu0 0.0
      %584 = vmatmul.mubr.f32.gmra.mrb[0].mxu0 %v473
      %v585 = vpop.f32.mrb[0].mxu0
      %v586 = vadd.f32 0.0, %v585
      %v587 = vpop.f32.mrb[0].mxu0
      %588 = vmatprep.mubr.f32.mxu0 0.0
      %589 = vmatmul.mubr.f32.gmra.mrb[0].mxu0 %v472
      %v590 = vpop.f32.mrb[0].mxu0
      %v591 = vadd.f32 0.0, %v590
      %v592 = vpop.f32.mrb[0].mxu0
      %593 = vmatprep.mubr.f32.mxu0 0.0
      %594 = vmatmul.mubr.f32.gmra.mrb[0].mxu0 %v471
      %v595 = vpop.f32.mrb[0].mxu0
      %v596 = vadd.f32 0.0, %v595
      %v597 = vpop.f32.mrb[0].mxu0
      %598 = vmatprep.mubr.f32.mxu0 0.0
      %599 = vmatmul.mubr.f32.gmra.mrb[0].mxu0 %v470
      %v600 = vpop.f32.mrb[0].mxu0
      %v601 = vadd.f32 0.0, %v600
      %v602 = vpop.f32.mrb[0].mxu0
      %603 = vmatprep.mubr.f32.mxu0 0.0
      %604 = vmatmul.mubr.f32.gmra.mrb[0].mxu0 %v469
      %v605 = vpop.f32.mrb[0].mxu0
      %v606 = vadd.f32 0.0, %v605
      %v607 = vpop.f32.mrb[0].mxu0
      %608 = vmatprep.mubr.f32.mxu0 0.0
      %609 = vmatmul.mubr.f32.gmra.mrb[0].mxu0 %v468
      %v610 = vpop.f32.mrb[0].mxu0
      %v611 = vadd.f32 0.0, %v610
      %v612 = vpop.f32.mrb[0].mxu0
      %613 = vmatprep.mubr.f32.mxu0 0.0
      %614 = vmatmul.mubr.f32.gmra.mrb[0].mxu0 %v467
      %v615 = vpop.f32.mrb[0].mxu0
      %v616 = vadd.f32 0.0, %v615
      %v617 = vpop.f32.mrb[0].mxu0
      %618 = vmatprep.mubr.f32.mxu0 0.0
      %619 = vmatmul.mubr.f32.gmra.mrb[0].mxu0 %v466
      %v620 = vpop.f32.mrb[0].mxu0
      %v621 = vadd.f32 0.0, %v620
      %v622 = vpop.f32.mrb[0].mxu0
      %623 = vmatprep.mubr.f32.mxu0 0.0
      %624 = vmatmul.mubr.f32.gmra.mrb[0].mxu0 %v465
      %v625 = vpop.f32.mrb[0].mxu0
      %v626 = vadd.f32 0.0, %v625
      %v627 = vpop.f32.mrb[0].mxu0
      %628 = vmatprep.mubr.f32.mxu0 0.0
      %629 = vmatmul.mubr.f32.gmra.mrb[0].mxu0 %v464
      %v630 = vpop.f32.mrb[0].mxu0
      %v631 = vadd.f32 0.0, %v630
      %v632 = vpop.f32.mrb[0].mxu0
      %633 = vmatprep.mubr.f32.mxu0 0.0
      %634 = vmatmul.mubr.f32.gmra.mrb[0].mxu0 %v463
      %v635 = vpop.f32.mrb[0].mxu0
      %v636 = vadd.f32 0.0, %v635
      %v637 = vpop.f32.mrb[0].mxu0
      %638 = vmatprep.mubr.f32.mxu0 0.0
      %639 = vmatmul.mubr.f32.gmra.mrb[0].mxu0 %v462
      %v640 = vpop.f32.mrb[0].mxu0
      %v641 = vadd.f32 0.0, %v640
      %v642 = vpop.f32.mrb[0].mxu0
      %643 = vmatprep.mubr.f32.mxu0 0.0
      %644 = vmatmul.mubr.f32.gmra.mrb[0].mxu0 %v461
      %v645 = vpop.f32.mrb[0].mxu0
      %v646 = vadd.f32 0.0, %v645
      %v647 = vpop.f32.mrb[0].mxu0
      %648 = vmatprep.mubr.f32.mxu0 0.0
      %649 = vmatmul.mubr.f32.gmra.mrb[0].mxu0 %v460
      %v650 = vpop.f32.mrb[0].mxu0
      %v651 = vadd.f32 0.0, %v650
      %v652 = vpop.f32.mrb[0].mxu0
      %653 = vmatprep.mubr.f32.mxu0 0.0
      %654 = vmatmul.mubr.f32.gmra.mrb[0].mxu0 %v459
      %v655 = vpop.f32.mrb[0].mxu0
      %v656 = vadd.f32 0.0, %v655
      %v657 = vpop.f32.mrb[0].mxu0
      %658 = vmatprep.mubr.f32.mxu0 0.0
      %659 = vmatmul.mubr.f32.gmra.mrb[0].mxu0 %v458
      %v660 = vpop.f32.mrb[0].mxu0
      %v661 = vadd.f32 0.0, %v660
      %v662 = vpop.f32.mrb[0].mxu0
      %663 = vmatprep.mubr.f32.mxu0 0.0
      %664 = vmatmul.mubr.f32.gmra.mrb[0].mxu0 %v457
      %v665 = vpop.f32.mrb[0].mxu0
      %v666 = vadd.f32 0.0, %v665
      %v667 = vpop.f32.mrb[0].mxu0
      %668 = vmatprep.mubr.f32.mxu0 0.0
      %669 = vmatmul.mubr.f32.gmra.mrb[0].mxu0 %v456
      %v670 = vpop.f32.mrb[0].mxu0
      %v671 = vadd.f32 0.0, %v670
      %v672 = vpop.f32.mrb[0].mxu0
      %673 = vmatprep.mubr.f32.mxu0 0.0
      %674 = vmatmul.mubr.f32.gmra.mrb[0].mxu0 %v455
      %v675 = vpop.f32.mrb[0].mxu0
      %v676 = vadd.f32 0.0, %v675
      %v677 = vpop.f32.mrb[0].mxu0
      %678 = vmatprep.mubr.f32.mxu0 0.0
      %679 = vmatmul.mubr.f32.gmra.mrb[0].mxu0 %v454
      %v680 = vpop.f32.mrb[0].mxu0
      %v681 = vadd.f32 0.0, %v680
      %v682 = vpop.f32.mrb[0].mxu0
      %683 = vmatprep.mubr.f32.mxu0 0.0
      %684 = vmatmul.mubr.f32.gmra.mrb[0].mxu0 %v453
      %v685 = vpop.f32.mrb[0].mxu0
      %v686 = vadd.f32 0.0, %v685
      %v687 = vpop.f32.mrb[0].mxu0
      %688 = vmatprep.mubr.f32.mxu0 0.0
      %689 = vmatmul.mubr.f32.gmra.mrb[0].mxu0 %v452
      %v690 = vpop.f32.mrb[0].mxu0
      %v691 = vadd.f32 0.0, %v690
      %v692 = vpop.f32.mrb[0].mxu0
      %693 = vmatprep.mubr.f32.mxu0 0.0
      %694 = vmatmul.mubr.f32.gmra.mrb[0].mxu0 %v451
      %v695 = vpop.f32.mrb[0].mxu0
      %v696 = vadd.f32 0.0, %v695
      %v697 = vpop.f32.mrb[0].mxu0
      %698 = vmatprep.mubr.f32.mxu0 0.0
      %699 = vmatmul.mubr.f32.gmra.mrb[0].mxu0 %v450
      %v700 = vpop.f32.mrb[0].mxu0
      %v701 = vadd.f32 0.0, %v700
      %v702 = vpop.f32.mrb[0].mxu0
      %703 = vmatprep.mubr.f32.mxu0 0.0
      %704 = vmatmul.mubr.f32.gmra.mrb[0].mxu0 %v449
      %v705 = vpop.f32.mrb[0].mxu0
      %v706 = vadd.f32 0.0, %v705
      %v707 = vpop.f32.mrb[0].mxu0
      %708 = vmatprep.mubr.f32.mxu0 0.0
      %709 = vmatmul.mubr.f32.gmra.mrb[0].mxu0 %v448
      %v710 = vpop.f32.mrb[0].mxu0
      %v711 = vadd.f32 0.0, %v710
      %v712 = vpop.f32.mrb[0].mxu0
      %713 = vmatprep.mubr.f32.mxu0 0.0
      %714 = vmatmul.mubr.f32.gmra.mrb[0].mxu0 %v447
      %v715 = vpop.f32.mrb[0].mxu0
      %v716 = vadd.f32 0.0, %v715
      %v717 = vpop.f32.mrb[0].mxu0
      %718 = vmatprep.mubr.f32.mxu0 0.0
      %719 = vmatmul.mubr.f32.gmra.mrb[0].mxu0 %v446
      %v720 = vpop.f32.mrb[0].mxu0
      %v721 = vadd.f32 0.0, %v720
      %v722 = vpop.f32.mrb[0].mxu0
      %723 = vmatprep.mubr.f32.mxu0 0.0
      %724 = vmatmul.mubr.f32.gmra.mrb[0].mxu0 %v445
      %v725 = vpop.f32.mrb[0].mxu0
      %v726 = vadd.f32 0.0, %v725
      %v727 = vpop.f32.mrb[0].mxu0
      %728 = vmatprep.mubr.f32.mxu0 0.0
      %729 = vmatmul.mubr.f32.gmra.mrb[0].mxu0 %v444
      %v730 = vpop.f32.mrb[0].mxu0
      %v731 = vadd.f32 0.0, %v730
      %v732 = vpop.f32.mrb[0].mxu0
      %733 = vmatprep.mubr.f32.mxu0 0.0
      %734 = vmatmul.mubr.f32.gmra.mrb[0].mxu0 %v443
      %v735 = vpop.f32.mrb[0].mxu0
      %v736 = vadd.f32 0.0, %v735
      %v737 = vpop.f32.mrb[0].mxu0
      %738 = vmatprep.mubr.f32.mxu0 0.0
      %739 = vmatmul.mubr.f32.gmra.mrb[0].mxu0 %v442
      %v740 = vpop.f32.mrb[0].mxu0
      %v741 = vadd.f32 0.0, %v740
      %v742 = vpop.f32.mrb[0].mxu0
      %743 = vmatprep.mubr.f32.mxu0 0.0
      %744 = vmatmul.mubr.f32.gmra.mrb[0].mxu0 %v441
      %v745 = vpop.f32.mrb[0].mxu0
      %v746 = vadd.f32 0.0, %v745
      %v747 = vpop.f32.mrb[0].mxu0
      %748 = vmatprep.mubr.f32.mxu0 0.0
      %749 = vmatmul.mubr.f32.gmra.mrb[0].mxu0 %v440
      %v750 = vpop.f32.mrb[0].mxu0
      %v751 = vadd.f32 0.0, %v750
      %v752 = vpop.f32.mrb[0].mxu0
      %753 = vmatprep.mubr.f32.mxu0 0.0
      %754 = vmatmul.mubr.f32.gmra.mrb[0].mxu0 %v439
      %v755 = vpop.f32.mrb[0].mxu0
      %v756 = vadd.f32 0.0, %v755
      %v757 = vpop.f32.mrb[0].mxu0
      %758 = vmatprep.mubr.f32.mxu0 0.0
      %759 = vmatmul.mubr.f32.gmra.mrb[0].mxu0 %v438
      %v760 = vpop.f32.mrb[0].mxu0
      %v761 = vadd.f32 0.0, %v760
      %v762 = vpop.f32.mrb[0].mxu0
      %763 = vdwg.mxu0
      %764 = vmatprep.subr.mxu0 0.0
      %765 = vmatpush1.msra.mxu0 %v378
      %766 = vmatprep.subr.mxu0 0.0
      %767 = vmatpush1.msra.mxu0 %v379
      %768 = vmatprep.subr.mxu0 0.0
      %769 = vmatpush1.msra.mxu0 %v380
      %770 = vmatprep.subr.mxu0 0.0
      %771 = vmatpush1.msra.mxu0 %v381
      %772 = vmatprep.subr.mxu0 0.0
      %773 = vmatpush1.msra.mxu0 %v382
      %774 = vmatprep.subr.mxu0 0.0
      %775 = vmatpush1.msra.mxu0 %v383
      %776 = vmatprep.subr.mxu0 0.0
      %777 = vmatpush1.msra.mxu0 %v384
      %778 = vmatprep.subr.mxu0 0.0
      %779 = vmatpush1.msra.mxu0 %v385
      %780 = vmatprep.subr.mxu0 0.0
      %781 = vmatpush1.msra.mxu0 %v386
      %782 = vmatprep.subr.mxu0 0.0
      %783 = vmatpush1.msra.mxu0 %v387
      %784 = vmatprep.subr.mxu0 0.0
      %785 = vmatpush1.msra.mxu0 %v388
      %786 = vmatprep.subr.mxu0 0.0
      %787 = vmatpush1.msra.mxu0 %v389
      %788 = vmatprep.subr.mxu0 0.0
      %789 = vmatpush1.msra.mxu0 %v390
      %790 = vmatprep.subr.mxu0 0.0
      %791 = vmatpush1.msra.mxu0 %v391
      %792 = vmatprep.subr.mxu0 0.0
      %793 = vmatpush1.msra.mxu0 %v392
      %794 = vmatprep.subr.mxu0 0.0
      %795 = vmatpush1.msra.mxu0 %v393
      %796 = vmatprep.subr.mxu0 0.0
      %797 = vmatpush1.msra.mxu0 0.0
      %798 = vmatprep.subr.mxu0 0.0
      %799 = vmatpush1.msra.mxu0 0.0
      %800 = vmatprep.subr.mxu0 0.0
      %801 = vmatpush1.msra.mxu0 0.0
      %802 = vmatprep.subr.mxu0 0.0
      %803 = vmatpush1.msra.mxu0 0.0
      %804 = vmatprep.subr.mxu0 0.0
      %805 = vmatpush1.msra.mxu0 0.0
      %806 = vmatprep.subr.mxu0 0.0
      %807 = vmatpush1.msra.mxu0 0.0
      %808 = vmatprep.subr.mxu0 0.0
      %809 = vmatpush1.msra.mxu0 0.0
      %810 = vmatprep.subr.mxu0 0.0
      %811 = vmatpush1.msra.mxu0 0.0
      %812 = vmatprep.subr.mxu0 0.0
      %813 = vmatpush1.msra.mxu0 0.0
      %814 = vmatprep.subr.mxu0 0.0
      %815 = vmatpush1.msra.mxu0 0.0
      %816 = vmatprep.subr.mxu0 0.0
      %817 = vmatpush1.msra.mxu0 0.0
      %818 = vmatprep.subr.mxu0 0.0
      %819 = vmatpush1.msra.mxu0 0.0
      %820 = vmatprep.subr.mxu0 0.0
      %821 = vmatpush1.msra.mxu0 0.0
      %822 = vmatprep.subr.mxu0 0.0
      %823 = vmatpush1.msra.mxu0 0.0
      %824 = vmatprep.subr.mxu0 0.0
      %825 = vmatpush1.msra.mxu0 0.0
      %826 = vmatprep.subr.mxu0 0.0
      %827 = vmatpush1.msra.mxu0 0.0
      %828 = vmatprep.mubr.f32.mxu0 0.0
      %829 = vmatmul.mubr.f32.gmra.mrb[0].mxu0 %v338
      %v830 = vpop.f32.mrb[0].mxu0
      %v831 = vadd.f32 %v561, %v830
      %v832 = vpop.f32.mrb[0].mxu0
      %833 = vmatprep.mubr.f32.mxu0 0.0
      %834 = vmatmul.mubr.f32.gmra.mrb[0].mxu0 %v337
      %v835 = vpop.f32.mrb[0].mxu0
      %v836 = vadd.f32 %v566, %v835
      %v837 = vpop.f32.mrb[0].mxu0
      %838 = vmatprep.mubr.f32.mxu0 0.0
      %839 = vmatmul.mubr.f32.gmra.mrb[0].mxu0 %v377
      %v840 = vpop.f32.mrb[0].mxu0
      %v841 = vadd.f32 %v571, %v840
      %v842 = vpop.f32.mrb[0].mxu0
      %843 = vmatprep.mubr.f32.mxu0 0.0
      %844 = vmatmul.mubr.f32.gmra.mrb[0].mxu0 %v376
      %v845 = vpop.f32.mrb[0].mxu0
      %v846 = vadd.f32 %v576, %v845
      %v847 = vpop.f32.mrb[0].mxu0
      %848 = vmatprep.mubr.f32.mxu0 0.0
      %849 = vmatmul.mubr.f32.gmra.mrb[0].mxu0 %v375
      %v850 = vpop.f32.mrb[0].mxu0
      %v851 = vadd.f32 %v581, %v850
      %v852 = vpop.f32.mrb[0].mxu0
      %853 = vmatprep.mubr.f32.mxu0 0.0
      %854 = vmatmul.mubr.f32.gmra.mrb[0].mxu0 %v374
      %v855 = vpop.f32.mrb[0].mxu0
      %v856 = vadd.f32 %v586, %v855
      %v857 = vpop.f32.mrb[0].mxu0
      %858 = vmatprep.mubr.f32.mxu0 0.0
      %859 = vmatmul.mubr.f32.gmra.mrb[0].mxu0 %v373
      %v860 = vpop.f32.mrb[0].mxu0
      %v861 = vadd.f32 %v591, %v860
      %v862 = vpop.f32.mrb[0].mxu0
      %863 = vmatprep.mubr.f32.mxu0 0.0
      %864 = vmatmul.mubr.f32.gmra.mrb[0].mxu0 %v372
      %v865 = vpop.f32.mrb[0].mxu0
      %v866 = vadd.f32 %v596, %v865
      %v867 = vpop.f32.mrb[0].mxu0
      %868 = vmatprep.mubr.f32.mxu0 0.0
      %869 = vmatmul.mubr.f32.gmra.mrb[0].mxu0 %v371
      %v870 = vpop.f32.mrb[0].mxu0
      %v871 = vadd.f32 %v601, %v870
      %v872 = vpop.f32.mrb[0].mxu0
      %873 = vmatprep.mubr.f32.mxu0 0.0
      %874 = vmatmul.mubr.f32.gmra.mrb[0].mxu0 %v370
      %v875 = vpop.f32.mrb[0].mxu0
      %v876 = vadd.f32 %v606, %v875
      %v877 = vpop.f32.mrb[0].mxu0
      %878 = vmatprep.mubr.f32.mxu0 0.0
      %879 = vmatmul.mubr.f32.gmra.mrb[0].mxu0 %v369
      %v880 = vpop.f32.mrb[0].mxu0
      %v881 = vadd.f32 %v611, %v880
      %v882 = vpop.f32.mrb[0].mxu0
      %883 = vmatprep.mubr.f32.mxu0 0.0
      %884 = vmatmul.mubr.f32.gmra.mrb[0].mxu0 %v368
      %v885 = vpop.f32.mrb[0].mxu0
      %v886 = vadd.f32 %v616, %v885
      %v887 = vpop.f32.mrb[0].mxu0
      %888 = vmatprep.mubr.f32.mxu0 0.0
      %889 = vmatmul.mubr.f32.gmra.mrb[0].mxu0 %v367
      %v890 = vpop.f32.mrb[0].mxu0
      %v891 = vadd.f32 %v621, %v890
      %v892 = vpop.f32.mrb[0].mxu0
      %893 = vmatprep.mubr.f32.mxu0 0.0
      %894 = vmatmul.mubr.f32.gmra.mrb[0].mxu0 %v366
      %v895 = vpop.f32.mrb[0].mxu0
      %v896 = vadd.f32 %v626, %v895
      %v897 = vpop.f32.mrb[0].mxu0
      %898 = vmatprep.mubr.f32.mxu0 0.0
      %899 = vmatmul.mubr.f32.gmra.mrb[0].mxu0 %v365
      %v900 = vpop.f32.mrb[0].mxu0
      %v901 = vadd.f32 %v631, %v900
      %v902 = vpop.f32.mrb[0].mxu0
      %903 = vmatprep.mubr.f32.mxu0 0.0
      %904 = vmatmul.mubr.f32.gmra.mrb[0].mxu0 %v364
      %v905 = vpop.f32.mrb[0].mxu0
      %v906 = vadd.f32 %v636, %v905
      %v907 = vpop.f32.mrb[0].mxu0
      %908 = vmatprep.mubr.f32.mxu0 0.0
      %909 = vmatmul.mubr.f32.gmra.mrb[0].mxu0 %v363
      %v910 = vpop.f32.mrb[0].mxu0
      %v911 = vadd.f32 %v641, %v910
      %v912 = vpop.f32.mrb[0].mxu0
      %913 = vmatprep.mubr.f32.mxu0 0.0
      %914 = vmatmul.mubr.f32.gmra.mrb[0].mxu0 %v362
      %v915 = vpop.f32.mrb[0].mxu0
      %v916 = vadd.f32 %v646, %v915
      %v917 = vpop.f32.mrb[0].mxu0
      %918 = vmatprep.mubr.f32.mxu0 0.0
      %919 = vmatmul.mubr.f32.gmra.mrb[0].mxu0 %v361
      %v920 = vpop.f32.mrb[0].mxu0
      %v921 = vadd.f32 %v651, %v920
      %v922 = vpop.f32.mrb[0].mxu0
      %923 = vmatprep.mubr.f32.mxu0 0.0
      %924 = vmatmul.mubr.f32.gmra.mrb[0].mxu0 %v360
      %v925 = vpop.f32.mrb[0].mxu0
      %v926 = vadd.f32 %v656, %v925
      %v927 = vpop.f32.mrb[0].mxu0
      %928 = vmatprep.mubr.f32.mxu0 0.0
      %929 = vmatmul.mubr.f32.gmra.mrb[0].mxu0 %v359
      %v930 = vpop.f32.mrb[0].mxu0
      %v931 = vadd.f32 %v661, %v930
      %v932 = vpop.f32.mrb[0].mxu0
      %933 = vmatprep.mubr.f32.mxu0 0.0
      %934 = vmatmul.mubr.f32.gmra.mrb[0].mxu0 %v358
      %v935 = vpop.f32.mrb[0].mxu0
      %v936 = vadd.f32 %v666, %v935
      %v937 = vpop.f32.mrb[0].mxu0
      %938 = vmatprep.mubr.f32.mxu0 0.0
      %939 = vmatmul.mubr.f32.gmra.mrb[0].mxu0 %v357
      %v940 = vpop.f32.mrb[0].mxu0
      %v941 = vadd.f32 %v671, %v940
      %v942 = vpop.f32.mrb[0].mxu0
      %943 = vmatprep.mubr.f32.mxu0 0.0
      %944 = vmatmul.mubr.f32.gmra.mrb[0].mxu0 %v356
      %v945 = vpop.f32.mrb[0].mxu0
      %v946 = vadd.f32 %v676, %v945
      %v947 = vpop.f32.mrb[0].mxu0
      %948 = vmatprep.mubr.f32.mxu0 0.0
      %949 = vmatmul.mubr.f32.gmra.mrb[0].mxu0 %v355
      %v950 = vpop.f32.mrb[0].mxu0
      %v951 = vadd.f32 %v681, %v950
      %v952 = vpop.f32.mrb[0].mxu0
      %953 = vmatprep.mubr.f32.mxu0 0.0
      %954 = vmatmul.mubr.f32.gmra.mrb[0].mxu0 %v354
      %v955 = vpop.f32.mrb[0].mxu0
      %v956 = vadd.f32 %v686, %v955
      %v957 = vpop.f32.mrb[0].mxu0
      %958 = vmatprep.mubr.f32.mxu0 0.0
      %959 = vmatmul.mubr.f32.gmra.mrb[0].mxu0 %v353
      %v960 = vpop.f32.mrb[0].mxu0
      %v961 = vadd.f32 %v691, %v960
      %v962 = vpop.f32.mrb[0].mxu0
      %963 = vmatprep.mubr.f32.mxu0 0.0
      %964 = vmatmul.mubr.f32.gmra.mrb[0].mxu0 %v352
      %v965 = vpop.f32.mrb[0].mxu0
      %v966 = vadd.f32 %v696, %v965
      %v967 = vpop.f32.mrb[0].mxu0
      %968 = vmatprep.mubr.f32.mxu0 0.0
      %969 = vmatmul.mubr.f32.gmra.mrb[0].mxu0 %v351
      %v970 = vpop.f32.mrb[0].mxu0
      %v971 = vadd.f32 %v701, %v970
      %v972 = vpop.f32.mrb[0].mxu0
      %973 = vmatprep.mubr.f32.mxu0 0.0
      %974 = vmatmul.mubr.f32.gmra.mrb[0].mxu0 %v350
      %v975 = vpop.f32.mrb[0].mxu0
      %v976 = vadd.f32 %v706, %v975
      %v977 = vpop.f32.mrb[0].mxu0
      %978 = vmatprep.mubr.f32.mxu0 0.0
      %979 = vmatmul.mubr.f32.gmra.mrb[0].mxu0 %v349
      %v980 = vpop.f32.mrb[0].mxu0
      %v981 = vadd.f32 %v711, %v980
      %v982 = vpop.f32.mrb[0].mxu0
      %983 = vmatprep.mubr.f32.mxu0 0.0
      %984 = vmatmul.mubr.f32.gmra.mrb[0].mxu0 %v348
      %v985 = vpop.f32.mrb[0].mxu0
      %v986 = vadd.f32 %v716, %v985
      %v987 = vpop.f32.mrb[0].mxu0
      %988 = vmatprep.mubr.f32.mxu0 0.0
      %989 = vmatmul.mubr.f32.gmra.mrb[0].mxu0 %v347
      %v990 = vpop.f32.mrb[0].mxu0
      %v991 = vadd.f32 %v721, %v990
      %v992 = vpop.f32.mrb[0].mxu0
      %993 = vmatprep.mubr.f32.mxu0 0.0
      %994 = vmatmul.mubr.f32.gmra.mrb[0].mxu0 %v346
      %v995 = vpop.f32.mrb[0].mxu0
      %v996 = vadd.f32 %v726, %v995
      %v997 = vpop.f32.mrb[0].mxu0
      %998 = vmatprep.mubr.f32.mxu0 0.0
      %999 = vmatmul.mubr.f32.gmra.mrb[0].mxu0 %v345
      %v1000 = vpop.f32.mrb[0].mxu0
      %v1001 = vadd.f32 %v731, %v1000
      %v1002 = vpop.f32.mrb[0].mxu0
      %1003 = vmatprep.mubr.f32.mxu0 0.0
      %1004 = vmatmul.mubr.f32.gmra.mrb[0].mxu0 %v344
      %v1005 = vpop.f32.mrb[0].mxu0
      %v1006 = vadd.f32 %v736, %v1005
      %v1007 = vpop.f32.mrb[0].mxu0
      %1008 = vmatprep.mubr.f32.mxu0 0.0
      %1009 = vmatmul.mubr.f32.gmra.mrb[0].mxu0 %v343
      %v1010 = vpop.f32.mrb[0].mxu0
      %v1011 = vadd.f32 %v741, %v1010
      %v1012 = vpop.f32.mrb[0].mxu0
      %1013 = vmatprep.mubr.f32.mxu0 0.0
      %1014 = vmatmul.mubr.f32.gmra.mrb[0].mxu0 %v342
      %v1015 = vpop.f32.mrb[0].mxu0
      %v1016 = vadd.f32 %v746, %v1015
      %v1017 = vpop.f32.mrb[0].mxu0
      %1018 = vmatprep.mubr.f32.mxu0 0.0
      %1019 = vmatmul.mubr.f32.gmra.mrb[0].mxu0 %v341
      %v1020 = vpop.f32.mrb[0].mxu0
      %v1021 = vadd.f32 %v751, %v1020
      %v1022 = vpop.f32.mrb[0].mxu0
      %1023 = vmatprep.mubr.f32.mxu0 0.0
      %1024 = vmatmul.mubr.f32.gmra.mrb[0].mxu0 %v340
      %v1025 = vpop.f32.mrb[0].mxu0
      %v1026 = vadd.f32 %v756, %v1025
      %v1027 = vpop.f32.mrb[0].mxu0
      %1028 = vmatprep.mubr.f32.mxu0 0.0
      %1029 = vmatmul.mubr.f32.gmra.mrb[0].mxu0 %v339
      %v1030 = vpop.f32.mrb[0].mxu0
      %v1031 = vadd.f32 %v761, %v1030
      %v1032 = vpop.f32.mrb[0].mxu0
      %1033 = vdwg.mxu0
      %v1034 = vrot.slane %v252, 7
      %v1035 = vrot.slane %v253, 7
      %v1036 = vrot.slane %v254, 7
      %v1037 = vrot.slane %v255, 7
      %v1038 = vrot.slane %v256, 7
      %v1039 = vrot.slane %v257, 7
      %v1040 = vrot.slane %v258, 7
      %v1041 = vrot.slane %v259, 7
      %v1042 = vrot.slane %v260, 7
      %v1043 = vrot.slane %v261, 7
      %v1044 = vrot.slane %v262, 7
      %v1045 = vrot.slane %v263, 7
      %v1046 = vrot.slane %v264, 7
      %v1047 = vrot.slane %v265, 7
      %v1048 = vrot.slane %v266, 7
      %v1049 = vrot.slane %v267, 7
      %v1050 = vrot.slane %v268, 7
      %v1051 = vrot.slane %v269, 7
      %v1052 = vrot.slane %v270, 7
      %v1053 = vrot.slane %v271, 7
      %v1054 = vrot.slane %v272, 7
      %v1055 = vrot.slane %v273, 7
      %v1056 = vrot.slane %v274, 7
      %v1057 = vrot.slane %v275, 7
      %v1058 = vrot.slane %v276, 7
      %v1059 = vrot.slane %v277, 7
      %v1060 = vrot.slane %v278, 7
      %v1061 = vrot.slane %v279, 7
      %v1062 = vrot.slane %v280, 7
      %v1063 = vrot.slane %v281, 7
      %v1064 = vrot.slane %v282, 7
      %v1065 = vrot.slane %v283, 7
      %v1066 = vrot.slane %v284, 7
      %v1067 = vrot.slane %v285, 7
      %v1068 = vrot.slane %v286, 7
      %v1069 = vrot.slane %v287, 7
      %v1070 = vrot.slane %v288, 7
      %v1071 = vrot.slane %v289, 7
      %v1072 = vrot.slane %v290, 7
      %v1073 = vrot.slane %v291, 7
      %v1074 = vrot.slane %v292, 7
      %vm1075 = vcmp.lt.s32.totalorder %v335, 1
      %v1076 = vsel %vm1075, %v1073, %v1074
      %v1077 = vsel %vm1075, %v1072, %v1073
      %v1078 = vsel %vm1075, %v1071, %v1072
      %v1079 = vsel %vm1075, %v1070, %v1071
      %v1080 = vsel %vm1075, %v1069, %v1070
      %v1081 = vsel %vm1075, %v1068, %v1069
      %v1082 = vsel %vm1075, %v1067, %v1068
      %v1083 = vsel %vm1075, %v1066, %v1067
      %v1084 = vsel %vm1075, %v1065, %v1066
      %v1085 = vsel %vm1075, %v1064, %v1065
      %v1086 = vsel %vm1075, %v1063, %v1064
      %v1087 = vsel %vm1075, %v1062, %v1063
      %v1088 = vsel %vm1075, %v1061, %v1062
      %v1089 = vsel %vm1075, %v1060, %v1061
      %v1090 = vsel %vm1075, %v1059, %v1060
      %v1091 = vsel %vm1075, %v1058, %v1059
      %v1092 = vsel %vm1075, %v1057, %v1058
      %v1093 = vsel %vm1075, %v1056, %v1057
      %v1094 = vsel %vm1075, %v1055, %v1056
      %v1095 = vsel %vm1075, %v1054, %v1055
      %v1096 = vsel %vm1075, %v1053, %v1054
      %v1097 = vsel %vm1075, %v1052, %v1053
      %v1098 = vsel %vm1075, %v1051, %v1052
      %v1099 = vsel %vm1075, %v1050, %v1051
      %v1100 = vsel %vm1075, %v1049, %v1050
      %v1101 = vsel %vm1075, %v1048, %v1049
      %v1102 = vsel %vm1075, %v1047, %v1048
      %v1103 = vsel %vm1075, %v1046, %v1047
      %v1104 = vsel %vm1075, %v1045, %v1046
      %v1105 = vsel %vm1075, %v1044, %v1045
      %v1106 = vsel %vm1075, %v1043, %v1044
      %v1107 = vsel %vm1075, %v1042, %v1043
      %v1108 = vsel %vm1075, %v1041, %v1042
      %v1109 = vsel %vm1075, %v1040, %v1041
      %v1110 = vsel %vm1075, %v1039, %v1040
      %v1111 = vsel %vm1075, %v1038, %v1039
      %v1112 = vsel %vm1075, %v1037, %v1038
      %v1113 = vsel %vm1075, %v1036, %v1037
      %v1114 = vsel %vm1075, %v1035, %v1036
      %v1115 = vsel %vm1075, %v1034, %v1035
      %v1116 = vsel %vm1075, %v1074, %v1034
      %s1117 = scalar_lea.vmem %s2, 256
      %v1118 = vld [vmem:[%s1117] sm:$0xff]
      %v1119 = vld [vmem:[%s1117 + $0x8] sm:$0xff]
      %v1120 = vld [vmem:[%s1117 + $0x10] sm:$0xff]
      %v1121 = vld [vmem:[%s1117 + $0x18] sm:$0xff]
      %v1122 = vld [vmem:[%s1117 + $0x20] sm:$0xff]
      %v1123 = vld [vmem:[%s1117 + $0x28] sm:$0xff]
      %v1124 = vld [vmem:[%s1117 + $0x30] sm:$0xff]
      %v1125 = vld [vmem:[%s1117 + $0x38] sm:$0xff]
      %v1126 = vld [vmem:[%s1117 + $0x40] sm:$0xff]
      %v1127 = vld [vmem:[%s1117 + $0x48] sm:$0xff]
      %v1128 = vld [vmem:[%s1117 + $0x50] sm:$0xff]
      %v1129 = vld [vmem:[%s1117 + $0x58] sm:$0xff]
      %v1130 = vld [vmem:[%s1117 + $0x60] sm:$0xff]
      %v1131 = vld [vmem:[%s1117 + $0x68] sm:$0xff]
      %v1132 = vld [vmem:[%s1117 + $0x70] sm:$0xff]
      %v1133 = vld [vmem:[%s1117 + $0x78] sm:$0xff]
      %1134 = vmatprep.subr.mxu0 0.0
      %1135 = vmatpush1.msra.mxu0 %v1118
      %1136 = vmatprep.subr.mxu0 0.0
      %1137 = vmatpush1.msra.mxu0 %v1119
      %1138 = vmatprep.subr.mxu0 0.0
      %1139 = vmatpush1.msra.mxu0 %v1120
      %1140 = vmatprep.subr.mxu0 0.0
      %1141 = vmatpush1.msra.mxu0 %v1121
      %1142 = vmatprep.subr.mxu0 0.0
      %1143 = vmatpush1.msra.mxu0 %v1122
      %1144 = vmatprep.subr.mxu0 0.0
      %1145 = vmatpush1.msra.mxu0 %v1123
      %1146 = vmatprep.subr.mxu0 0.0
      %1147 = vmatpush1.msra.mxu0 %v1124
      %1148 = vmatprep.subr.mxu0 0.0
      %1149 = vmatpush1.msra.mxu0 %v1125
      %1150 = vmatprep.subr.mxu0 0.0
      %1151 = vmatpush1.msra.mxu0 %v1126
      %1152 = vmatprep.subr.mxu0 0.0
      %1153 = vmatpush1.msra.mxu0 %v1127
      %1154 = vmatprep.subr.mxu0 0.0
      %1155 = vmatpush1.msra.mxu0 %v1128
      %1156 = vmatprep.subr.mxu0 0.0
      %1157 = vmatpush1.msra.mxu0 %v1129
      %1158 = vmatprep.subr.mxu0 0.0
      %1159 = vmatpush1.msra.mxu0 %v1130
      %1160 = vmatprep.subr.mxu0 0.0
      %1161 = vmatpush1.msra.mxu0 %v1131
      %1162 = vmatprep.subr.mxu0 0.0
      %1163 = vmatpush1.msra.mxu0 %v1132
      %1164 = vmatprep.subr.mxu0 0.0
      %1165 = vmatpush1.msra.mxu0 %v1133
      %1166 = vmatprep.subr.mxu0 0.0
      %1167 = vmatpush1.msra.mxu0 0.0
      %1168 = vmatprep.subr.mxu0 0.0
      %1169 = vmatpush1.msra.mxu0 0.0
      %1170 = vmatprep.subr.mxu0 0.0
      %1171 = vmatpush1.msra.mxu0 0.0
      %1172 = vmatprep.subr.mxu0 0.0
      %1173 = vmatpush1.msra.mxu0 0.0
      %1174 = vmatprep.subr.mxu0 0.0
      %1175 = vmatpush1.msra.mxu0 0.0
      %1176 = vmatprep.subr.mxu0 0.0
      %1177 = vmatpush1.msra.mxu0 0.0
      %1178 = vmatprep.subr.mxu0 0.0
      %1179 = vmatpush1.msra.mxu0 0.0
      %1180 = vmatprep.subr.mxu0 0.0
      %1181 = vmatpush1.msra.mxu0 0.0
      %1182 = vmatprep.subr.mxu0 0.0
      %1183 = vmatpush1.msra.mxu0 0.0
      %1184 = vmatprep.subr.mxu0 0.0
      %1185 = vmatpush1.msra.mxu0 0.0
      %1186 = vmatprep.subr.mxu0 0.0
      %1187 = vmatpush1.msra.mxu0 0.0
      %1188 = vmatprep.subr.mxu0 0.0
      %1189 = vmatpush1.msra.mxu0 0.0
      %1190 = vmatprep.subr.mxu0 0.0
      %1191 = vmatpush1.msra.mxu0 0.0
      %1192 = vmatprep.subr.mxu0 0.0
      %1193 = vmatpush1.msra.mxu0 0.0
      %1194 = vmatprep.subr.mxu0 0.0
      %1195 = vmatpush1.msra.mxu0 0.0
      %1196 = vmatprep.subr.mxu0 0.0
      %1197 = vmatpush1.msra.mxu0 0.0
      %1198 = vmatprep.mubr.f32.mxu0 0.0
      %1199 = vmatmul.mubr.f32.gmra.mrb[0].mxu0 %v1077
      %v1200 = vpop.f32.mrb[0].mxu0
      %v1201 = vadd.f32 0.0, %v1200
      %v1202 = vpop.f32.mrb[0].mxu0
      %1203 = vmatprep.mubr.f32.mxu0 0.0
      %1204 = vmatmul.mubr.f32.gmra.mrb[0].mxu0 %v1076
      %v1205 = vpop.f32.mrb[0].mxu0
      %v1206 = vadd.f32 0.0, %v1205
      %v1207 = vpop.f32.mrb[0].mxu0
      %1208 = vmatprep.mubr.f32.mxu0 0.0
      %1209 = vmatmul.mubr.f32.gmra.mrb[0].mxu0 %v1116
      %v1210 = vpop.f32.mrb[0].mxu0
      %v1211 = vadd.f32 0.0, %v1210
      %v1212 = vpop.f32.mrb[0].mxu0
      %1213 = vmatprep.mubr.f32.mxu0 0.0
      %1214 = vmatmul.mubr.f32.gmra.mrb[0].mxu0 %v1115
      %v1215 = vpop.f32.mrb[0].mxu0
      %v1216 = vadd.f32 0.0, %v1215
      %v1217 = vpop.f32.mrb[0].mxu0
      %1218 = vmatprep.mubr.f32.mxu0 0.0
      %1219 = vmatmul.mubr.f32.gmra.mrb[0].mxu0 %v1114
      %v1220 = vpop.f32.mrb[0].mxu0
      %v1221 = vadd.f32 0.0, %v1220
      %v1222 = vpop.f32.mrb[0].mxu0
      %1223 = vmatprep.mubr.f32.mxu0 0.0
      %1224 = vmatmul.mubr.f32.gmra.mrb[0].mxu0 %v1113
      %v1225 = vpop.f32.mrb[0].mxu0
      %v1226 = vadd.f32 0.0, %v1225
      %v1227 = vpop.f32.mrb[0].mxu0
      %1228 = vmatprep.mubr.f32.mxu0 0.0
      %1229 = vmatmul.mubr.f32.gmra.mrb[0].mxu0 %v1112
      %v1230 = vpop.f32.mrb[0].mxu0
      %v1231 = vadd.f32 0.0, %v1230
      %v1232 = vpop.f32.mrb[0].mxu0
      %1233 = vmatprep.mubr.f32.mxu0 0.0
      %1234 = vmatmul.mubr.f32.gmra.mrb[0].mxu0 %v1111
      %v1235 = vpop.f32.mrb[0].mxu0
      %v1236 = vadd.f32 0.0, %v1235
      %v1237 = vpop.f32.mrb[0].mxu0
      %1238 = vmatprep.mubr.f32.mxu0 0.0
      %1239 = vmatmul.mubr.f32.gmra.mrb[0].mxu0 %v1110
      %v1240 = vpop.f32.mrb[0].mxu0
      %v1241 = vadd.f32 0.0, %v1240
      %v1242 = vpop.f32.mrb[0].mxu0
      %1243 = vmatprep.mubr.f32.mxu0 0.0
      %1244 = vmatmul.mubr.f32.gmra.mrb[0].mxu0 %v1109
      %v1245 = vpop.f32.mrb[0].mxu0
      %v1246 = vadd.f32 0.0, %v1245
      %v1247 = vpop.f32.mrb[0].mxu0
      %1248 = vmatprep.mubr.f32.mxu0 0.0
      %1249 = vmatmul.mubr.f32.gmra.mrb[0].mxu0 %v1108
      %v1250 = vpop.f32.mrb[0].mxu0
      %v1251 = vadd.f32 0.0, %v1250
      %v1252 = vpop.f32.mrb[0].mxu0
      %1253 = vmatprep.mubr.f32.mxu0 0.0
      %1254 = vmatmul.mubr.f32.gmra.mrb[0].mxu0 %v1107
      %v1255 = vpop.f32.mrb[0].mxu0
      %v1256 = vadd.f32 0.0, %v1255
      %v1257 = vpop.f32.mrb[0].mxu0
      %1258 = vmatprep.mubr.f32.mxu0 0.0
      %1259 = vmatmul.mubr.f32.gmra.mrb[0].mxu0 %v1106
      %v1260 = vpop.f32.mrb[0].mxu0
      %v1261 = vadd.f32 0.0, %v1260
      %v1262 = vpop.f32.mrb[0].mxu0
      %1263 = vmatprep.mubr.f32.mxu0 0.0
      %1264 = vmatmul.mubr.f32.gmra.mrb[0].mxu0 %v1105
      %v1265 = vpop.f32.mrb[0].mxu0
      %v1266 = vadd.f32 0.0, %v1265
      %v1267 = vpop.f32.mrb[0].mxu0
      %1268 = vmatprep.mubr.f32.mxu0 0.0
      %1269 = vmatmul.mubr.f32.gmra.mrb[0].mxu0 %v1104
      %v1270 = vpop.f32.mrb[0].mxu0
      %v1271 = vadd.f32 0.0, %v1270
      %v1272 = vpop.f32.mrb[0].mxu0
      %1273 = vmatprep.mubr.f32.mxu0 0.0
      %1274 = vmatmul.mubr.f32.gmra.mrb[0].mxu0 %v1103
      %v1275 = vpop.f32.mrb[0].mxu0
      %v1276 = vadd.f32 0.0, %v1275
      %v1277 = vpop.f32.mrb[0].mxu0
      %1278 = vmatprep.mubr.f32.mxu0 0.0
      %1279 = vmatmul.mubr.f32.gmra.mrb[0].mxu0 %v1102
      %v1280 = vpop.f32.mrb[0].mxu0
      %v1281 = vadd.f32 0.0, %v1280
      %v1282 = vpop.f32.mrb[0].mxu0
      %1283 = vmatprep.mubr.f32.mxu0 0.0
      %1284 = vmatmul.mubr.f32.gmra.mrb[0].mxu0 %v1101
      %v1285 = vpop.f32.mrb[0].mxu0
      %v1286 = vadd.f32 0.0, %v1285
      %v1287 = vpop.f32.mrb[0].mxu0
      %1288 = vmatprep.mubr.f32.mxu0 0.0
      %1289 = vmatmul.mubr.f32.gmra.mrb[0].mxu0 %v1100
      %v1290 = vpop.f32.mrb[0].mxu0
      %v1291 = vadd.f32 0.0, %v1290
      %v1292 = vpop.f32.mrb[0].mxu0
      %1293 = vmatprep.mubr.f32.mxu0 0.0
      %1294 = vmatmul.mubr.f32.gmra.mrb[0].mxu0 %v1099
      %v1295 = vpop.f32.mrb[0].mxu0
      %v1296 = vadd.f32 0.0, %v1295
      %v1297 = vpop.f32.mrb[0].mxu0
      %1298 = vmatprep.mubr.f32.mxu0 0.0
      %1299 = vmatmul.mubr.f32.gmra.mrb[0].mxu0 %v1098
      %v1300 = vpop.f32.mrb[0].mxu0
      %v1301 = vadd.f32 0.0, %v1300
      %v1302 = vpop.f32.mrb[0].mxu0
      %1303 = vmatprep.mubr.f32.mxu0 0.0
      %1304 = vmatmul.mubr.f32.gmra.mrb[0].mxu0 %v1097
      %v1305 = vpop.f32.mrb[0].mxu0
      %v1306 = vadd.f32 0.0, %v1305
      %v1307 = vpop.f32.mrb[0].mxu0
      %1308 = vmatprep.mubr.f32.mxu0 0.0
      %1309 = vmatmul.mubr.f32.gmra.mrb[0].mxu0 %v1096
      %v1310 = vpop.f32.mrb[0].mxu0
      %v1311 = vadd.f32 0.0, %v1310
      %v1312 = vpop.f32.mrb[0].mxu0
      %1313 = vmatprep.mubr.f32.mxu0 0.0
      %1314 = vmatmul.mubr.f32.gmra.mrb[0].mxu0 %v1095
      %v1315 = vpop.f32.mrb[0].mxu0
      %v1316 = vadd.f32 0.0, %v1315
      %v1317 = vpop.f32.mrb[0].mxu0
      %1318 = vmatprep.mubr.f32.mxu0 0.0
      %1319 = vmatmul.mubr.f32.gmra.mrb[0].mxu0 %v1094
      %v1320 = vpop.f32.mrb[0].mxu0
      %v1321 = vadd.f32 0.0, %v1320
      %v1322 = vpop.f32.mrb[0].mxu0
      %1323 = vmatprep.mubr.f32.mxu0 0.0
      %1324 = vmatmul.mubr.f32.gmra.mrb[0].mxu0 %v1093
      %v1325 = vpop.f32.mrb[0].mxu0
      %v1326 = vadd.f32 0.0, %v1325
      %v1327 = vpop.f32.mrb[0].mxu0
      %1328 = vmatprep.mubr.f32.mxu0 0.0
      %1329 = vmatmul.mubr.f32.gmra.mrb[0].mxu0 %v1092
      %v1330 = vpop.f32.mrb[0].mxu0
      %v1331 = vadd.f32 0.0, %v1330
      %v1332 = vpop.f32.mrb[0].mxu0
      %1333 = vmatprep.mubr.f32.mxu0 0.0
      %1334 = vmatmul.mubr.f32.gmra.mrb[0].mxu0 %v1091
      %v1335 = vpop.f32.mrb[0].mxu0
      %v1336 = vadd.f32 0.0, %v1335
      %v1337 = vpop.f32.mrb[0].mxu0
      %1338 = vmatprep.mubr.f32.mxu0 0.0
      %1339 = vmatmul.mubr.f32.gmra.mrb[0].mxu0 %v1090
      %v1340 = vpop.f32.mrb[0].mxu0
      %v1341 = vadd.f32 0.0, %v1340
      %v1342 = vpop.f32.mrb[0].mxu0
      %1343 = vmatprep.mubr.f32.mxu0 0.0
      %1344 = vmatmul.mubr.f32.gmra.mrb[0].mxu0 %v1089
      %v1345 = vpop.f32.mrb[0].mxu0
      %v1346 = vadd.f32 0.0, %v1345
      %v1347 = vpop.f32.mrb[0].mxu0
      %1348 = vmatprep.mubr.f32.mxu0 0.0
      %1349 = vmatmul.mubr.f32.gmra.mrb[0].mxu0 %v1088
      %v1350 = vpop.f32.mrb[0].mxu0
      %v1351 = vadd.f32 0.0, %v1350
      %v1352 = vpop.f32.mrb[0].mxu0
      %1353 = vmatprep.mubr.f32.mxu0 0.0
      %1354 = vmatmul.mubr.f32.gmra.mrb[0].mxu0 %v1087
      %v1355 = vpop.f32.mrb[0].mxu0
      %v1356 = vadd.f32 0.0, %v1355
      %v1357 = vpop.f32.mrb[0].mxu0
      %1358 = vmatprep.mubr.f32.mxu0 0.0
      %1359 = vmatmul.mubr.f32.gmra.mrb[0].mxu0 %v1086
      %v1360 = vpop.f32.mrb[0].mxu0
      %v1361 = vadd.f32 0.0, %v1360
      %v1362 = vpop.f32.mrb[0].mxu0
      %1363 = vmatprep.mubr.f32.mxu0 0.0
      %1364 = vmatmul.mubr.f32.gmra.mrb[0].mxu0 %v1085
      %v1365 = vpop.f32.mrb[0].mxu0
      %v1366 = vadd.f32 0.0, %v1365
      %v1367 = vpop.f32.mrb[0].mxu0
      %1368 = vmatprep.mubr.f32.mxu0 0.0
      %1369 = vmatmul.mubr.f32.gmra.mrb[0].mxu0 %v1084
      %v1370 = vpop.f32.mrb[0].mxu0
      %v1371 = vadd.f32 0.0, %v1370
      %v1372 = vpop.f32.mrb[0].mxu0
      %1373 = vmatprep.mubr.f32.mxu0 0.0
      %1374 = vmatmul.mubr.f32.gmra.mrb[0].mxu0 %v1083
      %v1375 = vpop.f32.mrb[0].mxu0
      %v1376 = vadd.f32 0.0, %v1375
      %v1377 = vpop.f32.mrb[0].mxu0
      %1378 = vmatprep.mubr.f32.mxu0 0.0
      %1379 = vmatmul.mubr.f32.gmra.mrb[0].mxu0 %v1082
      %v1380 = vpop.f32.mrb[0].mxu0
      %v1381 = vadd.f32 0.0, %v1380
      %v1382 = vpop.f32.mrb[0].mxu0
      %1383 = vmatprep.mubr.f32.mxu0 0.0
      %1384 = vmatmul.mubr.f32.gmra.mrb[0].mxu0 %v1081
      %v1385 = vpop.f32.mrb[0].mxu0
      %v1386 = vadd.f32 0.0, %v1385
      %v1387 = vpop.f32.mrb[0].mxu0
      %1388 = vmatprep.mubr.f32.mxu0 0.0
      %1389 = vmatmul.mubr.f32.gmra.mrb[0].mxu0 %v1080
      %v1390 = vpop.f32.mrb[0].mxu0
      %v1391 = vadd.f32 0.0, %v1390
      %v1392 = vpop.f32.mrb[0].mxu0
      %1393 = vmatprep.mubr.f32.mxu0 0.0
      %1394 = vmatmul.mubr.f32.gmra.mrb[0].mxu0 %v1079
      %v1395 = vpop.f32.mrb[0].mxu0
      %v1396 = vadd.f32 0.0, %v1395
      %v1397 = vpop.f32.mrb[0].mxu0
      %1398 = vmatprep.mubr.f32.mxu0 0.0
      %1399 = vmatmul.mubr.f32.gmra.mrb[0].mxu0 %v1078
      %v1400 = vpop.f32.mrb[0].mxu0
      %v1401 = vadd.f32 0.0, %v1400
      %v1402 = vpop.f32.mrb[0].mxu0
      %1403 = vdwg.mxu0
      %v1404 = vadd.f32 %v831, %v1201
      %v1405 = vadd.f32 %v836, %v1206
      %v1406 = vadd.f32 %v841, %v1211
      %v1407 = vadd.f32 %v846, %v1216
      %v1408 = vadd.f32 %v851, %v1221
      %v1409 = vadd.f32 %v856, %v1226
      %v1410 = vadd.f32 %v861, %v1231
      %v1411 = vadd.f32 %v866, %v1236
      %v1412 = vadd.f32 %v871, %v1241
      %v1413 = vadd.f32 %v876, %v1246
      %v1414 = vadd.f32 %v881, %v1251
      %v1415 = vadd.f32 %v886, %v1256
      %v1416 = vadd.f32 %v891, %v1261
      %v1417 = vadd.f32 %v896, %v1266
      %v1418 = vadd.f32 %v901, %v1271
      %v1419 = vadd.f32 %v906, %v1276
      %v1420 = vadd.f32 %v911, %v1281
      %v1421 = vadd.f32 %v916, %v1286
      %v1422 = vadd.f32 %v921, %v1291
      %v1423 = vadd.f32 %v926, %v1296
      %v1424 = vadd.f32 %v931, %v1301
      %v1425 = vadd.f32 %v936, %v1306
      %v1426 = vadd.f32 %v941, %v1311
      %v1427 = vadd.f32 %v946, %v1316
      %v1428 = vadd.f32 %v951, %v1321
      %v1429 = vadd.f32 %v956, %v1326
      %v1430 = vadd.f32 %v961, %v1331
      %v1431 = vadd.f32 %v966, %v1336
      %v1432 = vadd.f32 %v971, %v1341
      %v1433 = vadd.f32 %v976, %v1346
      %v1434 = vadd.f32 %v981, %v1351
      %v1435 = vadd.f32 %v986, %v1356
      %v1436 = vadd.f32 %v991, %v1361
      %v1437 = vadd.f32 %v996, %v1366
      %v1438 = vadd.f32 %v1001, %v1371
      %v1439 = vadd.f32 %v1006, %v1376
      %v1440 = vadd.f32 %v1011, %v1381
      %v1441 = vadd.f32 %v1016, %v1386
      %v1442 = vadd.f32 %v1021, %v1391
      %v1443 = vadd.f32 %v1026, %v1396
      %v1444 = vadd.f32 %v1031, %v1401
      %s1445 = scalar_lea.vmem %s2, 384
      %v1446 = vld [vmem:[%s1445] sm:$0xff]
      %v1447 = vld [vmem:[%s1445 + $0x8] sm:$0xff]
      %v1448 = vld [vmem:[%s1445 + $0x10] sm:$0xff]
      %v1449 = vld [vmem:[%s1445 + $0x18] sm:$0xff]
      %v1450 = vld [vmem:[%s1445 + $0x20] sm:$0xff]
      %v1451 = vld [vmem:[%s1445 + $0x28] sm:$0xff]
      %v1452 = vld [vmem:[%s1445 + $0x30] sm:$0xff]
      %v1453 = vld [vmem:[%s1445 + $0x38] sm:$0xff]
      %v1454 = vld [vmem:[%s1445 + $0x40] sm:$0xff]
      %v1455 = vld [vmem:[%s1445 + $0x48] sm:$0xff]
      %v1456 = vld [vmem:[%s1445 + $0x50] sm:$0xff]
      %v1457 = vld [vmem:[%s1445 + $0x58] sm:$0xff]
      %v1458 = vld [vmem:[%s1445 + $0x60] sm:$0xff]
      %v1459 = vld [vmem:[%s1445 + $0x68] sm:$0xff]
      %v1460 = vld [vmem:[%s1445 + $0x70] sm:$0xff]
      %v1461 = vld [vmem:[%s1445 + $0x78] sm:$0xff]
      %1462 = vmatprep.subr.mxu0 0.0
      %1463 = vmatpush1.msra.mxu0 %v1446
      %1464 = vmatprep.subr.mxu0 0.0
      %1465 = vmatpush1.msra.mxu0 %v1447
      %1466 = vmatprep.subr.mxu0 0.0
      %1467 = vmatpush1.msra.mxu0 %v1448
      %1468 = vmatprep.subr.mxu0 0.0
      %1469 = vmatpush1.msra.mxu0 %v1449
      %1470 = vmatprep.subr.mxu0 0.0
      %1471 = vmatpush1.msra.mxu0 %v1450
      %1472 = vmatprep.subr.mxu0 0.0
      %1473 = vmatpush1.msra.mxu0 %v1451
      %1474 = vmatprep.subr.mxu0 0.0
      %1475 = vmatpush1.msra.mxu0 %v1452
      %1476 = vmatprep.subr.mxu0 0.0
      %1477 = vmatpush1.msra.mxu0 %v1453
      %1478 = vmatprep.subr.mxu0 0.0
      %1479 = vmatpush1.msra.mxu0 %v1454
      %1480 = vmatprep.subr.mxu0 0.0
      %1481 = vmatpush1.msra.mxu0 %v1455
      %1482 = vmatprep.subr.mxu0 0.0
      %1483 = vmatpush1.msra.mxu0 %v1456
      %1484 = vmatprep.subr.mxu0 0.0
      %1485 = vmatpush1.msra.mxu0 %v1457
      %1486 = vmatprep.subr.mxu0 0.0
      %1487 = vmatpush1.msra.mxu0 %v1458
      %1488 = vmatprep.subr.mxu0 0.0
      %1489 = vmatpush1.msra.mxu0 %v1459
      %1490 = vmatprep.subr.mxu0 0.0
      %1491 = vmatpush1.msra.mxu0 %v1460
      %1492 = vmatprep.subr.mxu0 0.0
      %1493 = vmatpush1.msra.mxu0 %v1461
      %1494 = vmatprep.subr.mxu0 0.0
      %1495 = vmatpush1.msra.mxu0 0.0
      %1496 = vmatprep.subr.mxu0 0.0
      %1497 = vmatpush1.msra.mxu0 0.0
      %1498 = vmatprep.subr.mxu0 0.0
      %1499 = vmatpush1.msra.mxu0 0.0
      %1500 = vmatprep.subr.mxu0 0.0
      %1501 = vmatpush1.msra.mxu0 0.0
      %1502 = vmatprep.subr.mxu0 0.0
      %1503 = vmatpush1.msra.mxu0 0.0
      %1504 = vmatprep.subr.mxu0 0.0
      %1505 = vmatpush1.msra.mxu0 0.0
      %1506 = vmatprep.subr.mxu0 0.0
      %1507 = vmatpush1.msra.mxu0 0.0
      %1508 = vmatprep.subr.mxu0 0.0
      %1509 = vmatpush1.msra.mxu0 0.0
      %1510 = vmatprep.subr.mxu0 0.0
      %1511 = vmatpush1.msra.mxu0 0.0
      %1512 = vmatprep.subr.mxu0 0.0
      %1513 = vmatpush1.msra.mxu0 0.0
      %1514 = vmatprep.subr.mxu0 0.0
      %1515 = vmatpush1.msra.mxu0 0.0
      %1516 = vmatprep.subr.mxu0 0.0
      %1517 = vmatpush1.msra.mxu0 0.0
      %1518 = vmatprep.subr.mxu0 0.0
      %1519 = vmatpush1.msra.mxu0 0.0
      %1520 = vmatprep.subr.mxu0 0.0
      %1521 = vmatpush1.msra.mxu0 0.0
      %1522 = vmatprep.subr.mxu0 0.0
      %1523 = vmatpush1.msra.mxu0 0.0
      %1524 = vmatprep.subr.mxu0 0.0
      %1525 = vmatpush1.msra.mxu0 0.0
      %1526 = vmatprep.mubr.f32.mxu0 0.0
      %1527 = vmatmul.mubr.f32.gmra.mrb[0].mxu0 %v1116
      %v1528 = vpop.f32.mrb[0].mxu0
      %v1529 = vadd.f32 0.0, %v1528
      %v1530 = vpop.f32.mrb[0].mxu0
      %1531 = vmatprep.mubr.f32.mxu0 0.0
      %1532 = vmatmul.mubr.f32.gmra.mrb[0].mxu0 %v1115
      %v1533 = vpop.f32.mrb[0].mxu0
      %v1534 = vadd.f32 0.0, %v1533
      %v1535 = vpop.f32.mrb[0].mxu0
      %1536 = vmatprep.mubr.f32.mxu0 0.0
      %1537 = vmatmul.mubr.f32.gmra.mrb[0].mxu0 %v1114
      %v1538 = vpop.f32.mrb[0].mxu0
      %v1539 = vadd.f32 0.0, %v1538
      %v1540 = vpop.f32.mrb[0].mxu0
      %1541 = vmatprep.mubr.f32.mxu0 0.0
      %1542 = vmatmul.mubr.f32.gmra.mrb[0].mxu0 %v1113
      %v1543 = vpop.f32.mrb[0].mxu0
      %v1544 = vadd.f32 0.0, %v1543
      %v1545 = vpop.f32.mrb[0].mxu0
      %1546 = vmatprep.mubr.f32.mxu0 0.0
      %1547 = vmatmul.mubr.f32.gmra.mrb[0].mxu0 %v1112
      %v1548 = vpop.f32.mrb[0].mxu0
      %v1549 = vadd.f32 0.0, %v1548
      %v1550 = vpop.f32.mrb[0].mxu0
      %1551 = vmatprep.mubr.f32.mxu0 0.0
      %1552 = vmatmul.mubr.f32.gmra.mrb[0].mxu0 %v1111
      %v1553 = vpop.f32.mrb[0].mxu0
      %v1554 = vadd.f32 0.0, %v1553
      %v1555 = vpop.f32.mrb[0].mxu0
      %1556 = vmatprep.mubr.f32.mxu0 0.0
      %1557 = vmatmul.mubr.f32.gmra.mrb[0].mxu0 %v1110
      %v1558 = vpop.f32.mrb[0].mxu0
      %v1559 = vadd.f32 0.0, %v1558
      %v1560 = vpop.f32.mrb[0].mxu0
      %1561 = vmatprep.mubr.f32.mxu0 0.0
      %1562 = vmatmul.mubr.f32.gmra.mrb[0].mxu0 %v1109
      %v1563 = vpop.f32.mrb[0].mxu0
      %v1564 = vadd.f32 0.0, %v1563
      %v1565 = vpop.f32.mrb[0].mxu0
      %1566 = vmatprep.mubr.f32.mxu0 0.0
      %1567 = vmatmul.mubr.f32.gmra.mrb[0].mxu0 %v1108
      %v1568 = vpop.f32.mrb[0].mxu0
      %v1569 = vadd.f32 0.0, %v1568
      %v1570 = vpop.f32.mrb[0].mxu0
      %1571 = vmatprep.mubr.f32.mxu0 0.0
      %1572 = vmatmul.mubr.f32.gmra.mrb[0].mxu0 %v1107
      %v1573 = vpop.f32.mrb[0].mxu0
      %v1574 = vadd.f32 0.0, %v1573
      %v1575 = vpop.f32.mrb[0].mxu0
      %1576 = vmatprep.mubr.f32.mxu0 0.0
      %1577 = vmatmul.mubr.f32.gmra.mrb[0].mxu0 %v1106
      %v1578 = vpop.f32.mrb[0].mxu0
      %v1579 = vadd.f32 0.0, %v1578
      %v1580 = vpop.f32.mrb[0].mxu0
      %1581 = vmatprep.mubr.f32.mxu0 0.0
      %1582 = vmatmul.mubr.f32.gmra.mrb[0].mxu0 %v1105
      %v1583 = vpop.f32.mrb[0].mxu0
      %v1584 = vadd.f32 0.0, %v1583
      %v1585 = vpop.f32.mrb[0].mxu0
      %1586 = vmatprep.mubr.f32.mxu0 0.0
      %1587 = vmatmul.mubr.f32.gmra.mrb[0].mxu0 %v1104
      %v1588 = vpop.f32.mrb[0].mxu0
      %v1589 = vadd.f32 0.0, %v1588
      %v1590 = vpop.f32.mrb[0].mxu0
      %1591 = vmatprep.mubr.f32.mxu0 0.0
      %1592 = vmatmul.mubr.f32.gmra.mrb[0].mxu0 %v1103
      %v1593 = vpop.f32.mrb[0].mxu0
      %v1594 = vadd.f32 0.0, %v1593
      %v1595 = vpop.f32.mrb[0].mxu0
      %1596 = vmatprep.mubr.f32.mxu0 0.0
      %1597 = vmatmul.mubr.f32.gmra.mrb[0].mxu0 %v1102
      %v1598 = vpop.f32.mrb[0].mxu0
      %v1599 = vadd.f32 0.0, %v1598
      %v1600 = vpop.f32.mrb[0].mxu0
      %1601 = vmatprep.mubr.f32.mxu0 0.0
      %1602 = vmatmul.mubr.f32.gmra.mrb[0].mxu0 %v1101
      %v1603 = vpop.f32.mrb[0].mxu0
      %v1604 = vadd.f32 0.0, %v1603
      %v1605 = vpop.f32.mrb[0].mxu0
      %1606 = vmatprep.mubr.f32.mxu0 0.0
      %1607 = vmatmul.mubr.f32.gmra.mrb[0].mxu0 %v1100
      %v1608 = vpop.f32.mrb[0].mxu0
      %v1609 = vadd.f32 0.0, %v1608
      %v1610 = vpop.f32.mrb[0].mxu0
      %1611 = vmatprep.mubr.f32.mxu0 0.0
      %1612 = vmatmul.mubr.f32.gmra.mrb[0].mxu0 %v1099
      %v1613 = vpop.f32.mrb[0].mxu0
      %v1614 = vadd.f32 0.0, %v1613
      %v1615 = vpop.f32.mrb[0].mxu0
      %1616 = vmatprep.mubr.f32.mxu0 0.0
      %1617 = vmatmul.mubr.f32.gmra.mrb[0].mxu0 %v1098
      %v1618 = vpop.f32.mrb[0].mxu0
      %v1619 = vadd.f32 0.0, %v1618
      %v1620 = vpop.f32.mrb[0].mxu0
      %1621 = vmatprep.mubr.f32.mxu0 0.0
      %1622 = vmatmul.mubr.f32.gmra.mrb[0].mxu0 %v1097
      %v1623 = vpop.f32.mrb[0].mxu0
      %v1624 = vadd.f32 0.0, %v1623
      %v1625 = vpop.f32.mrb[0].mxu0
      %1626 = vmatprep.mubr.f32.mxu0 0.0
      %1627 = vmatmul.mubr.f32.gmra.mrb[0].mxu0 %v1096
      %v1628 = vpop.f32.mrb[0].mxu0
      %v1629 = vadd.f32 0.0, %v1628
      %v1630 = vpop.f32.mrb[0].mxu0
      %1631 = vmatprep.mubr.f32.mxu0 0.0
      %1632 = vmatmul.mubr.f32.gmra.mrb[0].mxu0 %v1095
      %v1633 = vpop.f32.mrb[0].mxu0
      %v1634 = vadd.f32 0.0, %v1633
      %v1635 = vpop.f32.mrb[0].mxu0
      %1636 = vmatprep.mubr.f32.mxu0 0.0
      %1637 = vmatmul.mubr.f32.gmra.mrb[0].mxu0 %v1094
      %v1638 = vpop.f32.mrb[0].mxu0
      %v1639 = vadd.f32 0.0, %v1638
      %v1640 = vpop.f32.mrb[0].mxu0
      %1641 = vmatprep.mubr.f32.mxu0 0.0
      %1642 = vmatmul.mubr.f32.gmra.mrb[0].mxu0 %v1093
      %v1643 = vpop.f32.mrb[0].mxu0
      %v1644 = vadd.f32 0.0, %v1643
      %v1645 = vpop.f32.mrb[0].mxu0
      %1646 = vmatprep.mubr.f32.mxu0 0.0
      %1647 = vmatmul.mubr.f32.gmra.mrb[0].mxu0 %v1092
      %v1648 = vpop.f32.mrb[0].mxu0
      %v1649 = vadd.f32 0.0, %v1648
      %v1650 = vpop.f32.mrb[0].mxu0
      %1651 = vmatprep.mubr.f32.mxu0 0.0
      %1652 = vmatmul.mubr.f32.gmra.mrb[0].mxu0 %v1091
      %v1653 = vpop.f32.mrb[0].mxu0
      %v1654 = vadd.f32 0.0, %v1653
      %v1655 = vpop.f32.mrb[0].mxu0
      %1656 = vmatprep.mubr.f32.mxu0 0.0
      %1657 = vmatmul.mubr.f32.gmra.mrb[0].mxu0 %v1090
      %v1658 = vpop.f32.mrb[0].mxu0
      %v1659 = vadd.f32 0.0, %v1658
      %v1660 = vpop.f32.mrb[0].mxu0
      %1661 = vmatprep.mubr.f32.mxu0 0.0
      %1662 = vmatmul.mubr.f32.gmra.mrb[0].mxu0 %v1089
      %v1663 = vpop.f32.mrb[0].mxu0
      %v1664 = vadd.f32 0.0, %v1663
      %v1665 = vpop.f32.mrb[0].mxu0
      %1666 = vmatprep.mubr.f32.mxu0 0.0
      %1667 = vmatmul.mubr.f32.gmra.mrb[0].mxu0 %v1088
      %v1668 = vpop.f32.mrb[0].mxu0
      %v1669 = vadd.f32 0.0, %v1668
      %v1670 = vpop.f32.mrb[0].mxu0
      %1671 = vmatprep.mubr.f32.mxu0 0.0
      %1672 = vmatmul.mubr.f32.gmra.mrb[0].mxu0 %v1087
      %v1673 = vpop.f32.mrb[0].mxu0
      %v1674 = vadd.f32 0.0, %v1673
      %v1675 = vpop.f32.mrb[0].mxu0
      %1676 = vmatprep.mubr.f32.mxu0 0.0
      %1677 = vmatmul.mubr.f32.gmra.mrb[0].mxu0 %v1086
      %v1678 = vpop.f32.mrb[0].mxu0
      %v1679 = vadd.f32 0.0, %v1678
      %v1680 = vpop.f32.mrb[0].mxu0
      %1681 = vmatprep.mubr.f32.mxu0 0.0
      %1682 = vmatmul.mubr.f32.gmra.mrb[0].mxu0 %v1085
      %v1683 = vpop.f32.mrb[0].mxu0
      %v1684 = vadd.f32 0.0, %v1683
      %v1685 = vpop.f32.mrb[0].mxu0
      %1686 = vmatprep.mubr.f32.mxu0 0.0
      %1687 = vmatmul.mubr.f32.gmra.mrb[0].mxu0 %v1084
      %v1688 = vpop.f32.mrb[0].mxu0
      %v1689 = vadd.f32 0.0, %v1688
      %v1690 = vpop.f32.mrb[0].mxu0
      %1691 = vmatprep.mubr.f32.mxu0 0.0
      %1692 = vmatmul.mubr.f32.gmra.mrb[0].mxu0 %v1083
      %v1693 = vpop.f32.mrb[0].mxu0
      %v1694 = vadd.f32 0.0, %v1693
      %v1695 = vpop.f32.mrb[0].mxu0
      %1696 = vmatprep.mubr.f32.mxu0 0.0
      %1697 = vmatmul.mubr.f32.gmra.mrb[0].mxu0 %v1082
      %v1698 = vpop.f32.mrb[0].mxu0
      %v1699 = vadd.f32 0.0, %v1698
      %v1700 = vpop.f32.mrb[0].mxu0
      %1701 = vmatprep.mubr.f32.mxu0 0.0
      %1702 = vmatmul.mubr.f32.gmra.mrb[0].mxu0 %v1081
      %v1703 = vpop.f32.mrb[0].mxu0
      %v1704 = vadd.f32 0.0, %v1703
      %v1705 = vpop.f32.mrb[0].mxu0
      %1706 = vmatprep.mubr.f32.mxu0 0.0
      %1707 = vmatmul.mubr.f32.gmra.mrb[0].mxu0 %v1080
      %v1708 = vpop.f32.mrb[0].mxu0
      %v1709 = vadd.f32 0.0, %v1708
      %v1710 = vpop.f32.mrb[0].mxu0
      %1711 = vmatprep.mubr.f32.mxu0 0.0
      %1712 = vmatmul.mubr.f32.gmra.mrb[0].mxu0 %v1079
      %v1713 = vpop.f32.mrb[0].mxu0
      %v1714 = vadd.f32 0.0, %v1713
      %v1715 = vpop.f32.mrb[0].mxu0
      %1716 = vmatprep.mubr.f32.mxu0 0.0
      %1717 = vmatmul.mubr.f32.gmra.mrb[0].mxu0 %v1078
      %v1718 = vpop.f32.mrb[0].mxu0
      %v1719 = vadd.f32 0.0, %v1718
      %v1720 = vpop.f32.mrb[0].mxu0
      %1721 = vmatprep.mubr.f32.mxu0 0.0
      %1722 = vmatmul.mubr.f32.gmra.mrb[0].mxu0 %v1077
      %v1723 = vpop.f32.mrb[0].mxu0
      %v1724 = vadd.f32 0.0, %v1723
      %v1725 = vpop.f32.mrb[0].mxu0
      %1726 = vmatprep.mubr.f32.mxu0 0.0
      %1727 = vmatmul.mubr.f32.gmra.mrb[0].mxu0 %v1076
      %v1728 = vpop.f32.mrb[0].mxu0
      %v1729 = vadd.f32 0.0, %v1728
      %v1730 = vpop.f32.mrb[0].mxu0
      %1731 = vdwg.mxu0
      %v1732 = vadd.f32 %v1404, %v1529
      %v1733 = vadd.f32 %v1405, %v1534
      %v1734 = vadd.f32 %v1406, %v1539
      %v1735 = vadd.f32 %v1407, %v1544
      %v1736 = vadd.f32 %v1408, %v1549
      %v1737 = vadd.f32 %v1409, %v1554
      %v1738 = vadd.f32 %v1410, %v1559
      %v1739 = vadd.f32 %v1411, %v1564
      %v1740 = vadd.f32 %v1412, %v1569
      %v1741 = vadd.f32 %v1413, %v1574
      %v1742 = vadd.f32 %v1414, %v1579
      %v1743 = vadd.f32 %v1415, %v1584
      %v1744 = vadd.f32 %v1416, %v1589
      %v1745 = vadd.f32 %v1417, %v1594
      %v1746 = vadd.f32 %v1418, %v1599
      %v1747 = vadd.f32 %v1419, %v1604
      %v1748 = vadd.f32 %v1420, %v1609
      %v1749 = vadd.f32 %v1421, %v1614
      %v1750 = vadd.f32 %v1422, %v1619
      %v1751 = vadd.f32 %v1423, %v1624
      %v1752 = vadd.f32 %v1424, %v1629
      %v1753 = vadd.f32 %v1425, %v1634
      %v1754 = vadd.f32 %v1426, %v1639
      %v1755 = vadd.f32 %v1427, %v1644
      %v1756 = vadd.f32 %v1428, %v1649
      %v1757 = vadd.f32 %v1429, %v1654
      %v1758 = vadd.f32 %v1430, %v1659
      %v1759 = vadd.f32 %v1431, %v1664
      %v1760 = vadd.f32 %v1432, %v1669
      %v1761 = vadd.f32 %v1433, %v1674
      %v1762 = vadd.f32 %v1434, %v1679
      %v1763 = vadd.f32 %v1435, %v1684
      %v1764 = vadd.f32 %v1436, %v1689
      %v1765 = vadd.f32 %v1437, %v1694
      %v1766 = vadd.f32 %v1438, %v1699
      %v1767 = vadd.f32 %v1439, %v1704
      %v1768 = vadd.f32 %v1440, %v1709
      %v1769 = vadd.f32 %v1441, %v1714
      %v1770 = vadd.f32 %v1442, %v1719
      %v1771 = vadd.f32 %v1443, %v1724
      %v1772 = vadd.f32 %v1444, %v1729
      %s1773 = scalar_lea.vmem %s2, 512
      %v1774 = vld [vmem:[%s1773] sm:$0xff]
      %v1775 = vld [vmem:[%s1773 + $0x8] sm:$0xff]
      %v1776 = vld [vmem:[%s1773 + $0x10] sm:$0xff]
      %v1777 = vld [vmem:[%s1773 + $0x18] sm:$0xff]
      %v1778 = vld [vmem:[%s1773 + $0x20] sm:$0xff]
      %v1779 = vld [vmem:[%s1773 + $0x28] sm:$0xff]
      %v1780 = vld [vmem:[%s1773 + $0x30] sm:$0xff]
      %v1781 = vld [vmem:[%s1773 + $0x38] sm:$0xff]
      %v1782 = vld [vmem:[%s1773 + $0x40] sm:$0xff]
      %v1783 = vld [vmem:[%s1773 + $0x48] sm:$0xff]
      %v1784 = vld [vmem:[%s1773 + $0x50] sm:$0xff]
      %v1785 = vld [vmem:[%s1773 + $0x58] sm:$0xff]
      %v1786 = vld [vmem:[%s1773 + $0x60] sm:$0xff]
      %v1787 = vld [vmem:[%s1773 + $0x68] sm:$0xff]
      %v1788 = vld [vmem:[%s1773 + $0x70] sm:$0xff]
      %v1789 = vld [vmem:[%s1773 + $0x78] sm:$0xff]
      %1790 = vmatprep.subr.mxu0 0.0
      %1791 = vmatpush1.msra.mxu0 %v1774
      %1792 = vmatprep.subr.mxu0 0.0
      %1793 = vmatpush1.msra.mxu0 %v1775
      %1794 = vmatprep.subr.mxu0 0.0
      %1795 = vmatpush1.msra.mxu0 %v1776
      %1796 = vmatprep.subr.mxu0 0.0
      %1797 = vmatpush1.msra.mxu0 %v1777
      %1798 = vmatprep.subr.mxu0 0.0
      %1799 = vmatpush1.msra.mxu0 %v1778
      %1800 = vmatprep.subr.mxu0 0.0
      %1801 = vmatpush1.msra.mxu0 %v1779
      %1802 = vmatprep.subr.mxu0 0.0
      %1803 = vmatpush1.msra.mxu0 %v1780
      %1804 = vmatprep.subr.mxu0 0.0
      %1805 = vmatpush1.msra.mxu0 %v1781
      %1806 = vmatprep.subr.mxu0 0.0
      %1807 = vmatpush1.msra.mxu0 %v1782
      %1808 = vmatprep.subr.mxu0 0.0
      %1809 = vmatpush1.msra.mxu0 %v1783
      %1810 = vmatprep.subr.mxu0 0.0
      %1811 = vmatpush1.msra.mxu0 %v1784
      %1812 = vmatprep.subr.mxu0 0.0
      %1813 = vmatpush1.msra.mxu0 %v1785
      %1814 = vmatprep.subr.mxu0 0.0
      %1815 = vmatpush1.msra.mxu0 %v1786
      %1816 = vmatprep.subr.mxu0 0.0
      %1817 = vmatpush1.msra.mxu0 %v1787
      %1818 = vmatprep.subr.mxu0 0.0
      %1819 = vmatpush1.msra.mxu0 %v1788
      %1820 = vmatprep.subr.mxu0 0.0
      %1821 = vmatpush1.msra.mxu0 %v1789
      %1822 = vmatprep.subr.mxu0 0.0
      %1823 = vmatpush1.msra.mxu0 0.0
      %1824 = vmatprep.subr.mxu0 0.0
      %1825 = vmatpush1.msra.mxu0 0.0
      %1826 = vmatprep.subr.mxu0 0.0
      %1827 = vmatpush1.msra.mxu0 0.0
      %1828 = vmatprep.subr.mxu0 0.0
      %1829 = vmatpush1.msra.mxu0 0.0
      %1830 = vmatprep.subr.mxu0 0.0
      %1831 = vmatpush1.msra.mxu0 0.0
      %1832 = vmatprep.subr.mxu0 0.0
      %1833 = vmatpush1.msra.mxu0 0.0
      %1834 = vmatprep.subr.mxu0 0.0
      %1835 = vmatpush1.msra.mxu0 0.0
      %1836 = vmatprep.subr.mxu0 0.0
      %1837 = vmatpush1.msra.mxu0 0.0
      %1838 = vmatprep.subr.mxu0 0.0
      %1839 = vmatpush1.msra.mxu0 0.0
      %1840 = vmatprep.subr.mxu0 0.0
      %1841 = vmatpush1.msra.mxu0 0.0
      %1842 = vmatprep.subr.mxu0 0.0
      %1843 = vmatpush1.msra.mxu0 0.0
      %1844 = vmatprep.subr.mxu0 0.0
      %1845 = vmatpush1.msra.mxu0 0.0
      %1846 = vmatprep.subr.mxu0 0.0
      %1847 = vmatpush1.msra.mxu0 0.0
      %1848 = vmatprep.subr.mxu0 0.0
      %1849 = vmatpush1.msra.mxu0 0.0
      %1850 = vmatprep.subr.mxu0 0.0
      %1851 = vmatpush1.msra.mxu0 0.0
      %1852 = vmatprep.subr.mxu0 0.0
      %1853 = vmatpush1.msra.mxu0 0.0
      %1854 = vmatprep.mubr.f32.mxu0 0.0
      %1855 = vmatmul.mubr.f32.gmra.mrb[0].mxu0 %v252
      %v1856 = vpop.f32.mrb[0].mxu0
      %v1857 = vadd.f32 0.0, %v1856
      %v1858 = vpop.f32.mrb[0].mxu0
      %1859 = vmatprep.mubr.f32.mxu0 0.0
      %1860 = vmatmul.mubr.f32.gmra.mrb[0].mxu0 %v253
      %v1861 = vpop.f32.mrb[0].mxu0
      %v1862 = vadd.f32 0.0, %v1861
      %v1863 = vpop.f32.mrb[0].mxu0
      %1864 = vmatprep.mubr.f32.mxu0 0.0
      %1865 = vmatmul.mubr.f32.gmra.mrb[0].mxu0 %v254
      %v1866 = vpop.f32.mrb[0].mxu0
      %v1867 = vadd.f32 0.0, %v1866
      %v1868 = vpop.f32.mrb[0].mxu0
      %1869 = vmatprep.mubr.f32.mxu0 0.0
      %1870 = vmatmul.mubr.f32.gmra.mrb[0].mxu0 %v255
      %v1871 = vpop.f32.mrb[0].mxu0
      %v1872 = vadd.f32 0.0, %v1871
      %v1873 = vpop.f32.mrb[0].mxu0
      %1874 = vmatprep.mubr.f32.mxu0 0.0
      %1875 = vmatmul.mubr.f32.gmra.mrb[0].mxu0 %v256
      %v1876 = vpop.f32.mrb[0].mxu0
      %v1877 = vadd.f32 0.0, %v1876
      %v1878 = vpop.f32.mrb[0].mxu0
      %1879 = vmatprep.mubr.f32.mxu0 0.0
      %1880 = vmatmul.mubr.f32.gmra.mrb[0].mxu0 %v257
      %v1881 = vpop.f32.mrb[0].mxu0
      %v1882 = vadd.f32 0.0, %v1881
      %v1883 = vpop.f32.mrb[0].mxu0
      %1884 = vmatprep.mubr.f32.mxu0 0.0
      %1885 = vmatmul.mubr.f32.gmra.mrb[0].mxu0 %v258
      %v1886 = vpop.f32.mrb[0].mxu0
      %v1887 = vadd.f32 0.0, %v1886
      %v1888 = vpop.f32.mrb[0].mxu0
      %1889 = vmatprep.mubr.f32.mxu0 0.0
      %1890 = vmatmul.mubr.f32.gmra.mrb[0].mxu0 %v259
      %v1891 = vpop.f32.mrb[0].mxu0
      %v1892 = vadd.f32 0.0, %v1891
      %v1893 = vpop.f32.mrb[0].mxu0
      %1894 = vmatprep.mubr.f32.mxu0 0.0
      %1895 = vmatmul.mubr.f32.gmra.mrb[0].mxu0 %v260
      %v1896 = vpop.f32.mrb[0].mxu0
      %v1897 = vadd.f32 0.0, %v1896
      %v1898 = vpop.f32.mrb[0].mxu0
      %1899 = vmatprep.mubr.f32.mxu0 0.0
      %1900 = vmatmul.mubr.f32.gmra.mrb[0].mxu0 %v261
      %v1901 = vpop.f32.mrb[0].mxu0
      %v1902 = vadd.f32 0.0, %v1901
      %v1903 = vpop.f32.mrb[0].mxu0
      %1904 = vmatprep.mubr.f32.mxu0 0.0
      %1905 = vmatmul.mubr.f32.gmra.mrb[0].mxu0 %v262
      %v1906 = vpop.f32.mrb[0].mxu0
      %v1907 = vadd.f32 0.0, %v1906
      %v1908 = vpop.f32.mrb[0].mxu0
      %1909 = vmatprep.mubr.f32.mxu0 0.0
      %1910 = vmatmul.mubr.f32.gmra.mrb[0].mxu0 %v263
      %v1911 = vpop.f32.mrb[0].mxu0
      %v1912 = vadd.f32 0.0, %v1911
      %v1913 = vpop.f32.mrb[0].mxu0
      %1914 = vmatprep.mubr.f32.mxu0 0.0
      %1915 = vmatmul.mubr.f32.gmra.mrb[0].mxu0 %v264
      %v1916 = vpop.f32.mrb[0].mxu0
      %v1917 = vadd.f32 0.0, %v1916
      %v1918 = vpop.f32.mrb[0].mxu0
      %1919 = vmatprep.mubr.f32.mxu0 0.0
      %1920 = vmatmul.mubr.f32.gmra.mrb[0].mxu0 %v265
      %v1921 = vpop.f32.mrb[0].mxu0
      %v1922 = vadd.f32 0.0, %v1921
      %v1923 = vpop.f32.mrb[0].mxu0
      %1924 = vmatprep.mubr.f32.mxu0 0.0
      %1925 = vmatmul.mubr.f32.gmra.mrb[0].mxu0 %v266
      %v1926 = vpop.f32.mrb[0].mxu0
      %v1927 = vadd.f32 0.0, %v1926
      %v1928 = vpop.f32.mrb[0].mxu0
      %1929 = vmatprep.mubr.f32.mxu0 0.0
      %1930 = vmatmul.mubr.f32.gmra.mrb[0].mxu0 %v267
      %v1931 = vpop.f32.mrb[0].mxu0
      %v1932 = vadd.f32 0.0, %v1931
      %v1933 = vpop.f32.mrb[0].mxu0
      %1934 = vmatprep.mubr.f32.mxu0 0.0
      %1935 = vmatmul.mubr.f32.gmra.mrb[0].mxu0 %v268
      %v1936 = vpop.f32.mrb[0].mxu0
      %v1937 = vadd.f32 0.0, %v1936
      %v1938 = vpop.f32.mrb[0].mxu0
      %1939 = vmatprep.mubr.f32.mxu0 0.0
      %1940 = vmatmul.mubr.f32.gmra.mrb[0].mxu0 %v269
      %v1941 = vpop.f32.mrb[0].mxu0
      %v1942 = vadd.f32 0.0, %v1941
      %v1943 = vpop.f32.mrb[0].mxu0
      %1944 = vmatprep.mubr.f32.mxu0 0.0
      %1945 = vmatmul.mubr.f32.gmra.mrb[0].mxu0 %v270
      %v1946 = vpop.f32.mrb[0].mxu0
      %v1947 = vadd.f32 0.0, %v1946
      %v1948 = vpop.f32.mrb[0].mxu0
      %1949 = vmatprep.mubr.f32.mxu0 0.0
      %1950 = vmatmul.mubr.f32.gmra.mrb[0].mxu0 %v271
      %v1951 = vpop.f32.mrb[0].mxu0
      %v1952 = vadd.f32 0.0, %v1951
      %v1953 = vpop.f32.mrb[0].mxu0
      %1954 = vmatprep.mubr.f32.mxu0 0.0
      %1955 = vmatmul.mubr.f32.gmra.mrb[0].mxu0 %v272
      %v1956 = vpop.f32.mrb[0].mxu0
      %v1957 = vadd.f32 0.0, %v1956
      %v1958 = vpop.f32.mrb[0].mxu0
      %1959 = vmatprep.mubr.f32.mxu0 0.0
      %1960 = vmatmul.mubr.f32.gmra.mrb[0].mxu0 %v273
      %v1961 = vpop.f32.mrb[0].mxu0
      %v1962 = vadd.f32 0.0, %v1961
      %v1963 = vpop.f32.mrb[0].mxu0
      %1964 = vmatprep.mubr.f32.mxu0 0.0
      %1965 = vmatmul.mubr.f32.gmra.mrb[0].mxu0 %v274
      %v1966 = vpop.f32.mrb[0].mxu0
      %v1967 = vadd.f32 0.0, %v1966
      %v1968 = vpop.f32.mrb[0].mxu0
      %1969 = vmatprep.mubr.f32.mxu0 0.0
      %1970 = vmatmul.mubr.f32.gmra.mrb[0].mxu0 %v275
      %v1971 = vpop.f32.mrb[0].mxu0
      %v1972 = vadd.f32 0.0, %v1971
      %v1973 = vpop.f32.mrb[0].mxu0
      %1974 = vmatprep.mubr.f32.mxu0 0.0
      %1975 = vmatmul.mubr.f32.gmra.mrb[0].mxu0 %v276
      %v1976 = vpop.f32.mrb[0].mxu0
      %v1977 = vadd.f32 0.0, %v1976
      %v1978 = vpop.f32.mrb[0].mxu0
      %1979 = vmatprep.mubr.f32.mxu0 0.0
      %1980 = vmatmul.mubr.f32.gmra.mrb[0].mxu0 %v277
      %v1981 = vpop.f32.mrb[0].mxu0
      %v1982 = vadd.f32 0.0, %v1981
      %v1983 = vpop.f32.mrb[0].mxu0
      %1984 = vmatprep.mubr.f32.mxu0 0.0
      %1985 = vmatmul.mubr.f32.gmra.mrb[0].mxu0 %v278
      %v1986 = vpop.f32.mrb[0].mxu0
      %v1987 = vadd.f32 0.0, %v1986
      %v1988 = vpop.f32.mrb[0].mxu0
      %1989 = vmatprep.mubr.f32.mxu0 0.0
      %1990 = vmatmul.mubr.f32.gmra.mrb[0].mxu0 %v279
      %v1991 = vpop.f32.mrb[0].mxu0
      %v1992 = vadd.f32 0.0, %v1991
      %v1993 = vpop.f32.mrb[0].mxu0
      %1994 = vmatprep.mubr.f32.mxu0 0.0
      %1995 = vmatmul.mubr.f32.gmra.mrb[0].mxu0 %v280
      %v1996 = vpop.f32.mrb[0].mxu0
      %v1997 = vadd.f32 0.0, %v1996
      %v1998 = vpop.f32.mrb[0].mxu0
      %1999 = vmatprep.mubr.f32.mxu0 0.0
      %2000 = vmatmul.mubr.f32.gmra.mrb[0].mxu0 %v281
      %v2001 = vpop.f32.mrb[0].mxu0
      %v2002 = vadd.f32 0.0, %v2001
      %v2003 = vpop.f32.mrb[0].mxu0
      %2004 = vmatprep.mubr.f32.mxu0 0.0
      %2005 = vmatmul.mubr.f32.gmra.mrb[0].mxu0 %v282
      %v2006 = vpop.f32.mrb[0].mxu0
      %v2007 = vadd.f32 0.0, %v2006
      %v2008 = vpop.f32.mrb[0].mxu0
      %2009 = vmatprep.mubr.f32.mxu0 0.0
      %2010 = vmatmul.mubr.f32.gmra.mrb[0].mxu0 %v283
      %v2011 = vpop.f32.mrb[0].mxu0
      %v2012 = vadd.f32 0.0, %v2011
      %v2013 = vpop.f32.mrb[0].mxu0
      %2014 = vmatprep.mubr.f32.mxu0 0.0
      %2015 = vmatmul.mubr.f32.gmra.mrb[0].mxu0 %v284
      %v2016 = vpop.f32.mrb[0].mxu0
      %v2017 = vadd.f32 0.0, %v2016
      %v2018 = vpop.f32.mrb[0].mxu0
      %2019 = vmatprep.mubr.f32.mxu0 0.0
      %2020 = vmatmul.mubr.f32.gmra.mrb[0].mxu0 %v285
      %v2021 = vpop.f32.mrb[0].mxu0
      %v2022 = vadd.f32 0.0, %v2021
      %v2023 = vpop.f32.mrb[0].mxu0
      %2024 = vmatprep.mubr.f32.mxu0 0.0
      %2025 = vmatmul.mubr.f32.gmra.mrb[0].mxu0 %v286
      %v2026 = vpop.f32.mrb[0].mxu0
      %v2027 = vadd.f32 0.0, %v2026
      %v2028 = vpop.f32.mrb[0].mxu0
      %2029 = vmatprep.mubr.f32.mxu0 0.0
      %2030 = vmatmul.mubr.f32.gmra.mrb[0].mxu0 %v287
      %v2031 = vpop.f32.mrb[0].mxu0
      %v2032 = vadd.f32 0.0, %v2031
      %v2033 = vpop.f32.mrb[0].mxu0
      %2034 = vmatprep.mubr.f32.mxu0 0.0
      %2035 = vmatmul.mubr.f32.gmra.mrb[0].mxu0 %v288
      %v2036 = vpop.f32.mrb[0].mxu0
      %v2037 = vadd.f32 0.0, %v2036
      %v2038 = vpop.f32.mrb[0].mxu0
      %2039 = vmatprep.mubr.f32.mxu0 0.0
      %2040 = vmatmul.mubr.f32.gmra.mrb[0].mxu0 %v289
      %v2041 = vpop.f32.mrb[0].mxu0
      %v2042 = vadd.f32 0.0, %v2041
      %v2043 = vpop.f32.mrb[0].mxu0
      %2044 = vmatprep.mubr.f32.mxu0 0.0
      %2045 = vmatmul.mubr.f32.gmra.mrb[0].mxu0 %v290
      %v2046 = vpop.f32.mrb[0].mxu0
      %v2047 = vadd.f32 0.0, %v2046
      %v2048 = vpop.f32.mrb[0].mxu0
      %2049 = vmatprep.mubr.f32.mxu0 0.0
      %2050 = vmatmul.mubr.f32.gmra.mrb[0].mxu0 %v291
      %v2051 = vpop.f32.mrb[0].mxu0
      %v2052 = vadd.f32 0.0, %v2051
      %v2053 = vpop.f32.mrb[0].mxu0
      %2054 = vmatprep.mubr.f32.mxu0 0.0
      %2055 = vmatmul.mubr.f32.gmra.mrb[0].mxu0 %v292
      %v2056 = vpop.f32.mrb[0].mxu0
      %v2057 = vadd.f32 0.0, %v2056
      %v2058 = vpop.f32.mrb[0].mxu0
      %2059 = vdwg.mxu0
      %v2060 = vadd.f32 %v1732, %v1857
      %v2061 = vadd.f32 %v1733, %v1862
      %v2062 = vadd.f32 %v1734, %v1867
      %v2063 = vadd.f32 %v1735, %v1872
      %v2064 = vadd.f32 %v1736, %v1877
      %v2065 = vadd.f32 %v1737, %v1882
      %v2066 = vadd.f32 %v1738, %v1887
      %v2067 = vadd.f32 %v1739, %v1892
      %v2068 = vadd.f32 %v1740, %v1897
      %v2069 = vadd.f32 %v1741, %v1902
      %v2070 = vadd.f32 %v1742, %v1907
      %v2071 = vadd.f32 %v1743, %v1912
      %v2072 = vadd.f32 %v1744, %v1917
      %v2073 = vadd.f32 %v1745, %v1922
      %v2074 = vadd.f32 %v1746, %v1927
      %v2075 = vadd.f32 %v1747, %v1932
      %v2076 = vadd.f32 %v1748, %v1937
      %v2077 = vadd.f32 %v1749, %v1942
      %v2078 = vadd.f32 %v1750, %v1947
      %v2079 = vadd.f32 %v1751, %v1952
      %v2080 = vadd.f32 %v1752, %v1957
      %v2081 = vadd.f32 %v1753, %v1962
      %v2082 = vadd.f32 %v1754, %v1967
      %v2083 = vadd.f32 %v1755, %v1972
      %v2084 = vadd.f32 %v1756, %v1977
      %v2085 = vadd.f32 %v1757, %v1982
      %v2086 = vadd.f32 %v1758, %v1987
      %v2087 = vadd.f32 %v1759, %v1992
      %v2088 = vadd.f32 %v1760, %v1997
      %v2089 = vadd.f32 %v1761, %v2002
      %v2090 = vadd.f32 %v1762, %v2007
      %v2091 = vadd.f32 %v1763, %v2012
      %v2092 = vadd.f32 %v1764, %v2017
      %v2093 = vadd.f32 %v1765, %v2022
      %v2094 = vadd.f32 %v1766, %v2027
      %v2095 = vadd.f32 %v1767, %v2032
      %v2096 = vadd.f32 %v1768, %v2037
      %v2097 = vadd.f32 %v1769, %v2042
      %v2098 = vadd.f32 %v1770, %v2047
      %v2099 = vadd.f32 %v1771, %v2052
      %v2100 = vadd.f32 %v1772, %v2057
      %v2101 = vrot.slane %v252, 1
      %v2102 = vrot.slane %v253, 1
      %v2103 = vrot.slane %v254, 1
      %v2104 = vrot.slane %v255, 1
      %v2105 = vrot.slane %v256, 1
      %v2106 = vrot.slane %v257, 1
      %v2107 = vrot.slane %v258, 1
      %v2108 = vrot.slane %v259, 1
      %v2109 = vrot.slane %v260, 1
      %v2110 = vrot.slane %v261, 1
      %v2111 = vrot.slane %v262, 1
      %v2112 = vrot.slane %v263, 1
      %v2113 = vrot.slane %v264, 1
      %v2114 = vrot.slane %v265, 1
      %v2115 = vrot.slane %v266, 1
      %v2116 = vrot.slane %v267, 1
      %v2117 = vrot.slane %v268, 1
      %v2118 = vrot.slane %v269, 1
      %v2119 = vrot.slane %v270, 1
      %v2120 = vrot.slane %v271, 1
      %v2121 = vrot.slane %v272, 1
      %v2122 = vrot.slane %v273, 1
      %v2123 = vrot.slane %v274, 1
      %v2124 = vrot.slane %v275, 1
      %v2125 = vrot.slane %v276, 1
      %v2126 = vrot.slane %v277, 1
      %v2127 = vrot.slane %v278, 1
      %v2128 = vrot.slane %v279, 1
      %v2129 = vrot.slane %v280, 1
      %v2130 = vrot.slane %v281, 1
      %v2131 = vrot.slane %v282, 1
      %v2132 = vrot.slane %v283, 1
      %v2133 = vrot.slane %v284, 1
      %v2134 = vrot.slane %v285, 1
      %v2135 = vrot.slane %v286, 1
      %v2136 = vrot.slane %v287, 1
      %v2137 = vrot.slane %v288, 1
      %v2138 = vrot.slane %v289, 1
      %v2139 = vrot.slane %v290, 1
      %v2140 = vrot.slane %v291, 1
      %v2141 = vrot.slane %v292, 1
      %vm2142 = vcmp.lt.s32.totalorder %v335, 7
      %v2143 = vsel %vm2142, %v2140, %v2141
      %v2144 = vsel %vm2142, %v2139, %v2140
      %v2145 = vsel %vm2142, %v2138, %v2139
      %v2146 = vsel %vm2142, %v2137, %v2138
      %v2147 = vsel %vm2142, %v2136, %v2137
      %v2148 = vsel %vm2142, %v2135, %v2136
      %v2149 = vsel %vm2142, %v2134, %v2135
      %v2150 = vsel %vm2142, %v2133, %v2134
      %v2151 = vsel %vm2142, %v2132, %v2133
      %v2152 = vsel %vm2142, %v2131, %v2132
      %v2153 = vsel %vm2142, %v2130, %v2131
      %v2154 = vsel %vm2142, %v2129, %v2130
      %v2155 = vsel %vm2142, %v2128, %v2129
      %v2156 = vsel %vm2142, %v2127, %v2128
      %v2157 = vsel %vm2142, %v2126, %v2127
      %v2158 = vsel %vm2142, %v2125, %v2126
      %v2159 = vsel %vm2142, %v2124, %v2125
      %v2160 = vsel %vm2142, %v2123, %v2124
      %v2161 = vsel %vm2142, %v2122, %v2123
      %v2162 = vsel %vm2142, %v2121, %v2122
      %v2163 = vsel %vm2142, %v2120, %v2121
      %v2164 = vsel %vm2142, %v2119, %v2120
      %v2165 = vsel %vm2142, %v2118, %v2119
      %v2166 = vsel %vm2142, %v2117, %v2118
      %v2167 = vsel %vm2142, %v2116, %v2117
      %v2168 = vsel %vm2142, %v2115, %v2116
      %v2169 = vsel %vm2142, %v2114, %v2115
      %v2170 = vsel %vm2142, %v2113, %v2114
      %v2171 = vsel %vm2142, %v2112, %v2113
      %v2172 = vsel %vm2142, %v2111, %v2112
      %v2173 = vsel %vm2142, %v2110, %v2111
      %v2174 = vsel %vm2142, %v2109, %v2110
      %v2175 = vsel %vm2142, %v2108, %v2109
      %v2176 = vsel %vm2142, %v2107, %v2108
      %v2177 = vsel %vm2142, %v2106, %v2107
      %v2178 = vsel %vm2142, %v2105, %v2106
      %v2179 = vsel %vm2142, %v2104, %v2105
      %v2180 = vsel %vm2142, %v2103, %v2104
      %v2181 = vsel %vm2142, %v2102, %v2103
      %v2182 = vsel %vm2142, %v2101, %v2102
      %v2183 = vsel %vm2142, %v2141, %v2101
      %s2184 = scalar_lea.vmem %s2, 640
      %v2185 = vld [vmem:[%s2184] sm:$0xff]
      %v2186 = vld [vmem:[%s2184 + $0x8] sm:$0xff]
      %v2187 = vld [vmem:[%s2184 + $0x10] sm:$0xff]
      %v2188 = vld [vmem:[%s2184 + $0x18] sm:$0xff]
      %v2189 = vld [vmem:[%s2184 + $0x20] sm:$0xff]
      %v2190 = vld [vmem:[%s2184 + $0x28] sm:$0xff]
      %v2191 = vld [vmem:[%s2184 + $0x30] sm:$0xff]
      %v2192 = vld [vmem:[%s2184 + $0x38] sm:$0xff]
      %v2193 = vld [vmem:[%s2184 + $0x40] sm:$0xff]
      %v2194 = vld [vmem:[%s2184 + $0x48] sm:$0xff]
      %v2195 = vld [vmem:[%s2184 + $0x50] sm:$0xff]
      %v2196 = vld [vmem:[%s2184 + $0x58] sm:$0xff]
      %v2197 = vld [vmem:[%s2184 + $0x60] sm:$0xff]
      %v2198 = vld [vmem:[%s2184 + $0x68] sm:$0xff]
      %v2199 = vld [vmem:[%s2184 + $0x70] sm:$0xff]
      %v2200 = vld [vmem:[%s2184 + $0x78] sm:$0xff]
      %2201 = vmatprep.subr.mxu0 0.0
      %2202 = vmatpush1.msra.mxu0 %v2185
      %2203 = vmatprep.subr.mxu0 0.0
      %2204 = vmatpush1.msra.mxu0 %v2186
      %2205 = vmatprep.subr.mxu0 0.0
      %2206 = vmatpush1.msra.mxu0 %v2187
      %2207 = vmatprep.subr.mxu0 0.0
      %2208 = vmatpush1.msra.mxu0 %v2188
      %2209 = vmatprep.subr.mxu0 0.0
      %2210 = vmatpush1.msra.mxu0 %v2189
      %2211 = vmatprep.subr.mxu0 0.0
      %2212 = vmatpush1.msra.mxu0 %v2190
      %2213 = vmatprep.subr.mxu0 0.0
      %2214 = vmatpush1.msra.mxu0 %v2191
      %2215 = vmatprep.subr.mxu0 0.0
      %2216 = vmatpush1.msra.mxu0 %v2192
      %2217 = vmatprep.subr.mxu0 0.0
      %2218 = vmatpush1.msra.mxu0 %v2193
      %2219 = vmatprep.subr.mxu0 0.0
      %2220 = vmatpush1.msra.mxu0 %v2194
      %2221 = vmatprep.subr.mxu0 0.0
      %2222 = vmatpush1.msra.mxu0 %v2195
      %2223 = vmatprep.subr.mxu0 0.0
      %2224 = vmatpush1.msra.mxu0 %v2196
      %2225 = vmatprep.subr.mxu0 0.0
      %2226 = vmatpush1.msra.mxu0 %v2197
      %2227 = vmatprep.subr.mxu0 0.0
      %2228 = vmatpush1.msra.mxu0 %v2198
      %2229 = vmatprep.subr.mxu0 0.0
      %2230 = vmatpush1.msra.mxu0 %v2199
      %2231 = vmatprep.subr.mxu0 0.0
      %2232 = vmatpush1.msra.mxu0 %v2200
      %2233 = vmatprep.subr.mxu0 0.0
      %2234 = vmatpush1.msra.mxu0 0.0
      %2235 = vmatprep.subr.mxu0 0.0
      %2236 = vmatpush1.msra.mxu0 0.0
      %2237 = vmatprep.subr.mxu0 0.0
      %2238 = vmatpush1.msra.mxu0 0.0
      %2239 = vmatprep.subr.mxu0 0.0
      %2240 = vmatpush1.msra.mxu0 0.0
      %2241 = vmatprep.subr.mxu0 0.0
      %2242 = vmatpush1.msra.mxu0 0.0
      %2243 = vmatprep.subr.mxu0 0.0
      %2244 = vmatpush1.msra.mxu0 0.0
      %2245 = vmatprep.subr.mxu0 0.0
      %2246 = vmatpush1.msra.mxu0 0.0
      %2247 = vmatprep.subr.mxu0 0.0
      %2248 = vmatpush1.msra.mxu0 0.0
      %2249 = vmatprep.subr.mxu0 0.0
      %2250 = vmatpush1.msra.mxu0 0.0
      %2251 = vmatprep.subr.mxu0 0.0
      %2252 = vmatpush1.msra.mxu0 0.0
      %2253 = vmatprep.subr.mxu0 0.0
      %2254 = vmatpush1.msra.mxu0 0.0
      %2255 = vmatprep.subr.mxu0 0.0
      %2256 = vmatpush1.msra.mxu0 0.0
      %2257 = vmatprep.subr.mxu0 0.0
      %2258 = vmatpush1.msra.mxu0 0.0
      %2259 = vmatprep.subr.mxu0 0.0
      %2260 = vmatpush1.msra.mxu0 0.0
      %2261 = vmatprep.subr.mxu0 0.0
      %2262 = vmatpush1.msra.mxu0 0.0
      %2263 = vmatprep.subr.mxu0 0.0
      %2264 = vmatpush1.msra.mxu0 0.0
      %2265 = vmatprep.mubr.f32.mxu0 0.0
      %2266 = vmatmul.mubr.f32.gmra.mrb[0].mxu0 %v2182
      %v2267 = vpop.f32.mrb[0].mxu0
      %v2268 = vadd.f32 0.0, %v2267
      %v2269 = vpop.f32.mrb[0].mxu0
      %2270 = vmatprep.mubr.f32.mxu0 0.0
      %2271 = vmatmul.mubr.f32.gmra.mrb[0].mxu0 %v2181
      %v2272 = vpop.f32.mrb[0].mxu0
      %v2273 = vadd.f32 0.0, %v2272
      %v2274 = vpop.f32.mrb[0].mxu0
      %2275 = vmatprep.mubr.f32.mxu0 0.0
      %2276 = vmatmul.mubr.f32.gmra.mrb[0].mxu0 %v2180
      %v2277 = vpop.f32.mrb[0].mxu0
      %v2278 = vadd.f32 0.0, %v2277
      %v2279 = vpop.f32.mrb[0].mxu0
      %2280 = vmatprep.mubr.f32.mxu0 0.0
      %2281 = vmatmul.mubr.f32.gmra.mrb[0].mxu0 %v2179
      %v2282 = vpop.f32.mrb[0].mxu0
      %v2283 = vadd.f32 0.0, %v2282
      %v2284 = vpop.f32.mrb[0].mxu0
      %2285 = vmatprep.mubr.f32.mxu0 0.0
      %2286 = vmatmul.mubr.f32.gmra.mrb[0].mxu0 %v2178
      %v2287 = vpop.f32.mrb[0].mxu0
      %v2288 = vadd.f32 0.0, %v2287
      %v2289 = vpop.f32.mrb[0].mxu0
      %2290 = vmatprep.mubr.f32.mxu0 0.0
      %2291 = vmatmul.mubr.f32.gmra.mrb[0].mxu0 %v2177
      %v2292 = vpop.f32.mrb[0].mxu0
      %v2293 = vadd.f32 0.0, %v2292
      %v2294 = vpop.f32.mrb[0].mxu0
      %2295 = vmatprep.mubr.f32.mxu0 0.0
      %2296 = vmatmul.mubr.f32.gmra.mrb[0].mxu0 %v2176
      %v2297 = vpop.f32.mrb[0].mxu0
      %v2298 = vadd.f32 0.0, %v2297
      %v2299 = vpop.f32.mrb[0].mxu0
      %2300 = vmatprep.mubr.f32.mxu0 0.0
      %2301 = vmatmul.mubr.f32.gmra.mrb[0].mxu0 %v2175
      %v2302 = vpop.f32.mrb[0].mxu0
      %v2303 = vadd.f32 0.0, %v2302
      %v2304 = vpop.f32.mrb[0].mxu0
      %2305 = vmatprep.mubr.f32.mxu0 0.0
      %2306 = vmatmul.mubr.f32.gmra.mrb[0].mxu0 %v2174
      %v2307 = vpop.f32.mrb[0].mxu0
      %v2308 = vadd.f32 0.0, %v2307
      %v2309 = vpop.f32.mrb[0].mxu0
      %2310 = vmatprep.mubr.f32.mxu0 0.0
      %2311 = vmatmul.mubr.f32.gmra.mrb[0].mxu0 %v2173
      %v2312 = vpop.f32.mrb[0].mxu0
      %v2313 = vadd.f32 0.0, %v2312
      %v2314 = vpop.f32.mrb[0].mxu0
      %2315 = vmatprep.mubr.f32.mxu0 0.0
      %2316 = vmatmul.mubr.f32.gmra.mrb[0].mxu0 %v2172
      %v2317 = vpop.f32.mrb[0].mxu0
      %v2318 = vadd.f32 0.0, %v2317
      %v2319 = vpop.f32.mrb[0].mxu0
      %2320 = vmatprep.mubr.f32.mxu0 0.0
      %2321 = vmatmul.mubr.f32.gmra.mrb[0].mxu0 %v2171
      %v2322 = vpop.f32.mrb[0].mxu0
      %v2323 = vadd.f32 0.0, %v2322
      %v2324 = vpop.f32.mrb[0].mxu0
      %2325 = vmatprep.mubr.f32.mxu0 0.0
      %2326 = vmatmul.mubr.f32.gmra.mrb[0].mxu0 %v2170
      %v2327 = vpop.f32.mrb[0].mxu0
      %v2328 = vadd.f32 0.0, %v2327
      %v2329 = vpop.f32.mrb[0].mxu0
      %2330 = vmatprep.mubr.f32.mxu0 0.0
      %2331 = vmatmul.mubr.f32.gmra.mrb[0].mxu0 %v2169
      %v2332 = vpop.f32.mrb[0].mxu0
      %v2333 = vadd.f32 0.0, %v2332
      %v2334 = vpop.f32.mrb[0].mxu0
      %2335 = vmatprep.mubr.f32.mxu0 0.0
      %2336 = vmatmul.mubr.f32.gmra.mrb[0].mxu0 %v2168
      %v2337 = vpop.f32.mrb[0].mxu0
      %v2338 = vadd.f32 0.0, %v2337
      %v2339 = vpop.f32.mrb[0].mxu0
      %2340 = vmatprep.mubr.f32.mxu0 0.0
      %2341 = vmatmul.mubr.f32.gmra.mrb[0].mxu0 %v2167
      %v2342 = vpop.f32.mrb[0].mxu0
      %v2343 = vadd.f32 0.0, %v2342
      %v2344 = vpop.f32.mrb[0].mxu0
      %2345 = vmatprep.mubr.f32.mxu0 0.0
      %2346 = vmatmul.mubr.f32.gmra.mrb[0].mxu0 %v2166
      %v2347 = vpop.f32.mrb[0].mxu0
      %v2348 = vadd.f32 0.0, %v2347
      %v2349 = vpop.f32.mrb[0].mxu0
      %2350 = vmatprep.mubr.f32.mxu0 0.0
      %2351 = vmatmul.mubr.f32.gmra.mrb[0].mxu0 %v2165
      %v2352 = vpop.f32.mrb[0].mxu0
      %v2353 = vadd.f32 0.0, %v2352
      %v2354 = vpop.f32.mrb[0].mxu0
      %2355 = vmatprep.mubr.f32.mxu0 0.0
      %2356 = vmatmul.mubr.f32.gmra.mrb[0].mxu0 %v2164
      %v2357 = vpop.f32.mrb[0].mxu0
      %v2358 = vadd.f32 0.0, %v2357
      %v2359 = vpop.f32.mrb[0].mxu0
      %2360 = vmatprep.mubr.f32.mxu0 0.0
      %2361 = vmatmul.mubr.f32.gmra.mrb[0].mxu0 %v2163
      %v2362 = vpop.f32.mrb[0].mxu0
      %v2363 = vadd.f32 0.0, %v2362
      %v2364 = vpop.f32.mrb[0].mxu0
      %2365 = vmatprep.mubr.f32.mxu0 0.0
      %2366 = vmatmul.mubr.f32.gmra.mrb[0].mxu0 %v2162
      %v2367 = vpop.f32.mrb[0].mxu0
      %v2368 = vadd.f32 0.0, %v2367
      %v2369 = vpop.f32.mrb[0].mxu0
      %2370 = vmatprep.mubr.f32.mxu0 0.0
      %2371 = vmatmul.mubr.f32.gmra.mrb[0].mxu0 %v2161
      %v2372 = vpop.f32.mrb[0].mxu0
      %v2373 = vadd.f32 0.0, %v2372
      %v2374 = vpop.f32.mrb[0].mxu0
      %2375 = vmatprep.mubr.f32.mxu0 0.0
      %2376 = vmatmul.mubr.f32.gmra.mrb[0].mxu0 %v2160
      %v2377 = vpop.f32.mrb[0].mxu0
      %v2378 = vadd.f32 0.0, %v2377
      %v2379 = vpop.f32.mrb[0].mxu0
      %2380 = vmatprep.mubr.f32.mxu0 0.0
      %2381 = vmatmul.mubr.f32.gmra.mrb[0].mxu0 %v2159
      %v2382 = vpop.f32.mrb[0].mxu0
      %v2383 = vadd.f32 0.0, %v2382
      %v2384 = vpop.f32.mrb[0].mxu0
      %2385 = vmatprep.mubr.f32.mxu0 0.0
      %2386 = vmatmul.mubr.f32.gmra.mrb[0].mxu0 %v2158
      %v2387 = vpop.f32.mrb[0].mxu0
      %v2388 = vadd.f32 0.0, %v2387
      %v2389 = vpop.f32.mrb[0].mxu0
      %2390 = vmatprep.mubr.f32.mxu0 0.0
      %2391 = vmatmul.mubr.f32.gmra.mrb[0].mxu0 %v2157
      %v2392 = vpop.f32.mrb[0].mxu0
      %v2393 = vadd.f32 0.0, %v2392
      %v2394 = vpop.f32.mrb[0].mxu0
      %2395 = vmatprep.mubr.f32.mxu0 0.0
      %2396 = vmatmul.mubr.f32.gmra.mrb[0].mxu0 %v2156
      %v2397 = vpop.f32.mrb[0].mxu0
      %v2398 = vadd.f32 0.0, %v2397
      %v2399 = vpop.f32.mrb[0].mxu0
      %2400 = vmatprep.mubr.f32.mxu0 0.0
      %2401 = vmatmul.mubr.f32.gmra.mrb[0].mxu0 %v2155
      %v2402 = vpop.f32.mrb[0].mxu0
      %v2403 = vadd.f32 0.0, %v2402
      %v2404 = vpop.f32.mrb[0].mxu0
      %2405 = vmatprep.mubr.f32.mxu0 0.0
      %2406 = vmatmul.mubr.f32.gmra.mrb[0].mxu0 %v2154
      %v2407 = vpop.f32.mrb[0].mxu0
      %v2408 = vadd.f32 0.0, %v2407
      %v2409 = vpop.f32.mrb[0].mxu0
      %2410 = vmatprep.mubr.f32.mxu0 0.0
      %2411 = vmatmul.mubr.f32.gmra.mrb[0].mxu0 %v2153
      %v2412 = vpop.f32.mrb[0].mxu0
      %v2413 = vadd.f32 0.0, %v2412
      %v2414 = vpop.f32.mrb[0].mxu0
      %2415 = vmatprep.mubr.f32.mxu0 0.0
      %2416 = vmatmul.mubr.f32.gmra.mrb[0].mxu0 %v2152
      %v2417 = vpop.f32.mrb[0].mxu0
      %v2418 = vadd.f32 0.0, %v2417
      %v2419 = vpop.f32.mrb[0].mxu0
      %2420 = vmatprep.mubr.f32.mxu0 0.0
      %2421 = vmatmul.mubr.f32.gmra.mrb[0].mxu0 %v2151
      %v2422 = vpop.f32.mrb[0].mxu0
      %v2423 = vadd.f32 0.0, %v2422
      %v2424 = vpop.f32.mrb[0].mxu0
      %2425 = vmatprep.mubr.f32.mxu0 0.0
      %2426 = vmatmul.mubr.f32.gmra.mrb[0].mxu0 %v2150
      %v2427 = vpop.f32.mrb[0].mxu0
      %v2428 = vadd.f32 0.0, %v2427
      %v2429 = vpop.f32.mrb[0].mxu0
      %2430 = vmatprep.mubr.f32.mxu0 0.0
      %2431 = vmatmul.mubr.f32.gmra.mrb[0].mxu0 %v2149
      %v2432 = vpop.f32.mrb[0].mxu0
      %v2433 = vadd.f32 0.0, %v2432
      %v2434 = vpop.f32.mrb[0].mxu0
      %2435 = vmatprep.mubr.f32.mxu0 0.0
      %2436 = vmatmul.mubr.f32.gmra.mrb[0].mxu0 %v2148
      %v2437 = vpop.f32.mrb[0].mxu0
      %v2438 = vadd.f32 0.0, %v2437
      %v2439 = vpop.f32.mrb[0].mxu0
      %2440 = vmatprep.mubr.f32.mxu0 0.0
      %2441 = vmatmul.mubr.f32.gmra.mrb[0].mxu0 %v2147
      %v2442 = vpop.f32.mrb[0].mxu0
      %v2443 = vadd.f32 0.0, %v2442
      %v2444 = vpop.f32.mrb[0].mxu0
      %2445 = vmatprep.mubr.f32.mxu0 0.0
      %2446 = vmatmul.mubr.f32.gmra.mrb[0].mxu0 %v2146
      %v2447 = vpop.f32.mrb[0].mxu0
      %v2448 = vadd.f32 0.0, %v2447
      %v2449 = vpop.f32.mrb[0].mxu0
      %2450 = vmatprep.mubr.f32.mxu0 0.0
      %2451 = vmatmul.mubr.f32.gmra.mrb[0].mxu0 %v2145
      %v2452 = vpop.f32.mrb[0].mxu0
      %v2453 = vadd.f32 0.0, %v2452
      %v2454 = vpop.f32.mrb[0].mxu0
      %2455 = vmatprep.mubr.f32.mxu0 0.0
      %2456 = vmatmul.mubr.f32.gmra.mrb[0].mxu0 %v2144
      %v2457 = vpop.f32.mrb[0].mxu0
      %v2458 = vadd.f32 0.0, %v2457
      %v2459 = vpop.f32.mrb[0].mxu0
      %2460 = vmatprep.mubr.f32.mxu0 0.0
      %2461 = vmatmul.mubr.f32.gmra.mrb[0].mxu0 %v2143
      %v2462 = vpop.f32.mrb[0].mxu0
      %v2463 = vadd.f32 0.0, %v2462
      %v2464 = vpop.f32.mrb[0].mxu0
      %2465 = vmatprep.mubr.f32.mxu0 0.0
      %2466 = vmatmul.mubr.f32.gmra.mrb[0].mxu0 %v2183
      %v2467 = vpop.f32.mrb[0].mxu0
      %v2468 = vadd.f32 0.0, %v2467
      %v2469 = vpop.f32.mrb[0].mxu0
      %2470 = vdwg.mxu0
      %v2471 = vadd.f32 %v2060, %v2268
      %v2472 = vadd.f32 %v2061, %v2273
      %v2473 = vadd.f32 %v2062, %v2278
      %v2474 = vadd.f32 %v2063, %v2283
      %v2475 = vadd.f32 %v2064, %v2288
      %v2476 = vadd.f32 %v2065, %v2293
      %v2477 = vadd.f32 %v2066, %v2298
      %v2478 = vadd.f32 %v2067, %v2303
      %v2479 = vadd.f32 %v2068, %v2308
      %v2480 = vadd.f32 %v2069, %v2313
      %v2481 = vadd.f32 %v2070, %v2318
      %v2482 = vadd.f32 %v2071, %v2323
      %v2483 = vadd.f32 %v2072, %v2328
      %v2484 = vadd.f32 %v2073, %v2333
      %v2485 = vadd.f32 %v2074, %v2338
      %v2486 = vadd.f32 %v2075, %v2343
      %v2487 = vadd.f32 %v2076, %v2348
      %v2488 = vadd.f32 %v2077, %v2353
      %v2489 = vadd.f32 %v2078, %v2358
      %v2490 = vadd.f32 %v2079, %v2363
      %v2491 = vadd.f32 %v2080, %v2368
      %v2492 = vadd.f32 %v2081, %v2373
      %v2493 = vadd.f32 %v2082, %v2378
      %v2494 = vadd.f32 %v2083, %v2383
      %v2495 = vadd.f32 %v2084, %v2388
      %v2496 = vadd.f32 %v2085, %v2393
      %v2497 = vadd.f32 %v2086, %v2398
      %v2498 = vadd.f32 %v2087, %v2403
      %v2499 = vadd.f32 %v2088, %v2408
      %v2500 = vadd.f32 %v2089, %v2413
      %v2501 = vadd.f32 %v2090, %v2418
      %v2502 = vadd.f32 %v2091, %v2423
      %v2503 = vadd.f32 %v2092, %v2428
      %v2504 = vadd.f32 %v2093, %v2433
      %v2505 = vadd.f32 %v2094, %v2438
      %v2506 = vadd.f32 %v2095, %v2443
      %v2507 = vadd.f32 %v2096, %v2448
      %v2508 = vadd.f32 %v2097, %v2453
      %v2509 = vadd.f32 %v2098, %v2458
      %v2510 = vadd.f32 %v2099, %v2463
      %v2511 = vadd.f32 %v2100, %v2468
      %s2512 = scalar_lea.vmem %s2, 768
      %v2513 = vld [vmem:[%s2512] sm:$0xff]
      %v2514 = vld [vmem:[%s2512 + $0x8] sm:$0xff]
      %v2515 = vld [vmem:[%s2512 + $0x10] sm:$0xff]
      %v2516 = vld [vmem:[%s2512 + $0x18] sm:$0xff]
      %v2517 = vld [vmem:[%s2512 + $0x20] sm:$0xff]
      %v2518 = vld [vmem:[%s2512 + $0x28] sm:$0xff]
      %v2519 = vld [vmem:[%s2512 + $0x30] sm:$0xff]
      %v2520 = vld [vmem:[%s2512 + $0x38] sm:$0xff]
      %v2521 = vld [vmem:[%s2512 + $0x40] sm:$0xff]
      %v2522 = vld [vmem:[%s2512 + $0x48] sm:$0xff]
      %v2523 = vld [vmem:[%s2512 + $0x50] sm:$0xff]
      %v2524 = vld [vmem:[%s2512 + $0x58] sm:$0xff]
      %v2525 = vld [vmem:[%s2512 + $0x60] sm:$0xff]
      %v2526 = vld [vmem:[%s2512 + $0x68] sm:$0xff]
      %v2527 = vld [vmem:[%s2512 + $0x70] sm:$0xff]
      %v2528 = vld [vmem:[%s2512 + $0x78] sm:$0xff]
      %2529 = vmatprep.subr.mxu0 0.0
      %2530 = vmatpush1.msra.mxu0 %v2513
      %2531 = vmatprep.subr.mxu0 0.0
      %2532 = vmatpush1.msra.mxu0 %v2514
      %2533 = vmatprep.subr.mxu0 0.0
      %2534 = vmatpush1.msra.mxu0 %v2515
      %2535 = vmatprep.subr.mxu0 0.0
      %2536 = vmatpush1.msra.mxu0 %v2516
      %2537 = vmatprep.subr.mxu0 0.0
      %2538 = vmatpush1.msra.mxu0 %v2517
      %2539 = vmatprep.subr.mxu0 0.0
      %2540 = vmatpush1.msra.mxu0 %v2518
      %2541 = vmatprep.subr.mxu0 0.0
      %2542 = vmatpush1.msra.mxu0 %v2519
      %2543 = vmatprep.subr.mxu0 0.0
      %2544 = vmatpush1.msra.mxu0 %v2520
      %2545 = vmatprep.subr.mxu0 0.0
      %2546 = vmatpush1.msra.mxu0 %v2521
      %2547 = vmatprep.subr.mxu0 0.0
      %2548 = vmatpush1.msra.mxu0 %v2522
      %2549 = vmatprep.subr.mxu0 0.0
      %2550 = vmatpush1.msra.mxu0 %v2523
      %2551 = vmatprep.subr.mxu0 0.0
      %2552 = vmatpush1.msra.mxu0 %v2524
      %2553 = vmatprep.subr.mxu0 0.0
      %2554 = vmatpush1.msra.mxu0 %v2525
      %2555 = vmatprep.subr.mxu0 0.0
      %2556 = vmatpush1.msra.mxu0 %v2526
      %2557 = vmatprep.subr.mxu0 0.0
      %2558 = vmatpush1.msra.mxu0 %v2527
      %2559 = vmatprep.subr.mxu0 0.0
      %2560 = vmatpush1.msra.mxu0 %v2528
      %2561 = vmatprep.subr.mxu0 0.0
      %2562 = vmatpush1.msra.mxu0 0.0
      %2563 = vmatprep.subr.mxu0 0.0
      %2564 = vmatpush1.msra.mxu0 0.0
      %2565 = vmatprep.subr.mxu0 0.0
      %2566 = vmatpush1.msra.mxu0 0.0
      %2567 = vmatprep.subr.mxu0 0.0
      %2568 = vmatpush1.msra.mxu0 0.0
      %2569 = vmatprep.subr.mxu0 0.0
      %2570 = vmatpush1.msra.mxu0 0.0
      %2571 = vmatprep.subr.mxu0 0.0
      %2572 = vmatpush1.msra.mxu0 0.0
      %2573 = vmatprep.subr.mxu0 0.0
      %2574 = vmatpush1.msra.mxu0 0.0
      %2575 = vmatprep.subr.mxu0 0.0
      %2576 = vmatpush1.msra.mxu0 0.0
      %2577 = vmatprep.subr.mxu0 0.0
      %2578 = vmatpush1.msra.mxu0 0.0
      %2579 = vmatprep.subr.mxu0 0.0
      %2580 = vmatpush1.msra.mxu0 0.0
      %2581 = vmatprep.subr.mxu0 0.0
      %2582 = vmatpush1.msra.mxu0 0.0
      %2583 = vmatprep.subr.mxu0 0.0
      %2584 = vmatpush1.msra.mxu0 0.0
      %2585 = vmatprep.subr.mxu0 0.0
      %2586 = vmatpush1.msra.mxu0 0.0
      %2587 = vmatprep.subr.mxu0 0.0
      %2588 = vmatpush1.msra.mxu0 0.0
      %2589 = vmatprep.subr.mxu0 0.0
      %2590 = vmatpush1.msra.mxu0 0.0
      %2591 = vmatprep.subr.mxu0 0.0
      %2592 = vmatpush1.msra.mxu0 0.0
      %2593 = vmatprep.mubr.f32.mxu0 0.0
      %2594 = vmatmul.mubr.f32.gmra.mrb[0].mxu0 %v2180
      %v2595 = vpop.f32.mrb[0].mxu0
      %v2596 = vadd.f32 0.0, %v2595
      %v2597 = vpop.f32.mrb[0].mxu0
      %2598 = vmatprep.mubr.f32.mxu0 0.0
      %2599 = vmatmul.mubr.f32.gmra.mrb[0].mxu0 %v2179
      %v2600 = vpop.f32.mrb[0].mxu0
      %v2601 = vadd.f32 0.0, %v2600
      %v2602 = vpop.f32.mrb[0].mxu0
      %2603 = vmatprep.mubr.f32.mxu0 0.0
      %2604 = vmatmul.mubr.f32.gmra.mrb[0].mxu0 %v2178
      %v2605 = vpop.f32.mrb[0].mxu0
      %v2606 = vadd.f32 0.0, %v2605
      %v2607 = vpop.f32.mrb[0].mxu0
      %2608 = vmatprep.mubr.f32.mxu0 0.0
      %2609 = vmatmul.mubr.f32.gmra.mrb[0].mxu0 %v2177
      %v2610 = vpop.f32.mrb[0].mxu0
      %v2611 = vadd.f32 0.0, %v2610
      %v2612 = vpop.f32.mrb[0].mxu0
      %2613 = vmatprep.mubr.f32.mxu0 0.0
      %2614 = vmatmul.mubr.f32.gmra.mrb[0].mxu0 %v2176
      %v2615 = vpop.f32.mrb[0].mxu0
      %v2616 = vadd.f32 0.0, %v2615
      %v2617 = vpop.f32.mrb[0].mxu0
      %2618 = vmatprep.mubr.f32.mxu0 0.0
      %2619 = vmatmul.mubr.f32.gmra.mrb[0].mxu0 %v2175
      %v2620 = vpop.f32.mrb[0].mxu0
      %v2621 = vadd.f32 0.0, %v2620
      %v2622 = vpop.f32.mrb[0].mxu0
      %2623 = vmatprep.mubr.f32.mxu0 0.0
      %2624 = vmatmul.mubr.f32.gmra.mrb[0].mxu0 %v2174
      %v2625 = vpop.f32.mrb[0].mxu0
      %v2626 = vadd.f32 0.0, %v2625
      %v2627 = vpop.f32.mrb[0].mxu0
      %2628 = vmatprep.mubr.f32.mxu0 0.0
      %2629 = vmatmul.mubr.f32.gmra.mrb[0].mxu0 %v2173
      %v2630 = vpop.f32.mrb[0].mxu0
      %v2631 = vadd.f32 0.0, %v2630
      %v2632 = vpop.f32.mrb[0].mxu0
      %2633 = vmatprep.mubr.f32.mxu0 0.0
      %2634 = vmatmul.mubr.f32.gmra.mrb[0].mxu0 %v2172
      %v2635 = vpop.f32.mrb[0].mxu0
      %v2636 = vadd.f32 0.0, %v2635
      %v2637 = vpop.f32.mrb[0].mxu0
      %2638 = vmatprep.mubr.f32.mxu0 0.0
      %2639 = vmatmul.mubr.f32.gmra.mrb[0].mxu0 %v2171
      %v2640 = vpop.f32.mrb[0].mxu0
      %v2641 = vadd.f32 0.0, %v2640
      %v2642 = vpop.f32.mrb[0].mxu0
      %2643 = vmatprep.mubr.f32.mxu0 0.0
      %2644 = vmatmul.mubr.f32.gmra.mrb[0].mxu0 %v2170
      %v2645 = vpop.f32.mrb[0].mxu0
      %v2646 = vadd.f32 0.0, %v2645
      %v2647 = vpop.f32.mrb[0].mxu0
      %2648 = vmatprep.mubr.f32.mxu0 0.0
      %2649 = vmatmul.mubr.f32.gmra.mrb[0].mxu0 %v2169
      %v2650 = vpop.f32.mrb[0].mxu0
      %v2651 = vadd.f32 0.0, %v2650
      %v2652 = vpop.f32.mrb[0].mxu0
      %2653 = vmatprep.mubr.f32.mxu0 0.0
      %2654 = vmatmul.mubr.f32.gmra.mrb[0].mxu0 %v2168
      %v2655 = vpop.f32.mrb[0].mxu0
      %v2656 = vadd.f32 0.0, %v2655
      %v2657 = vpop.f32.mrb[0].mxu0
      %2658 = vmatprep.mubr.f32.mxu0 0.0
      %2659 = vmatmul.mubr.f32.gmra.mrb[0].mxu0 %v2167
      %v2660 = vpop.f32.mrb[0].mxu0
      %v2661 = vadd.f32 0.0, %v2660
      %v2662 = vpop.f32.mrb[0].mxu0
      %2663 = vmatprep.mubr.f32.mxu0 0.0
      %2664 = vmatmul.mubr.f32.gmra.mrb[0].mxu0 %v2166
      %v2665 = vpop.f32.mrb[0].mxu0
      %v2666 = vadd.f32 0.0, %v2665
      %v2667 = vpop.f32.mrb[0].mxu0
      %2668 = vmatprep.mubr.f32.mxu0 0.0
      %2669 = vmatmul.mubr.f32.gmra.mrb[0].mxu0 %v2165
      %v2670 = vpop.f32.mrb[0].mxu0
      %v2671 = vadd.f32 0.0, %v2670
      %v2672 = vpop.f32.mrb[0].mxu0
      %2673 = vmatprep.mubr.f32.mxu0 0.0
      %2674 = vmatmul.mubr.f32.gmra.mrb[0].mxu0 %v2164
      %v2675 = vpop.f32.mrb[0].mxu0
      %v2676 = vadd.f32 0.0, %v2675
      %v2677 = vpop.f32.mrb[0].mxu0
      %2678 = vmatprep.mubr.f32.mxu0 0.0
      %2679 = vmatmul.mubr.f32.gmra.mrb[0].mxu0 %v2163
      %v2680 = vpop.f32.mrb[0].mxu0
      %v2681 = vadd.f32 0.0, %v2680
      %v2682 = vpop.f32.mrb[0].mxu0
      %2683 = vmatprep.mubr.f32.mxu0 0.0
      %2684 = vmatmul.mubr.f32.gmra.mrb[0].mxu0 %v2162
      %v2685 = vpop.f32.mrb[0].mxu0
      %v2686 = vadd.f32 0.0, %v2685
      %v2687 = vpop.f32.mrb[0].mxu0
      %2688 = vmatprep.mubr.f32.mxu0 0.0
      %2689 = vmatmul.mubr.f32.gmra.mrb[0].mxu0 %v2161
      %v2690 = vpop.f32.mrb[0].mxu0
      %v2691 = vadd.f32 0.0, %v2690
      %v2692 = vpop.f32.mrb[0].mxu0
      %2693 = vmatprep.mubr.f32.mxu0 0.0
      %2694 = vmatmul.mubr.f32.gmra.mrb[0].mxu0 %v2160
      %v2695 = vpop.f32.mrb[0].mxu0
      %v2696 = vadd.f32 0.0, %v2695
      %v2697 = vpop.f32.mrb[0].mxu0
      %2698 = vmatprep.mubr.f32.mxu0 0.0
      %2699 = vmatmul.mubr.f32.gmra.mrb[0].mxu0 %v2159
      %v2700 = vpop.f32.mrb[0].mxu0
      %v2701 = vadd.f32 0.0, %v2700
      %v2702 = vpop.f32.mrb[0].mxu0
      %2703 = vmatprep.mubr.f32.mxu0 0.0
      %2704 = vmatmul.mubr.f32.gmra.mrb[0].mxu0 %v2158
      %v2705 = vpop.f32.mrb[0].mxu0
      %v2706 = vadd.f32 0.0, %v2705
      %v2707 = vpop.f32.mrb[0].mxu0
      %2708 = vmatprep.mubr.f32.mxu0 0.0
      %2709 = vmatmul.mubr.f32.gmra.mrb[0].mxu0 %v2157
      %v2710 = vpop.f32.mrb[0].mxu0
      %v2711 = vadd.f32 0.0, %v2710
      %v2712 = vpop.f32.mrb[0].mxu0
      %2713 = vmatprep.mubr.f32.mxu0 0.0
      %2714 = vmatmul.mubr.f32.gmra.mrb[0].mxu0 %v2156
      %v2715 = vpop.f32.mrb[0].mxu0
      %v2716 = vadd.f32 0.0, %v2715
      %v2717 = vpop.f32.mrb[0].mxu0
      %2718 = vmatprep.mubr.f32.mxu0 0.0
      %2719 = vmatmul.mubr.f32.gmra.mrb[0].mxu0 %v2155
      %v2720 = vpop.f32.mrb[0].mxu0
      %v2721 = vadd.f32 0.0, %v2720
      %v2722 = vpop.f32.mrb[0].mxu0
      %2723 = vmatprep.mubr.f32.mxu0 0.0
      %2724 = vmatmul.mubr.f32.gmra.mrb[0].mxu0 %v2154
      %v2725 = vpop.f32.mrb[0].mxu0
      %v2726 = vadd.f32 0.0, %v2725
      %v2727 = vpop.f32.mrb[0].mxu0
      %2728 = vmatprep.mubr.f32.mxu0 0.0
      %2729 = vmatmul.mubr.f32.gmra.mrb[0].mxu0 %v2153
      %v2730 = vpop.f32.mrb[0].mxu0
      %v2731 = vadd.f32 0.0, %v2730
      %v2732 = vpop.f32.mrb[0].mxu0
      %2733 = vmatprep.mubr.f32.mxu0 0.0
      %2734 = vmatmul.mubr.f32.gmra.mrb[0].mxu0 %v2152
      %v2735 = vpop.f32.mrb[0].mxu0
      %v2736 = vadd.f32 0.0, %v2735
      %v2737 = vpop.f32.mrb[0].mxu0
      %2738 = vmatprep.mubr.f32.mxu0 0.0
      %2739 = vmatmul.mubr.f32.gmra.mrb[0].mxu0 %v2151
      %v2740 = vpop.f32.mrb[0].mxu0
      %v2741 = vadd.f32 0.0, %v2740
      %v2742 = vpop.f32.mrb[0].mxu0
      %2743 = vmatprep.mubr.f32.mxu0 0.0
      %2744 = vmatmul.mubr.f32.gmra.mrb[0].mxu0 %v2150
      %v2745 = vpop.f32.mrb[0].mxu0
      %v2746 = vadd.f32 0.0, %v2745
      %v2747 = vpop.f32.mrb[0].mxu0
      %2748 = vmatprep.mubr.f32.mxu0 0.0
      %2749 = vmatmul.mubr.f32.gmra.mrb[0].mxu0 %v2149
      %v2750 = vpop.f32.mrb[0].mxu0
      %v2751 = vadd.f32 0.0, %v2750
      %v2752 = vpop.f32.mrb[0].mxu0
      %2753 = vmatprep.mubr.f32.mxu0 0.0
      %2754 = vmatmul.mubr.f32.gmra.mrb[0].mxu0 %v2148
      %v2755 = vpop.f32.mrb[0].mxu0
      %v2756 = vadd.f32 0.0, %v2755
      %v2757 = vpop.f32.mrb[0].mxu0
      %2758 = vmatprep.mubr.f32.mxu0 0.0
      %2759 = vmatmul.mubr.f32.gmra.mrb[0].mxu0 %v2147
      %v2760 = vpop.f32.mrb[0].mxu0
      %v2761 = vadd.f32 0.0, %v2760
      %v2762 = vpop.f32.mrb[0].mxu0
      %2763 = vmatprep.mubr.f32.mxu0 0.0
      %2764 = vmatmul.mubr.f32.gmra.mrb[0].mxu0 %v2146
      %v2765 = vpop.f32.mrb[0].mxu0
      %v2766 = vadd.f32 0.0, %v2765
      %v2767 = vpop.f32.mrb[0].mxu0
      %2768 = vmatprep.mubr.f32.mxu0 0.0
      %2769 = vmatmul.mubr.f32.gmra.mrb[0].mxu0 %v2145
      %v2770 = vpop.f32.mrb[0].mxu0
      %v2771 = vadd.f32 0.0, %v2770
      %v2772 = vpop.f32.mrb[0].mxu0
      %2773 = vmatprep.mubr.f32.mxu0 0.0
      %2774 = vmatmul.mubr.f32.gmra.mrb[0].mxu0 %v2144
      %v2775 = vpop.f32.mrb[0].mxu0
      %v2776 = vadd.f32 0.0, %v2775
      %v2777 = vpop.f32.mrb[0].mxu0
      %2778 = vmatprep.mubr.f32.mxu0 0.0
      %2779 = vmatmul.mubr.f32.gmra.mrb[0].mxu0 %v2143
      %v2780 = vpop.f32.mrb[0].mxu0
      %v2781 = vadd.f32 0.0, %v2780
      %v2782 = vpop.f32.mrb[0].mxu0
      %2783 = vmatprep.mubr.f32.mxu0 0.0
      %2784 = vmatmul.mubr.f32.gmra.mrb[0].mxu0 %v2183
      %v2785 = vpop.f32.mrb[0].mxu0
      %v2786 = vadd.f32 0.0, %v2785
      %v2787 = vpop.f32.mrb[0].mxu0
      %2788 = vmatprep.mubr.f32.mxu0 0.0
      %2789 = vmatmul.mubr.f32.gmra.mrb[0].mxu0 %v2182
      %v2790 = vpop.f32.mrb[0].mxu0
      %v2791 = vadd.f32 0.0, %v2790
      %v2792 = vpop.f32.mrb[0].mxu0
      %2793 = vmatprep.mubr.f32.mxu0 0.0
      %2794 = vmatmul.mubr.f32.gmra.mrb[0].mxu0 %v2181
      %v2795 = vpop.f32.mrb[0].mxu0
      %v2796 = vadd.f32 0.0, %v2795
      %v2797 = vpop.f32.mrb[0].mxu0
      %2798 = vdwg.mxu0
      %v2799 = vadd.f32 %v2471, %v2596
      %v2800 = vadd.f32 %v2472, %v2601
      %v2801 = vadd.f32 %v2473, %v2606
      %v2802 = vadd.f32 %v2474, %v2611
      %v2803 = vadd.f32 %v2475, %v2616
      %v2804 = vadd.f32 %v2476, %v2621
      %v2805 = vadd.f32 %v2477, %v2626
      %v2806 = vadd.f32 %v2478, %v2631
      %v2807 = vadd.f32 %v2479, %v2636
      %v2808 = vadd.f32 %v2480, %v2641
      %v2809 = vadd.f32 %v2481, %v2646
      %v2810 = vadd.f32 %v2482, %v2651
      %v2811 = vadd.f32 %v2483, %v2656
      %v2812 = vadd.f32 %v2484, %v2661
      %v2813 = vadd.f32 %v2485, %v2666
      %v2814 = vadd.f32 %v2486, %v2671
      %v2815 = vadd.f32 %v2487, %v2676
      %v2816 = vadd.f32 %v2488, %v2681
      %v2817 = vadd.f32 %v2489, %v2686
      %v2818 = vadd.f32 %v2490, %v2691
      %v2819 = vadd.f32 %v2491, %v2696
      %v2820 = vadd.f32 %v2492, %v2701
      %v2821 = vadd.f32 %v2493, %v2706
      %v2822 = vadd.f32 %v2494, %v2711
      %v2823 = vadd.f32 %v2495, %v2716
      %v2824 = vadd.f32 %v2496, %v2721
      %v2825 = vadd.f32 %v2497, %v2726
      %v2826 = vadd.f32 %v2498, %v2731
      %v2827 = vadd.f32 %v2499, %v2736
      %v2828 = vadd.f32 %v2500, %v2741
      %v2829 = vadd.f32 %v2501, %v2746
      %v2830 = vadd.f32 %v2502, %v2751
      %v2831 = vadd.f32 %v2503, %v2756
      %v2832 = vadd.f32 %v2504, %v2761
      %v2833 = vadd.f32 %v2505, %v2766
      %v2834 = vadd.f32 %v2506, %v2771
      %v2835 = vadd.f32 %v2507, %v2776
      %v2836 = vadd.f32 %v2508, %v2781
      %v2837 = vadd.f32 %v2509, %v2786
      %v2838 = vadd.f32 %v2510, %v2791
      %v2839 = vadd.f32 %v2511, %v2796
      %v2840 = vrot.slane %v252, 2
      %v2841 = vrot.slane %v253, 2
      %v2842 = vrot.slane %v254, 2
      %v2843 = vrot.slane %v255, 2
      %v2844 = vrot.slane %v256, 2
      %v2845 = vrot.slane %v257, 2
      %v2846 = vrot.slane %v258, 2
      %v2847 = vrot.slane %v259, 2
      %v2848 = vrot.slane %v260, 2
      %v2849 = vrot.slane %v261, 2
      %v2850 = vrot.slane %v262, 2
      %v2851 = vrot.slane %v263, 2
      %v2852 = vrot.slane %v264, 2
      %v2853 = vrot.slane %v265, 2
      %v2854 = vrot.slane %v266, 2
      %v2855 = vrot.slane %v267, 2
      %v2856 = vrot.slane %v268, 2
      %v2857 = vrot.slane %v269, 2
      %v2858 = vrot.slane %v270, 2
      %v2859 = vrot.slane %v271, 2
      %v2860 = vrot.slane %v272, 2
      %v2861 = vrot.slane %v273, 2
      %v2862 = vrot.slane %v274, 2
      %v2863 = vrot.slane %v275, 2
      %v2864 = vrot.slane %v276, 2
      %v2865 = vrot.slane %v277, 2
      %v2866 = vrot.slane %v278, 2
      %v2867 = vrot.slane %v279, 2
      %v2868 = vrot.slane %v280, 2
      %v2869 = vrot.slane %v281, 2
      %v2870 = vrot.slane %v282, 2
      %v2871 = vrot.slane %v283, 2
      %v2872 = vrot.slane %v284, 2
      %v2873 = vrot.slane %v285, 2
      %v2874 = vrot.slane %v286, 2
      %v2875 = vrot.slane %v287, 2
      %v2876 = vrot.slane %v288, 2
      %v2877 = vrot.slane %v289, 2
      %v2878 = vrot.slane %v290, 2
      %v2879 = vrot.slane %v291, 2
      %v2880 = vrot.slane %v292, 2
      %vm2881 = vcmp.lt.s32.totalorder %v335, 6
      %v2882 = vsel %vm2881, %v2879, %v2880
      %v2883 = vsel %vm2881, %v2878, %v2879
      %v2884 = vsel %vm2881, %v2877, %v2878
      %v2885 = vsel %vm2881, %v2876, %v2877
      %v2886 = vsel %vm2881, %v2875, %v2876
      %v2887 = vsel %vm2881, %v2874, %v2875
      %v2888 = vsel %vm2881, %v2873, %v2874
      %v2889 = vsel %vm2881, %v2872, %v2873
      %v2890 = vsel %vm2881, %v2871, %v2872
      %v2891 = vsel %vm2881, %v2870, %v2871
      %v2892 = vsel %vm2881, %v2869, %v2870
      %v2893 = vsel %vm2881, %v2868, %v2869
      %v2894 = vsel %vm2881, %v2867, %v2868
      %v2895 = vsel %vm2881, %v2866, %v2867
      %v2896 = vsel %vm2881, %v2865, %v2866
      %v2897 = vsel %vm2881, %v2864, %v2865
      %v2898 = vsel %vm2881, %v2863, %v2864
      %v2899 = vsel %vm2881, %v2862, %v2863
      %v2900 = vsel %vm2881, %v2861, %v2862
      %v2901 = vsel %vm2881, %v2860, %v2861
      %v2902 = vsel %vm2881, %v2859, %v2860
      %v2903 = vsel %vm2881, %v2858, %v2859
      %v2904 = vsel %vm2881, %v2857, %v2858
      %v2905 = vsel %vm2881, %v2856, %v2857
      %v2906 = vsel %vm2881, %v2855, %v2856
      %v2907 = vsel %vm2881, %v2854, %v2855
      %v2908 = vsel %vm2881, %v2853, %v2854
      %v2909 = vsel %vm2881, %v2852, %v2853
      %v2910 = vsel %vm2881, %v2851, %v2852
      %v2911 = vsel %vm2881, %v2850, %v2851
      %v2912 = vsel %vm2881, %v2849, %v2850
      %v2913 = vsel %vm2881, %v2848, %v2849
      %v2914 = vsel %vm2881, %v2847, %v2848
      %v2915 = vsel %vm2881, %v2846, %v2847
      %v2916 = vsel %vm2881, %v2845, %v2846
      %v2917 = vsel %vm2881, %v2844, %v2845
      %v2918 = vsel %vm2881, %v2843, %v2844
      %v2919 = vsel %vm2881, %v2842, %v2843
      %v2920 = vsel %vm2881, %v2841, %v2842
      %v2921 = vsel %vm2881, %v2840, %v2841
      %v2922 = vsel %vm2881, %v2880, %v2840
      %s2923 = scalar_lea.vmem %s2, 896
      %v2924 = vld [vmem:[%s2923] sm:$0xff]
      %v2925 = vld [vmem:[%s2923 + $0x8] sm:$0xff]
      %v2926 = vld [vmem:[%s2923 + $0x10] sm:$0xff]
      %v2927 = vld [vmem:[%s2923 + $0x18] sm:$0xff]
      %v2928 = vld [vmem:[%s2923 + $0x20] sm:$0xff]
      %v2929 = vld [vmem:[%s2923 + $0x28] sm:$0xff]
      %v2930 = vld [vmem:[%s2923 + $0x30] sm:$0xff]
      %v2931 = vld [vmem:[%s2923 + $0x38] sm:$0xff]
      %v2932 = vld [vmem:[%s2923 + $0x40] sm:$0xff]
      %v2933 = vld [vmem:[%s2923 + $0x48] sm:$0xff]
      %v2934 = vld [vmem:[%s2923 + $0x50] sm:$0xff]
      %v2935 = vld [vmem:[%s2923 + $0x58] sm:$0xff]
      %v2936 = vld [vmem:[%s2923 + $0x60] sm:$0xff]
      %v2937 = vld [vmem:[%s2923 + $0x68] sm:$0xff]
      %v2938 = vld [vmem:[%s2923 + $0x70] sm:$0xff]
      %v2939 = vld [vmem:[%s2923 + $0x78] sm:$0xff]
      %2940 = vmatprep.subr.mxu0 0.0
      %2941 = vmatpush1.msra.mxu0 %v2924
      %2942 = vmatprep.subr.mxu0 0.0
      %2943 = vmatpush1.msra.mxu0 %v2925
      %2944 = vmatprep.subr.mxu0 0.0
      %2945 = vmatpush1.msra.mxu0 %v2926
      %2946 = vmatprep.subr.mxu0 0.0
      %2947 = vmatpush1.msra.mxu0 %v2927
      %2948 = vmatprep.subr.mxu0 0.0
      %2949 = vmatpush1.msra.mxu0 %v2928
      %2950 = vmatprep.subr.mxu0 0.0
      %2951 = vmatpush1.msra.mxu0 %v2929
      %2952 = vmatprep.subr.mxu0 0.0
      %2953 = vmatpush1.msra.mxu0 %v2930
      %2954 = vmatprep.subr.mxu0 0.0
      %2955 = vmatpush1.msra.mxu0 %v2931
      %2956 = vmatprep.subr.mxu0 0.0
      %2957 = vmatpush1.msra.mxu0 %v2932
      %2958 = vmatprep.subr.mxu0 0.0
      %2959 = vmatpush1.msra.mxu0 %v2933
      %2960 = vmatprep.subr.mxu0 0.0
      %2961 = vmatpush1.msra.mxu0 %v2934
      %2962 = vmatprep.subr.mxu0 0.0
      %2963 = vmatpush1.msra.mxu0 %v2935
      %2964 = vmatprep.subr.mxu0 0.0
      %2965 = vmatpush1.msra.mxu0 %v2936
      %2966 = vmatprep.subr.mxu0 0.0
      %2967 = vmatpush1.msra.mxu0 %v2937
      %2968 = vmatprep.subr.mxu0 0.0
      %2969 = vmatpush1.msra.mxu0 %v2938
      %2970 = vmatprep.subr.mxu0 0.0
      %2971 = vmatpush1.msra.mxu0 %v2939
      %2972 = vmatprep.subr.mxu0 0.0
      %2973 = vmatpush1.msra.mxu0 0.0
      %2974 = vmatprep.subr.mxu0 0.0
      %2975 = vmatpush1.msra.mxu0 0.0
      %2976 = vmatprep.subr.mxu0 0.0
      %2977 = vmatpush1.msra.mxu0 0.0
      %2978 = vmatprep.subr.mxu0 0.0
      %2979 = vmatpush1.msra.mxu0 0.0
      %2980 = vmatprep.subr.mxu0 0.0
      %2981 = vmatpush1.msra.mxu0 0.0
      %2982 = vmatprep.subr.mxu0 0.0
      %2983 = vmatpush1.msra.mxu0 0.0
      %2984 = vmatprep.subr.mxu0 0.0
      %2985 = vmatpush1.msra.mxu0 0.0
      %2986 = vmatprep.subr.mxu0 0.0
      %2987 = vmatpush1.msra.mxu0 0.0
      %2988 = vmatprep.subr.mxu0 0.0
      %2989 = vmatpush1.msra.mxu0 0.0
      %2990 = vmatprep.subr.mxu0 0.0
      %2991 = vmatpush1.msra.mxu0 0.0
      %2992 = vmatprep.subr.mxu0 0.0
      %2993 = vmatpush1.msra.mxu0 0.0
      %2994 = vmatprep.subr.mxu0 0.0
      %2995 = vmatpush1.msra.mxu0 0.0
      %2996 = vmatprep.subr.mxu0 0.0
      %2997 = vmatpush1.msra.mxu0 0.0
      %2998 = vmatprep.subr.mxu0 0.0
      %2999 = vmatpush1.msra.mxu0 0.0
      %3000 = vmatprep.subr.mxu0 0.0
      %3001 = vmatpush1.msra.mxu0 0.0
      %3002 = vmatprep.subr.mxu0 0.0
      %3003 = vmatpush1.msra.mxu0 0.0
      %3004 = vmatprep.mubr.f32.mxu0 0.0
      %3005 = vmatmul.mubr.f32.gmra.mrb[0].mxu0 %v2919
      %v3006 = vpop.f32.mrb[0].mxu0
      %v3007 = vadd.f32 0.0, %v3006
      %v3008 = vpop.f32.mrb[0].mxu0
      %3009 = vmatprep.mubr.f32.mxu0 0.0
      %3010 = vmatmul.mubr.f32.gmra.mrb[0].mxu0 %v2918
      %v3011 = vpop.f32.mrb[0].mxu0
      %v3012 = vadd.f32 0.0, %v3011
      %v3013 = vpop.f32.mrb[0].mxu0
      %3014 = vmatprep.mubr.f32.mxu0 0.0
      %3015 = vmatmul.mubr.f32.gmra.mrb[0].mxu0 %v2917
      %v3016 = vpop.f32.mrb[0].mxu0
      %v3017 = vadd.f32 0.0, %v3016
      %v3018 = vpop.f32.mrb[0].mxu0
      %3019 = vmatprep.mubr.f32.mxu0 0.0
      %3020 = vmatmul.mubr.f32.gmra.mrb[0].mxu0 %v2916
      %v3021 = vpop.f32.mrb[0].mxu0
      %v3022 = vadd.f32 0.0, %v3021
      %v3023 = vpop.f32.mrb[0].mxu0
      %3024 = vmatprep.mubr.f32.mxu0 0.0
      %3025 = vmatmul.mubr.f32.gmra.mrb[0].mxu0 %v2915
      %v3026 = vpop.f32.mrb[0].mxu0
      %v3027 = vadd.f32 0.0, %v3026
      %v3028 = vpop.f32.mrb[0].mxu0
      %3029 = vmatprep.mubr.f32.mxu0 0.0
      %3030 = vmatmul.mubr.f32.gmra.mrb[0].mxu0 %v2914
      %v3031 = vpop.f32.mrb[0].mxu0
      %v3032 = vadd.f32 0.0, %v3031
      %v3033 = vpop.f32.mrb[0].mxu0
      %3034 = vmatprep.mubr.f32.mxu0 0.0
      %3035 = vmatmul.mubr.f32.gmra.mrb[0].mxu0 %v2913
      %v3036 = vpop.f32.mrb[0].mxu0
      %v3037 = vadd.f32 0.0, %v3036
      %v3038 = vpop.f32.mrb[0].mxu0
      %3039 = vmatprep.mubr.f32.mxu0 0.0
      %3040 = vmatmul.mubr.f32.gmra.mrb[0].mxu0 %v2912
      %v3041 = vpop.f32.mrb[0].mxu0
      %v3042 = vadd.f32 0.0, %v3041
      %v3043 = vpop.f32.mrb[0].mxu0
      %3044 = vmatprep.mubr.f32.mxu0 0.0
      %3045 = vmatmul.mubr.f32.gmra.mrb[0].mxu0 %v2911
      %v3046 = vpop.f32.mrb[0].mxu0
      %v3047 = vadd.f32 0.0, %v3046
      %v3048 = vpop.f32.mrb[0].mxu0
      %3049 = vmatprep.mubr.f32.mxu0 0.0
      %3050 = vmatmul.mubr.f32.gmra.mrb[0].mxu0 %v2910
      %v3051 = vpop.f32.mrb[0].mxu0
      %v3052 = vadd.f32 0.0, %v3051
      %v3053 = vpop.f32.mrb[0].mxu0
      %3054 = vmatprep.mubr.f32.mxu0 0.0
      %3055 = vmatmul.mubr.f32.gmra.mrb[0].mxu0 %v2909
      %v3056 = vpop.f32.mrb[0].mxu0
      %v3057 = vadd.f32 0.0, %v3056
      %v3058 = vpop.f32.mrb[0].mxu0
      %3059 = vmatprep.mubr.f32.mxu0 0.0
      %3060 = vmatmul.mubr.f32.gmra.mrb[0].mxu0 %v2908
      %v3061 = vpop.f32.mrb[0].mxu0
      %v3062 = vadd.f32 0.0, %v3061
      %v3063 = vpop.f32.mrb[0].mxu0
      %3064 = vmatprep.mubr.f32.mxu0 0.0
      %3065 = vmatmul.mubr.f32.gmra.mrb[0].mxu0 %v2907
      %v3066 = vpop.f32.mrb[0].mxu0
      %v3067 = vadd.f32 0.0, %v3066
      %v3068 = vpop.f32.mrb[0].mxu0
      %3069 = vmatprep.mubr.f32.mxu0 0.0
      %3070 = vmatmul.mubr.f32.gmra.mrb[0].mxu0 %v2906
      %v3071 = vpop.f32.mrb[0].mxu0
      %v3072 = vadd.f32 0.0, %v3071
      %v3073 = vpop.f32.mrb[0].mxu0
      %3074 = vmatprep.mubr.f32.mxu0 0.0
      %3075 = vmatmul.mubr.f32.gmra.mrb[0].mxu0 %v2905
      %v3076 = vpop.f32.mrb[0].mxu0
      %v3077 = vadd.f32 0.0, %v3076
      %v3078 = vpop.f32.mrb[0].mxu0
      %3079 = vmatprep.mubr.f32.mxu0 0.0
      %3080 = vmatmul.mubr.f32.gmra.mrb[0].mxu0 %v2904
      %v3081 = vpop.f32.mrb[0].mxu0
      %v3082 = vadd.f32 0.0, %v3081
      %v3083 = vpop.f32.mrb[0].mxu0
      %3084 = vmatprep.mubr.f32.mxu0 0.0
      %3085 = vmatmul.mubr.f32.gmra.mrb[0].mxu0 %v2903
      %v3086 = vpop.f32.mrb[0].mxu0
      %v3087 = vadd.f32 0.0, %v3086
      %v3088 = vpop.f32.mrb[0].mxu0
      %3089 = vmatprep.mubr.f32.mxu0 0.0
      %3090 = vmatmul.mubr.f32.gmra.mrb[0].mxu0 %v2902
      %v3091 = vpop.f32.mrb[0].mxu0
      %v3092 = vadd.f32 0.0, %v3091
      %v3093 = vpop.f32.mrb[0].mxu0
      %3094 = vmatprep.mubr.f32.mxu0 0.0
      %3095 = vmatmul.mubr.f32.gmra.mrb[0].mxu0 %v2901
      %v3096 = vpop.f32.mrb[0].mxu0
      %v3097 = vadd.f32 0.0, %v3096
      %v3098 = vpop.f32.mrb[0].mxu0
      %3099 = vmatprep.mubr.f32.mxu0 0.0
      %3100 = vmatmul.mubr.f32.gmra.mrb[0].mxu0 %v2900
      %v3101 = vpop.f32.mrb[0].mxu0
      %v3102 = vadd.f32 0.0, %v3101
      %v3103 = vpop.f32.mrb[0].mxu0
      %3104 = vmatprep.mubr.f32.mxu0 0.0
      %3105 = vmatmul.mubr.f32.gmra.mrb[0].mxu0 %v2899
      %v3106 = vpop.f32.mrb[0].mxu0
      %v3107 = vadd.f32 0.0, %v3106
      %v3108 = vpop.f32.mrb[0].mxu0
      %3109 = vmatprep.mubr.f32.mxu0 0.0
      %3110 = vmatmul.mubr.f32.gmra.mrb[0].mxu0 %v2898
      %v3111 = vpop.f32.mrb[0].mxu0
      %v3112 = vadd.f32 0.0, %v3111
      %v3113 = vpop.f32.mrb[0].mxu0
      %3114 = vmatprep.mubr.f32.mxu0 0.0
      %3115 = vmatmul.mubr.f32.gmra.mrb[0].mxu0 %v2897
      %v3116 = vpop.f32.mrb[0].mxu0
      %v3117 = vadd.f32 0.0, %v3116
      %v3118 = vpop.f32.mrb[0].mxu0
      %3119 = vmatprep.mubr.f32.mxu0 0.0
      %3120 = vmatmul.mubr.f32.gmra.mrb[0].mxu0 %v2896
      %v3121 = vpop.f32.mrb[0].mxu0
      %v3122 = vadd.f32 0.0, %v3121
      %v3123 = vpop.f32.mrb[0].mxu0
      %3124 = vmatprep.mubr.f32.mxu0 0.0
      %3125 = vmatmul.mubr.f32.gmra.mrb[0].mxu0 %v2895
      %v3126 = vpop.f32.mrb[0].mxu0
      %v3127 = vadd.f32 0.0, %v3126
      %v3128 = vpop.f32.mrb[0].mxu0
      %3129 = vmatprep.mubr.f32.mxu0 0.0
      %3130 = vmatmul.mubr.f32.gmra.mrb[0].mxu0 %v2894
      %v3131 = vpop.f32.mrb[0].mxu0
      %v3132 = vadd.f32 0.0, %v3131
      %v3133 = vpop.f32.mrb[0].mxu0
      %3134 = vmatprep.mubr.f32.mxu0 0.0
      %3135 = vmatmul.mubr.f32.gmra.mrb[0].mxu0 %v2893
      %v3136 = vpop.f32.mrb[0].mxu0
      %v3137 = vadd.f32 0.0, %v3136
      %v3138 = vpop.f32.mrb[0].mxu0
      %3139 = vmatprep.mubr.f32.mxu0 0.0
      %3140 = vmatmul.mubr.f32.gmra.mrb[0].mxu0 %v2892
      %v3141 = vpop.f32.mrb[0].mxu0
      %v3142 = vadd.f32 0.0, %v3141
      %v3143 = vpop.f32.mrb[0].mxu0
      %3144 = vmatprep.mubr.f32.mxu0 0.0
      %3145 = vmatmul.mubr.f32.gmra.mrb[0].mxu0 %v2891
      %v3146 = vpop.f32.mrb[0].mxu0
      %v3147 = vadd.f32 0.0, %v3146
      %v3148 = vpop.f32.mrb[0].mxu0
      %3149 = vmatprep.mubr.f32.mxu0 0.0
      %3150 = vmatmul.mubr.f32.gmra.mrb[0].mxu0 %v2890
      %v3151 = vpop.f32.mrb[0].mxu0
      %v3152 = vadd.f32 0.0, %v3151
      %v3153 = vpop.f32.mrb[0].mxu0
      %3154 = vmatprep.mubr.f32.mxu0 0.0
      %3155 = vmatmul.mubr.f32.gmra.mrb[0].mxu0 %v2889
      %v3156 = vpop.f32.mrb[0].mxu0
      %v3157 = vadd.f32 0.0, %v3156
      %v3158 = vpop.f32.mrb[0].mxu0
      %3159 = vmatprep.mubr.f32.mxu0 0.0
      %3160 = vmatmul.mubr.f32.gmra.mrb[0].mxu0 %v2888
      %v3161 = vpop.f32.mrb[0].mxu0
      %v3162 = vadd.f32 0.0, %v3161
      %v3163 = vpop.f32.mrb[0].mxu0
      %3164 = vmatprep.mubr.f32.mxu0 0.0
      %3165 = vmatmul.mubr.f32.gmra.mrb[0].mxu0 %v2887
      %v3166 = vpop.f32.mrb[0].mxu0
      %v3167 = vadd.f32 0.0, %v3166
      %v3168 = vpop.f32.mrb[0].mxu0
      %3169 = vmatprep.mubr.f32.mxu0 0.0
      %3170 = vmatmul.mubr.f32.gmra.mrb[0].mxu0 %v2886
      %v3171 = vpop.f32.mrb[0].mxu0
      %v3172 = vadd.f32 0.0, %v3171
      %v3173 = vpop.f32.mrb[0].mxu0
      %3174 = vmatprep.mubr.f32.mxu0 0.0
      %3175 = vmatmul.mubr.f32.gmra.mrb[0].mxu0 %v2885
      %v3176 = vpop.f32.mrb[0].mxu0
      %v3177 = vadd.f32 0.0, %v3176
      %v3178 = vpop.f32.mrb[0].mxu0
      %3179 = vmatprep.mubr.f32.mxu0 0.0
      %3180 = vmatmul.mubr.f32.gmra.mrb[0].mxu0 %v2884
      %v3181 = vpop.f32.mrb[0].mxu0
      %v3182 = vadd.f32 0.0, %v3181
      %v3183 = vpop.f32.mrb[0].mxu0
      %3184 = vmatprep.mubr.f32.mxu0 0.0
      %3185 = vmatmul.mubr.f32.gmra.mrb[0].mxu0 %v2883
      %v3186 = vpop.f32.mrb[0].mxu0
      %v3187 = vadd.f32 0.0, %v3186
      %v3188 = vpop.f32.mrb[0].mxu0
      %3189 = vmatprep.mubr.f32.mxu0 0.0
      %3190 = vmatmul.mubr.f32.gmra.mrb[0].mxu0 %v2882
      %v3191 = vpop.f32.mrb[0].mxu0
      %v3192 = vadd.f32 0.0, %v3191
      %v3193 = vpop.f32.mrb[0].mxu0
      %3194 = vmatprep.mubr.f32.mxu0 0.0
      %3195 = vmatmul.mubr.f32.gmra.mrb[0].mxu0 %v2922
      %v3196 = vpop.f32.mrb[0].mxu0
      %v3197 = vadd.f32 0.0, %v3196
      %v3198 = vpop.f32.mrb[0].mxu0
      %3199 = vmatprep.mubr.f32.mxu0 0.0
      %3200 = vmatmul.mubr.f32.gmra.mrb[0].mxu0 %v2921
      %v3201 = vpop.f32.mrb[0].mxu0
      %v3202 = vadd.f32 0.0, %v3201
      %v3203 = vpop.f32.mrb[0].mxu0
      %3204 = vmatprep.mubr.f32.mxu0 0.0
      %3205 = vmatmul.mubr.f32.gmra.mrb[0].mxu0 %v2920
      %v3206 = vpop.f32.mrb[0].mxu0
      %v3207 = vadd.f32 0.0, %v3206
      %v3208 = vpop.f32.mrb[0].mxu0
      %3209 = vdwg.mxu0
      %v3210 = vadd.f32 %v2799, %v3007
      %v3211 = vadd.f32 %v2800, %v3012
      %v3212 = vadd.f32 %v2801, %v3017
      %v3213 = vadd.f32 %v2802, %v3022
      %v3214 = vadd.f32 %v2803, %v3027
      %v3215 = vadd.f32 %v2804, %v3032
      %v3216 = vadd.f32 %v2805, %v3037
      %v3217 = vadd.f32 %v2806, %v3042
      %v3218 = vadd.f32 %v2807, %v3047
      %v3219 = vadd.f32 %v2808, %v3052
      %v3220 = vadd.f32 %v2809, %v3057
      %v3221 = vadd.f32 %v2810, %v3062
      %v3222 = vadd.f32 %v2811, %v3067
      %v3223 = vadd.f32 %v2812, %v3072
      %v3224 = vadd.f32 %v2813, %v3077
      %v3225 = vadd.f32 %v2814, %v3082
      %v3226 = vadd.f32 %v2815, %v3087
      %v3227 = vadd.f32 %v2816, %v3092
      %v3228 = vadd.f32 %v2817, %v3097
      %v3229 = vadd.f32 %v2818, %v3102
      %v3230 = vadd.f32 %v2819, %v3107
      %v3231 = vadd.f32 %v2820, %v3112
      %v3232 = vadd.f32 %v2821, %v3117
      %v3233 = vadd.f32 %v2822, %v3122
      %v3234 = vadd.f32 %v2823, %v3127
      %v3235 = vadd.f32 %v2824, %v3132
      %v3236 = vadd.f32 %v2825, %v3137
      %v3237 = vadd.f32 %v2826, %v3142
      %v3238 = vadd.f32 %v2827, %v3147
      %v3239 = vadd.f32 %v2828, %v3152
      %v3240 = vadd.f32 %v2829, %v3157
      %v3241 = vadd.f32 %v2830, %v3162
      %v3242 = vadd.f32 %v2831, %v3167
      %v3243 = vadd.f32 %v2832, %v3172
      %v3244 = vadd.f32 %v2833, %v3177
      %v3245 = vadd.f32 %v2834, %v3182
      %v3246 = vadd.f32 %v2835, %v3187
      %v3247 = vadd.f32 %v2836, %v3192
      %v3248 = vadd.f32 %v2837, %v3197
      %v3249 = vadd.f32 %v2838, %v3202
      %v3250 = vadd.f32 %v2839, %v3207
      %v3251 = vrot.slane %v252, 3
      %v3252 = vrot.slane %v253, 3
      %v3253 = vrot.slane %v254, 3
      %v3254 = vrot.slane %v255, 3
      %v3255 = vrot.slane %v256, 3
      %v3256 = vrot.slane %v257, 3
      %v3257 = vrot.slane %v258, 3
      %v3258 = vrot.slane %v259, 3
      %v3259 = vrot.slane %v260, 3
      %v3260 = vrot.slane %v261, 3
      %v3261 = vrot.slane %v262, 3
      %v3262 = vrot.slane %v263, 3
      %v3263 = vrot.slane %v264, 3
      %v3264 = vrot.slane %v265, 3
      %v3265 = vrot.slane %v266, 3
      %v3266 = vrot.slane %v267, 3
      %v3267 = vrot.slane %v268, 3
      %v3268 = vrot.slane %v269, 3
      %v3269 = vrot.slane %v270, 3
      %v3270 = vrot.slane %v271, 3
      %v3271 = vrot.slane %v272, 3
      %v3272 = vrot.slane %v273, 3
      %v3273 = vrot.slane %v274, 3
      %v3274 = vrot.slane %v275, 3
      %v3275 = vrot.slane %v276, 3
      %v3276 = vrot.slane %v277, 3
      %v3277 = vrot.slane %v278, 3
      %v3278 = vrot.slane %v279, 3
      %v3279 = vrot.slane %v280, 3
      %v3280 = vrot.slane %v281, 3
      %v3281 = vrot.slane %v282, 3
      %v3282 = vrot.slane %v283, 3
      %v3283 = vrot.slane %v284, 3
      %v3284 = vrot.slane %v285, 3
      %v3285 = vrot.slane %v286, 3
      %v3286 = vrot.slane %v287, 3
      %v3287 = vrot.slane %v288, 3
      %v3288 = vrot.slane %v289, 3
      %v3289 = vrot.slane %v290, 3
      %v3290 = vrot.slane %v291, 3
      %v3291 = vrot.slane %v292, 3
      %vm3292 = vcmp.lt.s32.totalorder %v335, 5
      %v3293 = vsel %vm3292, %v3290, %v3291
      %v3294 = vsel %vm3292, %v3289, %v3290
      %v3295 = vsel %vm3292, %v3288, %v3289
      %v3296 = vsel %vm3292, %v3287, %v3288
      %v3297 = vsel %vm3292, %v3286, %v3287
      %v3298 = vsel %vm3292, %v3285, %v3286
      %v3299 = vsel %vm3292, %v3284, %v3285
      %v3300 = vsel %vm3292, %v3283, %v3284
      %v3301 = vsel %vm3292, %v3282, %v3283
      %v3302 = vsel %vm3292, %v3281, %v3282
      %v3303 = vsel %vm3292, %v3280, %v3281
      %v3304 = vsel %vm3292, %v3279, %v3280
      %v3305 = vsel %vm3292, %v3278, %v3279
      %v3306 = vsel %vm3292, %v3277, %v3278
      %v3307 = vsel %vm3292, %v3276, %v3277
      %v3308 = vsel %vm3292, %v3275, %v3276
      %v3309 = vsel %vm3292, %v3274, %v3275
      %v3310 = vsel %vm3292, %v3273, %v3274
      %v3311 = vsel %vm3292, %v3272, %v3273
      %v3312 = vsel %vm3292, %v3271, %v3272
      %v3313 = vsel %vm3292, %v3270, %v3271
      %v3314 = vsel %vm3292, %v3269, %v3270
      %v3315 = vsel %vm3292, %v3268, %v3269
      %v3316 = vsel %vm3292, %v3267, %v3268
      %v3317 = vsel %vm3292, %v3266, %v3267
      %v3318 = vsel %vm3292, %v3265, %v3266
      %v3319 = vsel %vm3292, %v3264, %v3265
      %v3320 = vsel %vm3292, %v3263, %v3264
      %v3321 = vsel %vm3292, %v3262, %v3263
      %v3322 = vsel %vm3292, %v3261, %v3262
      %v3323 = vsel %vm3292, %v3260, %v3261
      %v3324 = vsel %vm3292, %v3259, %v3260
      %v3325 = vsel %vm3292, %v3258, %v3259
      %v3326 = vsel %vm3292, %v3257, %v3258
      %v3327 = vsel %vm3292, %v3256, %v3257
      %v3328 = vsel %vm3292, %v3255, %v3256
      %v3329 = vsel %vm3292, %v3254, %v3255
      %v3330 = vsel %vm3292, %v3253, %v3254
      %v3331 = vsel %vm3292, %v3252, %v3253
      %v3332 = vsel %vm3292, %v3251, %v3252
      %v3333 = vsel %vm3292, %v3291, %v3251
      %s3334 = scalar_lea.vmem %s2, 1024
      %v3335 = vld [vmem:[%s3334] sm:$0xff]
      %v3336 = vld [vmem:[%s3334 + $0x8] sm:$0xff]
      %v3337 = vld [vmem:[%s3334 + $0x10] sm:$0xff]
      %v3338 = vld [vmem:[%s3334 + $0x18] sm:$0xff]
      %v3339 = vld [vmem:[%s3334 + $0x20] sm:$0xff]
      %v3340 = vld [vmem:[%s3334 + $0x28] sm:$0xff]
      %v3341 = vld [vmem:[%s3334 + $0x30] sm:$0xff]
      %v3342 = vld [vmem:[%s3334 + $0x38] sm:$0xff]
      %v3343 = vld [vmem:[%s3334 + $0x40] sm:$0xff]
      %v3344 = vld [vmem:[%s3334 + $0x48] sm:$0xff]
      %v3345 = vld [vmem:[%s3334 + $0x50] sm:$0xff]
      %v3346 = vld [vmem:[%s3334 + $0x58] sm:$0xff]
      %v3347 = vld [vmem:[%s3334 + $0x60] sm:$0xff]
      %v3348 = vld [vmem:[%s3334 + $0x68] sm:$0xff]
      %v3349 = vld [vmem:[%s3334 + $0x70] sm:$0xff]
      %v3350 = vld [vmem:[%s3334 + $0x78] sm:$0xff]
      %3351 = vmatprep.subr.mxu0 0.0
      %3352 = vmatpush1.msra.mxu0 %v3335
      %3353 = vmatprep.subr.mxu0 0.0
      %3354 = vmatpush1.msra.mxu0 %v3336
      %3355 = vmatprep.subr.mxu0 0.0
      %3356 = vmatpush1.msra.mxu0 %v3337
      %3357 = vmatprep.subr.mxu0 0.0
      %3358 = vmatpush1.msra.mxu0 %v3338
      %3359 = vmatprep.subr.mxu0 0.0
      %3360 = vmatpush1.msra.mxu0 %v3339
      %3361 = vmatprep.subr.mxu0 0.0
      %3362 = vmatpush1.msra.mxu0 %v3340
      %3363 = vmatprep.subr.mxu0 0.0
      %3364 = vmatpush1.msra.mxu0 %v3341
      %3365 = vmatprep.subr.mxu0 0.0
      %3366 = vmatpush1.msra.mxu0 %v3342
      %3367 = vmatprep.subr.mxu0 0.0
      %3368 = vmatpush1.msra.mxu0 %v3343
      %3369 = vmatprep.subr.mxu0 0.0
      %3370 = vmatpush1.msra.mxu0 %v3344
      %3371 = vmatprep.subr.mxu0 0.0
      %3372 = vmatpush1.msra.mxu0 %v3345
      %3373 = vmatprep.subr.mxu0 0.0
      %3374 = vmatpush1.msra.mxu0 %v3346
      %3375 = vmatprep.subr.mxu0 0.0
      %3376 = vmatpush1.msra.mxu0 %v3347
      %3377 = vmatprep.subr.mxu0 0.0
      %3378 = vmatpush1.msra.mxu0 %v3348
      %3379 = vmatprep.subr.mxu0 0.0
      %3380 = vmatpush1.msra.mxu0 %v3349
      %3381 = vmatprep.subr.mxu0 0.0
      %3382 = vmatpush1.msra.mxu0 %v3350
      %3383 = vmatprep.subr.mxu0 0.0
      %3384 = vmatpush1.msra.mxu0 0.0
      %3385 = vmatprep.subr.mxu0 0.0
      %3386 = vmatpush1.msra.mxu0 0.0
      %3387 = vmatprep.subr.mxu0 0.0
      %3388 = vmatpush1.msra.mxu0 0.0
      %3389 = vmatprep.subr.mxu0 0.0
      %3390 = vmatpush1.msra.mxu0 0.0
      %3391 = vmatprep.subr.mxu0 0.0
      %3392 = vmatpush1.msra.mxu0 0.0
      %3393 = vmatprep.subr.mxu0 0.0
      %3394 = vmatpush1.msra.mxu0 0.0
      %3395 = vmatprep.subr.mxu0 0.0
      %3396 = vmatpush1.msra.mxu0 0.0
      %3397 = vmatprep.subr.mxu0 0.0
      %3398 = vmatpush1.msra.mxu0 0.0
      %3399 = vmatprep.subr.mxu0 0.0
      %3400 = vmatpush1.msra.mxu0 0.0
      %3401 = vmatprep.subr.mxu0 0.0
      %3402 = vmatpush1.msra.mxu0 0.0
      %3403 = vmatprep.subr.mxu0 0.0
      %3404 = vmatpush1.msra.mxu0 0.0
      %3405 = vmatprep.subr.mxu0 0.0
      %3406 = vmatpush1.msra.mxu0 0.0
      %3407 = vmatprep.subr.mxu0 0.0
      %3408 = vmatpush1.msra.mxu0 0.0
      %3409 = vmatprep.subr.mxu0 0.0
      %3410 = vmatpush1.msra.mxu0 0.0
      %3411 = vmatprep.subr.mxu0 0.0
      %3412 = vmatpush1.msra.mxu0 0.0
      %3413 = vmatprep.subr.mxu0 0.0
      %3414 = vmatpush1.msra.mxu0 0.0
      %3415 = vmatprep.mubr.f32.mxu0 0.0
      %3416 = vmatmul.mubr.f32.gmra.mrb[0].mxu0 %v3330
      %v3417 = vpop.f32.mrb[0].mxu0
      %v3418 = vadd.f32 0.0, %v3417
      %v3419 = vpop.f32.mrb[0].mxu0
      %3420 = vmatprep.mubr.f32.mxu0 0.0
      %3421 = vmatmul.mubr.f32.gmra.mrb[0].mxu0 %v3329
      %v3422 = vpop.f32.mrb[0].mxu0
      %v3423 = vadd.f32 0.0, %v3422
      %v3424 = vpop.f32.mrb[0].mxu0
      %3425 = vmatprep.mubr.f32.mxu0 0.0
      %3426 = vmatmul.mubr.f32.gmra.mrb[0].mxu0 %v3328
      %v3427 = vpop.f32.mrb[0].mxu0
      %v3428 = vadd.f32 0.0, %v3427
      %v3429 = vpop.f32.mrb[0].mxu0
      %3430 = vmatprep.mubr.f32.mxu0 0.0
      %3431 = vmatmul.mubr.f32.gmra.mrb[0].mxu0 %v3327
      %v3432 = vpop.f32.mrb[0].mxu0
      %v3433 = vadd.f32 0.0, %v3432
      %v3434 = vpop.f32.mrb[0].mxu0
      %3435 = vmatprep.mubr.f32.mxu0 0.0
      %3436 = vmatmul.mubr.f32.gmra.mrb[0].mxu0 %v3326
      %v3437 = vpop.f32.mrb[0].mxu0
      %v3438 = vadd.f32 0.0, %v3437
      %v3439 = vpop.f32.mrb[0].mxu0
      %3440 = vmatprep.mubr.f32.mxu0 0.0
      %3441 = vmatmul.mubr.f32.gmra.mrb[0].mxu0 %v3325
      %v3442 = vpop.f32.mrb[0].mxu0
      %v3443 = vadd.f32 0.0, %v3442
      %v3444 = vpop.f32.mrb[0].mxu0
      %3445 = vmatprep.mubr.f32.mxu0 0.0
      %3446 = vmatmul.mubr.f32.gmra.mrb[0].mxu0 %v3324
      %v3447 = vpop.f32.mrb[0].mxu0
      %v3448 = vadd.f32 0.0, %v3447
      %v3449 = vpop.f32.mrb[0].mxu0
      %3450 = vmatprep.mubr.f32.mxu0 0.0
      %3451 = vmatmul.mubr.f32.gmra.mrb[0].mxu0 %v3323
      %v3452 = vpop.f32.mrb[0].mxu0
      %v3453 = vadd.f32 0.0, %v3452
      %v3454 = vpop.f32.mrb[0].mxu0
      %3455 = vmatprep.mubr.f32.mxu0 0.0
      %3456 = vmatmul.mubr.f32.gmra.mrb[0].mxu0 %v3322
      %v3457 = vpop.f32.mrb[0].mxu0
      %v3458 = vadd.f32 0.0, %v3457
      %v3459 = vpop.f32.mrb[0].mxu0
      %3460 = vmatprep.mubr.f32.mxu0 0.0
      %3461 = vmatmul.mubr.f32.gmra.mrb[0].mxu0 %v3321
      %v3462 = vpop.f32.mrb[0].mxu0
      %v3463 = vadd.f32 0.0, %v3462
      %v3464 = vpop.f32.mrb[0].mxu0
      %3465 = vmatprep.mubr.f32.mxu0 0.0
      %3466 = vmatmul.mubr.f32.gmra.mrb[0].mxu0 %v3320
      %v3467 = vpop.f32.mrb[0].mxu0
      %v3468 = vadd.f32 0.0, %v3467
      %v3469 = vpop.f32.mrb[0].mxu0
      %3470 = vmatprep.mubr.f32.mxu0 0.0
      %3471 = vmatmul.mubr.f32.gmra.mrb[0].mxu0 %v3319
      %v3472 = vpop.f32.mrb[0].mxu0
      %v3473 = vadd.f32 0.0, %v3472
      %v3474 = vpop.f32.mrb[0].mxu0
      %3475 = vmatprep.mubr.f32.mxu0 0.0
      %3476 = vmatmul.mubr.f32.gmra.mrb[0].mxu0 %v3318
      %v3477 = vpop.f32.mrb[0].mxu0
      %v3478 = vadd.f32 0.0, %v3477
      %v3479 = vpop.f32.mrb[0].mxu0
      %3480 = vmatprep.mubr.f32.mxu0 0.0
      %3481 = vmatmul.mubr.f32.gmra.mrb[0].mxu0 %v3317
      %v3482 = vpop.f32.mrb[0].mxu0
      %v3483 = vadd.f32 0.0, %v3482
      %v3484 = vpop.f32.mrb[0].mxu0
      %3485 = vmatprep.mubr.f32.mxu0 0.0
      %3486 = vmatmul.mubr.f32.gmra.mrb[0].mxu0 %v3316
      %v3487 = vpop.f32.mrb[0].mxu0
      %v3488 = vadd.f32 0.0, %v3487
      %v3489 = vpop.f32.mrb[0].mxu0
      %3490 = vmatprep.mubr.f32.mxu0 0.0
      %3491 = vmatmul.mubr.f32.gmra.mrb[0].mxu0 %v3315
      %v3492 = vpop.f32.mrb[0].mxu0
      %v3493 = vadd.f32 0.0, %v3492
      %v3494 = vpop.f32.mrb[0].mxu0
      %3495 = vmatprep.mubr.f32.mxu0 0.0
      %3496 = vmatmul.mubr.f32.gmra.mrb[0].mxu0 %v3314
      %v3497 = vpop.f32.mrb[0].mxu0
      %v3498 = vadd.f32 0.0, %v3497
      %v3499 = vpop.f32.mrb[0].mxu0
      %3500 = vmatprep.mubr.f32.mxu0 0.0
      %3501 = vmatmul.mubr.f32.gmra.mrb[0].mxu0 %v3313
      %v3502 = vpop.f32.mrb[0].mxu0
      %v3503 = vadd.f32 0.0, %v3502
      %v3504 = vpop.f32.mrb[0].mxu0
      %3505 = vmatprep.mubr.f32.mxu0 0.0
      %3506 = vmatmul.mubr.f32.gmra.mrb[0].mxu0 %v3312
      %v3507 = vpop.f32.mrb[0].mxu0
      %v3508 = vadd.f32 0.0, %v3507
      %v3509 = vpop.f32.mrb[0].mxu0
      %3510 = vmatprep.mubr.f32.mxu0 0.0
      %3511 = vmatmul.mubr.f32.gmra.mrb[0].mxu0 %v3311
      %v3512 = vpop.f32.mrb[0].mxu0
      %v3513 = vadd.f32 0.0, %v3512
      %v3514 = vpop.f32.mrb[0].mxu0
      %3515 = vmatprep.mubr.f32.mxu0 0.0
      %3516 = vmatmul.mubr.f32.gmra.mrb[0].mxu0 %v3310
      %v3517 = vpop.f32.mrb[0].mxu0
      %v3518 = vadd.f32 0.0, %v3517
      %v3519 = vpop.f32.mrb[0].mxu0
      %3520 = vmatprep.mubr.f32.mxu0 0.0
      %3521 = vmatmul.mubr.f32.gmra.mrb[0].mxu0 %v3309
      %v3522 = vpop.f32.mrb[0].mxu0
      %v3523 = vadd.f32 0.0, %v3522
      %v3524 = vpop.f32.mrb[0].mxu0
      %3525 = vmatprep.mubr.f32.mxu0 0.0
      %3526 = vmatmul.mubr.f32.gmra.mrb[0].mxu0 %v3308
      %v3527 = vpop.f32.mrb[0].mxu0
      %v3528 = vadd.f32 0.0, %v3527
      %v3529 = vpop.f32.mrb[0].mxu0
      %3530 = vmatprep.mubr.f32.mxu0 0.0
      %3531 = vmatmul.mubr.f32.gmra.mrb[0].mxu0 %v3307
      %v3532 = vpop.f32.mrb[0].mxu0
      %v3533 = vadd.f32 0.0, %v3532
      %v3534 = vpop.f32.mrb[0].mxu0
      %3535 = vmatprep.mubr.f32.mxu0 0.0
      %3536 = vmatmul.mubr.f32.gmra.mrb[0].mxu0 %v3306
      %v3537 = vpop.f32.mrb[0].mxu0
      %v3538 = vadd.f32 0.0, %v3537
      %v3539 = vpop.f32.mrb[0].mxu0
      %3540 = vmatprep.mubr.f32.mxu0 0.0
      %3541 = vmatmul.mubr.f32.gmra.mrb[0].mxu0 %v3305
      %v3542 = vpop.f32.mrb[0].mxu0
      %v3543 = vadd.f32 0.0, %v3542
      %v3544 = vpop.f32.mrb[0].mxu0
      %3545 = vmatprep.mubr.f32.mxu0 0.0
      %3546 = vmatmul.mubr.f32.gmra.mrb[0].mxu0 %v3304
      %v3547 = vpop.f32.mrb[0].mxu0
      %v3548 = vadd.f32 0.0, %v3547
      %v3549 = vpop.f32.mrb[0].mxu0
      %3550 = vmatprep.mubr.f32.mxu0 0.0
      %3551 = vmatmul.mubr.f32.gmra.mrb[0].mxu0 %v3303
      %v3552 = vpop.f32.mrb[0].mxu0
      %v3553 = vadd.f32 0.0, %v3552
      %v3554 = vpop.f32.mrb[0].mxu0
      %3555 = vmatprep.mubr.f32.mxu0 0.0
      %3556 = vmatmul.mubr.f32.gmra.mrb[0].mxu0 %v3302
      %v3557 = vpop.f32.mrb[0].mxu0
      %v3558 = vadd.f32 0.0, %v3557
      %v3559 = vpop.f32.mrb[0].mxu0
      %3560 = vmatprep.mubr.f32.mxu0 0.0
      %3561 = vmatmul.mubr.f32.gmra.mrb[0].mxu0 %v3301
      %v3562 = vpop.f32.mrb[0].mxu0
      %v3563 = vadd.f32 0.0, %v3562
      %v3564 = vpop.f32.mrb[0].mxu0
      %3565 = vmatprep.mubr.f32.mxu0 0.0
      %3566 = vmatmul.mubr.f32.gmra.mrb[0].mxu0 %v3300
      %v3567 = vpop.f32.mrb[0].mxu0
      %v3568 = vadd.f32 0.0, %v3567
      %v3569 = vpop.f32.mrb[0].mxu0
      %3570 = vmatprep.mubr.f32.mxu0 0.0
      %3571 = vmatmul.mubr.f32.gmra.mrb[0].mxu0 %v3299
      %v3572 = vpop.f32.mrb[0].mxu0
      %v3573 = vadd.f32 0.0, %v3572
      %v3574 = vpop.f32.mrb[0].mxu0
      %3575 = vmatprep.mubr.f32.mxu0 0.0
      %3576 = vmatmul.mubr.f32.gmra.mrb[0].mxu0 %v3298
      %v3577 = vpop.f32.mrb[0].mxu0
      %v3578 = vadd.f32 0.0, %v3577
      %v3579 = vpop.f32.mrb[0].mxu0
      %3580 = vmatprep.mubr.f32.mxu0 0.0
      %3581 = vmatmul.mubr.f32.gmra.mrb[0].mxu0 %v3297
      %v3582 = vpop.f32.mrb[0].mxu0
      %v3583 = vadd.f32 0.0, %v3582
      %v3584 = vpop.f32.mrb[0].mxu0
      %3585 = vmatprep.mubr.f32.mxu0 0.0
      %3586 = vmatmul.mubr.f32.gmra.mrb[0].mxu0 %v3296
      %v3587 = vpop.f32.mrb[0].mxu0
      %v3588 = vadd.f32 0.0, %v3587
      %v3589 = vpop.f32.mrb[0].mxu0
      %3590 = vmatprep.mubr.f32.mxu0 0.0
      %3591 = vmatmul.mubr.f32.gmra.mrb[0].mxu0 %v3295
      %v3592 = vpop.f32.mrb[0].mxu0
      %v3593 = vadd.f32 0.0, %v3592
      %v3594 = vpop.f32.mrb[0].mxu0
      %3595 = vmatprep.mubr.f32.mxu0 0.0
      %3596 = vmatmul.mubr.f32.gmra.mrb[0].mxu0 %v3294
      %v3597 = vpop.f32.mrb[0].mxu0
      %v3598 = vadd.f32 0.0, %v3597
      %v3599 = vpop.f32.mrb[0].mxu0
      %3600 = vmatprep.mubr.f32.mxu0 0.0
      %3601 = vmatmul.mubr.f32.gmra.mrb[0].mxu0 %v3293
      %v3602 = vpop.f32.mrb[0].mxu0
      %v3603 = vadd.f32 0.0, %v3602
      %v3604 = vpop.f32.mrb[0].mxu0
      %3605 = vmatprep.mubr.f32.mxu0 0.0
      %3606 = vmatmul.mubr.f32.gmra.mrb[0].mxu0 %v3333
      %v3607 = vpop.f32.mrb[0].mxu0
      %v3608 = vadd.f32 0.0, %v3607
      %v3609 = vpop.f32.mrb[0].mxu0
      %3610 = vmatprep.mubr.f32.mxu0 0.0
      %3611 = vmatmul.mubr.f32.gmra.mrb[0].mxu0 %v3332
      %v3612 = vpop.f32.mrb[0].mxu0
      %v3613 = vadd.f32 0.0, %v3612
      %v3614 = vpop.f32.mrb[0].mxu0
      %3615 = vmatprep.mubr.f32.mxu0 0.0
      %3616 = vmatmul.mubr.f32.gmra.mrb[0].mxu0 %v3331
      %v3617 = vpop.f32.mrb[0].mxu0
      %v3618 = vadd.f32 0.0, %v3617
      %v3619 = vpop.f32.mrb[0].mxu0
      %3620 = vdwg.mxu0
      %v3621 = vadd.f32 %v3210, %v3418
      %v3622 = vadd.f32 %v3211, %v3423
      %v3623 = vadd.f32 %v3212, %v3428
      %v3624 = vadd.f32 %v3213, %v3433
      %v3625 = vadd.f32 %v3214, %v3438
      %v3626 = vadd.f32 %v3215, %v3443
      %v3627 = vadd.f32 %v3216, %v3448
      %v3628 = vadd.f32 %v3217, %v3453
      %v3629 = vadd.f32 %v3218, %v3458
      %v3630 = vadd.f32 %v3219, %v3463
      %v3631 = vadd.f32 %v3220, %v3468
      %v3632 = vadd.f32 %v3221, %v3473
      %v3633 = vadd.f32 %v3222, %v3478
      %v3634 = vadd.f32 %v3223, %v3483
      %v3635 = vadd.f32 %v3224, %v3488
      %v3636 = vadd.f32 %v3225, %v3493
      %v3637 = vadd.f32 %v3226, %v3498
      %v3638 = vadd.f32 %v3227, %v3503
      %v3639 = vadd.f32 %v3228, %v3508
      %v3640 = vadd.f32 %v3229, %v3513
      %v3641 = vadd.f32 %v3230, %v3518
      %v3642 = vadd.f32 %v3231, %v3523
      %v3643 = vadd.f32 %v3232, %v3528
      %v3644 = vadd.f32 %v3233, %v3533
      %v3645 = vadd.f32 %v3234, %v3538
      %v3646 = vadd.f32 %v3235, %v3543
      %v3647 = vadd.f32 %v3236, %v3548
      %v3648 = vadd.f32 %v3237, %v3553
      %v3649 = vadd.f32 %v3238, %v3558
      %v3650 = vadd.f32 %v3239, %v3563
      %v3651 = vadd.f32 %v3240, %v3568
      %v3652 = vadd.f32 %v3241, %v3573
      %v3653 = vadd.f32 %v3242, %v3578
      %v3654 = vadd.f32 %v3243, %v3583
      %v3655 = vadd.f32 %v3244, %v3588
      %v3656 = vadd.f32 %v3245, %v3593
      %v3657 = vadd.f32 %v3246, %v3598
      %v3658 = vadd.f32 %v3247, %v3603
      %v3659 = vadd.f32 %v3248, %v3608
      %v3660 = vadd.f32 %v3249, %v3613
      %v3661 = vadd.f32 %v3250, %v3618
      %v3662 = vld [vmem:[%s3] sm:$0x1]
      %v3664 = vlaneseq
      %v3665 = vshrl.u32 %v3664, 7
      %v3666 = vsub.s32 0, %v3665
      %v3667 = vrot.slane %v3662, %v3666
      %v3669 = vadd.f32 %v3621, %v3667
      %v3670 = vadd.f32 %v3622, %v3667
      %v3671 = vadd.f32 %v3623, %v3667
      %v3672 = vadd.f32 %v3624, %v3667
      %v3673 = vadd.f32 %v3625, %v3667
      %v3674 = vadd.f32 %v3626, %v3667
      %v3675 = vadd.f32 %v3627, %v3667
      %v3676 = vadd.f32 %v3628, %v3667
      %v3677 = vadd.f32 %v3629, %v3667
      %v3678 = vadd.f32 %v3630, %v3667
      %v3679 = vadd.f32 %v3631, %v3667
      %v3680 = vadd.f32 %v3632, %v3667
      %v3681 = vadd.f32 %v3633, %v3667
      %v3682 = vadd.f32 %v3634, %v3667
      %v3683 = vadd.f32 %v3635, %v3667
      %v3684 = vadd.f32 %v3636, %v3667
      %v3685 = vadd.f32 %v3637, %v3667
      %v3686 = vadd.f32 %v3638, %v3667
      %v3687 = vadd.f32 %v3639, %v3667
      %v3688 = vadd.f32 %v3640, %v3667
      %v3689 = vadd.f32 %v3641, %v3667
      %v3690 = vadd.f32 %v3642, %v3667
      %v3691 = vadd.f32 %v3643, %v3667
      %v3692 = vadd.f32 %v3644, %v3667
      %v3693 = vadd.f32 %v3645, %v3667
      %v3694 = vadd.f32 %v3646, %v3667
      %v3695 = vadd.f32 %v3647, %v3667
      %v3696 = vadd.f32 %v3648, %v3667
      %v3697 = vadd.f32 %v3649, %v3667
      %v3698 = vadd.f32 %v3650, %v3667
      %v3699 = vadd.f32 %v3651, %v3667
      %v3700 = vadd.f32 %v3652, %v3667
      %v3701 = vadd.f32 %v3653, %v3667
      %v3702 = vadd.f32 %v3654, %v3667
      %v3703 = vadd.f32 %v3655, %v3667
      %v3704 = vadd.f32 %v3656, %v3667
      %v3705 = vadd.f32 %v3657, %v3667
      %v3706 = vadd.f32 %v3658, %v3667
      %v3707 = vadd.f32 %v3659, %v3667
      %v3708 = vadd.f32 %v3660, %v3667
      %v3709 = vadd.f32 %v3661, %v3667
      %v3710 = vmul.f32 %v3669, 0.5
      %v3711 = vmul.f32 %v3670, 0.5
      %v3712 = vmul.f32 %v3671, 0.5
      %v3713 = vmul.f32 %v3672, 0.5
      %v3714 = vmul.f32 %v3673, 0.5
      %v3715 = vmul.f32 %v3674, 0.5
      %v3716 = vmul.f32 %v3675, 0.5
      %v3717 = vmul.f32 %v3676, 0.5
      %v3718 = vmul.f32 %v3677, 0.5
      %v3719 = vmul.f32 %v3678, 0.5
      %v3720 = vmul.f32 %v3679, 0.5
      %v3721 = vmul.f32 %v3680, 0.5
      %v3722 = vmul.f32 %v3681, 0.5
      %v3723 = vmul.f32 %v3682, 0.5
      %v3724 = vmul.f32 %v3683, 0.5
      %v3725 = vmul.f32 %v3684, 0.5
      %v3726 = vmul.f32 %v3685, 0.5
      %v3727 = vmul.f32 %v3686, 0.5
      %v3728 = vmul.f32 %v3687, 0.5
      %v3729 = vmul.f32 %v3688, 0.5
      %v3730 = vmul.f32 %v3689, 0.5
      %v3731 = vmul.f32 %v3690, 0.5
      %v3732 = vmul.f32 %v3691, 0.5
      %v3733 = vmul.f32 %v3692, 0.5
      %v3734 = vmul.f32 %v3693, 0.5
      %v3735 = vmul.f32 %v3694, 0.5
      %v3736 = vmul.f32 %v3695, 0.5
      %v3737 = vmul.f32 %v3696, 0.5
      %v3738 = vmul.f32 %v3697, 0.5
      %v3739 = vmul.f32 %v3698, 0.5
      %v3740 = vmul.f32 %v3699, 0.5
      %v3741 = vmul.f32 %v3700, 0.5
      %v3742 = vmul.f32 %v3701, 0.5
      %v3743 = vmul.f32 %v3702, 0.5
      %v3744 = vmul.f32 %v3703, 0.5
      %v3745 = vmul.f32 %v3704, 0.5
      %v3746 = vmul.f32 %v3705, 0.5
      %v3747 = vmul.f32 %v3706, 0.5
      %v3748 = vmul.f32 %v3707, 0.5
      %v3749 = vmul.f32 %v3708, 0.5
      %v3750 = vmul.f32 %v3709, 0.5
      %v3751 = vmul.f32 %v3669, 0.70710677
      %v3752 = vmul.f32 %v3670, 0.70710677
      %v3753 = vmul.f32 %v3671, 0.70710677
      %v3754 = vmul.f32 %v3672, 0.70710677
      %v3755 = vmul.f32 %v3673, 0.70710677
      %v3756 = vmul.f32 %v3674, 0.70710677
      %v3757 = vmul.f32 %v3675, 0.70710677
      %v3758 = vmul.f32 %v3676, 0.70710677
      %v3759 = vmul.f32 %v3677, 0.70710677
      %v3760 = vmul.f32 %v3678, 0.70710677
      %v3761 = vmul.f32 %v3679, 0.70710677
      %v3762 = vmul.f32 %v3680, 0.70710677
      %v3763 = vmul.f32 %v3681, 0.70710677
      %v3764 = vmul.f32 %v3682, 0.70710677
      %v3765 = vmul.f32 %v3683, 0.70710677
      %v3766 = vmul.f32 %v3684, 0.70710677
      %v3767 = vmul.f32 %v3685, 0.70710677
      %v3768 = vmul.f32 %v3686, 0.70710677
      %v3769 = vmul.f32 %v3687, 0.70710677
      %v3770 = vmul.f32 %v3688, 0.70710677
      %v3771 = vmul.f32 %v3689, 0.70710677
      %v3772 = vmul.f32 %v3690, 0.70710677
      %v3773 = vmul.f32 %v3691, 0.70710677
      %v3774 = vmul.f32 %v3692, 0.70710677
      %v3775 = vmul.f32 %v3693, 0.70710677
      %v3776 = vmul.f32 %v3694, 0.70710677
      %v3777 = vmul.f32 %v3695, 0.70710677
      %v3778 = vmul.f32 %v3696, 0.70710677
      %v3779 = vmul.f32 %v3697, 0.70710677
      %v3780 = vmul.f32 %v3698, 0.70710677
      %v3781 = vmul.f32 %v3699, 0.70710677
      %v3782 = vmul.f32 %v3700, 0.70710677
      %v3783 = vmul.f32 %v3701, 0.70710677
      %v3784 = vmul.f32 %v3702, 0.70710677
      %v3785 = vmul.f32 %v3703, 0.70710677
      %v3786 = vmul.f32 %v3704, 0.70710677
      %v3787 = vmul.f32 %v3705, 0.70710677
      %v3788 = vmul.f32 %v3706, 0.70710677
      %v3789 = vmul.f32 %v3707, 0.70710677
      %v3790 = vmul.f32 %v3708, 0.70710677
      %v3791 = vmul.f32 %v3709, 0.70710677
      %v3792 = verf.f32.pop %v3751
      %v3793 = verf.f32.pop %v3752
      %v3794 = verf.f32.pop %v3753
      %v3795 = verf.f32.pop %v3754
      %v3796 = verf.f32.pop %v3755
      %v3797 = verf.f32.pop %v3756
      %v3798 = verf.f32.pop %v3757
      %v3799 = verf.f32.pop %v3758
      %v3800 = verf.f32.pop %v3759
      %v3801 = verf.f32.pop %v3760
      %v3802 = verf.f32.pop %v3761
      %v3803 = verf.f32.pop %v3762
      %v3804 = verf.f32.pop %v3763
      %v3805 = verf.f32.pop %v3764
      %v3806 = verf.f32.pop %v3765
      %v3807 = verf.f32.pop %v3766
      %v3808 = verf.f32.pop %v3767
      %v3809 = verf.f32.pop %v3768
      %v3810 = verf.f32.pop %v3769
      %v3811 = verf.f32.pop %v3770
      %v3812 = verf.f32.pop %v3771
      %v3813 = verf.f32.pop %v3772
      %v3814 = verf.f32.pop %v3773
      %v3815 = verf.f32.pop %v3774
      %v3816 = verf.f32.pop %v3775
      %v3817 = verf.f32.pop %v3776
      %v3818 = verf.f32.pop %v3777
      %v3819 = verf.f32.pop %v3778
      %v3820 = verf.f32.pop %v3779
      %v3821 = verf.f32.pop %v3780
      %v3822 = verf.f32.pop %v3781
      %v3823 = verf.f32.pop %v3782
      %v3824 = verf.f32.pop %v3783
      %v3825 = verf.f32.pop %v3784
      %v3826 = verf.f32.pop %v3785
      %v3827 = verf.f32.pop %v3786
      %v3828 = verf.f32.pop %v3787
      %v3829 = verf.f32.pop %v3788
      %v3830 = verf.f32.pop %v3789
      %v3831 = verf.f32.pop %v3790
      %v3832 = verf.f32.pop %v3791
      %v3833 = vadd.f32 %v3792, 1.0
      %v3834 = vadd.f32 %v3793, 1.0
      %v3835 = vadd.f32 %v3794, 1.0
      %v3836 = vadd.f32 %v3795, 1.0
      %v3837 = vadd.f32 %v3796, 1.0
      %v3838 = vadd.f32 %v3797, 1.0
      %v3839 = vadd.f32 %v3798, 1.0
      %v3840 = vadd.f32 %v3799, 1.0
      %v3841 = vadd.f32 %v3800, 1.0
      %v3842 = vadd.f32 %v3801, 1.0
      %v3843 = vadd.f32 %v3802, 1.0
      %v3844 = vadd.f32 %v3803, 1.0
      %v3845 = vadd.f32 %v3804, 1.0
      %v3846 = vadd.f32 %v3805, 1.0
      %v3847 = vadd.f32 %v3806, 1.0
      %v3848 = vadd.f32 %v3807, 1.0
      %v3849 = vadd.f32 %v3808, 1.0
      %v3850 = vadd.f32 %v3809, 1.0
      %v3851 = vadd.f32 %v3810, 1.0
      %v3852 = vadd.f32 %v3811, 1.0
      %v3853 = vadd.f32 %v3812, 1.0
      %v3854 = vadd.f32 %v3813, 1.0
      %v3855 = vadd.f32 %v3814, 1.0
      %v3856 = vadd.f32 %v3815, 1.0
      %v3857 = vadd.f32 %v3816, 1.0
      %v3858 = vadd.f32 %v3817, 1.0
      %v3859 = vadd.f32 %v3818, 1.0
      %v3860 = vadd.f32 %v3819, 1.0
      %v3861 = vadd.f32 %v3820, 1.0
      %v3862 = vadd.f32 %v3821, 1.0
      %v3863 = vadd.f32 %v3822, 1.0
      %v3864 = vadd.f32 %v3823, 1.0
      %v3865 = vadd.f32 %v3824, 1.0
      %v3866 = vadd.f32 %v3825, 1.0
      %v3867 = vadd.f32 %v3826, 1.0
      %v3868 = vadd.f32 %v3827, 1.0
      %v3869 = vadd.f32 %v3828, 1.0
      %v3870 = vadd.f32 %v3829, 1.0
      %v3871 = vadd.f32 %v3830, 1.0
      %v3872 = vadd.f32 %v3831, 1.0
      %v3873 = vadd.f32 %v3832, 1.0
      %v3874 = vmul.f32 %v3710, %v3833
      %v3875 = vmul.f32 %v3711, %v3834
      %v3876 = vmul.f32 %v3712, %v3835
      %v3877 = vmul.f32 %v3713, %v3836
      %v3878 = vmul.f32 %v3714, %v3837
      %v3879 = vmul.f32 %v3715, %v3838
      %v3880 = vmul.f32 %v3716, %v3839
      %v3881 = vmul.f32 %v3717, %v3840
      %v3882 = vmul.f32 %v3718, %v3841
      %v3883 = vmul.f32 %v3719, %v3842
      %v3884 = vmul.f32 %v3720, %v3843
      %v3885 = vmul.f32 %v3721, %v3844
      %v3886 = vmul.f32 %v3722, %v3845
      %v3887 = vmul.f32 %v3723, %v3846
      %v3888 = vmul.f32 %v3724, %v3847
      %v3889 = vmul.f32 %v3725, %v3848
      %v3890 = vmul.f32 %v3726, %v3849
      %v3891 = vmul.f32 %v3727, %v3850
      %v3892 = vmul.f32 %v3728, %v3851
      %v3893 = vmul.f32 %v3729, %v3852
      %v3894 = vmul.f32 %v3730, %v3853
      %v3895 = vmul.f32 %v3731, %v3854
      %v3896 = vmul.f32 %v3732, %v3855
      %v3897 = vmul.f32 %v3733, %v3856
      %v3898 = vmul.f32 %v3734, %v3857
      %v3899 = vmul.f32 %v3735, %v3858
      %v3900 = vmul.f32 %v3736, %v3859
      %v3901 = vmul.f32 %v3737, %v3860
      %v3902 = vmul.f32 %v3738, %v3861
      %v3903 = vmul.f32 %v3739, %v3862
      %v3904 = vmul.f32 %v3740, %v3863
      %v3905 = vmul.f32 %v3741, %v3864
      %v3906 = vmul.f32 %v3742, %v3865
      %v3907 = vmul.f32 %v3743, %v3866
      %v3908 = vmul.f32 %v3744, %v3867
      %v3909 = vmul.f32 %v3745, %v3868
      %v3910 = vmul.f32 %v3746, %v3869
      %v3911 = vmul.f32 %v3747, %v3870
      %v3912 = vmul.f32 %v3748, %v3871
      %v3913 = vmul.f32 %v3749, %v3872
      %v3914 = vmul.f32 %v3750, %v3873
      %v3915 = vld [vmem:[%s1] sm:$0xff]
      %v3916 = vld [vmem:[%s1 + $0x8] sm:$0xff]
      %v3917 = vld [vmem:[%s1 + $0x10] sm:$0xff]
      %v3918 = vld [vmem:[%s1 + $0x18] sm:$0xff]
      %v3919 = vld [vmem:[%s1 + $0x20] sm:$0xff]
      %v3920 = vld [vmem:[%s1 + $0x28] sm:$0xff]
      %v3921 = vld [vmem:[%s1 + $0x30] sm:$0xff]
      %v3922 = vld [vmem:[%s1 + $0x38] sm:$0xff]
      %v3923 = vld [vmem:[%s1 + $0x40] sm:$0xff]
      %v3924 = vld [vmem:[%s1 + $0x48] sm:$0xff]
      %v3925 = vld [vmem:[%s1 + $0x50] sm:$0xff]
      %v3926 = vld [vmem:[%s1 + $0x58] sm:$0xff]
      %v3927 = vld [vmem:[%s1 + $0x60] sm:$0xff]
      %v3928 = vld [vmem:[%s1 + $0x68] sm:$0xff]
      %v3929 = vld [vmem:[%s1 + $0x70] sm:$0xff]
      %v3930 = vld [vmem:[%s1 + $0x78] sm:$0xff]
      %v3931 = vld [vmem:[%s1 + $0x80] sm:$0xff]
      %v3932 = vld [vmem:[%s1 + $0x88] sm:$0xff]
      %v3933 = vld [vmem:[%s1 + $0x90] sm:$0xff]
      %v3934 = vld [vmem:[%s1 + $0x98] sm:$0xff]
      %v3935 = vld [vmem:[%s1 + $0xa0] sm:$0xff]
      %v3936 = vld [vmem:[%s1 + $0xa8] sm:$0xff]
      %v3937 = vld [vmem:[%s1 + $0xb0] sm:$0xff]
      %v3938 = vld [vmem:[%s1 + $0xb8] sm:$0xff]
      %v3939 = vld [vmem:[%s1 + $0xc0] sm:$0xff]
      %v3940 = vld [vmem:[%s1 + $0xc8] sm:$0xff]
      %v3941 = vld [vmem:[%s1 + $0xd0] sm:$0xff]
      %v3942 = vld [vmem:[%s1 + $0xd8] sm:$0xff]
      %v3943 = vld [vmem:[%s1 + $0xe0] sm:$0xff]
      %v3944 = vld [vmem:[%s1 + $0xe8] sm:$0xff]
      %v3945 = vld [vmem:[%s1 + $0xf0] sm:$0xff]
      %v3946 = vld [vmem:[%s1 + $0xf8] sm:$0xff]
      %v3947 = vld [vmem:[%s1 + $0x100] sm:$0xff]
      %v3948 = vld [vmem:[%s1 + $0x108] sm:$0xff]
      %v3949 = vld [vmem:[%s1 + $0x110] sm:$0xff]
      %v3950 = vld [vmem:[%s1 + $0x118] sm:$0xff]
      %v3951 = vld [vmem:[%s1 + $0x120] sm:$0xff]
      %v3952 = vld [vmem:[%s1 + $0x128] sm:$0xff]
      %v3953 = vld [vmem:[%s1 + $0x130] sm:$0xff]
      %v3954 = vld [vmem:[%s1 + $0x138] sm:$0xff]
      %v3955 = vld [vmem:[%s1 + $0x140] sm:$0xff]
      %3957 = vset.pattern.permute.xlu0 0
      %3958 = vperm.xlu0 %3957, %v3915
      %v3959 = vpop.permute.xlu0 %3958
      %3962 = vset.pattern.permute.xlu0 0
      %3963 = vperm.xlu0 %3962, %v3916
      %v3964 = vpop.permute.xlu0 %3963
      %3967 = vset.pattern.permute.xlu0 0
      %3968 = vperm.xlu0 %3967, %v3917
      %v3969 = vpop.permute.xlu0 %3968
      %3972 = vset.pattern.permute.xlu0 0
      %3973 = vperm.xlu0 %3972, %v3918
      %v3974 = vpop.permute.xlu0 %3973
      %3977 = vset.pattern.permute.xlu0 0
      %3978 = vperm.xlu0 %3977, %v3919
      %v3979 = vpop.permute.xlu0 %3978
      %3982 = vset.pattern.permute.xlu0 0
      %3983 = vperm.xlu0 %3982, %v3920
      %v3984 = vpop.permute.xlu0 %3983
      %3987 = vset.pattern.permute.xlu0 0
      %3988 = vperm.xlu0 %3987, %v3921
      %v3989 = vpop.permute.xlu0 %3988
      %3992 = vset.pattern.permute.xlu0 0
      %3993 = vperm.xlu0 %3992, %v3922
      %v3994 = vpop.permute.xlu0 %3993
      %3997 = vset.pattern.permute.xlu0 0
      %3998 = vperm.xlu0 %3997, %v3923
      %v3999 = vpop.permute.xlu0 %3998
      %4002 = vset.pattern.permute.xlu0 0
      %4003 = vperm.xlu0 %4002, %v3924
      %v4004 = vpop.permute.xlu0 %4003
      %4007 = vset.pattern.permute.xlu0 0
      %4008 = vperm.xlu0 %4007, %v3925
      %v4009 = vpop.permute.xlu0 %4008
      %4012 = vset.pattern.permute.xlu0 0
      %4013 = vperm.xlu0 %4012, %v3926
      %v4014 = vpop.permute.xlu0 %4013
      %4017 = vset.pattern.permute.xlu0 0
      %4018 = vperm.xlu0 %4017, %v3927
      %v4019 = vpop.permute.xlu0 %4018
      %4022 = vset.pattern.permute.xlu0 0
      %4023 = vperm.xlu0 %4022, %v3928
      %v4024 = vpop.permute.xlu0 %4023
      %4027 = vset.pattern.permute.xlu0 0
      %4028 = vperm.xlu0 %4027, %v3929
      %v4029 = vpop.permute.xlu0 %4028
      %4032 = vset.pattern.permute.xlu0 0
      %4033 = vperm.xlu0 %4032, %v3930
      %v4034 = vpop.permute.xlu0 %4033
      %4037 = vset.pattern.permute.xlu0 0
      %4038 = vperm.xlu0 %4037, %v3931
      %v4039 = vpop.permute.xlu0 %4038
      %4042 = vset.pattern.permute.xlu0 0
      %4043 = vperm.xlu0 %4042, %v3932
      %v4044 = vpop.permute.xlu0 %4043
      %4047 = vset.pattern.permute.xlu0 0
      %4048 = vperm.xlu0 %4047, %v3933
      %v4049 = vpop.permute.xlu0 %4048
      %4052 = vset.pattern.permute.xlu0 0
      %4053 = vperm.xlu0 %4052, %v3934
      %v4054 = vpop.permute.xlu0 %4053
      %4057 = vset.pattern.permute.xlu0 0
      %4058 = vperm.xlu0 %4057, %v3935
      %v4059 = vpop.permute.xlu0 %4058
      %4062 = vset.pattern.permute.xlu0 0
      %4063 = vperm.xlu0 %4062, %v3936
      %v4064 = vpop.permute.xlu0 %4063
      %4067 = vset.pattern.permute.xlu0 0
      %4068 = vperm.xlu0 %4067, %v3937
      %v4069 = vpop.permute.xlu0 %4068
      %4072 = vset.pattern.permute.xlu0 0
      %4073 = vperm.xlu0 %4072, %v3938
      %v4074 = vpop.permute.xlu0 %4073
      %4077 = vset.pattern.permute.xlu0 0
      %4078 = vperm.xlu0 %4077, %v3939
      %v4079 = vpop.permute.xlu0 %4078
      %4082 = vset.pattern.permute.xlu0 0
      %4083 = vperm.xlu0 %4082, %v3940
      %v4084 = vpop.permute.xlu0 %4083
      %4087 = vset.pattern.permute.xlu0 0
      %4088 = vperm.xlu0 %4087, %v3941
      %v4089 = vpop.permute.xlu0 %4088
      %4092 = vset.pattern.permute.xlu0 0
      %4093 = vperm.xlu0 %4092, %v3942
      %v4094 = vpop.permute.xlu0 %4093
      %4097 = vset.pattern.permute.xlu0 0
      %4098 = vperm.xlu0 %4097, %v3943
      %v4099 = vpop.permute.xlu0 %4098
      %4102 = vset.pattern.permute.xlu0 0
      %4103 = vperm.xlu0 %4102, %v3944
      %v4104 = vpop.permute.xlu0 %4103
      %4107 = vset.pattern.permute.xlu0 0
      %4108 = vperm.xlu0 %4107, %v3945
      %v4109 = vpop.permute.xlu0 %4108
      %4112 = vset.pattern.permute.xlu0 0
      %4113 = vperm.xlu0 %4112, %v3946
      %v4114 = vpop.permute.xlu0 %4113
      %4117 = vset.pattern.permute.xlu0 0
      %4118 = vperm.xlu0 %4117, %v3947
      %v4119 = vpop.permute.xlu0 %4118
      %4122 = vset.pattern.permute.xlu0 0
      %4123 = vperm.xlu0 %4122, %v3948
      %v4124 = vpop.permute.xlu0 %4123
      %4127 = vset.pattern.permute.xlu0 0
      %4128 = vperm.xlu0 %4127, %v3949
      %v4129 = vpop.permute.xlu0 %4128
      %4132 = vset.pattern.permute.xlu0 0
      %4133 = vperm.xlu0 %4132, %v3950
      %v4134 = vpop.permute.xlu0 %4133
      %4137 = vset.pattern.permute.xlu0 0
      %4138 = vperm.xlu0 %4137, %v3951
      %v4139 = vpop.permute.xlu0 %4138
      %4142 = vset.pattern.permute.xlu0 0
      %4143 = vperm.xlu0 %4142, %v3952
      %v4144 = vpop.permute.xlu0 %4143
      %4147 = vset.pattern.permute.xlu0 0
      %4148 = vperm.xlu0 %4147, %v3953
      %v4149 = vpop.permute.xlu0 %4148
      %4152 = vset.pattern.permute.xlu0 0
      %4153 = vperm.xlu0 %4152, %v3954
      %v4154 = vpop.permute.xlu0 %4153
      %4157 = vset.pattern.permute.xlu0 0
      %4158 = vperm.xlu0 %4157, %v3955
      %v4159 = vpop.permute.xlu0 %4158
      %v4161 = vmul.f32 %v3874, %v3959
      %v4162 = vmul.f32 %v3875, %v3964
      %v4163 = vmul.f32 %v3876, %v3969
      %v4164 = vmul.f32 %v3877, %v3974
      %v4165 = vmul.f32 %v3878, %v3979
      %v4166 = vmul.f32 %v3879, %v3984
      %v4167 = vmul.f32 %v3880, %v3989
      %v4168 = vmul.f32 %v3881, %v3994
      %v4169 = vmul.f32 %v3882, %v3999
      %v4170 = vmul.f32 %v3883, %v4004
      %v4171 = vmul.f32 %v3884, %v4009
      %v4172 = vmul.f32 %v3885, %v4014
      %v4173 = vmul.f32 %v3886, %v4019
      %v4174 = vmul.f32 %v3887, %v4024
      %v4175 = vmul.f32 %v3888, %v4029
      %v4176 = vmul.f32 %v3889, %v4034
      %v4177 = vmul.f32 %v3890, %v4039
      %v4178 = vmul.f32 %v3891, %v4044
      %v4179 = vmul.f32 %v3892, %v4049
      %v4180 = vmul.f32 %v3893, %v4054
      %v4181 = vmul.f32 %v3894, %v4059
      %v4182 = vmul.f32 %v3895, %v4064
      %v4183 = vmul.f32 %v3896, %v4069
      %v4184 = vmul.f32 %v3897, %v4074
      %v4185 = vmul.f32 %v3898, %v4079
      %v4186 = vmul.f32 %v3899, %v4084
      %v4187 = vmul.f32 %v3900, %v4089
      %v4188 = vmul.f32 %v3901, %v4094
      %v4189 = vmul.f32 %v3902, %v4099
      %v4190 = vmul.f32 %v3903, %v4104
      %v4191 = vmul.f32 %v3904, %v4109
      %v4192 = vmul.f32 %v3905, %v4114
      %v4193 = vmul.f32 %v3906, %v4119
      %v4194 = vmul.f32 %v3907, %v4124
      %v4195 = vmul.f32 %v3908, %v4129
      %v4196 = vmul.f32 %v3909, %v4134
      %v4197 = vmul.f32 %v3910, %v4139
      %v4198 = vmul.f32 %v3911, %v4144
      %v4199 = vmul.f32 %v3912, %v4149
      %v4200 = vmul.f32 %v3913, %v4154
      %v4201 = vmul.f32 %v3914, %v4159
      %v4202 = vrot.slane %v4161, 5
      %v4203 = vrot.slane %v4162, 5
      %v4204 = vrot.slane %v4163, 5
      %v4205 = vrot.slane %v4164, 5
      %v4206 = vrot.slane %v4165, 5
      %v4207 = vrot.slane %v4166, 5
      %v4208 = vrot.slane %v4167, 5
      %v4209 = vrot.slane %v4168, 5
      %v4210 = vrot.slane %v4169, 5
      %v4211 = vrot.slane %v4170, 5
      %v4212 = vrot.slane %v4171, 5
      %v4213 = vrot.slane %v4172, 5
      %v4214 = vrot.slane %v4173, 5
      %v4215 = vrot.slane %v4174, 5
      %v4216 = vrot.slane %v4175, 5
      %v4217 = vrot.slane %v4176, 5
      %v4218 = vrot.slane %v4177, 5
      %v4219 = vrot.slane %v4178, 5
      %v4220 = vrot.slane %v4179, 5
      %v4221 = vrot.slane %v4180, 5
      %v4222 = vrot.slane %v4181, 5
      %v4223 = vrot.slane %v4182, 5
      %v4224 = vrot.slane %v4183, 5
      %v4225 = vrot.slane %v4184, 5
      %v4226 = vrot.slane %v4185, 5
      %v4227 = vrot.slane %v4186, 5
      %v4228 = vrot.slane %v4187, 5
      %v4229 = vrot.slane %v4188, 5
      %v4230 = vrot.slane %v4189, 5
      %v4231 = vrot.slane %v4190, 5
      %v4232 = vrot.slane %v4191, 5
      %v4233 = vrot.slane %v4192, 5
      %v4234 = vrot.slane %v4193, 5
      %v4235 = vrot.slane %v4194, 5
      %v4236 = vrot.slane %v4195, 5
      %v4237 = vrot.slane %v4196, 5
      %v4238 = vrot.slane %v4197, 5
      %v4239 = vrot.slane %v4198, 5
      %v4240 = vrot.slane %v4199, 5
      %v4241 = vrot.slane %v4200, 5
      %v4242 = vrot.slane %v4201, 5
      %v4243 = vsel %vm336, %v4241, %v4242
      %v4244 = vsel %vm336, %v4240, %v4241
      %v4245 = vsel %vm336, %v4239, %v4240
      %v4246 = vsel %vm336, %v4238, %v4239
      %v4247 = vsel %vm336, %v4237, %v4238
      %v4248 = vsel %vm336, %v4236, %v4237
      %v4249 = vsel %vm336, %v4235, %v4236
      %v4250 = vsel %vm336, %v4234, %v4235
      %v4251 = vsel %vm336, %v4233, %v4234
      %v4252 = vsel %vm336, %v4232, %v4233
      %v4253 = vsel %vm336, %v4231, %v4232
      %v4254 = vsel %vm336, %v4230, %v4231
      %v4255 = vsel %vm336, %v4229, %v4230
      %v4256 = vsel %vm336, %v4228, %v4229
      %v4257 = vsel %vm336, %v4227, %v4228
      %v4258 = vsel %vm336, %v4226, %v4227
      %v4259 = vsel %vm336, %v4225, %v4226
      %v4260 = vsel %vm336, %v4224, %v4225
      %v4261 = vsel %vm336, %v4223, %v4224
      %v4262 = vsel %vm336, %v4222, %v4223
      %v4263 = vsel %vm336, %v4221, %v4222
      %v4264 = vsel %vm336, %v4220, %v4221
      %v4265 = vsel %vm336, %v4219, %v4220
      %v4266 = vsel %vm336, %v4218, %v4219
      %v4267 = vsel %vm336, %v4217, %v4218
      %v4268 = vsel %vm336, %v4216, %v4217
      %v4269 = vsel %vm336, %v4215, %v4216
      %v4270 = vsel %vm336, %v4214, %v4215
      %v4271 = vsel %vm336, %v4213, %v4214
      %v4272 = vsel %vm336, %v4212, %v4213
      %v4273 = vsel %vm336, %v4211, %v4212
      %v4274 = vsel %vm336, %v4210, %v4211
      %v4275 = vsel %vm336, %v4209, %v4210
      %v4276 = vsel %vm336, %v4208, %v4209
      %v4277 = vsel %vm336, %v4207, %v4208
      %v4278 = vsel %vm336, %v4206, %v4207
      %v4279 = vsel %vm336, %v4205, %v4206
      %v4280 = vsel %vm336, %v4204, %v4205
      %v4281 = vsel %vm336, %v4203, %v4204
      %v4282 = vsel %vm336, %v4202, %v4203
      %v4283 = vsel %vm336, %v4242, %v4202
      %v4284 = vld [vmem:[%s4] sm:$0xff]
      %v4285 = vld [vmem:[%s4 + $0x8] sm:$0xff]
      %v4286 = vld [vmem:[%s4 + $0x10] sm:$0xff]
      %v4287 = vld [vmem:[%s4 + $0x18] sm:$0xff]
      %v4288 = vld [vmem:[%s4 + $0x20] sm:$0xff]
      %v4289 = vld [vmem:[%s4 + $0x28] sm:$0xff]
      %v4290 = vld [vmem:[%s4 + $0x30] sm:$0xff]
      %v4291 = vld [vmem:[%s4 + $0x38] sm:$0xff]
      %v4292 = vld [vmem:[%s4 + $0x40] sm:$0xff]
      %v4293 = vld [vmem:[%s4 + $0x48] sm:$0xff]
      %v4294 = vld [vmem:[%s4 + $0x50] sm:$0xff]
      %v4295 = vld [vmem:[%s4 + $0x58] sm:$0xff]
      %v4296 = vld [vmem:[%s4 + $0x60] sm:$0xff]
      %v4297 = vld [vmem:[%s4 + $0x68] sm:$0xff]
      %v4298 = vld [vmem:[%s4 + $0x70] sm:$0xff]
      %v4299 = vld [vmem:[%s4 + $0x78] sm:$0xff]
      %v4300 = vrot.slane %v4161, 6
      %v4301 = vrot.slane %v4162, 6
      %v4302 = vrot.slane %v4163, 6
      %v4303 = vrot.slane %v4164, 6
      %v4304 = vrot.slane %v4165, 6
      %v4305 = vrot.slane %v4166, 6
      %v4306 = vrot.slane %v4167, 6
      %v4307 = vrot.slane %v4168, 6
      %v4308 = vrot.slane %v4169, 6
      %v4309 = vrot.slane %v4170, 6
      %v4310 = vrot.slane %v4171, 6
      %v4311 = vrot.slane %v4172, 6
      %v4312 = vrot.slane %v4173, 6
      %v4313 = vrot.slane %v4174, 6
      %v4314 = vrot.slane %v4175, 6
      %v4315 = vrot.slane %v4176, 6
      %v4316 = vrot.slane %v4177, 6
      %v4317 = vrot.slane %v4178, 6
      %v4318 = vrot.slane %v4179, 6
      %v4319 = vrot.slane %v4180, 6
      %v4320 = vrot.slane %v4181, 6
      %v4321 = vrot.slane %v4182, 6
      %v4322 = vrot.slane %v4183, 6
      %v4323 = vrot.slane %v4184, 6
      %v4324 = vrot.slane %v4185, 6
      %v4325 = vrot.slane %v4186, 6
      %v4326 = vrot.slane %v4187, 6
      %v4327 = vrot.slane %v4188, 6
      %v4328 = vrot.slane %v4189, 6
      %v4329 = vrot.slane %v4190, 6
      %v4330 = vrot.slane %v4191, 6
      %v4331 = vrot.slane %v4192, 6
      %v4332 = vrot.slane %v4193, 6
      %v4333 = vrot.slane %v4194, 6
      %v4334 = vrot.slane %v4195, 6
      %v4335 = vrot.slane %v4196, 6
      %v4336 = vrot.slane %v4197, 6
      %v4337 = vrot.slane %v4198, 6
      %v4338 = vrot.slane %v4199, 6
      %v4339 = vrot.slane %v4200, 6
      %v4340 = vrot.slane %v4201, 6
      %v4341 = vsel %vm435, %v4339, %v4340
      %v4342 = vsel %vm435, %v4338, %v4339
      %v4343 = vsel %vm435, %v4337, %v4338
      %v4344 = vsel %vm435, %v4336, %v4337
      %v4345 = vsel %vm435, %v4335, %v4336
      %v4346 = vsel %vm435, %v4334, %v4335
      %v4347 = vsel %vm435, %v4333, %v4334
      %v4348 = vsel %vm435, %v4332, %v4333
      %v4349 = vsel %vm435, %v4331, %v4332
      %v4350 = vsel %vm435, %v4330, %v4331
      %v4351 = vsel %vm435, %v4329, %v4330
      %v4352 = vsel %vm435, %v4328, %v4329
      %v4353 = vsel %vm435, %v4327, %v4328
      %v4354 = vsel %vm435, %v4326, %v4327
      %v4355 = vsel %vm435, %v4325, %v4326
      %v4356 = vsel %vm435, %v4324, %v4325
      %v4357 = vsel %vm435, %v4323, %v4324
      %v4358 = vsel %vm435, %v4322, %v4323
      %v4359 = vsel %vm435, %v4321, %v4322
      %v4360 = vsel %vm435, %v4320, %v4321
      %v4361 = vsel %vm435, %v4319, %v4320
      %v4362 = vsel %vm435, %v4318, %v4319
      %v4363 = vsel %vm435, %v4317, %v4318
      %v4364 = vsel %vm435, %v4316, %v4317
      %v4365 = vsel %vm435, %v4315, %v4316
      %v4366 = vsel %vm435, %v4314, %v4315
      %v4367 = vsel %vm435, %v4313, %v4314
      %v4368 = vsel %vm435, %v4312, %v4313
      %v4369 = vsel %vm435, %v4311, %v4312
      %v4370 = vsel %vm435, %v4310, %v4311
      %v4371 = vsel %vm435, %v4309, %v4310
      %v4372 = vsel %vm435, %v4308, %v4309
      %v4373 = vsel %vm435, %v4307, %v4308
      %v4374 = vsel %vm435, %v4306, %v4307
      %v4375 = vsel %vm435, %v4305, %v4306
      %v4376 = vsel %vm435, %v4304, %v4305
      %v4377 = vsel %vm435, %v4303, %v4304
      %v4378 = vsel %vm435, %v4302, %v4303
      %v4379 = vsel %vm435, %v4301, %v4302
      %v4380 = vsel %vm435, %v4300, %v4301
      %v4381 = vsel %vm435, %v4340, %v4300
      %s4382 = scalar_lea.vmem %s4, 128
      %v4383 = vld [vmem:[%s4382] sm:$0xff]
      %v4384 = vld [vmem:[%s4382 + $0x8] sm:$0xff]
      %v4385 = vld [vmem:[%s4382 + $0x10] sm:$0xff]
      %v4386 = vld [vmem:[%s4382 + $0x18] sm:$0xff]
      %v4387 = vld [vmem:[%s4382 + $0x20] sm:$0xff]
      %v4388 = vld [vmem:[%s4382 + $0x28] sm:$0xff]
      %v4389 = vld [vmem:[%s4382 + $0x30] sm:$0xff]
      %v4390 = vld [vmem:[%s4382 + $0x38] sm:$0xff]
      %v4391 = vld [vmem:[%s4382 + $0x40] sm:$0xff]
      %v4392 = vld [vmem:[%s4382 + $0x48] sm:$0xff]
      %v4393 = vld [vmem:[%s4382 + $0x50] sm:$0xff]
      %v4394 = vld [vmem:[%s4382 + $0x58] sm:$0xff]
      %v4395 = vld [vmem:[%s4382 + $0x60] sm:$0xff]
      %v4396 = vld [vmem:[%s4382 + $0x68] sm:$0xff]
      %v4397 = vld [vmem:[%s4382 + $0x70] sm:$0xff]
      %v4398 = vld [vmem:[%s4382 + $0x78] sm:$0xff]
      %4399 = vmatprep.subr.mxu0 0.0
      %4400 = vmatpush1.msra.mxu0 %v4383
      %4401 = vmatprep.subr.mxu0 0.0
      %4402 = vmatpush1.msra.mxu0 %v4384
      %4403 = vmatprep.subr.mxu0 0.0
      %4404 = vmatpush1.msra.mxu0 %v4385
      %4405 = vmatprep.subr.mxu0 0.0
      %4406 = vmatpush1.msra.mxu0 %v4386
      %4407 = vmatprep.subr.mxu0 0.0
      %4408 = vmatpush1.msra.mxu0 %v4387
      %4409 = vmatprep.subr.mxu0 0.0
      %4410 = vmatpush1.msra.mxu0 %v4388
      %4411 = vmatprep.subr.mxu0 0.0
      %4412 = vmatpush1.msra.mxu0 %v4389
      %4413 = vmatprep.subr.mxu0 0.0
      %4414 = vmatpush1.msra.mxu0 %v4390
      %4415 = vmatprep.subr.mxu0 0.0
      %4416 = vmatpush1.msra.mxu0 %v4391
      %4417 = vmatprep.subr.mxu0 0.0
      %4418 = vmatpush1.msra.mxu0 %v4392
      %4419 = vmatprep.subr.mxu0 0.0
      %4420 = vmatpush1.msra.mxu0 %v4393
      %4421 = vmatprep.subr.mxu0 0.0
      %4422 = vmatpush1.msra.mxu0 %v4394
      %4423 = vmatprep.subr.mxu0 0.0
      %4424 = vmatpush1.msra.mxu0 %v4395
      %4425 = vmatprep.subr.mxu0 0.0
      %4426 = vmatpush1.msra.mxu0 %v4396
      %4427 = vmatprep.subr.mxu0 0.0
      %4428 = vmatpush1.msra.mxu0 %v4397
      %4429 = vmatprep.subr.mxu0 0.0
      %4430 = vmatpush1.msra.mxu0 %v4398
      %4431 = vmatprep.subr.mxu0 0.0
      %4432 = vmatpush1.msra.mxu0 0.0
      %4433 = vmatprep.subr.mxu0 0.0
      %4434 = vmatpush1.msra.mxu0 0.0
      %4435 = vmatprep.subr.mxu0 0.0
      %4436 = vmatpush1.msra.mxu0 0.0
      %4437 = vmatprep.subr.mxu0 0.0
      %4438 = vmatpush1.msra.mxu0 0.0
      %4439 = vmatprep.subr.mxu0 0.0
      %4440 = vmatpush1.msra.mxu0 0.0
      %4441 = vmatprep.subr.mxu0 0.0
      %4442 = vmatpush1.msra.mxu0 0.0
      %4443 = vmatprep.subr.mxu0 0.0
      %4444 = vmatpush1.msra.mxu0 0.0
      %4445 = vmatprep.subr.mxu0 0.0
      %4446 = vmatpush1.msra.mxu0 0.0
      %4447 = vmatprep.subr.mxu0 0.0
      %4448 = vmatpush1.msra.mxu0 0.0
      %4449 = vmatprep.subr.mxu0 0.0
      %4450 = vmatpush1.msra.mxu0 0.0
      %4451 = vmatprep.subr.mxu0 0.0
      %4452 = vmatpush1.msra.mxu0 0.0
      %4453 = vmatprep.subr.mxu0 0.0
      %4454 = vmatpush1.msra.mxu0 0.0
      %4455 = vmatprep.subr.mxu0 0.0
      %4456 = vmatpush1.msra.mxu0 0.0
      %4457 = vmatprep.subr.mxu0 0.0
      %4458 = vmatpush1.msra.mxu0 0.0
      %4459 = vmatprep.subr.mxu0 0.0
      %4460 = vmatpush1.msra.mxu0 0.0
      %4461 = vmatprep.subr.mxu0 0.0
      %4462 = vmatpush1.msra.mxu0 0.0
      %4463 = vmatprep.mubr.f32.mxu0 0.0
      %4464 = vmatmul.mubr.f32.gmra.mrb[0].mxu0 %v4342
      %v4465 = vpop.f32.mrb[0].mxu0
      %v4466 = vadd.f32 0.0, %v4465
      %v4467 = vpop.f32.mrb[0].mxu0
      %4468 = vmatprep.mubr.f32.mxu0 0.0
      %4469 = vmatmul.mubr.f32.gmra.mrb[0].mxu0 %v4341
      %v4470 = vpop.f32.mrb[0].mxu0
      %v4471 = vadd.f32 0.0, %v4470
      %v4472 = vpop.f32.mrb[0].mxu0
      %4473 = vmatprep.mubr.f32.mxu0 0.0
      %4474 = vmatmul.mubr.f32.gmra.mrb[0].mxu0 %v4381
      %v4475 = vpop.f32.mrb[0].mxu0
      %v4476 = vadd.f32 0.0, %v4475
      %v4477 = vpop.f32.mrb[0].mxu0
      %4478 = vmatprep.mubr.f32.mxu0 0.0
      %4479 = vmatmul.mubr.f32.gmra.mrb[0].mxu0 %v4380
      %v4480 = vpop.f32.mrb[0].mxu0
      %v4481 = vadd.f32 0.0, %v4480
      %v4482 = vpop.f32.mrb[0].mxu0
      %4483 = vmatprep.mubr.f32.mxu0 0.0
      %4484 = vmatmul.mubr.f32.gmra.mrb[0].mxu0 %v4379
      %v4485 = vpop.f32.mrb[0].mxu0
      %v4486 = vadd.f32 0.0, %v4485
      %v4487 = vpop.f32.mrb[0].mxu0
      %4488 = vmatprep.mubr.f32.mxu0 0.0
      %4489 = vmatmul.mubr.f32.gmra.mrb[0].mxu0 %v4378
      %v4490 = vpop.f32.mrb[0].mxu0
      %v4491 = vadd.f32 0.0, %v4490
      %v4492 = vpop.f32.mrb[0].mxu0
      %4493 = vmatprep.mubr.f32.mxu0 0.0
      %4494 = vmatmul.mubr.f32.gmra.mrb[0].mxu0 %v4377
      %v4495 = vpop.f32.mrb[0].mxu0
      %v4496 = vadd.f32 0.0, %v4495
      %v4497 = vpop.f32.mrb[0].mxu0
      %4498 = vmatprep.mubr.f32.mxu0 0.0
      %4499 = vmatmul.mubr.f32.gmra.mrb[0].mxu0 %v4376
      %v4500 = vpop.f32.mrb[0].mxu0
      %v4501 = vadd.f32 0.0, %v4500
      %v4502 = vpop.f32.mrb[0].mxu0
      %4503 = vmatprep.mubr.f32.mxu0 0.0
      %4504 = vmatmul.mubr.f32.gmra.mrb[0].mxu0 %v4375
      %v4505 = vpop.f32.mrb[0].mxu0
      %v4506 = vadd.f32 0.0, %v4505
      %v4507 = vpop.f32.mrb[0].mxu0
      %4508 = vmatprep.mubr.f32.mxu0 0.0
      %4509 = vmatmul.mubr.f32.gmra.mrb[0].mxu0 %v4374
      %v4510 = vpop.f32.mrb[0].mxu0
      %v4511 = vadd.f32 0.0, %v4510
      %v4512 = vpop.f32.mrb[0].mxu0
      %4513 = vmatprep.mubr.f32.mxu0 0.0
      %4514 = vmatmul.mubr.f32.gmra.mrb[0].mxu0 %v4373
      %v4515 = vpop.f32.mrb[0].mxu0
      %v4516 = vadd.f32 0.0, %v4515
      %v4517 = vpop.f32.mrb[0].mxu0
      %4518 = vmatprep.mubr.f32.mxu0 0.0
      %4519 = vmatmul.mubr.f32.gmra.mrb[0].mxu0 %v4372
      %v4520 = vpop.f32.mrb[0].mxu0
      %v4521 = vadd.f32 0.0, %v4520
      %v4522 = vpop.f32.mrb[0].mxu0
      %4523 = vmatprep.mubr.f32.mxu0 0.0
      %4524 = vmatmul.mubr.f32.gmra.mrb[0].mxu0 %v4371
      %v4525 = vpop.f32.mrb[0].mxu0
      %v4526 = vadd.f32 0.0, %v4525
      %v4527 = vpop.f32.mrb[0].mxu0
      %4528 = vmatprep.mubr.f32.mxu0 0.0
      %4529 = vmatmul.mubr.f32.gmra.mrb[0].mxu0 %v4370
      %v4530 = vpop.f32.mrb[0].mxu0
      %v4531 = vadd.f32 0.0, %v4530
      %v4532 = vpop.f32.mrb[0].mxu0
      %4533 = vmatprep.mubr.f32.mxu0 0.0
      %4534 = vmatmul.mubr.f32.gmra.mrb[0].mxu0 %v4369
      %v4535 = vpop.f32.mrb[0].mxu0
      %v4536 = vadd.f32 0.0, %v4535
      %v4537 = vpop.f32.mrb[0].mxu0
      %4538 = vmatprep.mubr.f32.mxu0 0.0
      %4539 = vmatmul.mubr.f32.gmra.mrb[0].mxu0 %v4368
      %v4540 = vpop.f32.mrb[0].mxu0
      %v4541 = vadd.f32 0.0, %v4540
      %v4542 = vpop.f32.mrb[0].mxu0
      %4543 = vmatprep.mubr.f32.mxu0 0.0
      %4544 = vmatmul.mubr.f32.gmra.mrb[0].mxu0 %v4367
      %v4545 = vpop.f32.mrb[0].mxu0
      %v4546 = vadd.f32 0.0, %v4545
      %v4547 = vpop.f32.mrb[0].mxu0
      %4548 = vmatprep.mubr.f32.mxu0 0.0
      %4549 = vmatmul.mubr.f32.gmra.mrb[0].mxu0 %v4366
      %v4550 = vpop.f32.mrb[0].mxu0
      %v4551 = vadd.f32 0.0, %v4550
      %v4552 = vpop.f32.mrb[0].mxu0
      %4553 = vmatprep.mubr.f32.mxu0 0.0
      %4554 = vmatmul.mubr.f32.gmra.mrb[0].mxu0 %v4365
      %v4555 = vpop.f32.mrb[0].mxu0
      %v4556 = vadd.f32 0.0, %v4555
      %v4557 = vpop.f32.mrb[0].mxu0
      %4558 = vmatprep.mubr.f32.mxu0 0.0
      %4559 = vmatmul.mubr.f32.gmra.mrb[0].mxu0 %v4364
      %v4560 = vpop.f32.mrb[0].mxu0
      %v4561 = vadd.f32 0.0, %v4560
      %v4562 = vpop.f32.mrb[0].mxu0
      %4563 = vmatprep.mubr.f32.mxu0 0.0
      %4564 = vmatmul.mubr.f32.gmra.mrb[0].mxu0 %v4363
      %v4565 = vpop.f32.mrb[0].mxu0
      %v4566 = vadd.f32 0.0, %v4565
      %v4567 = vpop.f32.mrb[0].mxu0
      %4568 = vmatprep.mubr.f32.mxu0 0.0
      %4569 = vmatmul.mubr.f32.gmra.mrb[0].mxu0 %v4362
      %v4570 = vpop.f32.mrb[0].mxu0
      %v4571 = vadd.f32 0.0, %v4570
      %v4572 = vpop.f32.mrb[0].mxu0
      %4573 = vmatprep.mubr.f32.mxu0 0.0
      %4574 = vmatmul.mubr.f32.gmra.mrb[0].mxu0 %v4361
      %v4575 = vpop.f32.mrb[0].mxu0
      %v4576 = vadd.f32 0.0, %v4575
      %v4577 = vpop.f32.mrb[0].mxu0
      %4578 = vmatprep.mubr.f32.mxu0 0.0
      %4579 = vmatmul.mubr.f32.gmra.mrb[0].mxu0 %v4360
      %v4580 = vpop.f32.mrb[0].mxu0
      %v4581 = vadd.f32 0.0, %v4580
      %v4582 = vpop.f32.mrb[0].mxu0
      %4583 = vmatprep.mubr.f32.mxu0 0.0
      %4584 = vmatmul.mubr.f32.gmra.mrb[0].mxu0 %v4359
      %v4585 = vpop.f32.mrb[0].mxu0
      %v4586 = vadd.f32 0.0, %v4585
      %v4587 = vpop.f32.mrb[0].mxu0
      %4588 = vmatprep.mubr.f32.mxu0 0.0
      %4589 = vmatmul.mubr.f32.gmra.mrb[0].mxu0 %v4358
      %v4590 = vpop.f32.mrb[0].mxu0
      %v4591 = vadd.f32 0.0, %v4590
      %v4592 = vpop.f32.mrb[0].mxu0
      %4593 = vmatprep.mubr.f32.mxu0 0.0
      %4594 = vmatmul.mubr.f32.gmra.mrb[0].mxu0 %v4357
      %v4595 = vpop.f32.mrb[0].mxu0
      %v4596 = vadd.f32 0.0, %v4595
      %v4597 = vpop.f32.mrb[0].mxu0
      %4598 = vmatprep.mubr.f32.mxu0 0.0
      %4599 = vmatmul.mubr.f32.gmra.mrb[0].mxu0 %v4356
      %v4600 = vpop.f32.mrb[0].mxu0
      %v4601 = vadd.f32 0.0, %v4600
      %v4602 = vpop.f32.mrb[0].mxu0
      %4603 = vmatprep.mubr.f32.mxu0 0.0
      %4604 = vmatmul.mubr.f32.gmra.mrb[0].mxu0 %v4355
      %v4605 = vpop.f32.mrb[0].mxu0
      %v4606 = vadd.f32 0.0, %v4605
      %v4607 = vpop.f32.mrb[0].mxu0
      %4608 = vmatprep.mubr.f32.mxu0 0.0
      %4609 = vmatmul.mubr.f32.gmra.mrb[0].mxu0 %v4354
      %v4610 = vpop.f32.mrb[0].mxu0
      %v4611 = vadd.f32 0.0, %v4610
      %v4612 = vpop.f32.mrb[0].mxu0
      %4613 = vmatprep.mubr.f32.mxu0 0.0
      %4614 = vmatmul.mubr.f32.gmra.mrb[0].mxu0 %v4353
      %v4615 = vpop.f32.mrb[0].mxu0
      %v4616 = vadd.f32 0.0, %v4615
      %v4617 = vpop.f32.mrb[0].mxu0
      %4618 = vmatprep.mubr.f32.mxu0 0.0
      %4619 = vmatmul.mubr.f32.gmra.mrb[0].mxu0 %v4352
      %v4620 = vpop.f32.mrb[0].mxu0
      %v4621 = vadd.f32 0.0, %v4620
      %v4622 = vpop.f32.mrb[0].mxu0
      %4623 = vmatprep.mubr.f32.mxu0 0.0
      %4624 = vmatmul.mubr.f32.gmra.mrb[0].mxu0 %v4351
      %v4625 = vpop.f32.mrb[0].mxu0
      %v4626 = vadd.f32 0.0, %v4625
      %v4627 = vpop.f32.mrb[0].mxu0
      %4628 = vmatprep.mubr.f32.mxu0 0.0
      %4629 = vmatmul.mubr.f32.gmra.mrb[0].mxu0 %v4350
      %v4630 = vpop.f32.mrb[0].mxu0
      %v4631 = vadd.f32 0.0, %v4630
      %v4632 = vpop.f32.mrb[0].mxu0
      %4633 = vmatprep.mubr.f32.mxu0 0.0
      %4634 = vmatmul.mubr.f32.gmra.mrb[0].mxu0 %v4349
      %v4635 = vpop.f32.mrb[0].mxu0
      %v4636 = vadd.f32 0.0, %v4635
      %v4637 = vpop.f32.mrb[0].mxu0
      %4638 = vmatprep.mubr.f32.mxu0 0.0
      %4639 = vmatmul.mubr.f32.gmra.mrb[0].mxu0 %v4348
      %v4640 = vpop.f32.mrb[0].mxu0
      %v4641 = vadd.f32 0.0, %v4640
      %v4642 = vpop.f32.mrb[0].mxu0
      %4643 = vmatprep.mubr.f32.mxu0 0.0
      %4644 = vmatmul.mubr.f32.gmra.mrb[0].mxu0 %v4347
      %v4645 = vpop.f32.mrb[0].mxu0
      %v4646 = vadd.f32 0.0, %v4645
      %v4647 = vpop.f32.mrb[0].mxu0
      %4648 = vmatprep.mubr.f32.mxu0 0.0
      %4649 = vmatmul.mubr.f32.gmra.mrb[0].mxu0 %v4346
      %v4650 = vpop.f32.mrb[0].mxu0
      %v4651 = vadd.f32 0.0, %v4650
      %v4652 = vpop.f32.mrb[0].mxu0
      %4653 = vmatprep.mubr.f32.mxu0 0.0
      %4654 = vmatmul.mubr.f32.gmra.mrb[0].mxu0 %v4345
      %v4655 = vpop.f32.mrb[0].mxu0
      %v4656 = vadd.f32 0.0, %v4655
      %v4657 = vpop.f32.mrb[0].mxu0
      %4658 = vmatprep.mubr.f32.mxu0 0.0
      %4659 = vmatmul.mubr.f32.gmra.mrb[0].mxu0 %v4344
      %v4660 = vpop.f32.mrb[0].mxu0
      %v4661 = vadd.f32 0.0, %v4660
      %v4662 = vpop.f32.mrb[0].mxu0
      %4663 = vmatprep.mubr.f32.mxu0 0.0
      %4664 = vmatmul.mubr.f32.gmra.mrb[0].mxu0 %v4343
      %v4665 = vpop.f32.mrb[0].mxu0
      %v4666 = vadd.f32 0.0, %v4665
      %v4667 = vpop.f32.mrb[0].mxu0
      %4668 = vdwg.mxu0
      %4669 = vmatprep.subr.mxu0 0.0
      %4670 = vmatpush1.msra.mxu0 %v4284
      %4671 = vmatprep.subr.mxu0 0.0
      %4672 = vmatpush1.msra.mxu0 %v4285
      %4673 = vmatprep.subr.mxu0 0.0
      %4674 = vmatpush1.msra.mxu0 %v4286
      %4675 = vmatprep.subr.mxu0 0.0
      %4676 = vmatpush1.msra.mxu0 %v4287
      %4677 = vmatprep.subr.mxu0 0.0
      %4678 = vmatpush1.msra.mxu0 %v4288
      %4679 = vmatprep.subr.mxu0 0.0
      %4680 = vmatpush1.msra.mxu0 %v4289
      %4681 = vmatprep.subr.mxu0 0.0
      %4682 = vmatpush1.msra.mxu0 %v4290
      %4683 = vmatprep.subr.mxu0 0.0
      %4684 = vmatpush1.msra.mxu0 %v4291
      %4685 = vmatprep.subr.mxu0 0.0
      %4686 = vmatpush1.msra.mxu0 %v4292
      %4687 = vmatprep.subr.mxu0 0.0
      %4688 = vmatpush1.msra.mxu0 %v4293
      %4689 = vmatprep.subr.mxu0 0.0
      %4690 = vmatpush1.msra.mxu0 %v4294
      %4691 = vmatprep.subr.mxu0 0.0
      %4692 = vmatpush1.msra.mxu0 %v4295
      %4693 = vmatprep.subr.mxu0 0.0
      %4694 = vmatpush1.msra.mxu0 %v4296
      %4695 = vmatprep.subr.mxu0 0.0
      %4696 = vmatpush1.msra.mxu0 %v4297
      %4697 = vmatprep.subr.mxu0 0.0
      %4698 = vmatpush1.msra.mxu0 %v4298
      %4699 = vmatprep.subr.mxu0 0.0
      %4700 = vmatpush1.msra.mxu0 %v4299
      %4701 = vmatprep.subr.mxu0 0.0
      %4702 = vmatpush1.msra.mxu0 0.0
      %4703 = vmatprep.subr.mxu0 0.0
      %4704 = vmatpush1.msra.mxu0 0.0
      %4705 = vmatprep.subr.mxu0 0.0
      %4706 = vmatpush1.msra.mxu0 0.0
      %4707 = vmatprep.subr.mxu0 0.0
      %4708 = vmatpush1.msra.mxu0 0.0
      %4709 = vmatprep.subr.mxu0 0.0
      %4710 = vmatpush1.msra.mxu0 0.0
      %4711 = vmatprep.subr.mxu0 0.0
      %4712 = vmatpush1.msra.mxu0 0.0
      %4713 = vmatprep.subr.mxu0 0.0
      %4714 = vmatpush1.msra.mxu0 0.0
      %4715 = vmatprep.subr.mxu0 0.0
      %4716 = vmatpush1.msra.mxu0 0.0
      %4717 = vmatprep.subr.mxu0 0.0
      %4718 = vmatpush1.msra.mxu0 0.0
      %4719 = vmatprep.subr.mxu0 0.0
      %4720 = vmatpush1.msra.mxu0 0.0
      %4721 = vmatprep.subr.mxu0 0.0
      %4722 = vmatpush1.msra.mxu0 0.0
      %4723 = vmatprep.subr.mxu0 0.0
      %4724 = vmatpush1.msra.mxu0 0.0
      %4725 = vmatprep.subr.mxu0 0.0
      %4726 = vmatpush1.msra.mxu0 0.0
      %4727 = vmatprep.subr.mxu0 0.0
      %4728 = vmatpush1.msra.mxu0 0.0
      %4729 = vmatprep.subr.mxu0 0.0
      %4730 = vmatpush1.msra.mxu0 0.0
      %4731 = vmatprep.subr.mxu0 0.0
      %4732 = vmatpush1.msra.mxu0 0.0
      %4733 = vmatprep.mubr.f32.mxu0 0.0
      %4734 = vmatmul.mubr.f32.gmra.mrb[0].mxu0 %v4244
      %v4735 = vpop.f32.mrb[0].mxu0
      %v4736 = vadd.f32 %v4466, %v4735
      %v4737 = vpop.f32.mrb[0].mxu0
      %4738 = vmatprep.mubr.f32.mxu0 0.0
      %4739 = vmatmul.mubr.f32.gmra.mrb[0].mxu0 %v4243
      %v4740 = vpop.f32.mrb[0].mxu0
      %v4741 = vadd.f32 %v4471, %v4740
      %v4742 = vpop.f32.mrb[0].mxu0
      %4743 = vmatprep.mubr.f32.mxu0 0.0
      %4744 = vmatmul.mubr.f32.gmra.mrb[0].mxu0 %v4283
      %v4745 = vpop.f32.mrb[0].mxu0
      %v4746 = vadd.f32 %v4476, %v4745
      %v4747 = vpop.f32.mrb[0].mxu0
      %4748 = vmatprep.mubr.f32.mxu0 0.0
      %4749 = vmatmul.mubr.f32.gmra.mrb[0].mxu0 %v4282
      %v4750 = vpop.f32.mrb[0].mxu0
      %v4751 = vadd.f32 %v4481, %v4750
      %v4752 = vpop.f32.mrb[0].mxu0
      %4753 = vmatprep.mubr.f32.mxu0 0.0
      %4754 = vmatmul.mubr.f32.gmra.mrb[0].mxu0 %v4281
      %v4755 = vpop.f32.mrb[0].mxu0
      %v4756 = vadd.f32 %v4486, %v4755
      %v4757 = vpop.f32.mrb[0].mxu0
      %4758 = vmatprep.mubr.f32.mxu0 0.0
      %4759 = vmatmul.mubr.f32.gmra.mrb[0].mxu0 %v4280
      %v4760 = vpop.f32.mrb[0].mxu0
      %v4761 = vadd.f32 %v4491, %v4760
      %v4762 = vpop.f32.mrb[0].mxu0
      %4763 = vmatprep.mubr.f32.mxu0 0.0
      %4764 = vmatmul.mubr.f32.gmra.mrb[0].mxu0 %v4279
      %v4765 = vpop.f32.mrb[0].mxu0
      %v4766 = vadd.f32 %v4496, %v4765
      %v4767 = vpop.f32.mrb[0].mxu0
      %4768 = vmatprep.mubr.f32.mxu0 0.0
      %4769 = vmatmul.mubr.f32.gmra.mrb[0].mxu0 %v4278
      %v4770 = vpop.f32.mrb[0].mxu0
      %v4771 = vadd.f32 %v4501, %v4770
      %v4772 = vpop.f32.mrb[0].mxu0
      %4773 = vmatprep.mubr.f32.mxu0 0.0
      %4774 = vmatmul.mubr.f32.gmra.mrb[0].mxu0 %v4277
      %v4775 = vpop.f32.mrb[0].mxu0
      %v4776 = vadd.f32 %v4506, %v4775
      %v4777 = vpop.f32.mrb[0].mxu0
      %4778 = vmatprep.mubr.f32.mxu0 0.0
      %4779 = vmatmul.mubr.f32.gmra.mrb[0].mxu0 %v4276
      %v4780 = vpop.f32.mrb[0].mxu0
      %v4781 = vadd.f32 %v4511, %v4780
      %v4782 = vpop.f32.mrb[0].mxu0
      %4783 = vmatprep.mubr.f32.mxu0 0.0
      %4784 = vmatmul.mubr.f32.gmra.mrb[0].mxu0 %v4275
      %v4785 = vpop.f32.mrb[0].mxu0
      %v4786 = vadd.f32 %v4516, %v4785
      %v4787 = vpop.f32.mrb[0].mxu0
      %4788 = vmatprep.mubr.f32.mxu0 0.0
      %4789 = vmatmul.mubr.f32.gmra.mrb[0].mxu0 %v4274
      %v4790 = vpop.f32.mrb[0].mxu0
      %v4791 = vadd.f32 %v4521, %v4790
      %v4792 = vpop.f32.mrb[0].mxu0
      %4793 = vmatprep.mubr.f32.mxu0 0.0
      %4794 = vmatmul.mubr.f32.gmra.mrb[0].mxu0 %v4273
      %v4795 = vpop.f32.mrb[0].mxu0
      %v4796 = vadd.f32 %v4526, %v4795
      %v4797 = vpop.f32.mrb[0].mxu0
      %4798 = vmatprep.mubr.f32.mxu0 0.0
      %4799 = vmatmul.mubr.f32.gmra.mrb[0].mxu0 %v4272
      %v4800 = vpop.f32.mrb[0].mxu0
      %v4801 = vadd.f32 %v4531, %v4800
      %v4802 = vpop.f32.mrb[0].mxu0
      %4803 = vmatprep.mubr.f32.mxu0 0.0
      %4804 = vmatmul.mubr.f32.gmra.mrb[0].mxu0 %v4271
      %v4805 = vpop.f32.mrb[0].mxu0
      %v4806 = vadd.f32 %v4536, %v4805
      %v4807 = vpop.f32.mrb[0].mxu0
      %4808 = vmatprep.mubr.f32.mxu0 0.0
      %4809 = vmatmul.mubr.f32.gmra.mrb[0].mxu0 %v4270
      %v4810 = vpop.f32.mrb[0].mxu0
      %v4811 = vadd.f32 %v4541, %v4810
      %v4812 = vpop.f32.mrb[0].mxu0
      %4813 = vmatprep.mubr.f32.mxu0 0.0
      %4814 = vmatmul.mubr.f32.gmra.mrb[0].mxu0 %v4269
      %v4815 = vpop.f32.mrb[0].mxu0
      %v4816 = vadd.f32 %v4546, %v4815
      %v4817 = vpop.f32.mrb[0].mxu0
      %4818 = vmatprep.mubr.f32.mxu0 0.0
      %4819 = vmatmul.mubr.f32.gmra.mrb[0].mxu0 %v4268
      %v4820 = vpop.f32.mrb[0].mxu0
      %v4821 = vadd.f32 %v4551, %v4820
      %v4822 = vpop.f32.mrb[0].mxu0
      %4823 = vmatprep.mubr.f32.mxu0 0.0
      %4824 = vmatmul.mubr.f32.gmra.mrb[0].mxu0 %v4267
      %v4825 = vpop.f32.mrb[0].mxu0
      %v4826 = vadd.f32 %v4556, %v4825
      %v4827 = vpop.f32.mrb[0].mxu0
      %4828 = vmatprep.mubr.f32.mxu0 0.0
      %4829 = vmatmul.mubr.f32.gmra.mrb[0].mxu0 %v4266
      %v4830 = vpop.f32.mrb[0].mxu0
      %v4831 = vadd.f32 %v4561, %v4830
      %v4832 = vpop.f32.mrb[0].mxu0
      %4833 = vmatprep.mubr.f32.mxu0 0.0
      %4834 = vmatmul.mubr.f32.gmra.mrb[0].mxu0 %v4265
      %v4835 = vpop.f32.mrb[0].mxu0
      %v4836 = vadd.f32 %v4566, %v4835
      %v4837 = vpop.f32.mrb[0].mxu0
      %4838 = vmatprep.mubr.f32.mxu0 0.0
      %4839 = vmatmul.mubr.f32.gmra.mrb[0].mxu0 %v4264
      %v4840 = vpop.f32.mrb[0].mxu0
      %v4841 = vadd.f32 %v4571, %v4840
      %v4842 = vpop.f32.mrb[0].mxu0
      %4843 = vmatprep.mubr.f32.mxu0 0.0
      %4844 = vmatmul.mubr.f32.gmra.mrb[0].mxu0 %v4263
      %v4845 = vpop.f32.mrb[0].mxu0
      %v4846 = vadd.f32 %v4576, %v4845
      %v4847 = vpop.f32.mrb[0].mxu0
      %4848 = vmatprep.mubr.f32.mxu0 0.0
      %4849 = vmatmul.mubr.f32.gmra.mrb[0].mxu0 %v4262
      %v4850 = vpop.f32.mrb[0].mxu0
      %v4851 = vadd.f32 %v4581, %v4850
      %v4852 = vpop.f32.mrb[0].mxu0
      %4853 = vmatprep.mubr.f32.mxu0 0.0
      %4854 = vmatmul.mubr.f32.gmra.mrb[0].mxu0 %v4261
      %v4855 = vpop.f32.mrb[0].mxu0
      %v4856 = vadd.f32 %v4586, %v4855
      %v4857 = vpop.f32.mrb[0].mxu0
      %4858 = vmatprep.mubr.f32.mxu0 0.0
      %4859 = vmatmul.mubr.f32.gmra.mrb[0].mxu0 %v4260
      %v4860 = vpop.f32.mrb[0].mxu0
      %v4861 = vadd.f32 %v4591, %v4860
      %v4862 = vpop.f32.mrb[0].mxu0
      %4863 = vmatprep.mubr.f32.mxu0 0.0
      %4864 = vmatmul.mubr.f32.gmra.mrb[0].mxu0 %v4259
      %v4865 = vpop.f32.mrb[0].mxu0
      %v4866 = vadd.f32 %v4596, %v4865
      %v4867 = vpop.f32.mrb[0].mxu0
      %4868 = vmatprep.mubr.f32.mxu0 0.0
      %4869 = vmatmul.mubr.f32.gmra.mrb[0].mxu0 %v4258
      %v4870 = vpop.f32.mrb[0].mxu0
      %v4871 = vadd.f32 %v4601, %v4870
      %v4872 = vpop.f32.mrb[0].mxu0
      %4873 = vmatprep.mubr.f32.mxu0 0.0
      %4874 = vmatmul.mubr.f32.gmra.mrb[0].mxu0 %v4257
      %v4875 = vpop.f32.mrb[0].mxu0
      %v4876 = vadd.f32 %v4606, %v4875
      %v4877 = vpop.f32.mrb[0].mxu0
      %4878 = vmatprep.mubr.f32.mxu0 0.0
      %4879 = vmatmul.mubr.f32.gmra.mrb[0].mxu0 %v4256
      %v4880 = vpop.f32.mrb[0].mxu0
      %v4881 = vadd.f32 %v4611, %v4880
      %v4882 = vpop.f32.mrb[0].mxu0
      %4883 = vmatprep.mubr.f32.mxu0 0.0
      %4884 = vmatmul.mubr.f32.gmra.mrb[0].mxu0 %v4255
      %v4885 = vpop.f32.mrb[0].mxu0
      %v4886 = vadd.f32 %v4616, %v4885
      %v4887 = vpop.f32.mrb[0].mxu0
      %4888 = vmatprep.mubr.f32.mxu0 0.0
      %4889 = vmatmul.mubr.f32.gmra.mrb[0].mxu0 %v4254
      %v4890 = vpop.f32.mrb[0].mxu0
      %v4891 = vadd.f32 %v4621, %v4890
      %v4892 = vpop.f32.mrb[0].mxu0
      %4893 = vmatprep.mubr.f32.mxu0 0.0
      %4894 = vmatmul.mubr.f32.gmra.mrb[0].mxu0 %v4253
      %v4895 = vpop.f32.mrb[0].mxu0
      %v4896 = vadd.f32 %v4626, %v4895
      %v4897 = vpop.f32.mrb[0].mxu0
      %4898 = vmatprep.mubr.f32.mxu0 0.0
      %4899 = vmatmul.mubr.f32.gmra.mrb[0].mxu0 %v4252
      %v4900 = vpop.f32.mrb[0].mxu0
      %v4901 = vadd.f32 %v4631, %v4900
      %v4902 = vpop.f32.mrb[0].mxu0
      %4903 = vmatprep.mubr.f32.mxu0 0.0
      %4904 = vmatmul.mubr.f32.gmra.mrb[0].mxu0 %v4251
      %v4905 = vpop.f32.mrb[0].mxu0
      %v4906 = vadd.f32 %v4636, %v4905
      %v4907 = vpop.f32.mrb[0].mxu0
      %4908 = vmatprep.mubr.f32.mxu0 0.0
      %4909 = vmatmul.mubr.f32.gmra.mrb[0].mxu0 %v4250
      %v4910 = vpop.f32.mrb[0].mxu0
      %v4911 = vadd.f32 %v4641, %v4910
      %v4912 = vpop.f32.mrb[0].mxu0
      %4913 = vmatprep.mubr.f32.mxu0 0.0
      %4914 = vmatmul.mubr.f32.gmra.mrb[0].mxu0 %v4249
      %v4915 = vpop.f32.mrb[0].mxu0
      %v4916 = vadd.f32 %v4646, %v4915
      %v4917 = vpop.f32.mrb[0].mxu0
      %4918 = vmatprep.mubr.f32.mxu0 0.0
      %4919 = vmatmul.mubr.f32.gmra.mrb[0].mxu0 %v4248
      %v4920 = vpop.f32.mrb[0].mxu0
      %v4921 = vadd.f32 %v4651, %v4920
      %v4922 = vpop.f32.mrb[0].mxu0
      %4923 = vmatprep.mubr.f32.mxu0 0.0
      %4924 = vmatmul.mubr.f32.gmra.mrb[0].mxu0 %v4247
      %v4925 = vpop.f32.mrb[0].mxu0
      %v4926 = vadd.f32 %v4656, %v4925
      %v4927 = vpop.f32.mrb[0].mxu0
      %4928 = vmatprep.mubr.f32.mxu0 0.0
      %4929 = vmatmul.mubr.f32.gmra.mrb[0].mxu0 %v4246
      %v4930 = vpop.f32.mrb[0].mxu0
      %v4931 = vadd.f32 %v4661, %v4930
      %v4932 = vpop.f32.mrb[0].mxu0
      %4933 = vmatprep.mubr.f32.mxu0 0.0
      %4934 = vmatmul.mubr.f32.gmra.mrb[0].mxu0 %v4245
      %v4935 = vpop.f32.mrb[0].mxu0
      %v4936 = vadd.f32 %v4666, %v4935
      %v4937 = vpop.f32.mrb[0].mxu0
      %4938 = vdwg.mxu0
      %v4939 = vrot.slane %v4161, 7
      %v4940 = vrot.slane %v4162, 7
      %v4941 = vrot.slane %v4163, 7
      %v4942 = vrot.slane %v4164, 7
      %v4943 = vrot.slane %v4165, 7
      %v4944 = vrot.slane %v4166, 7
      %v4945 = vrot.slane %v4167, 7
      %v4946 = vrot.slane %v4168, 7
      %v4947 = vrot.slane %v4169, 7
      %v4948 = vrot.slane %v4170, 7
      %v4949 = vrot.slane %v4171, 7
      %v4950 = vrot.slane %v4172, 7
      %v4951 = vrot.slane %v4173, 7
      %v4952 = vrot.slane %v4174, 7
      %v4953 = vrot.slane %v4175, 7
      %v4954 = vrot.slane %v4176, 7
      %v4955 = vrot.slane %v4177, 7
      %v4956 = vrot.slane %v4178, 7
      %v4957 = vrot.slane %v4179, 7
      %v4958 = vrot.slane %v4180, 7
      %v4959 = vrot.slane %v4181, 7
      %v4960 = vrot.slane %v4182, 7
      %v4961 = vrot.slane %v4183, 7
      %v4962 = vrot.slane %v4184, 7
      %v4963 = vrot.slane %v4185, 7
      %v4964 = vrot.slane %v4186, 7
      %v4965 = vrot.slane %v4187, 7
      %v4966 = vrot.slane %v4188, 7
      %v4967 = vrot.slane %v4189, 7
      %v4968 = vrot.slane %v4190, 7
      %v4969 = vrot.slane %v4191, 7
      %v4970 = vrot.slane %v4192, 7
      %v4971 = vrot.slane %v4193, 7
      %v4972 = vrot.slane %v4194, 7
      %v4973 = vrot.slane %v4195, 7
      %v4974 = vrot.slane %v4196, 7
      %v4975 = vrot.slane %v4197, 7
      %v4976 = vrot.slane %v4198, 7
      %v4977 = vrot.slane %v4199, 7
      %v4978 = vrot.slane %v4200, 7
      %v4979 = vrot.slane %v4201, 7
      %v4980 = vsel %vm1075, %v4978, %v4979
      %v4981 = vsel %vm1075, %v4977, %v4978
      %v4982 = vsel %vm1075, %v4976, %v4977
      %v4983 = vsel %vm1075, %v4975, %v4976
      %v4984 = vsel %vm1075, %v4974, %v4975
      %v4985 = vsel %vm1075, %v4973, %v4974
      %v4986 = vsel %vm1075, %v4972, %v4973
      %v4987 = vsel %vm1075, %v4971, %v4972
      %v4988 = vsel %vm1075, %v4970, %v4971
      %v4989 = vsel %vm1075, %v4969, %v4970
      %v4990 = vsel %vm1075, %v4968, %v4969
      %v4991 = vsel %vm1075, %v4967, %v4968
      %v4992 = vsel %vm1075, %v4966, %v4967
      %v4993 = vsel %vm1075, %v4965, %v4966
      %v4994 = vsel %vm1075, %v4964, %v4965
      %v4995 = vsel %vm1075, %v4963, %v4964
      %v4996 = vsel %vm1075, %v4962, %v4963
      %v4997 = vsel %vm1075, %v4961, %v4962
      %v4998 = vsel %vm1075, %v4960, %v4961
      %v4999 = vsel %vm1075, %v4959, %v4960
      %v5000 = vsel %vm1075, %v4958, %v4959
      %v5001 = vsel %vm1075, %v4957, %v4958
      %v5002 = vsel %vm1075, %v4956, %v4957
      %v5003 = vsel %vm1075, %v4955, %v4956
      %v5004 = vsel %vm1075, %v4954, %v4955
      %v5005 = vsel %vm1075, %v4953, %v4954
      %v5006 = vsel %vm1075, %v4952, %v4953
      %v5007 = vsel %vm1075, %v4951, %v4952
      %v5008 = vsel %vm1075, %v4950, %v4951
      %v5009 = vsel %vm1075, %v4949, %v4950
      %v5010 = vsel %vm1075, %v4948, %v4949
      %v5011 = vsel %vm1075, %v4947, %v4948
      %v5012 = vsel %vm1075, %v4946, %v4947
      %v5013 = vsel %vm1075, %v4945, %v4946
      %v5014 = vsel %vm1075, %v4944, %v4945
      %v5015 = vsel %vm1075, %v4943, %v4944
      %v5016 = vsel %vm1075, %v4942, %v4943
      %v5017 = vsel %vm1075, %v4941, %v4942
      %v5018 = vsel %vm1075, %v4940, %v4941
      %v5019 = vsel %vm1075, %v4939, %v4940
      %v5020 = vsel %vm1075, %v4979, %v4939
      %s5021 = scalar_lea.vmem %s4, 256
      %v5022 = vld [vmem:[%s5021] sm:$0xff]
      %v5023 = vld [vmem:[%s5021 + $0x8] sm:$0xff]
      %v5024 = vld [vmem:[%s5021 + $0x10] sm:$0xff]
      %v5025 = vld [vmem:[%s5021 + $0x18] sm:$0xff]
      %v5026 = vld [vmem:[%s5021 + $0x20] sm:$0xff]
      %v5027 = vld [vmem:[%s5021 + $0x28] sm:$0xff]
      %v5028 = vld [vmem:[%s5021 + $0x30] sm:$0xff]
      %v5029 = vld [vmem:[%s5021 + $0x38] sm:$0xff]
      %v5030 = vld [vmem:[%s5021 + $0x40] sm:$0xff]
      %v5031 = vld [vmem:[%s5021 + $0x48] sm:$0xff]
      %v5032 = vld [vmem:[%s5021 + $0x50] sm:$0xff]
      %v5033 = vld [vmem:[%s5021 + $0x58] sm:$0xff]
      %v5034 = vld [vmem:[%s5021 + $0x60] sm:$0xff]
      %v5035 = vld [vmem:[%s5021 + $0x68] sm:$0xff]
      %v5036 = vld [vmem:[%s5021 + $0x70] sm:$0xff]
      %v5037 = vld [vmem:[%s5021 + $0x78] sm:$0xff]
      %5038 = vmatprep.subr.mxu0 0.0
      %5039 = vmatpush1.msra.mxu0 %v5022
      %5040 = vmatprep.subr.mxu0 0.0
      %5041 = vmatpush1.msra.mxu0 %v5023
      %5042 = vmatprep.subr.mxu0 0.0
      %5043 = vmatpush1.msra.mxu0 %v5024
      %5044 = vmatprep.subr.mxu0 0.0
      %5045 = vmatpush1.msra.mxu0 %v5025
      %5046 = vmatprep.subr.mxu0 0.0
      %5047 = vmatpush1.msra.mxu0 %v5026
      %5048 = vmatprep.subr.mxu0 0.0
      %5049 = vmatpush1.msra.mxu0 %v5027
      %5050 = vmatprep.subr.mxu0 0.0
      %5051 = vmatpush1.msra.mxu0 %v5028
      %5052 = vmatprep.subr.mxu0 0.0
      %5053 = vmatpush1.msra.mxu0 %v5029
      %5054 = vmatprep.subr.mxu0 0.0
      %5055 = vmatpush1.msra.mxu0 %v5030
      %5056 = vmatprep.subr.mxu0 0.0
      %5057 = vmatpush1.msra.mxu0 %v5031
      %5058 = vmatprep.subr.mxu0 0.0
      %5059 = vmatpush1.msra.mxu0 %v5032
      %5060 = vmatprep.subr.mxu0 0.0
      %5061 = vmatpush1.msra.mxu0 %v5033
      %5062 = vmatprep.subr.mxu0 0.0
      %5063 = vmatpush1.msra.mxu0 %v5034
      %5064 = vmatprep.subr.mxu0 0.0
      %5065 = vmatpush1.msra.mxu0 %v5035
      %5066 = vmatprep.subr.mxu0 0.0
      %5067 = vmatpush1.msra.mxu0 %v5036
      %5068 = vmatprep.subr.mxu0 0.0
      %5069 = vmatpush1.msra.mxu0 %v5037
      %5070 = vmatprep.subr.mxu0 0.0
      %5071 = vmatpush1.msra.mxu0 0.0
      %5072 = vmatprep.subr.mxu0 0.0
      %5073 = vmatpush1.msra.mxu0 0.0
      %5074 = vmatprep.subr.mxu0 0.0
      %5075 = vmatpush1.msra.mxu0 0.0
      %5076 = vmatprep.subr.mxu0 0.0
      %5077 = vmatpush1.msra.mxu0 0.0
      %5078 = vmatprep.subr.mxu0 0.0
      %5079 = vmatpush1.msra.mxu0 0.0
      %5080 = vmatprep.subr.mxu0 0.0
      %5081 = vmatpush1.msra.mxu0 0.0
      %5082 = vmatprep.subr.mxu0 0.0
      %5083 = vmatpush1.msra.mxu0 0.0
      %5084 = vmatprep.subr.mxu0 0.0
      %5085 = vmatpush1.msra.mxu0 0.0
      %5086 = vmatprep.subr.mxu0 0.0
      %5087 = vmatpush1.msra.mxu0 0.0
      %5088 = vmatprep.subr.mxu0 0.0
      %5089 = vmatpush1.msra.mxu0 0.0
      %5090 = vmatprep.subr.mxu0 0.0
      %5091 = vmatpush1.msra.mxu0 0.0
      %5092 = vmatprep.subr.mxu0 0.0
      %5093 = vmatpush1.msra.mxu0 0.0
      %5094 = vmatprep.subr.mxu0 0.0
      %5095 = vmatpush1.msra.mxu0 0.0
      %5096 = vmatprep.subr.mxu0 0.0
      %5097 = vmatpush1.msra.mxu0 0.0
      %5098 = vmatprep.subr.mxu0 0.0
      %5099 = vmatpush1.msra.mxu0 0.0
      %5100 = vmatprep.subr.mxu0 0.0
      %5101 = vmatpush1.msra.mxu0 0.0
      %5102 = vmatprep.mubr.f32.mxu0 0.0
      %5103 = vmatmul.mubr.f32.gmra.mrb[0].mxu0 %v4981
      %v5104 = vpop.f32.mrb[0].mxu0
      %v5105 = vadd.f32 0.0, %v5104
      %v5106 = vpop.f32.mrb[0].mxu0
      %5107 = vmatprep.mubr.f32.mxu0 0.0
      %5108 = vmatmul.mubr.f32.gmra.mrb[0].mxu0 %v4980
      %v5109 = vpop.f32.mrb[0].mxu0
      %v5110 = vadd.f32 0.0, %v5109
      %v5111 = vpop.f32.mrb[0].mxu0
      %5112 = vmatprep.mubr.f32.mxu0 0.0
      %5113 = vmatmul.mubr.f32.gmra.mrb[0].mxu0 %v5020
      %v5114 = vpop.f32.mrb[0].mxu0
      %v5115 = vadd.f32 0.0, %v5114
      %v5116 = vpop.f32.mrb[0].mxu0
      %5117 = vmatprep.mubr.f32.mxu0 0.0
      %5118 = vmatmul.mubr.f32.gmra.mrb[0].mxu0 %v5019
      %v5119 = vpop.f32.mrb[0].mxu0
      %v5120 = vadd.f32 0.0, %v5119
      %v5121 = vpop.f32.mrb[0].mxu0
      %5122 = vmatprep.mubr.f32.mxu0 0.0
      %5123 = vmatmul.mubr.f32.gmra.mrb[0].mxu0 %v5018
      %v5124 = vpop.f32.mrb[0].mxu0
      %v5125 = vadd.f32 0.0, %v5124
      %v5126 = vpop.f32.mrb[0].mxu0
      %5127 = vmatprep.mubr.f32.mxu0 0.0
      %5128 = vmatmul.mubr.f32.gmra.mrb[0].mxu0 %v5017
      %v5129 = vpop.f32.mrb[0].mxu0
      %v5130 = vadd.f32 0.0, %v5129
      %v5131 = vpop.f32.mrb[0].mxu0
      %5132 = vmatprep.mubr.f32.mxu0 0.0
      %5133 = vmatmul.mubr.f32.gmra.mrb[0].mxu0 %v5016
      %v5134 = vpop.f32.mrb[0].mxu0
      %v5135 = vadd.f32 0.0, %v5134
      %v5136 = vpop.f32.mrb[0].mxu0
      %5137 = vmatprep.mubr.f32.mxu0 0.0
      %5138 = vmatmul.mubr.f32.gmra.mrb[0].mxu0 %v5015
      %v5139 = vpop.f32.mrb[0].mxu0
      %v5140 = vadd.f32 0.0, %v5139
      %v5141 = vpop.f32.mrb[0].mxu0
      %5142 = vmatprep.mubr.f32.mxu0 0.0
      %5143 = vmatmul.mubr.f32.gmra.mrb[0].mxu0 %v5014
      %v5144 = vpop.f32.mrb[0].mxu0
      %v5145 = vadd.f32 0.0, %v5144
      %v5146 = vpop.f32.mrb[0].mxu0
      %5147 = vmatprep.mubr.f32.mxu0 0.0
      %5148 = vmatmul.mubr.f32.gmra.mrb[0].mxu0 %v5013
      %v5149 = vpop.f32.mrb[0].mxu0
      %v5150 = vadd.f32 0.0, %v5149
      %v5151 = vpop.f32.mrb[0].mxu0
      %5152 = vmatprep.mubr.f32.mxu0 0.0
      %5153 = vmatmul.mubr.f32.gmra.mrb[0].mxu0 %v5012
      %v5154 = vpop.f32.mrb[0].mxu0
      %v5155 = vadd.f32 0.0, %v5154
      %v5156 = vpop.f32.mrb[0].mxu0
      %5157 = vmatprep.mubr.f32.mxu0 0.0
      %5158 = vmatmul.mubr.f32.gmra.mrb[0].mxu0 %v5011
      %v5159 = vpop.f32.mrb[0].mxu0
      %v5160 = vadd.f32 0.0, %v5159
      %v5161 = vpop.f32.mrb[0].mxu0
      %5162 = vmatprep.mubr.f32.mxu0 0.0
      %5163 = vmatmul.mubr.f32.gmra.mrb[0].mxu0 %v5010
      %v5164 = vpop.f32.mrb[0].mxu0
      %v5165 = vadd.f32 0.0, %v5164
      %v5166 = vpop.f32.mrb[0].mxu0
      %5167 = vmatprep.mubr.f32.mxu0 0.0
      %5168 = vmatmul.mubr.f32.gmra.mrb[0].mxu0 %v5009
      %v5169 = vpop.f32.mrb[0].mxu0
      %v5170 = vadd.f32 0.0, %v5169
      %v5171 = vpop.f32.mrb[0].mxu0
      %5172 = vmatprep.mubr.f32.mxu0 0.0
      %5173 = vmatmul.mubr.f32.gmra.mrb[0].mxu0 %v5008
      %v5174 = vpop.f32.mrb[0].mxu0
      %v5175 = vadd.f32 0.0, %v5174
      %v5176 = vpop.f32.mrb[0].mxu0
      %5177 = vmatprep.mubr.f32.mxu0 0.0
      %5178 = vmatmul.mubr.f32.gmra.mrb[0].mxu0 %v5007
      %v5179 = vpop.f32.mrb[0].mxu0
      %v5180 = vadd.f32 0.0, %v5179
      %v5181 = vpop.f32.mrb[0].mxu0
      %5182 = vmatprep.mubr.f32.mxu0 0.0
      %5183 = vmatmul.mubr.f32.gmra.mrb[0].mxu0 %v5006
      %v5184 = vpop.f32.mrb[0].mxu0
      %v5185 = vadd.f32 0.0, %v5184
      %v5186 = vpop.f32.mrb[0].mxu0
      %5187 = vmatprep.mubr.f32.mxu0 0.0
      %5188 = vmatmul.mubr.f32.gmra.mrb[0].mxu0 %v5005
      %v5189 = vpop.f32.mrb[0].mxu0
      %v5190 = vadd.f32 0.0, %v5189
      %v5191 = vpop.f32.mrb[0].mxu0
      %5192 = vmatprep.mubr.f32.mxu0 0.0
      %5193 = vmatmul.mubr.f32.gmra.mrb[0].mxu0 %v5004
      %v5194 = vpop.f32.mrb[0].mxu0
      %v5195 = vadd.f32 0.0, %v5194
      %v5196 = vpop.f32.mrb[0].mxu0
      %5197 = vmatprep.mubr.f32.mxu0 0.0
      %5198 = vmatmul.mubr.f32.gmra.mrb[0].mxu0 %v5003
      %v5199 = vpop.f32.mrb[0].mxu0
      %v5200 = vadd.f32 0.0, %v5199
      %v5201 = vpop.f32.mrb[0].mxu0
      %5202 = vmatprep.mubr.f32.mxu0 0.0
      %5203 = vmatmul.mubr.f32.gmra.mrb[0].mxu0 %v5002
      %v5204 = vpop.f32.mrb[0].mxu0
      %v5205 = vadd.f32 0.0, %v5204
      %v5206 = vpop.f32.mrb[0].mxu0
      %5207 = vmatprep.mubr.f32.mxu0 0.0
      %5208 = vmatmul.mubr.f32.gmra.mrb[0].mxu0 %v5001
      %v5209 = vpop.f32.mrb[0].mxu0
      %v5210 = vadd.f32 0.0, %v5209
      %v5211 = vpop.f32.mrb[0].mxu0
      %5212 = vmatprep.mubr.f32.mxu0 0.0
      %5213 = vmatmul.mubr.f32.gmra.mrb[0].mxu0 %v5000
      %v5214 = vpop.f32.mrb[0].mxu0
      %v5215 = vadd.f32 0.0, %v5214
      %v5216 = vpop.f32.mrb[0].mxu0
      %5217 = vmatprep.mubr.f32.mxu0 0.0
      %5218 = vmatmul.mubr.f32.gmra.mrb[0].mxu0 %v4999
      %v5219 = vpop.f32.mrb[0].mxu0
      %v5220 = vadd.f32 0.0, %v5219
      %v5221 = vpop.f32.mrb[0].mxu0
      %5222 = vmatprep.mubr.f32.mxu0 0.0
      %5223 = vmatmul.mubr.f32.gmra.mrb[0].mxu0 %v4998
      %v5224 = vpop.f32.mrb[0].mxu0
      %v5225 = vadd.f32 0.0, %v5224
      %v5226 = vpop.f32.mrb[0].mxu0
      %5227 = vmatprep.mubr.f32.mxu0 0.0
      %5228 = vmatmul.mubr.f32.gmra.mrb[0].mxu0 %v4997
      %v5229 = vpop.f32.mrb[0].mxu0
      %v5230 = vadd.f32 0.0, %v5229
      %v5231 = vpop.f32.mrb[0].mxu0
      %5232 = vmatprep.mubr.f32.mxu0 0.0
      %5233 = vmatmul.mubr.f32.gmra.mrb[0].mxu0 %v4996
      %v5234 = vpop.f32.mrb[0].mxu0
      %v5235 = vadd.f32 0.0, %v5234
      %v5236 = vpop.f32.mrb[0].mxu0
      %5237 = vmatprep.mubr.f32.mxu0 0.0
      %5238 = vmatmul.mubr.f32.gmra.mrb[0].mxu0 %v4995
      %v5239 = vpop.f32.mrb[0].mxu0
      %v5240 = vadd.f32 0.0, %v5239
      %v5241 = vpop.f32.mrb[0].mxu0
      %5242 = vmatprep.mubr.f32.mxu0 0.0
      %5243 = vmatmul.mubr.f32.gmra.mrb[0].mxu0 %v4994
      %v5244 = vpop.f32.mrb[0].mxu0
      %v5245 = vadd.f32 0.0, %v5244
      %v5246 = vpop.f32.mrb[0].mxu0
      %5247 = vmatprep.mubr.f32.mxu0 0.0
      %5248 = vmatmul.mubr.f32.gmra.mrb[0].mxu0 %v4993
      %v5249 = vpop.f32.mrb[0].mxu0
      %v5250 = vadd.f32 0.0, %v5249
      %v5251 = vpop.f32.mrb[0].mxu0
      %5252 = vmatprep.mubr.f32.mxu0 0.0
      %5253 = vmatmul.mubr.f32.gmra.mrb[0].mxu0 %v4992
      %v5254 = vpop.f32.mrb[0].mxu0
      %v5255 = vadd.f32 0.0, %v5254
      %v5256 = vpop.f32.mrb[0].mxu0
      %5257 = vmatprep.mubr.f32.mxu0 0.0
      %5258 = vmatmul.mubr.f32.gmra.mrb[0].mxu0 %v4991
      %v5259 = vpop.f32.mrb[0].mxu0
      %v5260 = vadd.f32 0.0, %v5259
      %v5261 = vpop.f32.mrb[0].mxu0
      %5262 = vmatprep.mubr.f32.mxu0 0.0
      %5263 = vmatmul.mubr.f32.gmra.mrb[0].mxu0 %v4990
      %v5264 = vpop.f32.mrb[0].mxu0
      %v5265 = vadd.f32 0.0, %v5264
      %v5266 = vpop.f32.mrb[0].mxu0
      %5267 = vmatprep.mubr.f32.mxu0 0.0
      %5268 = vmatmul.mubr.f32.gmra.mrb[0].mxu0 %v4989
      %v5269 = vpop.f32.mrb[0].mxu0
      %v5270 = vadd.f32 0.0, %v5269
      %v5271 = vpop.f32.mrb[0].mxu0
      %5272 = vmatprep.mubr.f32.mxu0 0.0
      %5273 = vmatmul.mubr.f32.gmra.mrb[0].mxu0 %v4988
      %v5274 = vpop.f32.mrb[0].mxu0
      %v5275 = vadd.f32 0.0, %v5274
      %v5276 = vpop.f32.mrb[0].mxu0
      %5277 = vmatprep.mubr.f32.mxu0 0.0
      %5278 = vmatmul.mubr.f32.gmra.mrb[0].mxu0 %v4987
      %v5279 = vpop.f32.mrb[0].mxu0
      %v5280 = vadd.f32 0.0, %v5279
      %v5281 = vpop.f32.mrb[0].mxu0
      %5282 = vmatprep.mubr.f32.mxu0 0.0
      %5283 = vmatmul.mubr.f32.gmra.mrb[0].mxu0 %v4986
      %v5284 = vpop.f32.mrb[0].mxu0
      %v5285 = vadd.f32 0.0, %v5284
      %v5286 = vpop.f32.mrb[0].mxu0
      %5287 = vmatprep.mubr.f32.mxu0 0.0
      %5288 = vmatmul.mubr.f32.gmra.mrb[0].mxu0 %v4985
      %v5289 = vpop.f32.mrb[0].mxu0
      %v5290 = vadd.f32 0.0, %v5289
      %v5291 = vpop.f32.mrb[0].mxu0
      %5292 = vmatprep.mubr.f32.mxu0 0.0
      %5293 = vmatmul.mubr.f32.gmra.mrb[0].mxu0 %v4984
      %v5294 = vpop.f32.mrb[0].mxu0
      %v5295 = vadd.f32 0.0, %v5294
      %v5296 = vpop.f32.mrb[0].mxu0
      %5297 = vmatprep.mubr.f32.mxu0 0.0
      %5298 = vmatmul.mubr.f32.gmra.mrb[0].mxu0 %v4983
      %v5299 = vpop.f32.mrb[0].mxu0
      %v5300 = vadd.f32 0.0, %v5299
      %v5301 = vpop.f32.mrb[0].mxu0
      %5302 = vmatprep.mubr.f32.mxu0 0.0
      %5303 = vmatmul.mubr.f32.gmra.mrb[0].mxu0 %v4982
      %v5304 = vpop.f32.mrb[0].mxu0
      %v5305 = vadd.f32 0.0, %v5304
      %v5306 = vpop.f32.mrb[0].mxu0
      %5307 = vdwg.mxu0
      %v5308 = vadd.f32 %v4736, %v5105
      %v5309 = vadd.f32 %v4741, %v5110
      %v5310 = vadd.f32 %v4746, %v5115
      %v5311 = vadd.f32 %v4751, %v5120
      %v5312 = vadd.f32 %v4756, %v5125
      %v5313 = vadd.f32 %v4761, %v5130
      %v5314 = vadd.f32 %v4766, %v5135
      %v5315 = vadd.f32 %v4771, %v5140
      %v5316 = vadd.f32 %v4776, %v5145
      %v5317 = vadd.f32 %v4781, %v5150
      %v5318 = vadd.f32 %v4786, %v5155
      %v5319 = vadd.f32 %v4791, %v5160
      %v5320 = vadd.f32 %v4796, %v5165
      %v5321 = vadd.f32 %v4801, %v5170
      %v5322 = vadd.f32 %v4806, %v5175
      %v5323 = vadd.f32 %v4811, %v5180
      %v5324 = vadd.f32 %v4816, %v5185
      %v5325 = vadd.f32 %v4821, %v5190
      %v5326 = vadd.f32 %v4826, %v5195
      %v5327 = vadd.f32 %v4831, %v5200
      %v5328 = vadd.f32 %v4836, %v5205
      %v5329 = vadd.f32 %v4841, %v5210
      %v5330 = vadd.f32 %v4846, %v5215
      %v5331 = vadd.f32 %v4851, %v5220
      %v5332 = vadd.f32 %v4856, %v5225
      %v5333 = vadd.f32 %v4861, %v5230
      %v5334 = vadd.f32 %v4866, %v5235
      %v5335 = vadd.f32 %v4871, %v5240
      %v5336 = vadd.f32 %v4876, %v5245
      %v5337 = vadd.f32 %v4881, %v5250
      %v5338 = vadd.f32 %v4886, %v5255
      %v5339 = vadd.f32 %v4891, %v5260
      %v5340 = vadd.f32 %v4896, %v5265
      %v5341 = vadd.f32 %v4901, %v5270
      %v5342 = vadd.f32 %v4906, %v5275
      %v5343 = vadd.f32 %v4911, %v5280
      %v5344 = vadd.f32 %v4916, %v5285
      %v5345 = vadd.f32 %v4921, %v5290
      %v5346 = vadd.f32 %v4926, %v5295
      %v5347 = vadd.f32 %v4931, %v5300
      %v5348 = vadd.f32 %v4936, %v5305
      %s5349 = scalar_lea.vmem %s4, 384
      %v5350 = vld [vmem:[%s5349] sm:$0xff]
      %v5351 = vld [vmem:[%s5349 + $0x8] sm:$0xff]
      %v5352 = vld [vmem:[%s5349 + $0x10] sm:$0xff]
      %v5353 = vld [vmem:[%s5349 + $0x18] sm:$0xff]
      %v5354 = vld [vmem:[%s5349 + $0x20] sm:$0xff]
      %v5355 = vld [vmem:[%s5349 + $0x28] sm:$0xff]
      %v5356 = vld [vmem:[%s5349 + $0x30] sm:$0xff]
      %v5357 = vld [vmem:[%s5349 + $0x38] sm:$0xff]
      %v5358 = vld [vmem:[%s5349 + $0x40] sm:$0xff]
      %v5359 = vld [vmem:[%s5349 + $0x48] sm:$0xff]
      %v5360 = vld [vmem:[%s5349 + $0x50] sm:$0xff]
      %v5361 = vld [vmem:[%s5349 + $0x58] sm:$0xff]
      %v5362 = vld [vmem:[%s5349 + $0x60] sm:$0xff]
      %v5363 = vld [vmem:[%s5349 + $0x68] sm:$0xff]
      %v5364 = vld [vmem:[%s5349 + $0x70] sm:$0xff]
      %v5365 = vld [vmem:[%s5349 + $0x78] sm:$0xff]
      %5366 = vmatprep.subr.mxu0 0.0
      %5367 = vmatpush1.msra.mxu0 %v5350
      %5368 = vmatprep.subr.mxu0 0.0
      %5369 = vmatpush1.msra.mxu0 %v5351
      %5370 = vmatprep.subr.mxu0 0.0
      %5371 = vmatpush1.msra.mxu0 %v5352
      %5372 = vmatprep.subr.mxu0 0.0
      %5373 = vmatpush1.msra.mxu0 %v5353
      %5374 = vmatprep.subr.mxu0 0.0
      %5375 = vmatpush1.msra.mxu0 %v5354
      %5376 = vmatprep.subr.mxu0 0.0
      %5377 = vmatpush1.msra.mxu0 %v5355
      %5378 = vmatprep.subr.mxu0 0.0
      %5379 = vmatpush1.msra.mxu0 %v5356
      %5380 = vmatprep.subr.mxu0 0.0
      %5381 = vmatpush1.msra.mxu0 %v5357
      %5382 = vmatprep.subr.mxu0 0.0
      %5383 = vmatpush1.msra.mxu0 %v5358
      %5384 = vmatprep.subr.mxu0 0.0
      %5385 = vmatpush1.msra.mxu0 %v5359
      %5386 = vmatprep.subr.mxu0 0.0
      %5387 = vmatpush1.msra.mxu0 %v5360
      %5388 = vmatprep.subr.mxu0 0.0
      %5389 = vmatpush1.msra.mxu0 %v5361
      %5390 = vmatprep.subr.mxu0 0.0
      %5391 = vmatpush1.msra.mxu0 %v5362
      %5392 = vmatprep.subr.mxu0 0.0
      %5393 = vmatpush1.msra.mxu0 %v5363
      %5394 = vmatprep.subr.mxu0 0.0
      %5395 = vmatpush1.msra.mxu0 %v5364
      %5396 = vmatprep.subr.mxu0 0.0
      %5397 = vmatpush1.msra.mxu0 %v5365
      %5398 = vmatprep.subr.mxu0 0.0
      %5399 = vmatpush1.msra.mxu0 0.0
      %5400 = vmatprep.subr.mxu0 0.0
      %5401 = vmatpush1.msra.mxu0 0.0
      %5402 = vmatprep.subr.mxu0 0.0
      %5403 = vmatpush1.msra.mxu0 0.0
      %5404 = vmatprep.subr.mxu0 0.0
      %5405 = vmatpush1.msra.mxu0 0.0
      %5406 = vmatprep.subr.mxu0 0.0
      %5407 = vmatpush1.msra.mxu0 0.0
      %5408 = vmatprep.subr.mxu0 0.0
      %5409 = vmatpush1.msra.mxu0 0.0
      %5410 = vmatprep.subr.mxu0 0.0
      %5411 = vmatpush1.msra.mxu0 0.0
      %5412 = vmatprep.subr.mxu0 0.0
      %5413 = vmatpush1.msra.mxu0 0.0
      %5414 = vmatprep.subr.mxu0 0.0
      %5415 = vmatpush1.msra.mxu0 0.0
      %5416 = vmatprep.subr.mxu0 0.0
      %5417 = vmatpush1.msra.mxu0 0.0
      %5418 = vmatprep.subr.mxu0 0.0
      %5419 = vmatpush1.msra.mxu0 0.0
      %5420 = vmatprep.subr.mxu0 0.0
      %5421 = vmatpush1.msra.mxu0 0.0
      %5422 = vmatprep.subr.mxu0 0.0
      %5423 = vmatpush1.msra.mxu0 0.0
      %5424 = vmatprep.subr.mxu0 0.0
      %5425 = vmatpush1.msra.mxu0 0.0
      %5426 = vmatprep.subr.mxu0 0.0
      %5427 = vmatpush1.msra.mxu0 0.0
      %5428 = vmatprep.subr.mxu0 0.0
      %5429 = vmatpush1.msra.mxu0 0.0
      %5430 = vmatprep.mubr.f32.mxu0 0.0
      %5431 = vmatmul.mubr.f32.gmra.mrb[0].mxu0 %v5020
      %v5432 = vpop.f32.mrb[0].mxu0
      %v5433 = vadd.f32 0.0, %v5432
      %v5434 = vpop.f32.mrb[0].mxu0
      %5435 = vmatprep.mubr.f32.mxu0 0.0
      %5436 = vmatmul.mubr.f32.gmra.mrb[0].mxu0 %v5019
      %v5437 = vpop.f32.mrb[0].mxu0
      %v5438 = vadd.f32 0.0, %v5437
      %v5439 = vpop.f32.mrb[0].mxu0
      %5440 = vmatprep.mubr.f32.mxu0 0.0
      %5441 = vmatmul.mubr.f32.gmra.mrb[0].mxu0 %v5018
      %v5442 = vpop.f32.mrb[0].mxu0
      %v5443 = vadd.f32 0.0, %v5442
      %v5444 = vpop.f32.mrb[0].mxu0
      %5445 = vmatprep.mubr.f32.mxu0 0.0
      %5446 = vmatmul.mubr.f32.gmra.mrb[0].mxu0 %v5017
      %v5447 = vpop.f32.mrb[0].mxu0
      %v5448 = vadd.f32 0.0, %v5447
      %v5449 = vpop.f32.mrb[0].mxu0
      %5450 = vmatprep.mubr.f32.mxu0 0.0
      %5451 = vmatmul.mubr.f32.gmra.mrb[0].mxu0 %v5016
      %v5452 = vpop.f32.mrb[0].mxu0
      %v5453 = vadd.f32 0.0, %v5452
      %v5454 = vpop.f32.mrb[0].mxu0
      %5455 = vmatprep.mubr.f32.mxu0 0.0
      %5456 = vmatmul.mubr.f32.gmra.mrb[0].mxu0 %v5015
      %v5457 = vpop.f32.mrb[0].mxu0
      %v5458 = vadd.f32 0.0, %v5457
      %v5459 = vpop.f32.mrb[0].mxu0
      %5460 = vmatprep.mubr.f32.mxu0 0.0
      %5461 = vmatmul.mubr.f32.gmra.mrb[0].mxu0 %v5014
      %v5462 = vpop.f32.mrb[0].mxu0
      %v5463 = vadd.f32 0.0, %v5462
      %v5464 = vpop.f32.mrb[0].mxu0
      %5465 = vmatprep.mubr.f32.mxu0 0.0
      %5466 = vmatmul.mubr.f32.gmra.mrb[0].mxu0 %v5013
      %v5467 = vpop.f32.mrb[0].mxu0
      %v5468 = vadd.f32 0.0, %v5467
      %v5469 = vpop.f32.mrb[0].mxu0
      %5470 = vmatprep.mubr.f32.mxu0 0.0
      %5471 = vmatmul.mubr.f32.gmra.mrb[0].mxu0 %v5012
      %v5472 = vpop.f32.mrb[0].mxu0
      %v5473 = vadd.f32 0.0, %v5472
      %v5474 = vpop.f32.mrb[0].mxu0
      %5475 = vmatprep.mubr.f32.mxu0 0.0
      %5476 = vmatmul.mubr.f32.gmra.mrb[0].mxu0 %v5011
      %v5477 = vpop.f32.mrb[0].mxu0
      %v5478 = vadd.f32 0.0, %v5477
      %v5479 = vpop.f32.mrb[0].mxu0
      %5480 = vmatprep.mubr.f32.mxu0 0.0
      %5481 = vmatmul.mubr.f32.gmra.mrb[0].mxu0 %v5010
      %v5482 = vpop.f32.mrb[0].mxu0
      %v5483 = vadd.f32 0.0, %v5482
      %v5484 = vpop.f32.mrb[0].mxu0
      %5485 = vmatprep.mubr.f32.mxu0 0.0
      %5486 = vmatmul.mubr.f32.gmra.mrb[0].mxu0 %v5009
      %v5487 = vpop.f32.mrb[0].mxu0
      %v5488 = vadd.f32 0.0, %v5487
      %v5489 = vpop.f32.mrb[0].mxu0
      %5490 = vmatprep.mubr.f32.mxu0 0.0
      %5491 = vmatmul.mubr.f32.gmra.mrb[0].mxu0 %v5008
      %v5492 = vpop.f32.mrb[0].mxu0
      %v5493 = vadd.f32 0.0, %v5492
      %v5494 = vpop.f32.mrb[0].mxu0
      %5495 = vmatprep.mubr.f32.mxu0 0.0
      %5496 = vmatmul.mubr.f32.gmra.mrb[0].mxu0 %v5007
      %v5497 = vpop.f32.mrb[0].mxu0
      %v5498 = vadd.f32 0.0, %v5497
      %v5499 = vpop.f32.mrb[0].mxu0
      %5500 = vmatprep.mubr.f32.mxu0 0.0
      %5501 = vmatmul.mubr.f32.gmra.mrb[0].mxu0 %v5006
      %v5502 = vpop.f32.mrb[0].mxu0
      %v5503 = vadd.f32 0.0, %v5502
      %v5504 = vpop.f32.mrb[0].mxu0
      %5505 = vmatprep.mubr.f32.mxu0 0.0
      %5506 = vmatmul.mubr.f32.gmra.mrb[0].mxu0 %v5005
      %v5507 = vpop.f32.mrb[0].mxu0
      %v5508 = vadd.f32 0.0, %v5507
      %v5509 = vpop.f32.mrb[0].mxu0
      %5510 = vmatprep.mubr.f32.mxu0 0.0
      %5511 = vmatmul.mubr.f32.gmra.mrb[0].mxu0 %v5004
      %v5512 = vpop.f32.mrb[0].mxu0
      %v5513 = vadd.f32 0.0, %v5512
      %v5514 = vpop.f32.mrb[0].mxu0
      %5515 = vmatprep.mubr.f32.mxu0 0.0
      %5516 = vmatmul.mubr.f32.gmra.mrb[0].mxu0 %v5003
      %v5517 = vpop.f32.mrb[0].mxu0
      %v5518 = vadd.f32 0.0, %v5517
      %v5519 = vpop.f32.mrb[0].mxu0
      %5520 = vmatprep.mubr.f32.mxu0 0.0
      %5521 = vmatmul.mubr.f32.gmra.mrb[0].mxu0 %v5002
      %v5522 = vpop.f32.mrb[0].mxu0
      %v5523 = vadd.f32 0.0, %v5522
      %v5524 = vpop.f32.mrb[0].mxu0
      %5525 = vmatprep.mubr.f32.mxu0 0.0
      %5526 = vmatmul.mubr.f32.gmra.mrb[0].mxu0 %v5001
      %v5527 = vpop.f32.mrb[0].mxu0
      %v5528 = vadd.f32 0.0, %v5527
      %v5529 = vpop.f32.mrb[0].mxu0
      %5530 = vmatprep.mubr.f32.mxu0 0.0
      %5531 = vmatmul.mubr.f32.gmra.mrb[0].mxu0 %v5000
      %v5532 = vpop.f32.mrb[0].mxu0
      %v5533 = vadd.f32 0.0, %v5532
      %v5534 = vpop.f32.mrb[0].mxu0
      %5535 = vmatprep.mubr.f32.mxu0 0.0
      %5536 = vmatmul.mubr.f32.gmra.mrb[0].mxu0 %v4999
      %v5537 = vpop.f32.mrb[0].mxu0
      %v5538 = vadd.f32 0.0, %v5537
      %v5539 = vpop.f32.mrb[0].mxu0
      %5540 = vmatprep.mubr.f32.mxu0 0.0
      %5541 = vmatmul.mubr.f32.gmra.mrb[0].mxu0 %v4998
      %v5542 = vpop.f32.mrb[0].mxu0
      %v5543 = vadd.f32 0.0, %v5542
      %v5544 = vpop.f32.mrb[0].mxu0
      %5545 = vmatprep.mubr.f32.mxu0 0.0
      %5546 = vmatmul.mubr.f32.gmra.mrb[0].mxu0 %v4997
      %v5547 = vpop.f32.mrb[0].mxu0
      %v5548 = vadd.f32 0.0, %v5547
      %v5549 = vpop.f32.mrb[0].mxu0
      %5550 = vmatprep.mubr.f32.mxu0 0.0
      %5551 = vmatmul.mubr.f32.gmra.mrb[0].mxu0 %v4996
      %v5552 = vpop.f32.mrb[0].mxu0
      %v5553 = vadd.f32 0.0, %v5552
      %v5554 = vpop.f32.mrb[0].mxu0
      %5555 = vmatprep.mubr.f32.mxu0 0.0
      %5556 = vmatmul.mubr.f32.gmra.mrb[0].mxu0 %v4995
      %v5557 = vpop.f32.mrb[0].mxu0
      %v5558 = vadd.f32 0.0, %v5557
      %v5559 = vpop.f32.mrb[0].mxu0
      %5560 = vmatprep.mubr.f32.mxu0 0.0
      %5561 = vmatmul.mubr.f32.gmra.mrb[0].mxu0 %v4994
      %v5562 = vpop.f32.mrb[0].mxu0
      %v5563 = vadd.f32 0.0, %v5562
      %v5564 = vpop.f32.mrb[0].mxu0
      %5565 = vmatprep.mubr.f32.mxu0 0.0
      %5566 = vmatmul.mubr.f32.gmra.mrb[0].mxu0 %v4993
      %v5567 = vpop.f32.mrb[0].mxu0
      %v5568 = vadd.f32 0.0, %v5567
      %v5569 = vpop.f32.mrb[0].mxu0
      %5570 = vmatprep.mubr.f32.mxu0 0.0
      %5571 = vmatmul.mubr.f32.gmra.mrb[0].mxu0 %v4992
      %v5572 = vpop.f32.mrb[0].mxu0
      %v5573 = vadd.f32 0.0, %v5572
      %v5574 = vpop.f32.mrb[0].mxu0
      %5575 = vmatprep.mubr.f32.mxu0 0.0
      %5576 = vmatmul.mubr.f32.gmra.mrb[0].mxu0 %v4991
      %v5577 = vpop.f32.mrb[0].mxu0
      %v5578 = vadd.f32 0.0, %v5577
      %v5579 = vpop.f32.mrb[0].mxu0
      %5580 = vmatprep.mubr.f32.mxu0 0.0
      %5581 = vmatmul.mubr.f32.gmra.mrb[0].mxu0 %v4990
      %v5582 = vpop.f32.mrb[0].mxu0
      %v5583 = vadd.f32 0.0, %v5582
      %v5584 = vpop.f32.mrb[0].mxu0
      %5585 = vmatprep.mubr.f32.mxu0 0.0
      %5586 = vmatmul.mubr.f32.gmra.mrb[0].mxu0 %v4989
      %v5587 = vpop.f32.mrb[0].mxu0
      %v5588 = vadd.f32 0.0, %v5587
      %v5589 = vpop.f32.mrb[0].mxu0
      %5590 = vmatprep.mubr.f32.mxu0 0.0
      %5591 = vmatmul.mubr.f32.gmra.mrb[0].mxu0 %v4988
      %v5592 = vpop.f32.mrb[0].mxu0
      %v5593 = vadd.f32 0.0, %v5592
      %v5594 = vpop.f32.mrb[0].mxu0
      %5595 = vmatprep.mubr.f32.mxu0 0.0
      %5596 = vmatmul.mubr.f32.gmra.mrb[0].mxu0 %v4987
      %v5597 = vpop.f32.mrb[0].mxu0
      %v5598 = vadd.f32 0.0, %v5597
      %v5599 = vpop.f32.mrb[0].mxu0
      %5600 = vmatprep.mubr.f32.mxu0 0.0
      %5601 = vmatmul.mubr.f32.gmra.mrb[0].mxu0 %v4986
      %v5602 = vpop.f32.mrb[0].mxu0
      %v5603 = vadd.f32 0.0, %v5602
      %v5604 = vpop.f32.mrb[0].mxu0
      %5605 = vmatprep.mubr.f32.mxu0 0.0
      %5606 = vmatmul.mubr.f32.gmra.mrb[0].mxu0 %v4985
      %v5607 = vpop.f32.mrb[0].mxu0
      %v5608 = vadd.f32 0.0, %v5607
      %v5609 = vpop.f32.mrb[0].mxu0
      %5610 = vmatprep.mubr.f32.mxu0 0.0
      %5611 = vmatmul.mubr.f32.gmra.mrb[0].mxu0 %v4984
      %v5612 = vpop.f32.mrb[0].mxu0
      %v5613 = vadd.f32 0.0, %v5612
      %v5614 = vpop.f32.mrb[0].mxu0
      %5615 = vmatprep.mubr.f32.mxu0 0.0
      %5616 = vmatmul.mubr.f32.gmra.mrb[0].mxu0 %v4983
      %v5617 = vpop.f32.mrb[0].mxu0
      %v5618 = vadd.f32 0.0, %v5617
      %v5619 = vpop.f32.mrb[0].mxu0
      %5620 = vmatprep.mubr.f32.mxu0 0.0
      %5621 = vmatmul.mubr.f32.gmra.mrb[0].mxu0 %v4982
      %v5622 = vpop.f32.mrb[0].mxu0
      %v5623 = vadd.f32 0.0, %v5622
      %v5624 = vpop.f32.mrb[0].mxu0
      %5625 = vmatprep.mubr.f32.mxu0 0.0
      %5626 = vmatmul.mubr.f32.gmra.mrb[0].mxu0 %v4981
      %v5627 = vpop.f32.mrb[0].mxu0
      %v5628 = vadd.f32 0.0, %v5627
      %v5629 = vpop.f32.mrb[0].mxu0
      %5630 = vmatprep.mubr.f32.mxu0 0.0
      %5631 = vmatmul.mubr.f32.gmra.mrb[0].mxu0 %v4980
      %v5632 = vpop.f32.mrb[0].mxu0
      %v5633 = vadd.f32 0.0, %v5632
      %v5634 = vpop.f32.mrb[0].mxu0
      %5635 = vdwg.mxu0
      %v5636 = vadd.f32 %v5308, %v5433
      %v5637 = vadd.f32 %v5309, %v5438
      %v5638 = vadd.f32 %v5310, %v5443
      %v5639 = vadd.f32 %v5311, %v5448
      %v5640 = vadd.f32 %v5312, %v5453
      %v5641 = vadd.f32 %v5313, %v5458
      %v5642 = vadd.f32 %v5314, %v5463
      %v5643 = vadd.f32 %v5315, %v5468
      %v5644 = vadd.f32 %v5316, %v5473
      %v5645 = vadd.f32 %v5317, %v5478
      %v5646 = vadd.f32 %v5318, %v5483
      %v5647 = vadd.f32 %v5319, %v5488
      %v5648 = vadd.f32 %v5320, %v5493
      %v5649 = vadd.f32 %v5321, %v5498
      %v5650 = vadd.f32 %v5322, %v5503
      %v5651 = vadd.f32 %v5323, %v5508
      %v5652 = vadd.f32 %v5324, %v5513
      %v5653 = vadd.f32 %v5325, %v5518
      %v5654 = vadd.f32 %v5326, %v5523
      %v5655 = vadd.f32 %v5327, %v5528
      %v5656 = vadd.f32 %v5328, %v5533
      %v5657 = vadd.f32 %v5329, %v5538
      %v5658 = vadd.f32 %v5330, %v5543
      %v5659 = vadd.f32 %v5331, %v5548
      %v5660 = vadd.f32 %v5332, %v5553
      %v5661 = vadd.f32 %v5333, %v5558
      %v5662 = vadd.f32 %v5334, %v5563
      %v5663 = vadd.f32 %v5335, %v5568
      %v5664 = vadd.f32 %v5336, %v5573
      %v5665 = vadd.f32 %v5337, %v5578
      %v5666 = vadd.f32 %v5338, %v5583
      %v5667 = vadd.f32 %v5339, %v5588
      %v5668 = vadd.f32 %v5340, %v5593
      %v5669 = vadd.f32 %v5341, %v5598
      %v5670 = vadd.f32 %v5342, %v5603
      %v5671 = vadd.f32 %v5343, %v5608
      %v5672 = vadd.f32 %v5344, %v5613
      %v5673 = vadd.f32 %v5345, %v5618
      %v5674 = vadd.f32 %v5346, %v5623
      %v5675 = vadd.f32 %v5347, %v5628
      %v5676 = vadd.f32 %v5348, %v5633
      %s5677 = scalar_lea.vmem %s4, 512
      %v5678 = vld [vmem:[%s5677] sm:$0xff]
      %v5679 = vld [vmem:[%s5677 + $0x8] sm:$0xff]
      %v5680 = vld [vmem:[%s5677 + $0x10] sm:$0xff]
      %v5681 = vld [vmem:[%s5677 + $0x18] sm:$0xff]
      %v5682 = vld [vmem:[%s5677 + $0x20] sm:$0xff]
      %v5683 = vld [vmem:[%s5677 + $0x28] sm:$0xff]
      %v5684 = vld [vmem:[%s5677 + $0x30] sm:$0xff]
      %v5685 = vld [vmem:[%s5677 + $0x38] sm:$0xff]
      %v5686 = vld [vmem:[%s5677 + $0x40] sm:$0xff]
      %v5687 = vld [vmem:[%s5677 + $0x48] sm:$0xff]
      %v5688 = vld [vmem:[%s5677 + $0x50] sm:$0xff]
      %v5689 = vld [vmem:[%s5677 + $0x58] sm:$0xff]
      %v5690 = vld [vmem:[%s5677 + $0x60] sm:$0xff]
      %v5691 = vld [vmem:[%s5677 + $0x68] sm:$0xff]
      %v5692 = vld [vmem:[%s5677 + $0x70] sm:$0xff]
      %v5693 = vld [vmem:[%s5677 + $0x78] sm:$0xff]
      %5694 = vmatprep.subr.mxu0 0.0
      %5695 = vmatpush1.msra.mxu0 %v5678
      %5696 = vmatprep.subr.mxu0 0.0
      %5697 = vmatpush1.msra.mxu0 %v5679
      %5698 = vmatprep.subr.mxu0 0.0
      %5699 = vmatpush1.msra.mxu0 %v5680
      %5700 = vmatprep.subr.mxu0 0.0
      %5701 = vmatpush1.msra.mxu0 %v5681
      %5702 = vmatprep.subr.mxu0 0.0
      %5703 = vmatpush1.msra.mxu0 %v5682
      %5704 = vmatprep.subr.mxu0 0.0
      %5705 = vmatpush1.msra.mxu0 %v5683
      %5706 = vmatprep.subr.mxu0 0.0
      %5707 = vmatpush1.msra.mxu0 %v5684
      %5708 = vmatprep.subr.mxu0 0.0
      %5709 = vmatpush1.msra.mxu0 %v5685
      %5710 = vmatprep.subr.mxu0 0.0
      %5711 = vmatpush1.msra.mxu0 %v5686
      %5712 = vmatprep.subr.mxu0 0.0
      %5713 = vmatpush1.msra.mxu0 %v5687
      %5714 = vmatprep.subr.mxu0 0.0
      %5715 = vmatpush1.msra.mxu0 %v5688
      %5716 = vmatprep.subr.mxu0 0.0
      %5717 = vmatpush1.msra.mxu0 %v5689
      %5718 = vmatprep.subr.mxu0 0.0
      %5719 = vmatpush1.msra.mxu0 %v5690
      %5720 = vmatprep.subr.mxu0 0.0
      %5721 = vmatpush1.msra.mxu0 %v5691
      %5722 = vmatprep.subr.mxu0 0.0
      %5723 = vmatpush1.msra.mxu0 %v5692
      %5724 = vmatprep.subr.mxu0 0.0
      %5725 = vmatpush1.msra.mxu0 %v5693
      %5726 = vmatprep.subr.mxu0 0.0
      %5727 = vmatpush1.msra.mxu0 0.0
      %5728 = vmatprep.subr.mxu0 0.0
      %5729 = vmatpush1.msra.mxu0 0.0
      %5730 = vmatprep.subr.mxu0 0.0
      %5731 = vmatpush1.msra.mxu0 0.0
      %5732 = vmatprep.subr.mxu0 0.0
      %5733 = vmatpush1.msra.mxu0 0.0
      %5734 = vmatprep.subr.mxu0 0.0
      %5735 = vmatpush1.msra.mxu0 0.0
      %5736 = vmatprep.subr.mxu0 0.0
      %5737 = vmatpush1.msra.mxu0 0.0
      %5738 = vmatprep.subr.mxu0 0.0
      %5739 = vmatpush1.msra.mxu0 0.0
      %5740 = vmatprep.subr.mxu0 0.0
      %5741 = vmatpush1.msra.mxu0 0.0
      %5742 = vmatprep.subr.mxu0 0.0
      %5743 = vmatpush1.msra.mxu0 0.0
      %5744 = vmatprep.subr.mxu0 0.0
      %5745 = vmatpush1.msra.mxu0 0.0
      %5746 = vmatprep.subr.mxu0 0.0
      %5747 = vmatpush1.msra.mxu0 0.0
      %5748 = vmatprep.subr.mxu0 0.0
      %5749 = vmatpush1.msra.mxu0 0.0
      %5750 = vmatprep.subr.mxu0 0.0
      %5751 = vmatpush1.msra.mxu0 0.0
      %5752 = vmatprep.subr.mxu0 0.0
      %5753 = vmatpush1.msra.mxu0 0.0
      %5754 = vmatprep.subr.mxu0 0.0
      %5755 = vmatpush1.msra.mxu0 0.0
      %5756 = vmatprep.subr.mxu0 0.0
      %5757 = vmatpush1.msra.mxu0 0.0
      %5758 = vmatprep.mubr.f32.mxu0 0.0
      %5759 = vmatmul.mubr.f32.gmra.mrb[0].mxu0 %v4161
      %v5760 = vpop.f32.mrb[0].mxu0
      %v5761 = vadd.f32 0.0, %v5760
      %v5762 = vpop.f32.mrb[0].mxu0
      %5763 = vmatprep.mubr.f32.mxu0 0.0
      %5764 = vmatmul.mubr.f32.gmra.mrb[0].mxu0 %v4162
      %v5765 = vpop.f32.mrb[0].mxu0
      %v5766 = vadd.f32 0.0, %v5765
      %v5767 = vpop.f32.mrb[0].mxu0
      %5768 = vmatprep.mubr.f32.mxu0 0.0
      %5769 = vmatmul.mubr.f32.gmra.mrb[0].mxu0 %v4163
      %v5770 = vpop.f32.mrb[0].mxu0
      %v5771 = vadd.f32 0.0, %v5770
      %v5772 = vpop.f32.mrb[0].mxu0
      %5773 = vmatprep.mubr.f32.mxu0 0.0
      %5774 = vmatmul.mubr.f32.gmra.mrb[0].mxu0 %v4164
      %v5775 = vpop.f32.mrb[0].mxu0
      %v5776 = vadd.f32 0.0, %v5775
      %v5777 = vpop.f32.mrb[0].mxu0
      %5778 = vmatprep.mubr.f32.mxu0 0.0
      %5779 = vmatmul.mubr.f32.gmra.mrb[0].mxu0 %v4165
      %v5780 = vpop.f32.mrb[0].mxu0
      %v5781 = vadd.f32 0.0, %v5780
      %v5782 = vpop.f32.mrb[0].mxu0
      %5783 = vmatprep.mubr.f32.mxu0 0.0
      %5784 = vmatmul.mubr.f32.gmra.mrb[0].mxu0 %v4166
      %v5785 = vpop.f32.mrb[0].mxu0
      %v5786 = vadd.f32 0.0, %v5785
      %v5787 = vpop.f32.mrb[0].mxu0
      %5788 = vmatprep.mubr.f32.mxu0 0.0
      %5789 = vmatmul.mubr.f32.gmra.mrb[0].mxu0 %v4167
      %v5790 = vpop.f32.mrb[0].mxu0
      %v5791 = vadd.f32 0.0, %v5790
      %v5792 = vpop.f32.mrb[0].mxu0
      %5793 = vmatprep.mubr.f32.mxu0 0.0
      %5794 = vmatmul.mubr.f32.gmra.mrb[0].mxu0 %v4168
      %v5795 = vpop.f32.mrb[0].mxu0
      %v5796 = vadd.f32 0.0, %v5795
      %v5797 = vpop.f32.mrb[0].mxu0
      %5798 = vmatprep.mubr.f32.mxu0 0.0
      %5799 = vmatmul.mubr.f32.gmra.mrb[0].mxu0 %v4169
      %v5800 = vpop.f32.mrb[0].mxu0
      %v5801 = vadd.f32 0.0, %v5800
      %v5802 = vpop.f32.mrb[0].mxu0
      %5803 = vmatprep.mubr.f32.mxu0 0.0
      %5804 = vmatmul.mubr.f32.gmra.mrb[0].mxu0 %v4170
      %v5805 = vpop.f32.mrb[0].mxu0
      %v5806 = vadd.f32 0.0, %v5805
      %v5807 = vpop.f32.mrb[0].mxu0
      %5808 = vmatprep.mubr.f32.mxu0 0.0
      %5809 = vmatmul.mubr.f32.gmra.mrb[0].mxu0 %v4171
      %v5810 = vpop.f32.mrb[0].mxu0
      %v5811 = vadd.f32 0.0, %v5810
      %v5812 = vpop.f32.mrb[0].mxu0
      %5813 = vmatprep.mubr.f32.mxu0 0.0
      %5814 = vmatmul.mubr.f32.gmra.mrb[0].mxu0 %v4172
      %v5815 = vpop.f32.mrb[0].mxu0
      %v5816 = vadd.f32 0.0, %v5815
      %v5817 = vpop.f32.mrb[0].mxu0
      %5818 = vmatprep.mubr.f32.mxu0 0.0
      %5819 = vmatmul.mubr.f32.gmra.mrb[0].mxu0 %v4173
      %v5820 = vpop.f32.mrb[0].mxu0
      %v5821 = vadd.f32 0.0, %v5820
      %v5822 = vpop.f32.mrb[0].mxu0
      %5823 = vmatprep.mubr.f32.mxu0 0.0
      %5824 = vmatmul.mubr.f32.gmra.mrb[0].mxu0 %v4174
      %v5825 = vpop.f32.mrb[0].mxu0
      %v5826 = vadd.f32 0.0, %v5825
      %v5827 = vpop.f32.mrb[0].mxu0
      %5828 = vmatprep.mubr.f32.mxu0 0.0
      %5829 = vmatmul.mubr.f32.gmra.mrb[0].mxu0 %v4175
      %v5830 = vpop.f32.mrb[0].mxu0
      %v5831 = vadd.f32 0.0, %v5830
      %v5832 = vpop.f32.mrb[0].mxu0
      %5833 = vmatprep.mubr.f32.mxu0 0.0
      %5834 = vmatmul.mubr.f32.gmra.mrb[0].mxu0 %v4176
      %v5835 = vpop.f32.mrb[0].mxu0
      %v5836 = vadd.f32 0.0, %v5835
      %v5837 = vpop.f32.mrb[0].mxu0
      %5838 = vmatprep.mubr.f32.mxu0 0.0
      %5839 = vmatmul.mubr.f32.gmra.mrb[0].mxu0 %v4177
      %v5840 = vpop.f32.mrb[0].mxu0
      %v5841 = vadd.f32 0.0, %v5840
      %v5842 = vpop.f32.mrb[0].mxu0
      %5843 = vmatprep.mubr.f32.mxu0 0.0
      %5844 = vmatmul.mubr.f32.gmra.mrb[0].mxu0 %v4178
      %v5845 = vpop.f32.mrb[0].mxu0
      %v5846 = vadd.f32 0.0, %v5845
      %v5847 = vpop.f32.mrb[0].mxu0
      %5848 = vmatprep.mubr.f32.mxu0 0.0
      %5849 = vmatmul.mubr.f32.gmra.mrb[0].mxu0 %v4179
      %v5850 = vpop.f32.mrb[0].mxu0
      %v5851 = vadd.f32 0.0, %v5850
      %v5852 = vpop.f32.mrb[0].mxu0
      %5853 = vmatprep.mubr.f32.mxu0 0.0
      %5854 = vmatmul.mubr.f32.gmra.mrb[0].mxu0 %v4180
      %v5855 = vpop.f32.mrb[0].mxu0
      %v5856 = vadd.f32 0.0, %v5855
      %v5857 = vpop.f32.mrb[0].mxu0
      %5858 = vmatprep.mubr.f32.mxu0 0.0
      %5859 = vmatmul.mubr.f32.gmra.mrb[0].mxu0 %v4181
      %v5860 = vpop.f32.mrb[0].mxu0
      %v5861 = vadd.f32 0.0, %v5860
      %v5862 = vpop.f32.mrb[0].mxu0
      %5863 = vmatprep.mubr.f32.mxu0 0.0
      %5864 = vmatmul.mubr.f32.gmra.mrb[0].mxu0 %v4182
      %v5865 = vpop.f32.mrb[0].mxu0
      %v5866 = vadd.f32 0.0, %v5865
      %v5867 = vpop.f32.mrb[0].mxu0
      %5868 = vmatprep.mubr.f32.mxu0 0.0
      %5869 = vmatmul.mubr.f32.gmra.mrb[0].mxu0 %v4183
      %v5870 = vpop.f32.mrb[0].mxu0
      %v5871 = vadd.f32 0.0, %v5870
      %v5872 = vpop.f32.mrb[0].mxu0
      %5873 = vmatprep.mubr.f32.mxu0 0.0
      %5874 = vmatmul.mubr.f32.gmra.mrb[0].mxu0 %v4184
      %v5875 = vpop.f32.mrb[0].mxu0
      %v5876 = vadd.f32 0.0, %v5875
      %v5877 = vpop.f32.mrb[0].mxu0
      %5878 = vmatprep.mubr.f32.mxu0 0.0
      %5879 = vmatmul.mubr.f32.gmra.mrb[0].mxu0 %v4185
      %v5880 = vpop.f32.mrb[0].mxu0
      %v5881 = vadd.f32 0.0, %v5880
      %v5882 = vpop.f32.mrb[0].mxu0
      %5883 = vmatprep.mubr.f32.mxu0 0.0
      %5884 = vmatmul.mubr.f32.gmra.mrb[0].mxu0 %v4186
      %v5885 = vpop.f32.mrb[0].mxu0
      %v5886 = vadd.f32 0.0, %v5885
      %v5887 = vpop.f32.mrb[0].mxu0
      %5888 = vmatprep.mubr.f32.mxu0 0.0
      %5889 = vmatmul.mubr.f32.gmra.mrb[0].mxu0 %v4187
      %v5890 = vpop.f32.mrb[0].mxu0
      %v5891 = vadd.f32 0.0, %v5890
      %v5892 = vpop.f32.mrb[0].mxu0
      %5893 = vmatprep.mubr.f32.mxu0 0.0
      %5894 = vmatmul.mubr.f32.gmra.mrb[0].mxu0 %v4188
      %v5895 = vpop.f32.mrb[0].mxu0
      %v5896 = vadd.f32 0.0, %v5895
      %v5897 = vpop.f32.mrb[0].mxu0
      %5898 = vmatprep.mubr.f32.mxu0 0.0
      %5899 = vmatmul.mubr.f32.gmra.mrb[0].mxu0 %v4189
      %v5900 = vpop.f32.mrb[0].mxu0
      %v5901 = vadd.f32 0.0, %v5900
      %v5902 = vpop.f32.mrb[0].mxu0
      %5903 = vmatprep.mubr.f32.mxu0 0.0
      %5904 = vmatmul.mubr.f32.gmra.mrb[0].mxu0 %v4190
      %v5905 = vpop.f32.mrb[0].mxu0
      %v5906 = vadd.f32 0.0, %v5905
      %v5907 = vpop.f32.mrb[0].mxu0
      %5908 = vmatprep.mubr.f32.mxu0 0.0
      %5909 = vmatmul.mubr.f32.gmra.mrb[0].mxu0 %v4191
      %v5910 = vpop.f32.mrb[0].mxu0
      %v5911 = vadd.f32 0.0, %v5910
      %v5912 = vpop.f32.mrb[0].mxu0
      %5913 = vmatprep.mubr.f32.mxu0 0.0
      %5914 = vmatmul.mubr.f32.gmra.mrb[0].mxu0 %v4192
      %v5915 = vpop.f32.mrb[0].mxu0
      %v5916 = vadd.f32 0.0, %v5915
      %v5917 = vpop.f32.mrb[0].mxu0
      %5918 = vmatprep.mubr.f32.mxu0 0.0
      %5919 = vmatmul.mubr.f32.gmra.mrb[0].mxu0 %v4193
      %v5920 = vpop.f32.mrb[0].mxu0
      %v5921 = vadd.f32 0.0, %v5920
      %v5922 = vpop.f32.mrb[0].mxu0
      %5923 = vmatprep.mubr.f32.mxu0 0.0
      %5924 = vmatmul.mubr.f32.gmra.mrb[0].mxu0 %v4194
      %v5925 = vpop.f32.mrb[0].mxu0
      %v5926 = vadd.f32 0.0, %v5925
      %v5927 = vpop.f32.mrb[0].mxu0
      %5928 = vmatprep.mubr.f32.mxu0 0.0
      %5929 = vmatmul.mubr.f32.gmra.mrb[0].mxu0 %v4195
      %v5930 = vpop.f32.mrb[0].mxu0
      %v5931 = vadd.f32 0.0, %v5930
      %v5932 = vpop.f32.mrb[0].mxu0
      %5933 = vmatprep.mubr.f32.mxu0 0.0
      %5934 = vmatmul.mubr.f32.gmra.mrb[0].mxu0 %v4196
      %v5935 = vpop.f32.mrb[0].mxu0
      %v5936 = vadd.f32 0.0, %v5935
      %v5937 = vpop.f32.mrb[0].mxu0
      %5938 = vmatprep.mubr.f32.mxu0 0.0
      %5939 = vmatmul.mubr.f32.gmra.mrb[0].mxu0 %v4197
      %v5940 = vpop.f32.mrb[0].mxu0
      %v5941 = vadd.f32 0.0, %v5940
      %v5942 = vpop.f32.mrb[0].mxu0
      %5943 = vmatprep.mubr.f32.mxu0 0.0
      %5944 = vmatmul.mubr.f32.gmra.mrb[0].mxu0 %v4198
      %v5945 = vpop.f32.mrb[0].mxu0
      %v5946 = vadd.f32 0.0, %v5945
      %v5947 = vpop.f32.mrb[0].mxu0
      %5948 = vmatprep.mubr.f32.mxu0 0.0
      %5949 = vmatmul.mubr.f32.gmra.mrb[0].mxu0 %v4199
      %v5950 = vpop.f32.mrb[0].mxu0
      %v5951 = vadd.f32 0.0, %v5950
      %v5952 = vpop.f32.mrb[0].mxu0
      %5953 = vmatprep.mubr.f32.mxu0 0.0
      %5954 = vmatmul.mubr.f32.gmra.mrb[0].mxu0 %v4200
      %v5955 = vpop.f32.mrb[0].mxu0
      %v5956 = vadd.f32 0.0, %v5955
      %v5957 = vpop.f32.mrb[0].mxu0
      %5958 = vmatprep.mubr.f32.mxu0 0.0
      %5959 = vmatmul.mubr.f32.gmra.mrb[0].mxu0 %v4201
      %v5960 = vpop.f32.mrb[0].mxu0
      %v5961 = vadd.f32 0.0, %v5960
      %v5962 = vpop.f32.mrb[0].mxu0
      %5963 = vdwg.mxu0
      %v5964 = vadd.f32 %v5636, %v5761
      %v5965 = vadd.f32 %v5637, %v5766
      %v5966 = vadd.f32 %v5638, %v5771
      %v5967 = vadd.f32 %v5639, %v5776
      %v5968 = vadd.f32 %v5640, %v5781
      %v5969 = vadd.f32 %v5641, %v5786
      %v5970 = vadd.f32 %v5642, %v5791
      %v5971 = vadd.f32 %v5643, %v5796
      %v5972 = vadd.f32 %v5644, %v5801
      %v5973 = vadd.f32 %v5645, %v5806
      %v5974 = vadd.f32 %v5646, %v5811
      %v5975 = vadd.f32 %v5647, %v5816
      %v5976 = vadd.f32 %v5648, %v5821
      %v5977 = vadd.f32 %v5649, %v5826
      %v5978 = vadd.f32 %v5650, %v5831
      %v5979 = vadd.f32 %v5651, %v5836
      %v5980 = vadd.f32 %v5652, %v5841
      %v5981 = vadd.f32 %v5653, %v5846
      %v5982 = vadd.f32 %v5654, %v5851
      %v5983 = vadd.f32 %v5655, %v5856
      %v5984 = vadd.f32 %v5656, %v5861
      %v5985 = vadd.f32 %v5657, %v5866
      %v5986 = vadd.f32 %v5658, %v5871
      %v5987 = vadd.f32 %v5659, %v5876
      %v5988 = vadd.f32 %v5660, %v5881
      %v5989 = vadd.f32 %v5661, %v5886
      %v5990 = vadd.f32 %v5662, %v5891
      %v5991 = vadd.f32 %v5663, %v5896
      %v5992 = vadd.f32 %v5664, %v5901
      %v5993 = vadd.f32 %v5665, %v5906
      %v5994 = vadd.f32 %v5666, %v5911
      %v5995 = vadd.f32 %v5667, %v5916
      %v5996 = vadd.f32 %v5668, %v5921
      %v5997 = vadd.f32 %v5669, %v5926
      %v5998 = vadd.f32 %v5670, %v5931
      %v5999 = vadd.f32 %v5671, %v5936
      %v6000 = vadd.f32 %v5672, %v5941
      %v6001 = vadd.f32 %v5673, %v5946
      %v6002 = vadd.f32 %v5674, %v5951
      %v6003 = vadd.f32 %v5675, %v5956
      %v6004 = vadd.f32 %v5676, %v5961
      %v6005 = vrot.slane %v4161, 1
      %v6006 = vrot.slane %v4162, 1
      %v6007 = vrot.slane %v4163, 1
      %v6008 = vrot.slane %v4164, 1
      %v6009 = vrot.slane %v4165, 1
      %v6010 = vrot.slane %v4166, 1
      %v6011 = vrot.slane %v4167, 1
      %v6012 = vrot.slane %v4168, 1
      %v6013 = vrot.slane %v4169, 1
      %v6014 = vrot.slane %v4170, 1
      %v6015 = vrot.slane %v4171, 1
      %v6016 = vrot.slane %v4172, 1
      %v6017 = vrot.slane %v4173, 1
      %v6018 = vrot.slane %v4174, 1
      %v6019 = vrot.slane %v4175, 1
      %v6020 = vrot.slane %v4176, 1
      %v6021 = vrot.slane %v4177, 1
      %v6022 = vrot.slane %v4178, 1
      %v6023 = vrot.slane %v4179, 1
      %v6024 = vrot.slane %v4180, 1
      %v6025 = vrot.slane %v4181, 1
      %v6026 = vrot.slane %v4182, 1
      %v6027 = vrot.slane %v4183, 1
      %v6028 = vrot.slane %v4184, 1
      %v6029 = vrot.slane %v4185, 1
      %v6030 = vrot.slane %v4186, 1
      %v6031 = vrot.slane %v4187, 1
      %v6032 = vrot.slane %v4188, 1
      %v6033 = vrot.slane %v4189, 1
      %v6034 = vrot.slane %v4190, 1
      %v6035 = vrot.slane %v4191, 1
      %v6036 = vrot.slane %v4192, 1
      %v6037 = vrot.slane %v4193, 1
      %v6038 = vrot.slane %v4194, 1
      %v6039 = vrot.slane %v4195, 1
      %v6040 = vrot.slane %v4196, 1
      %v6041 = vrot.slane %v4197, 1
      %v6042 = vrot.slane %v4198, 1
      %v6043 = vrot.slane %v4199, 1
      %v6044 = vrot.slane %v4200, 1
      %v6045 = vrot.slane %v4201, 1
      %v6046 = vsel %vm2142, %v6044, %v6045
      %v6047 = vsel %vm2142, %v6043, %v6044
      %v6048 = vsel %vm2142, %v6042, %v6043
      %v6049 = vsel %vm2142, %v6041, %v6042
      %v6050 = vsel %vm2142, %v6040, %v6041
      %v6051 = vsel %vm2142, %v6039, %v6040
      %v6052 = vsel %vm2142, %v6038, %v6039
      %v6053 = vsel %vm2142, %v6037, %v6038
      %v6054 = vsel %vm2142, %v6036, %v6037
      %v6055 = vsel %vm2142, %v6035, %v6036
      %v6056 = vsel %vm2142, %v6034, %v6035
      %v6057 = vsel %vm2142, %v6033, %v6034
      %v6058 = vsel %vm2142, %v6032, %v6033
      %v6059 = vsel %vm2142, %v6031, %v6032
      %v6060 = vsel %vm2142, %v6030, %v6031
      %v6061 = vsel %vm2142, %v6029, %v6030
      %v6062 = vsel %vm2142, %v6028, %v6029
      %v6063 = vsel %vm2142, %v6027, %v6028
      %v6064 = vsel %vm2142, %v6026, %v6027
      %v6065 = vsel %vm2142, %v6025, %v6026
      %v6066 = vsel %vm2142, %v6024, %v6025
      %v6067 = vsel %vm2142, %v6023, %v6024
      %v6068 = vsel %vm2142, %v6022, %v6023
      %v6069 = vsel %vm2142, %v6021, %v6022
      %v6070 = vsel %vm2142, %v6020, %v6021
      %v6071 = vsel %vm2142, %v6019, %v6020
      %v6072 = vsel %vm2142, %v6018, %v6019
      %v6073 = vsel %vm2142, %v6017, %v6018
      %v6074 = vsel %vm2142, %v6016, %v6017
      %v6075 = vsel %vm2142, %v6015, %v6016
      %v6076 = vsel %vm2142, %v6014, %v6015
      %v6077 = vsel %vm2142, %v6013, %v6014
      %v6078 = vsel %vm2142, %v6012, %v6013
      %v6079 = vsel %vm2142, %v6011, %v6012
      %v6080 = vsel %vm2142, %v6010, %v6011
      %v6081 = vsel %vm2142, %v6009, %v6010
      %v6082 = vsel %vm2142, %v6008, %v6009
      %v6083 = vsel %vm2142, %v6007, %v6008
      %v6084 = vsel %vm2142, %v6006, %v6007
      %v6085 = vsel %vm2142, %v6005, %v6006
      %v6086 = vsel %vm2142, %v6045, %v6005
      %s6087 = scalar_lea.vmem %s4, 640
      %v6088 = vld [vmem:[%s6087] sm:$0xff]
      %v6089 = vld [vmem:[%s6087 + $0x8] sm:$0xff]
      %v6090 = vld [vmem:[%s6087 + $0x10] sm:$0xff]
      %v6091 = vld [vmem:[%s6087 + $0x18] sm:$0xff]
      %v6092 = vld [vmem:[%s6087 + $0x20] sm:$0xff]
      %v6093 = vld [vmem:[%s6087 + $0x28] sm:$0xff]
      %v6094 = vld [vmem:[%s6087 + $0x30] sm:$0xff]
      %v6095 = vld [vmem:[%s6087 + $0x38] sm:$0xff]
      %v6096 = vld [vmem:[%s6087 + $0x40] sm:$0xff]
      %v6097 = vld [vmem:[%s6087 + $0x48] sm:$0xff]
      %v6098 = vld [vmem:[%s6087 + $0x50] sm:$0xff]
      %v6099 = vld [vmem:[%s6087 + $0x58] sm:$0xff]
      %v6100 = vld [vmem:[%s6087 + $0x60] sm:$0xff]
      %v6101 = vld [vmem:[%s6087 + $0x68] sm:$0xff]
      %v6102 = vld [vmem:[%s6087 + $0x70] sm:$0xff]
      %v6103 = vld [vmem:[%s6087 + $0x78] sm:$0xff]
      %6104 = vmatprep.subr.mxu0 0.0
      %6105 = vmatpush1.msra.mxu0 %v6088
      %6106 = vmatprep.subr.mxu0 0.0
      %6107 = vmatpush1.msra.mxu0 %v6089
      %6108 = vmatprep.subr.mxu0 0.0
      %6109 = vmatpush1.msra.mxu0 %v6090
      %6110 = vmatprep.subr.mxu0 0.0
      %6111 = vmatpush1.msra.mxu0 %v6091
      %6112 = vmatprep.subr.mxu0 0.0
      %6113 = vmatpush1.msra.mxu0 %v6092
      %6114 = vmatprep.subr.mxu0 0.0
      %6115 = vmatpush1.msra.mxu0 %v6093
      %6116 = vmatprep.subr.mxu0 0.0
      %6117 = vmatpush1.msra.mxu0 %v6094
      %6118 = vmatprep.subr.mxu0 0.0
      %6119 = vmatpush1.msra.mxu0 %v6095
      %6120 = vmatprep.subr.mxu0 0.0
      %6121 = vmatpush1.msra.mxu0 %v6096
      %6122 = vmatprep.subr.mxu0 0.0
      %6123 = vmatpush1.msra.mxu0 %v6097
      %6124 = vmatprep.subr.mxu0 0.0
      %6125 = vmatpush1.msra.mxu0 %v6098
      %6126 = vmatprep.subr.mxu0 0.0
      %6127 = vmatpush1.msra.mxu0 %v6099
      %6128 = vmatprep.subr.mxu0 0.0
      %6129 = vmatpush1.msra.mxu0 %v6100
      %6130 = vmatprep.subr.mxu0 0.0
      %6131 = vmatpush1.msra.mxu0 %v6101
      %6132 = vmatprep.subr.mxu0 0.0
      %6133 = vmatpush1.msra.mxu0 %v6102
      %6134 = vmatprep.subr.mxu0 0.0
      %6135 = vmatpush1.msra.mxu0 %v6103
      %6136 = vmatprep.subr.mxu0 0.0
      %6137 = vmatpush1.msra.mxu0 0.0
      %6138 = vmatprep.subr.mxu0 0.0
      %6139 = vmatpush1.msra.mxu0 0.0
      %6140 = vmatprep.subr.mxu0 0.0
      %6141 = vmatpush1.msra.mxu0 0.0
      %6142 = vmatprep.subr.mxu0 0.0
      %6143 = vmatpush1.msra.mxu0 0.0
      %6144 = vmatprep.subr.mxu0 0.0
      %6145 = vmatpush1.msra.mxu0 0.0
      %6146 = vmatprep.subr.mxu0 0.0
      %6147 = vmatpush1.msra.mxu0 0.0
      %6148 = vmatprep.subr.mxu0 0.0
      %6149 = vmatpush1.msra.mxu0 0.0
      %6150 = vmatprep.subr.mxu0 0.0
      %6151 = vmatpush1.msra.mxu0 0.0
      %6152 = vmatprep.subr.mxu0 0.0
      %6153 = vmatpush1.msra.mxu0 0.0
      %6154 = vmatprep.subr.mxu0 0.0
      %6155 = vmatpush1.msra.mxu0 0.0
      %6156 = vmatprep.subr.mxu0 0.0
      %6157 = vmatpush1.msra.mxu0 0.0
      %6158 = vmatprep.subr.mxu0 0.0
      %6159 = vmatpush1.msra.mxu0 0.0
      %6160 = vmatprep.subr.mxu0 0.0
      %6161 = vmatpush1.msra.mxu0 0.0
      %6162 = vmatprep.subr.mxu0 0.0
      %6163 = vmatpush1.msra.mxu0 0.0
      %6164 = vmatprep.subr.mxu0 0.0
      %6165 = vmatpush1.msra.mxu0 0.0
      %6166 = vmatprep.subr.mxu0 0.0
      %6167 = vmatpush1.msra.mxu0 0.0
      %6168 = vmatprep.mubr.f32.mxu0 0.0
      %6169 = vmatmul.mubr.f32.gmra.mrb[0].mxu0 %v6085
      %v6170 = vpop.f32.mrb[0].mxu0
      %v6171 = vadd.f32 0.0, %v6170
      %v6172 = vpop.f32.mrb[0].mxu0
      %6173 = vmatprep.mubr.f32.mxu0 0.0
      %6174 = vmatmul.mubr.f32.gmra.mrb[0].mxu0 %v6084
      %v6175 = vpop.f32.mrb[0].mxu0
      %v6176 = vadd.f32 0.0, %v6175
      %v6177 = vpop.f32.mrb[0].mxu0
      %6178 = vmatprep.mubr.f32.mxu0 0.0
      %6179 = vmatmul.mubr.f32.gmra.mrb[0].mxu0 %v6083
      %v6180 = vpop.f32.mrb[0].mxu0
      %v6181 = vadd.f32 0.0, %v6180
      %v6182 = vpop.f32.mrb[0].mxu0
      %6183 = vmatprep.mubr.f32.mxu0 0.0
      %6184 = vmatmul.mubr.f32.gmra.mrb[0].mxu0 %v6082
      %v6185 = vpop.f32.mrb[0].mxu0
      %v6186 = vadd.f32 0.0, %v6185
      %v6187 = vpop.f32.mrb[0].mxu0
      %6188 = vmatprep.mubr.f32.mxu0 0.0
      %6189 = vmatmul.mubr.f32.gmra.mrb[0].mxu0 %v6081
      %v6190 = vpop.f32.mrb[0].mxu0
      %v6191 = vadd.f32 0.0, %v6190
      %v6192 = vpop.f32.mrb[0].mxu0
      %6193 = vmatprep.mubr.f32.mxu0 0.0
      %6194 = vmatmul.mubr.f32.gmra.mrb[0].mxu0 %v6080
      %v6195 = vpop.f32.mrb[0].mxu0
      %v6196 = vadd.f32 0.0, %v6195
      %v6197 = vpop.f32.mrb[0].mxu0
      %6198 = vmatprep.mubr.f32.mxu0 0.0
      %6199 = vmatmul.mubr.f32.gmra.mrb[0].mxu0 %v6079
      %v6200 = vpop.f32.mrb[0].mxu0
      %v6201 = vadd.f32 0.0, %v6200
      %v6202 = vpop.f32.mrb[0].mxu0
      %6203 = vmatprep.mubr.f32.mxu0 0.0
      %6204 = vmatmul.mubr.f32.gmra.mrb[0].mxu0 %v6078
      %v6205 = vpop.f32.mrb[0].mxu0
      %v6206 = vadd.f32 0.0, %v6205
      %v6207 = vpop.f32.mrb[0].mxu0
      %6208 = vmatprep.mubr.f32.mxu0 0.0
      %6209 = vmatmul.mubr.f32.gmra.mrb[0].mxu0 %v6077
      %v6210 = vpop.f32.mrb[0].mxu0
      %v6211 = vadd.f32 0.0, %v6210
      %v6212 = vpop.f32.mrb[0].mxu0
      %6213 = vmatprep.mubr.f32.mxu0 0.0
      %6214 = vmatmul.mubr.f32.gmra.mrb[0].mxu0 %v6076
      %v6215 = vpop.f32.mrb[0].mxu0
      %v6216 = vadd.f32 0.0, %v6215
      %v6217 = vpop.f32.mrb[0].mxu0
      %6218 = vmatprep.mubr.f32.mxu0 0.0
      %6219 = vmatmul.mubr.f32.gmra.mrb[0].mxu0 %v6075
      %v6220 = vpop.f32.mrb[0].mxu0
      %v6221 = vadd.f32 0.0, %v6220
      %v6222 = vpop.f32.mrb[0].mxu0
      %6223 = vmatprep.mubr.f32.mxu0 0.0
      %6224 = vmatmul.mubr.f32.gmra.mrb[0].mxu0 %v6074
      %v6225 = vpop.f32.mrb[0].mxu0
      %v6226 = vadd.f32 0.0, %v6225
      %v6227 = vpop.f32.mrb[0].mxu0
      %6228 = vmatprep.mubr.f32.mxu0 0.0
      %6229 = vmatmul.mubr.f32.gmra.mrb[0].mxu0 %v6073
      %v6230 = vpop.f32.mrb[0].mxu0
      %v6231 = vadd.f32 0.0, %v6230
      %v6232 = vpop.f32.mrb[0].mxu0
      %6233 = vmatprep.mubr.f32.mxu0 0.0
      %6234 = vmatmul.mubr.f32.gmra.mrb[0].mxu0 %v6072
      %v6235 = vpop.f32.mrb[0].mxu0
      %v6236 = vadd.f32 0.0, %v6235
      %v6237 = vpop.f32.mrb[0].mxu0
      %6238 = vmatprep.mubr.f32.mxu0 0.0
      %6239 = vmatmul.mubr.f32.gmra.mrb[0].mxu0 %v6071
      %v6240 = vpop.f32.mrb[0].mxu0
      %v6241 = vadd.f32 0.0, %v6240
      %v6242 = vpop.f32.mrb[0].mxu0
      %6243 = vmatprep.mubr.f32.mxu0 0.0
      %6244 = vmatmul.mubr.f32.gmra.mrb[0].mxu0 %v6070
      %v6245 = vpop.f32.mrb[0].mxu0
      %v6246 = vadd.f32 0.0, %v6245
      %v6247 = vpop.f32.mrb[0].mxu0
      %6248 = vmatprep.mubr.f32.mxu0 0.0
      %6249 = vmatmul.mubr.f32.gmra.mrb[0].mxu0 %v6069
      %v6250 = vpop.f32.mrb[0].mxu0
      %v6251 = vadd.f32 0.0, %v6250
      %v6252 = vpop.f32.mrb[0].mxu0
      %6253 = vmatprep.mubr.f32.mxu0 0.0
      %6254 = vmatmul.mubr.f32.gmra.mrb[0].mxu0 %v6068
      %v6255 = vpop.f32.mrb[0].mxu0
      %v6256 = vadd.f32 0.0, %v6255
      %v6257 = vpop.f32.mrb[0].mxu0
      %6258 = vmatprep.mubr.f32.mxu0 0.0
      %6259 = vmatmul.mubr.f32.gmra.mrb[0].mxu0 %v6067
      %v6260 = vpop.f32.mrb[0].mxu0
      %v6261 = vadd.f32 0.0, %v6260
      %v6262 = vpop.f32.mrb[0].mxu0
      %6263 = vmatprep.mubr.f32.mxu0 0.0
      %6264 = vmatmul.mubr.f32.gmra.mrb[0].mxu0 %v6066
      %v6265 = vpop.f32.mrb[0].mxu0
      %v6266 = vadd.f32 0.0, %v6265
      %v6267 = vpop.f32.mrb[0].mxu0
      %6268 = vmatprep.mubr.f32.mxu0 0.0
      %6269 = vmatmul.mubr.f32.gmra.mrb[0].mxu0 %v6065
      %v6270 = vpop.f32.mrb[0].mxu0
      %v6271 = vadd.f32 0.0, %v6270
      %v6272 = vpop.f32.mrb[0].mxu0
      %6273 = vmatprep.mubr.f32.mxu0 0.0
      %6274 = vmatmul.mubr.f32.gmra.mrb[0].mxu0 %v6064
      %v6275 = vpop.f32.mrb[0].mxu0
      %v6276 = vadd.f32 0.0, %v6275
      %v6277 = vpop.f32.mrb[0].mxu0
      %6278 = vmatprep.mubr.f32.mxu0 0.0
      %6279 = vmatmul.mubr.f32.gmra.mrb[0].mxu0 %v6063
      %v6280 = vpop.f32.mrb[0].mxu0
      %v6281 = vadd.f32 0.0, %v6280
      %v6282 = vpop.f32.mrb[0].mxu0
      %6283 = vmatprep.mubr.f32.mxu0 0.0
      %6284 = vmatmul.mubr.f32.gmra.mrb[0].mxu0 %v6062
      %v6285 = vpop.f32.mrb[0].mxu0
      %v6286 = vadd.f32 0.0, %v6285
      %v6287 = vpop.f32.mrb[0].mxu0
      %6288 = vmatprep.mubr.f32.mxu0 0.0
      %6289 = vmatmul.mubr.f32.gmra.mrb[0].mxu0 %v6061
      %v6290 = vpop.f32.mrb[0].mxu0
      %v6291 = vadd.f32 0.0, %v6290
      %v6292 = vpop.f32.mrb[0].mxu0
      %6293 = vmatprep.mubr.f32.mxu0 0.0
      %6294 = vmatmul.mubr.f32.gmra.mrb[0].mxu0 %v6060
      %v6295 = vpop.f32.mrb[0].mxu0
      %v6296 = vadd.f32 0.0, %v6295
      %v6297 = vpop.f32.mrb[0].mxu0
      %6298 = vmatprep.mubr.f32.mxu0 0.0
      %6299 = vmatmul.mubr.f32.gmra.mrb[0].mxu0 %v6059
      %v6300 = vpop.f32.mrb[0].mxu0
      %v6301 = vadd.f32 0.0, %v6300
      %v6302 = vpop.f32.mrb[0].mxu0
      %6303 = vmatprep.mubr.f32.mxu0 0.0
      %6304 = vmatmul.mubr.f32.gmra.mrb[0].mxu0 %v6058
      %v6305 = vpop.f32.mrb[0].mxu0
      %v6306 = vadd.f32 0.0, %v6305
      %v6307 = vpop.f32.mrb[0].mxu0
      %6308 = vmatprep.mubr.f32.mxu0 0.0
      %6309 = vmatmul.mubr.f32.gmra.mrb[0].mxu0 %v6057
      %v6310 = vpop.f32.mrb[0].mxu0
      %v6311 = vadd.f32 0.0, %v6310
      %v6312 = vpop.f32.mrb[0].mxu0
      %6313 = vmatprep.mubr.f32.mxu0 0.0
      %6314 = vmatmul.mubr.f32.gmra.mrb[0].mxu0 %v6056
      %v6315 = vpop.f32.mrb[0].mxu0
      %v6316 = vadd.f32 0.0, %v6315
      %v6317 = vpop.f32.mrb[0].mxu0
      %6318 = vmatprep.mubr.f32.mxu0 0.0
      %6319 = vmatmul.mubr.f32.gmra.mrb[0].mxu0 %v6055
      %v6320 = vpop.f32.mrb[0].mxu0
      %v6321 = vadd.f32 0.0, %v6320
      %v6322 = vpop.f32.mrb[0].mxu0
      %6323 = vmatprep.mubr.f32.mxu0 0.0
      %6324 = vmatmul.mubr.f32.gmra.mrb[0].mxu0 %v6054
      %v6325 = vpop.f32.mrb[0].mxu0
      %v6326 = vadd.f32 0.0, %v6325
      %v6327 = vpop.f32.mrb[0].mxu0
      %6328 = vmatprep.mubr.f32.mxu0 0.0
      %6329 = vmatmul.mubr.f32.gmra.mrb[0].mxu0 %v6053
      %v6330 = vpop.f32.mrb[0].mxu0
      %v6331 = vadd.f32 0.0, %v6330
      %v6332 = vpop.f32.mrb[0].mxu0
      %6333 = vmatprep.mubr.f32.mxu0 0.0
      %6334 = vmatmul.mubr.f32.gmra.mrb[0].mxu0 %v6052
      %v6335 = vpop.f32.mrb[0].mxu0
      %v6336 = vadd.f32 0.0, %v6335
      %v6337 = vpop.f32.mrb[0].mxu0
      %6338 = vmatprep.mubr.f32.mxu0 0.0
      %6339 = vmatmul.mubr.f32.gmra.mrb[0].mxu0 %v6051
      %v6340 = vpop.f32.mrb[0].mxu0
      %v6341 = vadd.f32 0.0, %v6340
      %v6342 = vpop.f32.mrb[0].mxu0
      %6343 = vmatprep.mubr.f32.mxu0 0.0
      %6344 = vmatmul.mubr.f32.gmra.mrb[0].mxu0 %v6050
      %v6345 = vpop.f32.mrb[0].mxu0
      %v6346 = vadd.f32 0.0, %v6345
      %v6347 = vpop.f32.mrb[0].mxu0
      %6348 = vmatprep.mubr.f32.mxu0 0.0
      %6349 = vmatmul.mubr.f32.gmra.mrb[0].mxu0 %v6049
      %v6350 = vpop.f32.mrb[0].mxu0
      %v6351 = vadd.f32 0.0, %v6350
      %v6352 = vpop.f32.mrb[0].mxu0
      %6353 = vmatprep.mubr.f32.mxu0 0.0
      %6354 = vmatmul.mubr.f32.gmra.mrb[0].mxu0 %v6048
      %v6355 = vpop.f32.mrb[0].mxu0
      %v6356 = vadd.f32 0.0, %v6355
      %v6357 = vpop.f32.mrb[0].mxu0
      %6358 = vmatprep.mubr.f32.mxu0 0.0
      %6359 = vmatmul.mubr.f32.gmra.mrb[0].mxu0 %v6047
      %v6360 = vpop.f32.mrb[0].mxu0
      %v6361 = vadd.f32 0.0, %v6360
      %v6362 = vpop.f32.mrb[0].mxu0
      %6363 = vmatprep.mubr.f32.mxu0 0.0
      %6364 = vmatmul.mubr.f32.gmra.mrb[0].mxu0 %v6046
      %v6365 = vpop.f32.mrb[0].mxu0
      %v6366 = vadd.f32 0.0, %v6365
      %v6367 = vpop.f32.mrb[0].mxu0
      %6368 = vmatprep.mubr.f32.mxu0 0.0
      %6369 = vmatmul.mubr.f32.gmra.mrb[0].mxu0 %v6086
      %v6370 = vpop.f32.mrb[0].mxu0
      %v6371 = vadd.f32 0.0, %v6370
      %v6372 = vpop.f32.mrb[0].mxu0
      %6373 = vdwg.mxu0
      %v6374 = vadd.f32 %v5964, %v6171
      %v6375 = vadd.f32 %v5965, %v6176
      %v6376 = vadd.f32 %v5966, %v6181
      %v6377 = vadd.f32 %v5967, %v6186
      %v6378 = vadd.f32 %v5968, %v6191
      %v6379 = vadd.f32 %v5969, %v6196
      %v6380 = vadd.f32 %v5970, %v6201
      %v6381 = vadd.f32 %v5971, %v6206
      %v6382 = vadd.f32 %v5972, %v6211
      %v6383 = vadd.f32 %v5973, %v6216
      %v6384 = vadd.f32 %v5974, %v6221
      %v6385 = vadd.f32 %v5975, %v6226
      %v6386 = vadd.f32 %v5976, %v6231
      %v6387 = vadd.f32 %v5977, %v6236
      %v6388 = vadd.f32 %v5978, %v6241
      %v6389 = vadd.f32 %v5979, %v6246
      %v6390 = vadd.f32 %v5980, %v6251
      %v6391 = vadd.f32 %v5981, %v6256
      %v6392 = vadd.f32 %v5982, %v6261
      %v6393 = vadd.f32 %v5983, %v6266
      %v6394 = vadd.f32 %v5984, %v6271
      %v6395 = vadd.f32 %v5985, %v6276
      %v6396 = vadd.f32 %v5986, %v6281
      %v6397 = vadd.f32 %v5987, %v6286
      %v6398 = vadd.f32 %v5988, %v6291
      %v6399 = vadd.f32 %v5989, %v6296
      %v6400 = vadd.f32 %v5990, %v6301
      %v6401 = vadd.f32 %v5991, %v6306
      %v6402 = vadd.f32 %v5992, %v6311
      %v6403 = vadd.f32 %v5993, %v6316
      %v6404 = vadd.f32 %v5994, %v6321
      %v6405 = vadd.f32 %v5995, %v6326
      %v6406 = vadd.f32 %v5996, %v6331
      %v6407 = vadd.f32 %v5997, %v6336
      %v6408 = vadd.f32 %v5998, %v6341
      %v6409 = vadd.f32 %v5999, %v6346
      %v6410 = vadd.f32 %v6000, %v6351
      %v6411 = vadd.f32 %v6001, %v6356
      %v6412 = vadd.f32 %v6002, %v6361
      %v6413 = vadd.f32 %v6003, %v6366
      %v6414 = vadd.f32 %v6004, %v6371
      %s6415 = scalar_lea.vmem %s4, 768
      %v6416 = vld [vmem:[%s6415] sm:$0xff]
      %v6417 = vld [vmem:[%s6415 + $0x8] sm:$0xff]
      %v6418 = vld [vmem:[%s6415 + $0x10] sm:$0xff]
      %v6419 = vld [vmem:[%s6415 + $0x18] sm:$0xff]
      %v6420 = vld [vmem:[%s6415 + $0x20] sm:$0xff]
      %v6421 = vld [vmem:[%s6415 + $0x28] sm:$0xff]
      %v6422 = vld [vmem:[%s6415 + $0x30] sm:$0xff]
      %v6423 = vld [vmem:[%s6415 + $0x38] sm:$0xff]
      %v6424 = vld [vmem:[%s6415 + $0x40] sm:$0xff]
      %v6425 = vld [vmem:[%s6415 + $0x48] sm:$0xff]
      %v6426 = vld [vmem:[%s6415 + $0x50] sm:$0xff]
      %v6427 = vld [vmem:[%s6415 + $0x58] sm:$0xff]
      %v6428 = vld [vmem:[%s6415 + $0x60] sm:$0xff]
      %v6429 = vld [vmem:[%s6415 + $0x68] sm:$0xff]
      %v6430 = vld [vmem:[%s6415 + $0x70] sm:$0xff]
      %v6431 = vld [vmem:[%s6415 + $0x78] sm:$0xff]
      %6432 = vmatprep.subr.mxu0 0.0
      %6433 = vmatpush1.msra.mxu0 %v6416
      %6434 = vmatprep.subr.mxu0 0.0
      %6435 = vmatpush1.msra.mxu0 %v6417
      %6436 = vmatprep.subr.mxu0 0.0
      %6437 = vmatpush1.msra.mxu0 %v6418
      %6438 = vmatprep.subr.mxu0 0.0
      %6439 = vmatpush1.msra.mxu0 %v6419
      %6440 = vmatprep.subr.mxu0 0.0
      %6441 = vmatpush1.msra.mxu0 %v6420
      %6442 = vmatprep.subr.mxu0 0.0
      %6443 = vmatpush1.msra.mxu0 %v6421
      %6444 = vmatprep.subr.mxu0 0.0
      %6445 = vmatpush1.msra.mxu0 %v6422
      %6446 = vmatprep.subr.mxu0 0.0
      %6447 = vmatpush1.msra.mxu0 %v6423
      %6448 = vmatprep.subr.mxu0 0.0
      %6449 = vmatpush1.msra.mxu0 %v6424
      %6450 = vmatprep.subr.mxu0 0.0
      %6451 = vmatpush1.msra.mxu0 %v6425
      %6452 = vmatprep.subr.mxu0 0.0
      %6453 = vmatpush1.msra.mxu0 %v6426
      %6454 = vmatprep.subr.mxu0 0.0
      %6455 = vmatpush1.msra.mxu0 %v6427
      %6456 = vmatprep.subr.mxu0 0.0
      %6457 = vmatpush1.msra.mxu0 %v6428
      %6458 = vmatprep.subr.mxu0 0.0
      %6459 = vmatpush1.msra.mxu0 %v6429
      %6460 = vmatprep.subr.mxu0 0.0
      %6461 = vmatpush1.msra.mxu0 %v6430
      %6462 = vmatprep.subr.mxu0 0.0
      %6463 = vmatpush1.msra.mxu0 %v6431
      %6464 = vmatprep.subr.mxu0 0.0
      %6465 = vmatpush1.msra.mxu0 0.0
      %6466 = vmatprep.subr.mxu0 0.0
      %6467 = vmatpush1.msra.mxu0 0.0
      %6468 = vmatprep.subr.mxu0 0.0
      %6469 = vmatpush1.msra.mxu0 0.0
      %6470 = vmatprep.subr.mxu0 0.0
      %6471 = vmatpush1.msra.mxu0 0.0
      %6472 = vmatprep.subr.mxu0 0.0
      %6473 = vmatpush1.msra.mxu0 0.0
      %6474 = vmatprep.subr.mxu0 0.0
      %6475 = vmatpush1.msra.mxu0 0.0
      %6476 = vmatprep.subr.mxu0 0.0
      %6477 = vmatpush1.msra.mxu0 0.0
      %6478 = vmatprep.subr.mxu0 0.0
      %6479 = vmatpush1.msra.mxu0 0.0
      %6480 = vmatprep.subr.mxu0 0.0
      %6481 = vmatpush1.msra.mxu0 0.0
      %6482 = vmatprep.subr.mxu0 0.0
      %6483 = vmatpush1.msra.mxu0 0.0
      %6484 = vmatprep.subr.mxu0 0.0
      %6485 = vmatpush1.msra.mxu0 0.0
      %6486 = vmatprep.subr.mxu0 0.0
      %6487 = vmatpush1.msra.mxu0 0.0
      %6488 = vmatprep.subr.mxu0 0.0
      %6489 = vmatpush1.msra.mxu0 0.0
      %6490 = vmatprep.subr.mxu0 0.0
      %6491 = vmatpush1.msra.mxu0 0.0
      %6492 = vmatprep.subr.mxu0 0.0
      %6493 = vmatpush1.msra.mxu0 0.0
      %6494 = vmatprep.subr.mxu0 0.0
      %6495 = vmatpush1.msra.mxu0 0.0
      %6496 = vmatprep.mubr.f32.mxu0 0.0
      %6497 = vmatmul.mubr.f32.gmra.mrb[0].mxu0 %v6083
      %v6498 = vpop.f32.mrb[0].mxu0
      %v6499 = vadd.f32 0.0, %v6498
      %v6500 = vpop.f32.mrb[0].mxu0
      %6501 = vmatprep.mubr.f32.mxu0 0.0
      %6502 = vmatmul.mubr.f32.gmra.mrb[0].mxu0 %v6082
      %v6503 = vpop.f32.mrb[0].mxu0
      %v6504 = vadd.f32 0.0, %v6503
      %v6505 = vpop.f32.mrb[0].mxu0
      %6506 = vmatprep.mubr.f32.mxu0 0.0
      %6507 = vmatmul.mubr.f32.gmra.mrb[0].mxu0 %v6081
      %v6508 = vpop.f32.mrb[0].mxu0
      %v6509 = vadd.f32 0.0, %v6508
      %v6510 = vpop.f32.mrb[0].mxu0
      %6511 = vmatprep.mubr.f32.mxu0 0.0
      %6512 = vmatmul.mubr.f32.gmra.mrb[0].mxu0 %v6080
      %v6513 = vpop.f32.mrb[0].mxu0
      %v6514 = vadd.f32 0.0, %v6513
      %v6515 = vpop.f32.mrb[0].mxu0
      %6516 = vmatprep.mubr.f32.mxu0 0.0
      %6517 = vmatmul.mubr.f32.gmra.mrb[0].mxu0 %v6079
      %v6518 = vpop.f32.mrb[0].mxu0
      %v6519 = vadd.f32 0.0, %v6518
      %v6520 = vpop.f32.mrb[0].mxu0
      %6521 = vmatprep.mubr.f32.mxu0 0.0
      %6522 = vmatmul.mubr.f32.gmra.mrb[0].mxu0 %v6078
      %v6523 = vpop.f32.mrb[0].mxu0
      %v6524 = vadd.f32 0.0, %v6523
      %v6525 = vpop.f32.mrb[0].mxu0
      %6526 = vmatprep.mubr.f32.mxu0 0.0
      %6527 = vmatmul.mubr.f32.gmra.mrb[0].mxu0 %v6077
      %v6528 = vpop.f32.mrb[0].mxu0
      %v6529 = vadd.f32 0.0, %v6528
      %v6530 = vpop.f32.mrb[0].mxu0
      %6531 = vmatprep.mubr.f32.mxu0 0.0
      %6532 = vmatmul.mubr.f32.gmra.mrb[0].mxu0 %v6076
      %v6533 = vpop.f32.mrb[0].mxu0
      %v6534 = vadd.f32 0.0, %v6533
      %v6535 = vpop.f32.mrb[0].mxu0
      %6536 = vmatprep.mubr.f32.mxu0 0.0
      %6537 = vmatmul.mubr.f32.gmra.mrb[0].mxu0 %v6075
      %v6538 = vpop.f32.mrb[0].mxu0
      %v6539 = vadd.f32 0.0, %v6538
      %v6540 = vpop.f32.mrb[0].mxu0
      %6541 = vmatprep.mubr.f32.mxu0 0.0
      %6542 = vmatmul.mubr.f32.gmra.mrb[0].mxu0 %v6074
      %v6543 = vpop.f32.mrb[0].mxu0
      %v6544 = vadd.f32 0.0, %v6543
      %v6545 = vpop.f32.mrb[0].mxu0
      %6546 = vmatprep.mubr.f32.mxu0 0.0
      %6547 = vmatmul.mubr.f32.gmra.mrb[0].mxu0 %v6073
      %v6548 = vpop.f32.mrb[0].mxu0
      %v6549 = vadd.f32 0.0, %v6548
      %v6550 = vpop.f32.mrb[0].mxu0
      %6551 = vmatprep.mubr.f32.mxu0 0.0
      %6552 = vmatmul.mubr.f32.gmra.mrb[0].mxu0 %v6072
      %v6553 = vpop.f32.mrb[0].mxu0
      %v6554 = vadd.f32 0.0, %v6553
      %v6555 = vpop.f32.mrb[0].mxu0
      %6556 = vmatprep.mubr.f32.mxu0 0.0
      %6557 = vmatmul.mubr.f32.gmra.mrb[0].mxu0 %v6071
      %v6558 = vpop.f32.mrb[0].mxu0
      %v6559 = vadd.f32 0.0, %v6558
      %v6560 = vpop.f32.mrb[0].mxu0
      %6561 = vmatprep.mubr.f32.mxu0 0.0
      %6562 = vmatmul.mubr.f32.gmra.mrb[0].mxu0 %v6070
      %v6563 = vpop.f32.mrb[0].mxu0
      %v6564 = vadd.f32 0.0, %v6563
      %v6565 = vpop.f32.mrb[0].mxu0
      %6566 = vmatprep.mubr.f32.mxu0 0.0
      %6567 = vmatmul.mubr.f32.gmra.mrb[0].mxu0 %v6069
      %v6568 = vpop.f32.mrb[0].mxu0
      %v6569 = vadd.f32 0.0, %v6568
      %v6570 = vpop.f32.mrb[0].mxu0
      %6571 = vmatprep.mubr.f32.mxu0 0.0
      %6572 = vmatmul.mubr.f32.gmra.mrb[0].mxu0 %v6068
      %v6573 = vpop.f32.mrb[0].mxu0
      %v6574 = vadd.f32 0.0, %v6573
      %v6575 = vpop.f32.mrb[0].mxu0
      %6576 = vmatprep.mubr.f32.mxu0 0.0
      %6577 = vmatmul.mubr.f32.gmra.mrb[0].mxu0 %v6067
      %v6578 = vpop.f32.mrb[0].mxu0
      %v6579 = vadd.f32 0.0, %v6578
      %v6580 = vpop.f32.mrb[0].mxu0
      %6581 = vmatprep.mubr.f32.mxu0 0.0
      %6582 = vmatmul.mubr.f32.gmra.mrb[0].mxu0 %v6066
      %v6583 = vpop.f32.mrb[0].mxu0
      %v6584 = vadd.f32 0.0, %v6583
      %v6585 = vpop.f32.mrb[0].mxu0
      %6586 = vmatprep.mubr.f32.mxu0 0.0
      %6587 = vmatmul.mubr.f32.gmra.mrb[0].mxu0 %v6065
      %v6588 = vpop.f32.mrb[0].mxu0
      %v6589 = vadd.f32 0.0, %v6588
      %v6590 = vpop.f32.mrb[0].mxu0
      %6591 = vmatprep.mubr.f32.mxu0 0.0
      %6592 = vmatmul.mubr.f32.gmra.mrb[0].mxu0 %v6064
      %v6593 = vpop.f32.mrb[0].mxu0
      %v6594 = vadd.f32 0.0, %v6593
      %v6595 = vpop.f32.mrb[0].mxu0
      %6596 = vmatprep.mubr.f32.mxu0 0.0
      %6597 = vmatmul.mubr.f32.gmra.mrb[0].mxu0 %v6063
      %v6598 = vpop.f32.mrb[0].mxu0
      %v6599 = vadd.f32 0.0, %v6598
      %v6600 = vpop.f32.mrb[0].mxu0
      %6601 = vmatprep.mubr.f32.mxu0 0.0
      %6602 = vmatmul.mubr.f32.gmra.mrb[0].mxu0 %v6062
      %v6603 = vpop.f32.mrb[0].mxu0
      %v6604 = vadd.f32 0.0, %v6603
      %v6605 = vpop.f32.mrb[0].mxu0
      %6606 = vmatprep.mubr.f32.mxu0 0.0
      %6607 = vmatmul.mubr.f32.gmra.mrb[0].mxu0 %v6061
      %v6608 = vpop.f32.mrb[0].mxu0
      %v6609 = vadd.f32 0.0, %v6608
      %v6610 = vpop.f32.mrb[0].mxu0
      %6611 = vmatprep.mubr.f32.mxu0 0.0
      %6612 = vmatmul.mubr.f32.gmra.mrb[0].mxu0 %v6060
      %v6613 = vpop.f32.mrb[0].mxu0
      %v6614 = vadd.f32 0.0, %v6613
      %v6615 = vpop.f32.mrb[0].mxu0
      %6616 = vmatprep.mubr.f32.mxu0 0.0
      %6617 = vmatmul.mubr.f32.gmra.mrb[0].mxu0 %v6059
      %v6618 = vpop.f32.mrb[0].mxu0
      %v6619 = vadd.f32 0.0, %v6618
      %v6620 = vpop.f32.mrb[0].mxu0
      %6621 = vmatprep.mubr.f32.mxu0 0.0
      %6622 = vmatmul.mubr.f32.gmra.mrb[0].mxu0 %v6058
      %v6623 = vpop.f32.mrb[0].mxu0
      %v6624 = vadd.f32 0.0, %v6623
      %v6625 = vpop.f32.mrb[0].mxu0
      %6626 = vmatprep.mubr.f32.mxu0 0.0
      %6627 = vmatmul.mubr.f32.gmra.mrb[0].mxu0 %v6057
      %v6628 = vpop.f32.mrb[0].mxu0
      %v6629 = vadd.f32 0.0, %v6628
      %v6630 = vpop.f32.mrb[0].mxu0
      %6631 = vmatprep.mubr.f32.mxu0 0.0
      %6632 = vmatmul.mubr.f32.gmra.mrb[0].mxu0 %v6056
      %v6633 = vpop.f32.mrb[0].mxu0
      %v6634 = vadd.f32 0.0, %v6633
      %v6635 = vpop.f32.mrb[0].mxu0
      %6636 = vmatprep.mubr.f32.mxu0 0.0
      %6637 = vmatmul.mubr.f32.gmra.mrb[0].mxu0 %v6055
      %v6638 = vpop.f32.mrb[0].mxu0
      %v6639 = vadd.f32 0.0, %v6638
      %v6640 = vpop.f32.mrb[0].mxu0
      %6641 = vmatprep.mubr.f32.mxu0 0.0
      %6642 = vmatmul.mubr.f32.gmra.mrb[0].mxu0 %v6054
      %v6643 = vpop.f32.mrb[0].mxu0
      %v6644 = vadd.f32 0.0, %v6643
      %v6645 = vpop.f32.mrb[0].mxu0
      %6646 = vmatprep.mubr.f32.mxu0 0.0
      %6647 = vmatmul.mubr.f32.gmra.mrb[0].mxu0 %v6053
      %v6648 = vpop.f32.mrb[0].mxu0
      %v6649 = vadd.f32 0.0, %v6648
      %v6650 = vpop.f32.mrb[0].mxu0
      %6651 = vmatprep.mubr.f32.mxu0 0.0
      %6652 = vmatmul.mubr.f32.gmra.mrb[0].mxu0 %v6052
      %v6653 = vpop.f32.mrb[0].mxu0
      %v6654 = vadd.f32 0.0, %v6653
      %v6655 = vpop.f32.mrb[0].mxu0
      %6656 = vmatprep.mubr.f32.mxu0 0.0
      %6657 = vmatmul.mubr.f32.gmra.mrb[0].mxu0 %v6051
      %v6658 = vpop.f32.mrb[0].mxu0
      %v6659 = vadd.f32 0.0, %v6658
      %v6660 = vpop.f32.mrb[0].mxu0
      %6661 = vmatprep.mubr.f32.mxu0 0.0
      %6662 = vmatmul.mubr.f32.gmra.mrb[0].mxu0 %v6050
      %v6663 = vpop.f32.mrb[0].mxu0
      %v6664 = vadd.f32 0.0, %v6663
      %v6665 = vpop.f32.mrb[0].mxu0
      %6666 = vmatprep.mubr.f32.mxu0 0.0
      %6667 = vmatmul.mubr.f32.gmra.mrb[0].mxu0 %v6049
      %v6668 = vpop.f32.mrb[0].mxu0
      %v6669 = vadd.f32 0.0, %v6668
      %v6670 = vpop.f32.mrb[0].mxu0
      %6671 = vmatprep.mubr.f32.mxu0 0.0
      %6672 = vmatmul.mubr.f32.gmra.mrb[0].mxu0 %v6048
      %v6673 = vpop.f32.mrb[0].mxu0
      %v6674 = vadd.f32 0.0, %v6673
      %v6675 = vpop.f32.mrb[0].mxu0
      %6676 = vmatprep.mubr.f32.mxu0 0.0
      %6677 = vmatmul.mubr.f32.gmra.mrb[0].mxu0 %v6047
      %v6678 = vpop.f32.mrb[0].mxu0
      %v6679 = vadd.f32 0.0, %v6678
      %v6680 = vpop.f32.mrb[0].mxu0
      %6681 = vmatprep.mubr.f32.mxu0 0.0
      %6682 = vmatmul.mubr.f32.gmra.mrb[0].mxu0 %v6046
      %v6683 = vpop.f32.mrb[0].mxu0
      %v6684 = vadd.f32 0.0, %v6683
      %v6685 = vpop.f32.mrb[0].mxu0
      %6686 = vmatprep.mubr.f32.mxu0 0.0
      %6687 = vmatmul.mubr.f32.gmra.mrb[0].mxu0 %v6086
      %v6688 = vpop.f32.mrb[0].mxu0
      %v6689 = vadd.f32 0.0, %v6688
      %v6690 = vpop.f32.mrb[0].mxu0
      %6691 = vmatprep.mubr.f32.mxu0 0.0
      %6692 = vmatmul.mubr.f32.gmra.mrb[0].mxu0 %v6085
      %v6693 = vpop.f32.mrb[0].mxu0
      %v6694 = vadd.f32 0.0, %v6693
      %v6695 = vpop.f32.mrb[0].mxu0
      %6696 = vmatprep.mubr.f32.mxu0 0.0
      %6697 = vmatmul.mubr.f32.gmra.mrb[0].mxu0 %v6084
      %v6698 = vpop.f32.mrb[0].mxu0
      %v6699 = vadd.f32 0.0, %v6698
      %v6700 = vpop.f32.mrb[0].mxu0
      %6701 = vdwg.mxu0
      %v6702 = vadd.f32 %v6374, %v6499
      %v6703 = vadd.f32 %v6375, %v6504
      %v6704 = vadd.f32 %v6376, %v6509
      %v6705 = vadd.f32 %v6377, %v6514
      %v6706 = vadd.f32 %v6378, %v6519
      %v6707 = vadd.f32 %v6379, %v6524
      %v6708 = vadd.f32 %v6380, %v6529
      %v6709 = vadd.f32 %v6381, %v6534
      %v6710 = vadd.f32 %v6382, %v6539
      %v6711 = vadd.f32 %v6383, %v6544
      %v6712 = vadd.f32 %v6384, %v6549
      %v6713 = vadd.f32 %v6385, %v6554
      %v6714 = vadd.f32 %v6386, %v6559
      %v6715 = vadd.f32 %v6387, %v6564
      %v6716 = vadd.f32 %v6388, %v6569
      %v6717 = vadd.f32 %v6389, %v6574
      %v6718 = vadd.f32 %v6390, %v6579
      %v6719 = vadd.f32 %v6391, %v6584
      %v6720 = vadd.f32 %v6392, %v6589
      %v6721 = vadd.f32 %v6393, %v6594
      %v6722 = vadd.f32 %v6394, %v6599
      %v6723 = vadd.f32 %v6395, %v6604
      %v6724 = vadd.f32 %v6396, %v6609
      %v6725 = vadd.f32 %v6397, %v6614
      %v6726 = vadd.f32 %v6398, %v6619
      %v6727 = vadd.f32 %v6399, %v6624
      %v6728 = vadd.f32 %v6400, %v6629
      %v6729 = vadd.f32 %v6401, %v6634
      %v6730 = vadd.f32 %v6402, %v6639
      %v6731 = vadd.f32 %v6403, %v6644
      %v6732 = vadd.f32 %v6404, %v6649
      %v6733 = vadd.f32 %v6405, %v6654
      %v6734 = vadd.f32 %v6406, %v6659
      %v6735 = vadd.f32 %v6407, %v6664
      %v6736 = vadd.f32 %v6408, %v6669
      %v6737 = vadd.f32 %v6409, %v6674
      %v6738 = vadd.f32 %v6410, %v6679
      %v6739 = vadd.f32 %v6411, %v6684
      %v6740 = vadd.f32 %v6412, %v6689
      %v6741 = vadd.f32 %v6413, %v6694
      %v6742 = vadd.f32 %v6414, %v6699
      %v6743 = vrot.slane %v4161, 2
      %v6744 = vrot.slane %v4162, 2
      %v6745 = vrot.slane %v4163, 2
      %v6746 = vrot.slane %v4164, 2
      %v6747 = vrot.slane %v4165, 2
      %v6748 = vrot.slane %v4166, 2
      %v6749 = vrot.slane %v4167, 2
      %v6750 = vrot.slane %v4168, 2
      %v6751 = vrot.slane %v4169, 2
      %v6752 = vrot.slane %v4170, 2
      %v6753 = vrot.slane %v4171, 2
      %v6754 = vrot.slane %v4172, 2
      %v6755 = vrot.slane %v4173, 2
      %v6756 = vrot.slane %v4174, 2
      %v6757 = vrot.slane %v4175, 2
      %v6758 = vrot.slane %v4176, 2
      %v6759 = vrot.slane %v4177, 2
      %v6760 = vrot.slane %v4178, 2
      %v6761 = vrot.slane %v4179, 2
      %v6762 = vrot.slane %v4180, 2
      %v6763 = vrot.slane %v4181, 2
      %v6764 = vrot.slane %v4182, 2
      %v6765 = vrot.slane %v4183, 2
      %v6766 = vrot.slane %v4184, 2
      %v6767 = vrot.slane %v4185, 2
      %v6768 = vrot.slane %v4186, 2
      %v6769 = vrot.slane %v4187, 2
      %v6770 = vrot.slane %v4188, 2
      %v6771 = vrot.slane %v4189, 2
      %v6772 = vrot.slane %v4190, 2
      %v6773 = vrot.slane %v4191, 2
      %v6774 = vrot.slane %v4192, 2
      %v6775 = vrot.slane %v4193, 2
      %v6776 = vrot.slane %v4194, 2
      %v6777 = vrot.slane %v4195, 2
      %v6778 = vrot.slane %v4196, 2
      %v6779 = vrot.slane %v4197, 2
      %v6780 = vrot.slane %v4198, 2
      %v6781 = vrot.slane %v4199, 2
      %v6782 = vrot.slane %v4200, 2
      %v6783 = vrot.slane %v4201, 2
      %v6784 = vsel %vm2881, %v6782, %v6783
      %v6785 = vsel %vm2881, %v6781, %v6782
      %v6786 = vsel %vm2881, %v6780, %v6781
      %v6787 = vsel %vm2881, %v6779, %v6780
      %v6788 = vsel %vm2881, %v6778, %v6779
      %v6789 = vsel %vm2881, %v6777, %v6778
      %v6790 = vsel %vm2881, %v6776, %v6777
      %v6791 = vsel %vm2881, %v6775, %v6776
      %v6792 = vsel %vm2881, %v6774, %v6775
      %v6793 = vsel %vm2881, %v6773, %v6774
      %v6794 = vsel %vm2881, %v6772, %v6773
      %v6795 = vsel %vm2881, %v6771, %v6772
      %v6796 = vsel %vm2881, %v6770, %v6771
      %v6797 = vsel %vm2881, %v6769, %v6770
      %v6798 = vsel %vm2881, %v6768, %v6769
      %v6799 = vsel %vm2881, %v6767, %v6768
      %v6800 = vsel %vm2881, %v6766, %v6767
      %v6801 = vsel %vm2881, %v6765, %v6766
      %v6802 = vsel %vm2881, %v6764, %v6765
      %v6803 = vsel %vm2881, %v6763, %v6764
      %v6804 = vsel %vm2881, %v6762, %v6763
      %v6805 = vsel %vm2881, %v6761, %v6762
      %v6806 = vsel %vm2881, %v6760, %v6761
      %v6807 = vsel %vm2881, %v6759, %v6760
      %v6808 = vsel %vm2881, %v6758, %v6759
      %v6809 = vsel %vm2881, %v6757, %v6758
      %v6810 = vsel %vm2881, %v6756, %v6757
      %v6811 = vsel %vm2881, %v6755, %v6756
      %v6812 = vsel %vm2881, %v6754, %v6755
      %v6813 = vsel %vm2881, %v6753, %v6754
      %v6814 = vsel %vm2881, %v6752, %v6753
      %v6815 = vsel %vm2881, %v6751, %v6752
      %v6816 = vsel %vm2881, %v6750, %v6751
      %v6817 = vsel %vm2881, %v6749, %v6750
      %v6818 = vsel %vm2881, %v6748, %v6749
      %v6819 = vsel %vm2881, %v6747, %v6748
      %v6820 = vsel %vm2881, %v6746, %v6747
      %v6821 = vsel %vm2881, %v6745, %v6746
      %v6822 = vsel %vm2881, %v6744, %v6745
      %v6823 = vsel %vm2881, %v6743, %v6744
      %v6824 = vsel %vm2881, %v6783, %v6743
      %s6825 = scalar_lea.vmem %s4, 896
      %v6826 = vld [vmem:[%s6825] sm:$0xff]
      %v6827 = vld [vmem:[%s6825 + $0x8] sm:$0xff]
      %v6828 = vld [vmem:[%s6825 + $0x10] sm:$0xff]
      %v6829 = vld [vmem:[%s6825 + $0x18] sm:$0xff]
      %v6830 = vld [vmem:[%s6825 + $0x20] sm:$0xff]
      %v6831 = vld [vmem:[%s6825 + $0x28] sm:$0xff]
      %v6832 = vld [vmem:[%s6825 + $0x30] sm:$0xff]
      %v6833 = vld [vmem:[%s6825 + $0x38] sm:$0xff]
      %v6834 = vld [vmem:[%s6825 + $0x40] sm:$0xff]
      %v6835 = vld [vmem:[%s6825 + $0x48] sm:$0xff]
      %v6836 = vld [vmem:[%s6825 + $0x50] sm:$0xff]
      %v6837 = vld [vmem:[%s6825 + $0x58] sm:$0xff]
      %v6838 = vld [vmem:[%s6825 + $0x60] sm:$0xff]
      %v6839 = vld [vmem:[%s6825 + $0x68] sm:$0xff]
      %v6840 = vld [vmem:[%s6825 + $0x70] sm:$0xff]
      %v6841 = vld [vmem:[%s6825 + $0x78] sm:$0xff]
      %6842 = vmatprep.subr.mxu0 0.0
      %6843 = vmatpush1.msra.mxu0 %v6826
      %6844 = vmatprep.subr.mxu0 0.0
      %6845 = vmatpush1.msra.mxu0 %v6827
      %6846 = vmatprep.subr.mxu0 0.0
      %6847 = vmatpush1.msra.mxu0 %v6828
      %6848 = vmatprep.subr.mxu0 0.0
      %6849 = vmatpush1.msra.mxu0 %v6829
      %6850 = vmatprep.subr.mxu0 0.0
      %6851 = vmatpush1.msra.mxu0 %v6830
      %6852 = vmatprep.subr.mxu0 0.0
      %6853 = vmatpush1.msra.mxu0 %v6831
      %6854 = vmatprep.subr.mxu0 0.0
      %6855 = vmatpush1.msra.mxu0 %v6832
      %6856 = vmatprep.subr.mxu0 0.0
      %6857 = vmatpush1.msra.mxu0 %v6833
      %6858 = vmatprep.subr.mxu0 0.0
      %6859 = vmatpush1.msra.mxu0 %v6834
      %6860 = vmatprep.subr.mxu0 0.0
      %6861 = vmatpush1.msra.mxu0 %v6835
      %6862 = vmatprep.subr.mxu0 0.0
      %6863 = vmatpush1.msra.mxu0 %v6836
      %6864 = vmatprep.subr.mxu0 0.0
      %6865 = vmatpush1.msra.mxu0 %v6837
      %6866 = vmatprep.subr.mxu0 0.0
      %6867 = vmatpush1.msra.mxu0 %v6838
      %6868 = vmatprep.subr.mxu0 0.0
      %6869 = vmatpush1.msra.mxu0 %v6839
      %6870 = vmatprep.subr.mxu0 0.0
      %6871 = vmatpush1.msra.mxu0 %v6840
      %6872 = vmatprep.subr.mxu0 0.0
      %6873 = vmatpush1.msra.mxu0 %v6841
      %6874 = vmatprep.subr.mxu0 0.0
      %6875 = vmatpush1.msra.mxu0 0.0
      %6876 = vmatprep.subr.mxu0 0.0
      %6877 = vmatpush1.msra.mxu0 0.0
      %6878 = vmatprep.subr.mxu0 0.0
      %6879 = vmatpush1.msra.mxu0 0.0
      %6880 = vmatprep.subr.mxu0 0.0
      %6881 = vmatpush1.msra.mxu0 0.0
      %6882 = vmatprep.subr.mxu0 0.0
      %6883 = vmatpush1.msra.mxu0 0.0
      %6884 = vmatprep.subr.mxu0 0.0
      %6885 = vmatpush1.msra.mxu0 0.0
      %6886 = vmatprep.subr.mxu0 0.0
      %6887 = vmatpush1.msra.mxu0 0.0
      %6888 = vmatprep.subr.mxu0 0.0
      %6889 = vmatpush1.msra.mxu0 0.0
      %6890 = vmatprep.subr.mxu0 0.0
      %6891 = vmatpush1.msra.mxu0 0.0
      %6892 = vmatprep.subr.mxu0 0.0
      %6893 = vmatpush1.msra.mxu0 0.0
      %6894 = vmatprep.subr.mxu0 0.0
      %6895 = vmatpush1.msra.mxu0 0.0
      %6896 = vmatprep.subr.mxu0 0.0
      %6897 = vmatpush1.msra.mxu0 0.0
      %6898 = vmatprep.subr.mxu0 0.0
      %6899 = vmatpush1.msra.mxu0 0.0
      %6900 = vmatprep.subr.mxu0 0.0
      %6901 = vmatpush1.msra.mxu0 0.0
      %6902 = vmatprep.subr.mxu0 0.0
      %6903 = vmatpush1.msra.mxu0 0.0
      %6904 = vmatprep.subr.mxu0 0.0
      %6905 = vmatpush1.msra.mxu0 0.0
      %6906 = vmatprep.mubr.f32.mxu0 0.0
      %6907 = vmatmul.mubr.f32.gmra.mrb[0].mxu0 %v6821
      %v6908 = vpop.f32.mrb[0].mxu0
      %v6909 = vadd.f32 0.0, %v6908
      %v6910 = vpop.f32.mrb[0].mxu0
      %6911 = vmatprep.mubr.f32.mxu0 0.0
      %6912 = vmatmul.mubr.f32.gmra.mrb[0].mxu0 %v6820
      %v6913 = vpop.f32.mrb[0].mxu0
      %v6914 = vadd.f32 0.0, %v6913
      %v6915 = vpop.f32.mrb[0].mxu0
      %6916 = vmatprep.mubr.f32.mxu0 0.0
      %6917 = vmatmul.mubr.f32.gmra.mrb[0].mxu0 %v6819
      %v6918 = vpop.f32.mrb[0].mxu0
      %v6919 = vadd.f32 0.0, %v6918
      %v6920 = vpop.f32.mrb[0].mxu0
      %6921 = vmatprep.mubr.f32.mxu0 0.0
      %6922 = vmatmul.mubr.f32.gmra.mrb[0].mxu0 %v6818
      %v6923 = vpop.f32.mrb[0].mxu0
      %v6924 = vadd.f32 0.0, %v6923
      %v6925 = vpop.f32.mrb[0].mxu0
      %6926 = vmatprep.mubr.f32.mxu0 0.0
      %6927 = vmatmul.mubr.f32.gmra.mrb[0].mxu0 %v6817
      %v6928 = vpop.f32.mrb[0].mxu0
      %v6929 = vadd.f32 0.0, %v6928
      %v6930 = vpop.f32.mrb[0].mxu0
      %6931 = vmatprep.mubr.f32.mxu0 0.0
      %6932 = vmatmul.mubr.f32.gmra.mrb[0].mxu0 %v6816
      %v6933 = vpop.f32.mrb[0].mxu0
      %v6934 = vadd.f32 0.0, %v6933
      %v6935 = vpop.f32.mrb[0].mxu0
      %6936 = vmatprep.mubr.f32.mxu0 0.0
      %6937 = vmatmul.mubr.f32.gmra.mrb[0].mxu0 %v6815
      %v6938 = vpop.f32.mrb[0].mxu0
      %v6939 = vadd.f32 0.0, %v6938
      %v6940 = vpop.f32.mrb[0].mxu0
      %6941 = vmatprep.mubr.f32.mxu0 0.0
      %6942 = vmatmul.mubr.f32.gmra.mrb[0].mxu0 %v6814
      %v6943 = vpop.f32.mrb[0].mxu0
      %v6944 = vadd.f32 0.0, %v6943
      %v6945 = vpop.f32.mrb[0].mxu0
      %6946 = vmatprep.mubr.f32.mxu0 0.0
      %6947 = vmatmul.mubr.f32.gmra.mrb[0].mxu0 %v6813
      %v6948 = vpop.f32.mrb[0].mxu0
      %v6949 = vadd.f32 0.0, %v6948
      %v6950 = vpop.f32.mrb[0].mxu0
      %6951 = vmatprep.mubr.f32.mxu0 0.0
      %6952 = vmatmul.mubr.f32.gmra.mrb[0].mxu0 %v6812
      %v6953 = vpop.f32.mrb[0].mxu0
      %v6954 = vadd.f32 0.0, %v6953
      %v6955 = vpop.f32.mrb[0].mxu0
      %6956 = vmatprep.mubr.f32.mxu0 0.0
      %6957 = vmatmul.mubr.f32.gmra.mrb[0].mxu0 %v6811
      %v6958 = vpop.f32.mrb[0].mxu0
      %v6959 = vadd.f32 0.0, %v6958
      %v6960 = vpop.f32.mrb[0].mxu0
      %6961 = vmatprep.mubr.f32.mxu0 0.0
      %6962 = vmatmul.mubr.f32.gmra.mrb[0].mxu0 %v6810
      %v6963 = vpop.f32.mrb[0].mxu0
      %v6964 = vadd.f32 0.0, %v6963
      %v6965 = vpop.f32.mrb[0].mxu0
      %6966 = vmatprep.mubr.f32.mxu0 0.0
      %6967 = vmatmul.mubr.f32.gmra.mrb[0].mxu0 %v6809
      %v6968 = vpop.f32.mrb[0].mxu0
      %v6969 = vadd.f32 0.0, %v6968
      %v6970 = vpop.f32.mrb[0].mxu0
      %6971 = vmatprep.mubr.f32.mxu0 0.0
      %6972 = vmatmul.mubr.f32.gmra.mrb[0].mxu0 %v6808
      %v6973 = vpop.f32.mrb[0].mxu0
      %v6974 = vadd.f32 0.0, %v6973
      %v6975 = vpop.f32.mrb[0].mxu0
      %6976 = vmatprep.mubr.f32.mxu0 0.0
      %6977 = vmatmul.mubr.f32.gmra.mrb[0].mxu0 %v6807
      %v6978 = vpop.f32.mrb[0].mxu0
      %v6979 = vadd.f32 0.0, %v6978
      %v6980 = vpop.f32.mrb[0].mxu0
      %6981 = vmatprep.mubr.f32.mxu0 0.0
      %6982 = vmatmul.mubr.f32.gmra.mrb[0].mxu0 %v6806
      %v6983 = vpop.f32.mrb[0].mxu0
      %v6984 = vadd.f32 0.0, %v6983
      %v6985 = vpop.f32.mrb[0].mxu0
      %6986 = vmatprep.mubr.f32.mxu0 0.0
      %6987 = vmatmul.mubr.f32.gmra.mrb[0].mxu0 %v6805
      %v6988 = vpop.f32.mrb[0].mxu0
      %v6989 = vadd.f32 0.0, %v6988
      %v6990 = vpop.f32.mrb[0].mxu0
      %6991 = vmatprep.mubr.f32.mxu0 0.0
      %6992 = vmatmul.mubr.f32.gmra.mrb[0].mxu0 %v6804
      %v6993 = vpop.f32.mrb[0].mxu0
      %v6994 = vadd.f32 0.0, %v6993
      %v6995 = vpop.f32.mrb[0].mxu0
      %6996 = vmatprep.mubr.f32.mxu0 0.0
      %6997 = vmatmul.mubr.f32.gmra.mrb[0].mxu0 %v6803
      %v6998 = vpop.f32.mrb[0].mxu0
      %v6999 = vadd.f32 0.0, %v6998
      %v7000 = vpop.f32.mrb[0].mxu0
      %7001 = vmatprep.mubr.f32.mxu0 0.0
      %7002 = vmatmul.mubr.f32.gmra.mrb[0].mxu0 %v6802
      %v7003 = vpop.f32.mrb[0].mxu0
      %v7004 = vadd.f32 0.0, %v7003
      %v7005 = vpop.f32.mrb[0].mxu0
      %7006 = vmatprep.mubr.f32.mxu0 0.0
      %7007 = vmatmul.mubr.f32.gmra.mrb[0].mxu0 %v6801
      %v7008 = vpop.f32.mrb[0].mxu0
      %v7009 = vadd.f32 0.0, %v7008
      %v7010 = vpop.f32.mrb[0].mxu0
      %7011 = vmatprep.mubr.f32.mxu0 0.0
      %7012 = vmatmul.mubr.f32.gmra.mrb[0].mxu0 %v6800
      %v7013 = vpop.f32.mrb[0].mxu0
      %v7014 = vadd.f32 0.0, %v7013
      %v7015 = vpop.f32.mrb[0].mxu0
      %7016 = vmatprep.mubr.f32.mxu0 0.0
      %7017 = vmatmul.mubr.f32.gmra.mrb[0].mxu0 %v6799
      %v7018 = vpop.f32.mrb[0].mxu0
      %v7019 = vadd.f32 0.0, %v7018
      %v7020 = vpop.f32.mrb[0].mxu0
      %7021 = vmatprep.mubr.f32.mxu0 0.0
      %7022 = vmatmul.mubr.f32.gmra.mrb[0].mxu0 %v6798
      %v7023 = vpop.f32.mrb[0].mxu0
      %v7024 = vadd.f32 0.0, %v7023
      %v7025 = vpop.f32.mrb[0].mxu0
      %7026 = vmatprep.mubr.f32.mxu0 0.0
      %7027 = vmatmul.mubr.f32.gmra.mrb[0].mxu0 %v6797
      %v7028 = vpop.f32.mrb[0].mxu0
      %v7029 = vadd.f32 0.0, %v7028
      %v7030 = vpop.f32.mrb[0].mxu0
      %7031 = vmatprep.mubr.f32.mxu0 0.0
      %7032 = vmatmul.mubr.f32.gmra.mrb[0].mxu0 %v6796
      %v7033 = vpop.f32.mrb[0].mxu0
      %v7034 = vadd.f32 0.0, %v7033
      %v7035 = vpop.f32.mrb[0].mxu0
      %7036 = vmatprep.mubr.f32.mxu0 0.0
      %7037 = vmatmul.mubr.f32.gmra.mrb[0].mxu0 %v6795
      %v7038 = vpop.f32.mrb[0].mxu0
      %v7039 = vadd.f32 0.0, %v7038
      %v7040 = vpop.f32.mrb[0].mxu0
      %7041 = vmatprep.mubr.f32.mxu0 0.0
      %7042 = vmatmul.mubr.f32.gmra.mrb[0].mxu0 %v6794
      %v7043 = vpop.f32.mrb[0].mxu0
      %v7044 = vadd.f32 0.0, %v7043
      %v7045 = vpop.f32.mrb[0].mxu0
      %7046 = vmatprep.mubr.f32.mxu0 0.0
      %7047 = vmatmul.mubr.f32.gmra.mrb[0].mxu0 %v6793
      %v7048 = vpop.f32.mrb[0].mxu0
      %v7049 = vadd.f32 0.0, %v7048
      %v7050 = vpop.f32.mrb[0].mxu0
      %7051 = vmatprep.mubr.f32.mxu0 0.0
      %7052 = vmatmul.mubr.f32.gmra.mrb[0].mxu0 %v6792
      %v7053 = vpop.f32.mrb[0].mxu0
      %v7054 = vadd.f32 0.0, %v7053
      %v7055 = vpop.f32.mrb[0].mxu0
      %7056 = vmatprep.mubr.f32.mxu0 0.0
      %7057 = vmatmul.mubr.f32.gmra.mrb[0].mxu0 %v6791
      %v7058 = vpop.f32.mrb[0].mxu0
      %v7059 = vadd.f32 0.0, %v7058
      %v7060 = vpop.f32.mrb[0].mxu0
      %7061 = vmatprep.mubr.f32.mxu0 0.0
      %7062 = vmatmul.mubr.f32.gmra.mrb[0].mxu0 %v6790
      %v7063 = vpop.f32.mrb[0].mxu0
      %v7064 = vadd.f32 0.0, %v7063
      %v7065 = vpop.f32.mrb[0].mxu0
      %7066 = vmatprep.mubr.f32.mxu0 0.0
      %7067 = vmatmul.mubr.f32.gmra.mrb[0].mxu0 %v6789
      %v7068 = vpop.f32.mrb[0].mxu0
      %v7069 = vadd.f32 0.0, %v7068
      %v7070 = vpop.f32.mrb[0].mxu0
      %7071 = vmatprep.mubr.f32.mxu0 0.0
      %7072 = vmatmul.mubr.f32.gmra.mrb[0].mxu0 %v6788
      %v7073 = vpop.f32.mrb[0].mxu0
      %v7074 = vadd.f32 0.0, %v7073
      %v7075 = vpop.f32.mrb[0].mxu0
      %7076 = vmatprep.mubr.f32.mxu0 0.0
      %7077 = vmatmul.mubr.f32.gmra.mrb[0].mxu0 %v6787
      %v7078 = vpop.f32.mrb[0].mxu0
      %v7079 = vadd.f32 0.0, %v7078
      %v7080 = vpop.f32.mrb[0].mxu0
      %7081 = vmatprep.mubr.f32.mxu0 0.0
      %7082 = vmatmul.mubr.f32.gmra.mrb[0].mxu0 %v6786
      %v7083 = vpop.f32.mrb[0].mxu0
      %v7084 = vadd.f32 0.0, %v7083
      %v7085 = vpop.f32.mrb[0].mxu0
      %7086 = vmatprep.mubr.f32.mxu0 0.0
      %7087 = vmatmul.mubr.f32.gmra.mrb[0].mxu0 %v6785
      %v7088 = vpop.f32.mrb[0].mxu0
      %v7089 = vadd.f32 0.0, %v7088
      %v7090 = vpop.f32.mrb[0].mxu0
      %7091 = vmatprep.mubr.f32.mxu0 0.0
      %7092 = vmatmul.mubr.f32.gmra.mrb[0].mxu0 %v6784
      %v7093 = vpop.f32.mrb[0].mxu0
      %v7094 = vadd.f32 0.0, %v7093
      %v7095 = vpop.f32.mrb[0].mxu0
      %7096 = vmatprep.mubr.f32.mxu0 0.0
      %7097 = vmatmul.mubr.f32.gmra.mrb[0].mxu0 %v6824
      %v7098 = vpop.f32.mrb[0].mxu0
      %v7099 = vadd.f32 0.0, %v7098
      %v7100 = vpop.f32.mrb[0].mxu0
      %7101 = vmatprep.mubr.f32.mxu0 0.0
      %7102 = vmatmul.mubr.f32.gmra.mrb[0].mxu0 %v6823
      %v7103 = vpop.f32.mrb[0].mxu0
      %v7104 = vadd.f32 0.0, %v7103
      %v7105 = vpop.f32.mrb[0].mxu0
      %7106 = vmatprep.mubr.f32.mxu0 0.0
      %7107 = vmatmul.mubr.f32.gmra.mrb[0].mxu0 %v6822
      %v7108 = vpop.f32.mrb[0].mxu0
      %v7109 = vadd.f32 0.0, %v7108
      %v7110 = vpop.f32.mrb[0].mxu0
      %7111 = vdwg.mxu0
      %v7112 = vadd.f32 %v6702, %v6909
      %v7113 = vadd.f32 %v6703, %v6914
      %v7114 = vadd.f32 %v6704, %v6919
      %v7115 = vadd.f32 %v6705, %v6924
      %v7116 = vadd.f32 %v6706, %v6929
      %v7117 = vadd.f32 %v6707, %v6934
      %v7118 = vadd.f32 %v6708, %v6939
      %v7119 = vadd.f32 %v6709, %v6944
      %v7120 = vadd.f32 %v6710, %v6949
      %v7121 = vadd.f32 %v6711, %v6954
      %v7122 = vadd.f32 %v6712, %v6959
      %v7123 = vadd.f32 %v6713, %v6964
      %v7124 = vadd.f32 %v6714, %v6969
      %v7125 = vadd.f32 %v6715, %v6974
      %v7126 = vadd.f32 %v6716, %v6979
      %v7127 = vadd.f32 %v6717, %v6984
      %v7128 = vadd.f32 %v6718, %v6989
      %v7129 = vadd.f32 %v6719, %v6994
      %v7130 = vadd.f32 %v6720, %v6999
      %v7131 = vadd.f32 %v6721, %v7004
      %v7132 = vadd.f32 %v6722, %v7009
      %v7133 = vadd.f32 %v6723, %v7014
      %v7134 = vadd.f32 %v6724, %v7019
      %v7135 = vadd.f32 %v6725, %v7024
      %v7136 = vadd.f32 %v6726, %v7029
      %v7137 = vadd.f32 %v6727, %v7034
      %v7138 = vadd.f32 %v6728, %v7039
      %v7139 = vadd.f32 %v6729, %v7044
      %v7140 = vadd.f32 %v6730, %v7049
      %v7141 = vadd.f32 %v6731, %v7054
      %v7142 = vadd.f32 %v6732, %v7059
      %v7143 = vadd.f32 %v6733, %v7064
      %v7144 = vadd.f32 %v6734, %v7069
      %v7145 = vadd.f32 %v6735, %v7074
      %v7146 = vadd.f32 %v6736, %v7079
      %v7147 = vadd.f32 %v6737, %v7084
      %v7148 = vadd.f32 %v6738, %v7089
      %v7149 = vadd.f32 %v6739, %v7094
      %v7150 = vadd.f32 %v6740, %v7099
      %v7151 = vadd.f32 %v6741, %v7104
      %v7152 = vadd.f32 %v6742, %v7109
      %v7153 = vrot.slane %v4161, 3
      %v7154 = vrot.slane %v4162, 3
      %v7155 = vrot.slane %v4163, 3
      %v7156 = vrot.slane %v4164, 3
      %v7157 = vrot.slane %v4165, 3
      %v7158 = vrot.slane %v4166, 3
      %v7159 = vrot.slane %v4167, 3
      %v7160 = vrot.slane %v4168, 3
      %v7161 = vrot.slane %v4169, 3
      %v7162 = vrot.slane %v4170, 3
      %v7163 = vrot.slane %v4171, 3
      %v7164 = vrot.slane %v4172, 3
      %v7165 = vrot.slane %v4173, 3
      %v7166 = vrot.slane %v4174, 3
      %v7167 = vrot.slane %v4175, 3
      %v7168 = vrot.slane %v4176, 3
      %v7169 = vrot.slane %v4177, 3
      %v7170 = vrot.slane %v4178, 3
      %v7171 = vrot.slane %v4179, 3
      %v7172 = vrot.slane %v4180, 3
      %v7173 = vrot.slane %v4181, 3
      %v7174 = vrot.slane %v4182, 3
      %v7175 = vrot.slane %v4183, 3
      %v7176 = vrot.slane %v4184, 3
      %v7177 = vrot.slane %v4185, 3
      %v7178 = vrot.slane %v4186, 3
      %v7179 = vrot.slane %v4187, 3
      %v7180 = vrot.slane %v4188, 3
      %v7181 = vrot.slane %v4189, 3
      %v7182 = vrot.slane %v4190, 3
      %v7183 = vrot.slane %v4191, 3
      %v7184 = vrot.slane %v4192, 3
      %v7185 = vrot.slane %v4193, 3
      %v7186 = vrot.slane %v4194, 3
      %v7187 = vrot.slane %v4195, 3
      %v7188 = vrot.slane %v4196, 3
      %v7189 = vrot.slane %v4197, 3
      %v7190 = vrot.slane %v4198, 3
      %v7191 = vrot.slane %v4199, 3
      %v7192 = vrot.slane %v4200, 3
      %v7193 = vrot.slane %v4201, 3
      %v7194 = vsel %vm3292, %v7192, %v7193
      %v7195 = vsel %vm3292, %v7191, %v7192
      %v7196 = vsel %vm3292, %v7190, %v7191
      %v7197 = vsel %vm3292, %v7189, %v7190
      %v7198 = vsel %vm3292, %v7188, %v7189
      %v7199 = vsel %vm3292, %v7187, %v7188
      %v7200 = vsel %vm3292, %v7186, %v7187
      %v7201 = vsel %vm3292, %v7185, %v7186
      %v7202 = vsel %vm3292, %v7184, %v7185
      %v7203 = vsel %vm3292, %v7183, %v7184
      %v7204 = vsel %vm3292, %v7182, %v7183
      %v7205 = vsel %vm3292, %v7181, %v7182
      %v7206 = vsel %vm3292, %v7180, %v7181
      %v7207 = vsel %vm3292, %v7179, %v7180
      %v7208 = vsel %vm3292, %v7178, %v7179
      %v7209 = vsel %vm3292, %v7177, %v7178
      %v7210 = vsel %vm3292, %v7176, %v7177
      %v7211 = vsel %vm3292, %v7175, %v7176
      %v7212 = vsel %vm3292, %v7174, %v7175
      %v7213 = vsel %vm3292, %v7173, %v7174
      %v7214 = vsel %vm3292, %v7172, %v7173
      %v7215 = vsel %vm3292, %v7171, %v7172
      %v7216 = vsel %vm3292, %v7170, %v7171
      %v7217 = vsel %vm3292, %v7169, %v7170
      %v7218 = vsel %vm3292, %v7168, %v7169
      %v7219 = vsel %vm3292, %v7167, %v7168
      %v7220 = vsel %vm3292, %v7166, %v7167
      %v7221 = vsel %vm3292, %v7165, %v7166
      %v7222 = vsel %vm3292, %v7164, %v7165
      %v7223 = vsel %vm3292, %v7163, %v7164
      %v7224 = vsel %vm3292, %v7162, %v7163
      %v7225 = vsel %vm3292, %v7161, %v7162
      %v7226 = vsel %vm3292, %v7160, %v7161
      %v7227 = vsel %vm3292, %v7159, %v7160
      %v7228 = vsel %vm3292, %v7158, %v7159
      %v7229 = vsel %vm3292, %v7157, %v7158
      %v7230 = vsel %vm3292, %v7156, %v7157
      %v7231 = vsel %vm3292, %v7155, %v7156
      %v7232 = vsel %vm3292, %v7154, %v7155
      %v7233 = vsel %vm3292, %v7153, %v7154
      %v7234 = vsel %vm3292, %v7193, %v7153
      %s7235 = scalar_lea.vmem %s4, 1024
      %v7236 = vld [vmem:[%s7235] sm:$0xff]
      %v7237 = vld [vmem:[%s7235 + $0x8] sm:$0xff]
      %v7238 = vld [vmem:[%s7235 + $0x10] sm:$0xff]
      %v7239 = vld [vmem:[%s7235 + $0x18] sm:$0xff]
      %v7240 = vld [vmem:[%s7235 + $0x20] sm:$0xff]
      %v7241 = vld [vmem:[%s7235 + $0x28] sm:$0xff]
      %v7242 = vld [vmem:[%s7235 + $0x30] sm:$0xff]
      %v7243 = vld [vmem:[%s7235 + $0x38] sm:$0xff]
      %v7244 = vld [vmem:[%s7235 + $0x40] sm:$0xff]
      %v7245 = vld [vmem:[%s7235 + $0x48] sm:$0xff]
      %v7246 = vld [vmem:[%s7235 + $0x50] sm:$0xff]
      %v7247 = vld [vmem:[%s7235 + $0x58] sm:$0xff]
      %v7248 = vld [vmem:[%s7235 + $0x60] sm:$0xff]
      %v7249 = vld [vmem:[%s7235 + $0x68] sm:$0xff]
      %v7250 = vld [vmem:[%s7235 + $0x70] sm:$0xff]
      %v7251 = vld [vmem:[%s7235 + $0x78] sm:$0xff]
      %7252 = vmatprep.subr.mxu0 0.0
      %7253 = vmatpush1.msra.mxu0 %v7236
      %7254 = vmatprep.subr.mxu0 0.0
      %7255 = vmatpush1.msra.mxu0 %v7237
      %7256 = vmatprep.subr.mxu0 0.0
      %7257 = vmatpush1.msra.mxu0 %v7238
      %7258 = vmatprep.subr.mxu0 0.0
      %7259 = vmatpush1.msra.mxu0 %v7239
      %7260 = vmatprep.subr.mxu0 0.0
      %7261 = vmatpush1.msra.mxu0 %v7240
      %7262 = vmatprep.subr.mxu0 0.0
      %7263 = vmatpush1.msra.mxu0 %v7241
      %7264 = vmatprep.subr.mxu0 0.0
      %7265 = vmatpush1.msra.mxu0 %v7242
      %7266 = vmatprep.subr.mxu0 0.0
      %7267 = vmatpush1.msra.mxu0 %v7243
      %7268 = vmatprep.subr.mxu0 0.0
      %7269 = vmatpush1.msra.mxu0 %v7244
      %7270 = vmatprep.subr.mxu0 0.0
      %7271 = vmatpush1.msra.mxu0 %v7245
      %7272 = vmatprep.subr.mxu0 0.0
      %7273 = vmatpush1.msra.mxu0 %v7246
      %7274 = vmatprep.subr.mxu0 0.0
      %7275 = vmatpush1.msra.mxu0 %v7247
      %7276 = vmatprep.subr.mxu0 0.0
      %7277 = vmatpush1.msra.mxu0 %v7248
      %7278 = vmatprep.subr.mxu0 0.0
      %7279 = vmatpush1.msra.mxu0 %v7249
      %7280 = vmatprep.subr.mxu0 0.0
      %7281 = vmatpush1.msra.mxu0 %v7250
      %7282 = vmatprep.subr.mxu0 0.0
      %7283 = vmatpush1.msra.mxu0 %v7251
      %7284 = vmatprep.subr.mxu0 0.0
      %7285 = vmatpush1.msra.mxu0 0.0
      %7286 = vmatprep.subr.mxu0 0.0
      %7287 = vmatpush1.msra.mxu0 0.0
      %7288 = vmatprep.subr.mxu0 0.0
      %7289 = vmatpush1.msra.mxu0 0.0
      %7290 = vmatprep.subr.mxu0 0.0
      %7291 = vmatpush1.msra.mxu0 0.0
      %7292 = vmatprep.subr.mxu0 0.0
      %7293 = vmatpush1.msra.mxu0 0.0
      %7294 = vmatprep.subr.mxu0 0.0
      %7295 = vmatpush1.msra.mxu0 0.0
      %7296 = vmatprep.subr.mxu0 0.0
      %7297 = vmatpush1.msra.mxu0 0.0
      %7298 = vmatprep.subr.mxu0 0.0
      %7299 = vmatpush1.msra.mxu0 0.0
      %7300 = vmatprep.subr.mxu0 0.0
      %7301 = vmatpush1.msra.mxu0 0.0
      %7302 = vmatprep.subr.mxu0 0.0
      %7303 = vmatpush1.msra.mxu0 0.0
      %7304 = vmatprep.subr.mxu0 0.0
      %7305 = vmatpush1.msra.mxu0 0.0
      %7306 = vmatprep.subr.mxu0 0.0
      %7307 = vmatpush1.msra.mxu0 0.0
      %7308 = vmatprep.subr.mxu0 0.0
      %7309 = vmatpush1.msra.mxu0 0.0
      %7310 = vmatprep.subr.mxu0 0.0
      %7311 = vmatpush1.msra.mxu0 0.0
      %7312 = vmatprep.subr.mxu0 0.0
      %7313 = vmatpush1.msra.mxu0 0.0
      %7314 = vmatprep.subr.mxu0 0.0
      %7315 = vmatpush1.msra.mxu0 0.0
      %7316 = vmatprep.mubr.f32.mxu0 0.0
      %7317 = vmatmul.mubr.f32.gmra.mrb[0].mxu0 %v7231
      %v7318 = vpop.f32.mrb[0].mxu0
      %v7319 = vadd.f32 0.0, %v7318
      %v7320 = vpop.f32.mrb[0].mxu0
      %7321 = vmatprep.mubr.f32.mxu0 0.0
      %7322 = vmatmul.mubr.f32.gmra.mrb[0].mxu0 %v7230
      %v7323 = vpop.f32.mrb[0].mxu0
      %v7324 = vadd.f32 0.0, %v7323
      %v7325 = vpop.f32.mrb[0].mxu0
      %7326 = vmatprep.mubr.f32.mxu0 0.0
      %7327 = vmatmul.mubr.f32.gmra.mrb[0].mxu0 %v7229
      %v7328 = vpop.f32.mrb[0].mxu0
      %v7329 = vadd.f32 0.0, %v7328
      %v7330 = vpop.f32.mrb[0].mxu0
      %7331 = vmatprep.mubr.f32.mxu0 0.0
      %7332 = vmatmul.mubr.f32.gmra.mrb[0].mxu0 %v7228
      %v7333 = vpop.f32.mrb[0].mxu0
      %v7334 = vadd.f32 0.0, %v7333
      %v7335 = vpop.f32.mrb[0].mxu0
      %7336 = vmatprep.mubr.f32.mxu0 0.0
      %7337 = vmatmul.mubr.f32.gmra.mrb[0].mxu0 %v7227
      %v7338 = vpop.f32.mrb[0].mxu0
      %v7339 = vadd.f32 0.0, %v7338
      %v7340 = vpop.f32.mrb[0].mxu0
      %7341 = vmatprep.mubr.f32.mxu0 0.0
      %7342 = vmatmul.mubr.f32.gmra.mrb[0].mxu0 %v7226
      %v7343 = vpop.f32.mrb[0].mxu0
      %v7344 = vadd.f32 0.0, %v7343
      %v7345 = vpop.f32.mrb[0].mxu0
      %7346 = vmatprep.mubr.f32.mxu0 0.0
      %7347 = vmatmul.mubr.f32.gmra.mrb[0].mxu0 %v7225
      %v7348 = vpop.f32.mrb[0].mxu0
      %v7349 = vadd.f32 0.0, %v7348
      %v7350 = vpop.f32.mrb[0].mxu0
      %7351 = vmatprep.mubr.f32.mxu0 0.0
      %7352 = vmatmul.mubr.f32.gmra.mrb[0].mxu0 %v7224
      %v7353 = vpop.f32.mrb[0].mxu0
      %v7354 = vadd.f32 0.0, %v7353
      %v7355 = vpop.f32.mrb[0].mxu0
      %7356 = vmatprep.mubr.f32.mxu0 0.0
      %7357 = vmatmul.mubr.f32.gmra.mrb[0].mxu0 %v7223
      %v7358 = vpop.f32.mrb[0].mxu0
      %v7359 = vadd.f32 0.0, %v7358
      %v7360 = vpop.f32.mrb[0].mxu0
      %7361 = vmatprep.mubr.f32.mxu0 0.0
      %7362 = vmatmul.mubr.f32.gmra.mrb[0].mxu0 %v7222
      %v7363 = vpop.f32.mrb[0].mxu0
      %v7364 = vadd.f32 0.0, %v7363
      %v7365 = vpop.f32.mrb[0].mxu0
      %7366 = vmatprep.mubr.f32.mxu0 0.0
      %7367 = vmatmul.mubr.f32.gmra.mrb[0].mxu0 %v7221
      %v7368 = vpop.f32.mrb[0].mxu0
      %v7369 = vadd.f32 0.0, %v7368
      %v7370 = vpop.f32.mrb[0].mxu0
      %7371 = vmatprep.mubr.f32.mxu0 0.0
      %7372 = vmatmul.mubr.f32.gmra.mrb[0].mxu0 %v7220
      %v7373 = vpop.f32.mrb[0].mxu0
      %v7374 = vadd.f32 0.0, %v7373
      %v7375 = vpop.f32.mrb[0].mxu0
      %7376 = vmatprep.mubr.f32.mxu0 0.0
      %7377 = vmatmul.mubr.f32.gmra.mrb[0].mxu0 %v7219
      %v7378 = vpop.f32.mrb[0].mxu0
      %v7379 = vadd.f32 0.0, %v7378
      %v7380 = vpop.f32.mrb[0].mxu0
      %7381 = vmatprep.mubr.f32.mxu0 0.0
      %7382 = vmatmul.mubr.f32.gmra.mrb[0].mxu0 %v7218
      %v7383 = vpop.f32.mrb[0].mxu0
      %v7384 = vadd.f32 0.0, %v7383
      %v7385 = vpop.f32.mrb[0].mxu0
      %7386 = vmatprep.mubr.f32.mxu0 0.0
      %7387 = vmatmul.mubr.f32.gmra.mrb[0].mxu0 %v7217
      %v7388 = vpop.f32.mrb[0].mxu0
      %v7389 = vadd.f32 0.0, %v7388
      %v7390 = vpop.f32.mrb[0].mxu0
      %7391 = vmatprep.mubr.f32.mxu0 0.0
      %7392 = vmatmul.mubr.f32.gmra.mrb[0].mxu0 %v7216
      %v7393 = vpop.f32.mrb[0].mxu0
      %v7394 = vadd.f32 0.0, %v7393
      %v7395 = vpop.f32.mrb[0].mxu0
      %7396 = vmatprep.mubr.f32.mxu0 0.0
      %7397 = vmatmul.mubr.f32.gmra.mrb[0].mxu0 %v7215
      %v7398 = vpop.f32.mrb[0].mxu0
      %v7399 = vadd.f32 0.0, %v7398
      %v7400 = vpop.f32.mrb[0].mxu0
      %7401 = vmatprep.mubr.f32.mxu0 0.0
      %7402 = vmatmul.mubr.f32.gmra.mrb[0].mxu0 %v7214
      %v7403 = vpop.f32.mrb[0].mxu0
      %v7404 = vadd.f32 0.0, %v7403
      %v7405 = vpop.f32.mrb[0].mxu0
      %7406 = vmatprep.mubr.f32.mxu0 0.0
      %7407 = vmatmul.mubr.f32.gmra.mrb[0].mxu0 %v7213
      %v7408 = vpop.f32.mrb[0].mxu0
      %v7409 = vadd.f32 0.0, %v7408
      %v7410 = vpop.f32.mrb[0].mxu0
      %7411 = vmatprep.mubr.f32.mxu0 0.0
      %7412 = vmatmul.mubr.f32.gmra.mrb[0].mxu0 %v7212
      %v7413 = vpop.f32.mrb[0].mxu0
      %v7414 = vadd.f32 0.0, %v7413
      %v7415 = vpop.f32.mrb[0].mxu0
      %7416 = vmatprep.mubr.f32.mxu0 0.0
      %7417 = vmatmul.mubr.f32.gmra.mrb[0].mxu0 %v7211
      %v7418 = vpop.f32.mrb[0].mxu0
      %v7419 = vadd.f32 0.0, %v7418
      %v7420 = vpop.f32.mrb[0].mxu0
      %7421 = vmatprep.mubr.f32.mxu0 0.0
      %7422 = vmatmul.mubr.f32.gmra.mrb[0].mxu0 %v7210
      %v7423 = vpop.f32.mrb[0].mxu0
      %v7424 = vadd.f32 0.0, %v7423
      %v7425 = vpop.f32.mrb[0].mxu0
      %7426 = vmatprep.mubr.f32.mxu0 0.0
      %7427 = vmatmul.mubr.f32.gmra.mrb[0].mxu0 %v7209
      %v7428 = vpop.f32.mrb[0].mxu0
      %v7429 = vadd.f32 0.0, %v7428
      %v7430 = vpop.f32.mrb[0].mxu0
      %7431 = vmatprep.mubr.f32.mxu0 0.0
      %7432 = vmatmul.mubr.f32.gmra.mrb[0].mxu0 %v7208
      %v7433 = vpop.f32.mrb[0].mxu0
      %v7434 = vadd.f32 0.0, %v7433
      %v7435 = vpop.f32.mrb[0].mxu0
      %7436 = vmatprep.mubr.f32.mxu0 0.0
      %7437 = vmatmul.mubr.f32.gmra.mrb[0].mxu0 %v7207
      %v7438 = vpop.f32.mrb[0].mxu0
      %v7439 = vadd.f32 0.0, %v7438
      %v7440 = vpop.f32.mrb[0].mxu0
      %7441 = vmatprep.mubr.f32.mxu0 0.0
      %7442 = vmatmul.mubr.f32.gmra.mrb[0].mxu0 %v7206
      %v7443 = vpop.f32.mrb[0].mxu0
      %v7444 = vadd.f32 0.0, %v7443
      %v7445 = vpop.f32.mrb[0].mxu0
      %7446 = vmatprep.mubr.f32.mxu0 0.0
      %7447 = vmatmul.mubr.f32.gmra.mrb[0].mxu0 %v7205
      %v7448 = vpop.f32.mrb[0].mxu0
      %v7449 = vadd.f32 0.0, %v7448
      %v7450 = vpop.f32.mrb[0].mxu0
      %7451 = vmatprep.mubr.f32.mxu0 0.0
      %7452 = vmatmul.mubr.f32.gmra.mrb[0].mxu0 %v7204
      %v7453 = vpop.f32.mrb[0].mxu0
      %v7454 = vadd.f32 0.0, %v7453
      %v7455 = vpop.f32.mrb[0].mxu0
      %7456 = vmatprep.mubr.f32.mxu0 0.0
      %7457 = vmatmul.mubr.f32.gmra.mrb[0].mxu0 %v7203
      %v7458 = vpop.f32.mrb[0].mxu0
      %v7459 = vadd.f32 0.0, %v7458
      %v7460 = vpop.f32.mrb[0].mxu0
      %7461 = vmatprep.mubr.f32.mxu0 0.0
      %7462 = vmatmul.mubr.f32.gmra.mrb[0].mxu0 %v7202
      %v7463 = vpop.f32.mrb[0].mxu0
      %v7464 = vadd.f32 0.0, %v7463
      %v7465 = vpop.f32.mrb[0].mxu0
      %7466 = vmatprep.mubr.f32.mxu0 0.0
      %7467 = vmatmul.mubr.f32.gmra.mrb[0].mxu0 %v7201
      %v7468 = vpop.f32.mrb[0].mxu0
      %v7469 = vadd.f32 0.0, %v7468
      %v7470 = vpop.f32.mrb[0].mxu0
      %7471 = vmatprep.mubr.f32.mxu0 0.0
      %7472 = vmatmul.mubr.f32.gmra.mrb[0].mxu0 %v7200
      %v7473 = vpop.f32.mrb[0].mxu0
      %v7474 = vadd.f32 0.0, %v7473
      %v7475 = vpop.f32.mrb[0].mxu0
      %7476 = vmatprep.mubr.f32.mxu0 0.0
      %7477 = vmatmul.mubr.f32.gmra.mrb[0].mxu0 %v7199
      %v7478 = vpop.f32.mrb[0].mxu0
      %v7479 = vadd.f32 0.0, %v7478
      %v7480 = vpop.f32.mrb[0].mxu0
      %7481 = vmatprep.mubr.f32.mxu0 0.0
      %7482 = vmatmul.mubr.f32.gmra.mrb[0].mxu0 %v7198
      %v7483 = vpop.f32.mrb[0].mxu0
      %v7484 = vadd.f32 0.0, %v7483
      %v7485 = vpop.f32.mrb[0].mxu0
      %7486 = vmatprep.mubr.f32.mxu0 0.0
      %7487 = vmatmul.mubr.f32.gmra.mrb[0].mxu0 %v7197
      %v7488 = vpop.f32.mrb[0].mxu0
      %v7489 = vadd.f32 0.0, %v7488
      %v7490 = vpop.f32.mrb[0].mxu0
      %7491 = vmatprep.mubr.f32.mxu0 0.0
      %7492 = vmatmul.mubr.f32.gmra.mrb[0].mxu0 %v7196
      %v7493 = vpop.f32.mrb[0].mxu0
      %v7494 = vadd.f32 0.0, %v7493
      %v7495 = vpop.f32.mrb[0].mxu0
      %7496 = vmatprep.mubr.f32.mxu0 0.0
      %7497 = vmatmul.mubr.f32.gmra.mrb[0].mxu0 %v7195
      %v7498 = vpop.f32.mrb[0].mxu0
      %v7499 = vadd.f32 0.0, %v7498
      %v7500 = vpop.f32.mrb[0].mxu0
      %7501 = vmatprep.mubr.f32.mxu0 0.0
      %7502 = vmatmul.mubr.f32.gmra.mrb[0].mxu0 %v7194
      %v7503 = vpop.f32.mrb[0].mxu0
      %v7504 = vadd.f32 0.0, %v7503
      %v7505 = vpop.f32.mrb[0].mxu0
      %7506 = vmatprep.mubr.f32.mxu0 0.0
      %7507 = vmatmul.mubr.f32.gmra.mrb[0].mxu0 %v7234
      %v7508 = vpop.f32.mrb[0].mxu0
      %v7509 = vadd.f32 0.0, %v7508
      %v7510 = vpop.f32.mrb[0].mxu0
      %7511 = vmatprep.mubr.f32.mxu0 0.0
      %7512 = vmatmul.mubr.f32.gmra.mrb[0].mxu0 %v7233
      %v7513 = vpop.f32.mrb[0].mxu0
      %v7514 = vadd.f32 0.0, %v7513
      %v7515 = vpop.f32.mrb[0].mxu0
      %7516 = vmatprep.mubr.f32.mxu0 0.0
      %7517 = vmatmul.mubr.f32.gmra.mrb[0].mxu0 %v7232
      %v7518 = vpop.f32.mrb[0].mxu0
      %v7519 = vadd.f32 0.0, %v7518
      %v7520 = vpop.f32.mrb[0].mxu0
      %7521 = vdwg.mxu0
      %v7522 = vadd.f32 %v7112, %v7319
      %v7523 = vadd.f32 %v7113, %v7324
      %v7524 = vadd.f32 %v7114, %v7329
      %v7525 = vadd.f32 %v7115, %v7334
      %v7526 = vadd.f32 %v7116, %v7339
      %v7527 = vadd.f32 %v7117, %v7344
      %v7528 = vadd.f32 %v7118, %v7349
      %v7529 = vadd.f32 %v7119, %v7354
      %v7530 = vadd.f32 %v7120, %v7359
      %v7531 = vadd.f32 %v7121, %v7364
      %v7532 = vadd.f32 %v7122, %v7369
      %v7533 = vadd.f32 %v7123, %v7374
      %v7534 = vadd.f32 %v7124, %v7379
      %v7535 = vadd.f32 %v7125, %v7384
      %v7536 = vadd.f32 %v7126, %v7389
      %v7537 = vadd.f32 %v7127, %v7394
      %v7538 = vadd.f32 %v7128, %v7399
      %v7539 = vadd.f32 %v7129, %v7404
      %v7540 = vadd.f32 %v7130, %v7409
      %v7541 = vadd.f32 %v7131, %v7414
      %v7542 = vadd.f32 %v7132, %v7419
      %v7543 = vadd.f32 %v7133, %v7424
      %v7544 = vadd.f32 %v7134, %v7429
      %v7545 = vadd.f32 %v7135, %v7434
      %v7546 = vadd.f32 %v7136, %v7439
      %v7547 = vadd.f32 %v7137, %v7444
      %v7548 = vadd.f32 %v7138, %v7449
      %v7549 = vadd.f32 %v7139, %v7454
      %v7550 = vadd.f32 %v7140, %v7459
      %v7551 = vadd.f32 %v7141, %v7464
      %v7552 = vadd.f32 %v7142, %v7469
      %v7553 = vadd.f32 %v7143, %v7474
      %v7554 = vadd.f32 %v7144, %v7479
      %v7555 = vadd.f32 %v7145, %v7484
      %v7556 = vadd.f32 %v7146, %v7489
      %v7557 = vadd.f32 %v7147, %v7494
      %v7558 = vadd.f32 %v7148, %v7499
      %v7559 = vadd.f32 %v7149, %v7504
      %v7560 = vadd.f32 %v7150, %v7509
      %v7561 = vadd.f32 %v7151, %v7514
      %v7562 = vadd.f32 %v7152, %v7519
      %v7563 = vld [vmem:[%s5] sm:$0x1]
      %v7565 = vlaneseq
      %v7566 = vshrl.u32 %v7565, 7
      %v7567 = vsub.s32 0, %v7566
      %v7568 = vrot.slane %v7563, %v7567
      %v7570 = vadd.f32 %v7522, %v7568
      %v7571 = vadd.f32 %v7523, %v7568
      %v7572 = vadd.f32 %v7524, %v7568
      %v7573 = vadd.f32 %v7525, %v7568
      %v7574 = vadd.f32 %v7526, %v7568
      %v7575 = vadd.f32 %v7527, %v7568
      %v7576 = vadd.f32 %v7528, %v7568
      %v7577 = vadd.f32 %v7529, %v7568
      %v7578 = vadd.f32 %v7530, %v7568
      %v7579 = vadd.f32 %v7531, %v7568
      %v7580 = vadd.f32 %v7532, %v7568
      %v7581 = vadd.f32 %v7533, %v7568
      %v7582 = vadd.f32 %v7534, %v7568
      %v7583 = vadd.f32 %v7535, %v7568
      %v7584 = vadd.f32 %v7536, %v7568
      %v7585 = vadd.f32 %v7537, %v7568
      %v7586 = vadd.f32 %v7538, %v7568
      %v7587 = vadd.f32 %v7539, %v7568
      %v7588 = vadd.f32 %v7540, %v7568
      %v7589 = vadd.f32 %v7541, %v7568
      %v7590 = vadd.f32 %v7542, %v7568
      %v7591 = vadd.f32 %v7543, %v7568
      %v7592 = vadd.f32 %v7544, %v7568
      %v7593 = vadd.f32 %v7545, %v7568
      %v7594 = vadd.f32 %v7546, %v7568
      %v7595 = vadd.f32 %v7547, %v7568
      %v7596 = vadd.f32 %v7548, %v7568
      %v7597 = vadd.f32 %v7549, %v7568
      %v7598 = vadd.f32 %v7550, %v7568
      %v7599 = vadd.f32 %v7551, %v7568
      %v7600 = vadd.f32 %v7552, %v7568
      %v7601 = vadd.f32 %v7553, %v7568
      %v7602 = vadd.f32 %v7554, %v7568
      %v7603 = vadd.f32 %v7555, %v7568
      %v7604 = vadd.f32 %v7556, %v7568
      %v7605 = vadd.f32 %v7557, %v7568
      %v7606 = vadd.f32 %v7558, %v7568
      %v7607 = vadd.f32 %v7559, %v7568
      %v7608 = vadd.f32 %v7560, %v7568
      %v7609 = vadd.f32 %v7561, %v7568
      %v7610 = vadd.f32 %v7562, %v7568
      %v7611 = vmul.f32 %v7570, 0.5
      %v7612 = vmul.f32 %v7571, 0.5
      %v7613 = vmul.f32 %v7572, 0.5
      %v7614 = vmul.f32 %v7573, 0.5
      %v7615 = vmul.f32 %v7574, 0.5
      %v7616 = vmul.f32 %v7575, 0.5
      %v7617 = vmul.f32 %v7576, 0.5
      %v7618 = vmul.f32 %v7577, 0.5
      %v7619 = vmul.f32 %v7578, 0.5
      %v7620 = vmul.f32 %v7579, 0.5
      %v7621 = vmul.f32 %v7580, 0.5
      %v7622 = vmul.f32 %v7581, 0.5
      %v7623 = vmul.f32 %v7582, 0.5
      %v7624 = vmul.f32 %v7583, 0.5
      %v7625 = vmul.f32 %v7584, 0.5
      %v7626 = vmul.f32 %v7585, 0.5
      %v7627 = vmul.f32 %v7586, 0.5
      %v7628 = vmul.f32 %v7587, 0.5
      %v7629 = vmul.f32 %v7588, 0.5
      %v7630 = vmul.f32 %v7589, 0.5
      %v7631 = vmul.f32 %v7590, 0.5
      %v7632 = vmul.f32 %v7591, 0.5
      %v7633 = vmul.f32 %v7592, 0.5
      %v7634 = vmul.f32 %v7593, 0.5
      %v7635 = vmul.f32 %v7594, 0.5
      %v7636 = vmul.f32 %v7595, 0.5
      %v7637 = vmul.f32 %v7596, 0.5
      %v7638 = vmul.f32 %v7597, 0.5
      %v7639 = vmul.f32 %v7598, 0.5
      %v7640 = vmul.f32 %v7599, 0.5
      %v7641 = vmul.f32 %v7600, 0.5
      %v7642 = vmul.f32 %v7601, 0.5
      %v7643 = vmul.f32 %v7602, 0.5
      %v7644 = vmul.f32 %v7603, 0.5
      %v7645 = vmul.f32 %v7604, 0.5
      %v7646 = vmul.f32 %v7605, 0.5
      %v7647 = vmul.f32 %v7606, 0.5
      %v7648 = vmul.f32 %v7607, 0.5
      %v7649 = vmul.f32 %v7608, 0.5
      %v7650 = vmul.f32 %v7609, 0.5
      %v7651 = vmul.f32 %v7610, 0.5
      %v7652 = vmul.f32 %v7570, 0.70710677
      %v7653 = vmul.f32 %v7571, 0.70710677
      %v7654 = vmul.f32 %v7572, 0.70710677
      %v7655 = vmul.f32 %v7573, 0.70710677
      %v7656 = vmul.f32 %v7574, 0.70710677
      %v7657 = vmul.f32 %v7575, 0.70710677
      %v7658 = vmul.f32 %v7576, 0.70710677
      %v7659 = vmul.f32 %v7577, 0.70710677
      %v7660 = vmul.f32 %v7578, 0.70710677
      %v7661 = vmul.f32 %v7579, 0.70710677
      %v7662 = vmul.f32 %v7580, 0.70710677
      %v7663 = vmul.f32 %v7581, 0.70710677
      %v7664 = vmul.f32 %v7582, 0.70710677
      %v7665 = vmul.f32 %v7583, 0.70710677
      %v7666 = vmul.f32 %v7584, 0.70710677
      %v7667 = vmul.f32 %v7585, 0.70710677
      %v7668 = vmul.f32 %v7586, 0.70710677
      %v7669 = vmul.f32 %v7587, 0.70710677
      %v7670 = vmul.f32 %v7588, 0.70710677
      %v7671 = vmul.f32 %v7589, 0.70710677
      %v7672 = vmul.f32 %v7590, 0.70710677
      %v7673 = vmul.f32 %v7591, 0.70710677
      %v7674 = vmul.f32 %v7592, 0.70710677
      %v7675 = vmul.f32 %v7593, 0.70710677
      %v7676 = vmul.f32 %v7594, 0.70710677
      %v7677 = vmul.f32 %v7595, 0.70710677
      %v7678 = vmul.f32 %v7596, 0.70710677
      %v7679 = vmul.f32 %v7597, 0.70710677
      %v7680 = vmul.f32 %v7598, 0.70710677
      %v7681 = vmul.f32 %v7599, 0.70710677
      %v7682 = vmul.f32 %v7600, 0.70710677
      %v7683 = vmul.f32 %v7601, 0.70710677
      %v7684 = vmul.f32 %v7602, 0.70710677
      %v7685 = vmul.f32 %v7603, 0.70710677
      %v7686 = vmul.f32 %v7604, 0.70710677
      %v7687 = vmul.f32 %v7605, 0.70710677
      %v7688 = vmul.f32 %v7606, 0.70710677
      %v7689 = vmul.f32 %v7607, 0.70710677
      %v7690 = vmul.f32 %v7608, 0.70710677
      %v7691 = vmul.f32 %v7609, 0.70710677
      %v7692 = vmul.f32 %v7610, 0.70710677
      %v7693 = verf.f32.pop %v7652
      %v7694 = verf.f32.pop %v7653
      %v7695 = verf.f32.pop %v7654
      %v7696 = verf.f32.pop %v7655
      %v7697 = verf.f32.pop %v7656
      %v7698 = verf.f32.pop %v7657
      %v7699 = verf.f32.pop %v7658
      %v7700 = verf.f32.pop %v7659
      %v7701 = verf.f32.pop %v7660
      %v7702 = verf.f32.pop %v7661
      %v7703 = verf.f32.pop %v7662
      %v7704 = verf.f32.pop %v7663
      %v7705 = verf.f32.pop %v7664
      %v7706 = verf.f32.pop %v7665
      %v7707 = verf.f32.pop %v7666
      %v7708 = verf.f32.pop %v7667
      %v7709 = verf.f32.pop %v7668
      %v7710 = verf.f32.pop %v7669
      %v7711 = verf.f32.pop %v7670
      %v7712 = verf.f32.pop %v7671
      %v7713 = verf.f32.pop %v7672
      %v7714 = verf.f32.pop %v7673
      %v7715 = verf.f32.pop %v7674
      %v7716 = verf.f32.pop %v7675
      %v7717 = verf.f32.pop %v7676
      %v7718 = verf.f32.pop %v7677
      %v7719 = verf.f32.pop %v7678
      %v7720 = verf.f32.pop %v7679
      %v7721 = verf.f32.pop %v7680
      %v7722 = verf.f32.pop %v7681
      %v7723 = verf.f32.pop %v7682
      %v7724 = verf.f32.pop %v7683
      %v7725 = verf.f32.pop %v7684
      %v7726 = verf.f32.pop %v7685
      %v7727 = verf.f32.pop %v7686
      %v7728 = verf.f32.pop %v7687
      %v7729 = verf.f32.pop %v7688
      %v7730 = verf.f32.pop %v7689
      %v7731 = verf.f32.pop %v7690
      %v7732 = verf.f32.pop %v7691
      %v7733 = verf.f32.pop %v7692
      %v7734 = vadd.f32 %v7693, 1.0
      %v7735 = vadd.f32 %v7694, 1.0
      %v7736 = vadd.f32 %v7695, 1.0
      %v7737 = vadd.f32 %v7696, 1.0
      %v7738 = vadd.f32 %v7697, 1.0
      %v7739 = vadd.f32 %v7698, 1.0
      %v7740 = vadd.f32 %v7699, 1.0
      %v7741 = vadd.f32 %v7700, 1.0
      %v7742 = vadd.f32 %v7701, 1.0
      %v7743 = vadd.f32 %v7702, 1.0
      %v7744 = vadd.f32 %v7703, 1.0
      %v7745 = vadd.f32 %v7704, 1.0
      %v7746 = vadd.f32 %v7705, 1.0
      %v7747 = vadd.f32 %v7706, 1.0
      %v7748 = vadd.f32 %v7707, 1.0
      %v7749 = vadd.f32 %v7708, 1.0
      %v7750 = vadd.f32 %v7709, 1.0
      %v7751 = vadd.f32 %v7710, 1.0
      %v7752 = vadd.f32 %v7711, 1.0
      %v7753 = vadd.f32 %v7712, 1.0
      %v7754 = vadd.f32 %v7713, 1.0
      %v7755 = vadd.f32 %v7714, 1.0
      %v7756 = vadd.f32 %v7715, 1.0
      %v7757 = vadd.f32 %v7716, 1.0
      %v7758 = vadd.f32 %v7717, 1.0
      %v7759 = vadd.f32 %v7718, 1.0
      %v7760 = vadd.f32 %v7719, 1.0
      %v7761 = vadd.f32 %v7720, 1.0
      %v7762 = vadd.f32 %v7721, 1.0
      %v7763 = vadd.f32 %v7722, 1.0
      %v7764 = vadd.f32 %v7723, 1.0
      %v7765 = vadd.f32 %v7724, 1.0
      %v7766 = vadd.f32 %v7725, 1.0
      %v7767 = vadd.f32 %v7726, 1.0
      %v7768 = vadd.f32 %v7727, 1.0
      %v7769 = vadd.f32 %v7728, 1.0
      %v7770 = vadd.f32 %v7729, 1.0
      %v7771 = vadd.f32 %v7730, 1.0
      %v7772 = vadd.f32 %v7731, 1.0
      %v7773 = vadd.f32 %v7732, 1.0
      %v7774 = vadd.f32 %v7733, 1.0
      %v7775 = vmul.f32 %v7611, %v7734
      %v7776 = vmul.f32 %v7612, %v7735
      %v7777 = vmul.f32 %v7613, %v7736
      %v7778 = vmul.f32 %v7614, %v7737
      %v7779 = vmul.f32 %v7615, %v7738
      %v7780 = vmul.f32 %v7616, %v7739
      %v7781 = vmul.f32 %v7617, %v7740
      %v7782 = vmul.f32 %v7618, %v7741
      %v7783 = vmul.f32 %v7619, %v7742
      %v7784 = vmul.f32 %v7620, %v7743
      %v7785 = vmul.f32 %v7621, %v7744
      %v7786 = vmul.f32 %v7622, %v7745
      %v7787 = vmul.f32 %v7623, %v7746
      %v7788 = vmul.f32 %v7624, %v7747
      %v7789 = vmul.f32 %v7625, %v7748
      %v7790 = vmul.f32 %v7626, %v7749
      %v7791 = vmul.f32 %v7627, %v7750
      %v7792 = vmul.f32 %v7628, %v7751
      %v7793 = vmul.f32 %v7629, %v7752
      %v7794 = vmul.f32 %v7630, %v7753
      %v7795 = vmul.f32 %v7631, %v7754
      %v7796 = vmul.f32 %v7632, %v7755
      %v7797 = vmul.f32 %v7633, %v7756
      %v7798 = vmul.f32 %v7634, %v7757
      %v7799 = vmul.f32 %v7635, %v7758
      %v7800 = vmul.f32 %v7636, %v7759
      %v7801 = vmul.f32 %v7637, %v7760
      %v7802 = vmul.f32 %v7638, %v7761
      %v7803 = vmul.f32 %v7639, %v7762
      %v7804 = vmul.f32 %v7640, %v7763
      %v7805 = vmul.f32 %v7641, %v7764
      %v7806 = vmul.f32 %v7642, %v7765
      %v7807 = vmul.f32 %v7643, %v7766
      %v7808 = vmul.f32 %v7644, %v7767
      %v7809 = vmul.f32 %v7645, %v7768
      %v7810 = vmul.f32 %v7646, %v7769
      %v7811 = vmul.f32 %v7647, %v7770
      %v7812 = vmul.f32 %v7648, %v7771
      %v7813 = vmul.f32 %v7649, %v7772
      %v7814 = vmul.f32 %v7650, %v7773
      %v7815 = vmul.f32 %v7651, %v7774
      %v7816 = vadd.f32 %v4161, %v7775
      %v7817 = vadd.f32 %v4162, %v7776
      %v7818 = vadd.f32 %v4163, %v7777
      %v7819 = vadd.f32 %v4164, %v7778
      %v7820 = vadd.f32 %v4165, %v7779
      %v7821 = vadd.f32 %v4166, %v7780
      %v7822 = vadd.f32 %v4167, %v7781
      %v7823 = vadd.f32 %v4168, %v7782
      %v7824 = vadd.f32 %v4169, %v7783
      %v7825 = vadd.f32 %v4170, %v7784
      %v7826 = vadd.f32 %v4171, %v7785
      %v7827 = vadd.f32 %v4172, %v7786
      %v7828 = vadd.f32 %v4173, %v7787
      %v7829 = vadd.f32 %v4174, %v7788
      %v7830 = vadd.f32 %v4175, %v7789
      %v7831 = vadd.f32 %v4176, %v7790
      %v7832 = vadd.f32 %v4177, %v7791
      %v7833 = vadd.f32 %v4178, %v7792
      %v7834 = vadd.f32 %v4179, %v7793
      %v7835 = vadd.f32 %v4180, %v7794
      %v7836 = vadd.f32 %v4181, %v7795
      %v7837 = vadd.f32 %v4182, %v7796
      %v7838 = vadd.f32 %v4183, %v7797
      %v7839 = vadd.f32 %v4184, %v7798
      %v7840 = vadd.f32 %v4185, %v7799
      %v7841 = vadd.f32 %v4186, %v7800
      %v7842 = vadd.f32 %v4187, %v7801
      %v7843 = vadd.f32 %v4188, %v7802
      %v7844 = vadd.f32 %v4189, %v7803
      %v7845 = vadd.f32 %v4190, %v7804
      %v7846 = vadd.f32 %v4191, %v7805
      %v7847 = vadd.f32 %v4192, %v7806
      %v7848 = vadd.f32 %v4193, %v7807
      %v7849 = vadd.f32 %v4194, %v7808
      %v7850 = vadd.f32 %v4195, %v7809
      %v7851 = vadd.f32 %v4196, %v7810
      %v7852 = vadd.f32 %v4197, %v7811
      %v7853 = vadd.f32 %v4198, %v7812
      %v7854 = vadd.f32 %v4199, %v7813
      %v7855 = vadd.f32 %v4200, %v7814
      %v7856 = vadd.f32 %v4201, %v7815
      %v7857 = vmul.f32 %v7816, 0.7072136
      %v7858 = vmul.f32 %v7817, 0.7072136
      %v7859 = vmul.f32 %v7818, 0.7072136
      %v7860 = vmul.f32 %v7819, 0.7072136
      %v7861 = vmul.f32 %v7820, 0.7072136
      %v7862 = vmul.f32 %v7821, 0.7072136
      %v7863 = vmul.f32 %v7822, 0.7072136
      %v7864 = vmul.f32 %v7823, 0.7072136
      %v7865 = vmul.f32 %v7824, 0.7072136
      %v7866 = vmul.f32 %v7825, 0.7072136
      %v7867 = vmul.f32 %v7826, 0.7072136
      %v7868 = vmul.f32 %v7827, 0.7072136
      %v7869 = vmul.f32 %v7828, 0.7072136
      %v7870 = vmul.f32 %v7829, 0.7072136
      %v7871 = vmul.f32 %v7830, 0.7072136
      %v7872 = vmul.f32 %v7831, 0.7072136
      %v7873 = vmul.f32 %v7832, 0.7072136
      %v7874 = vmul.f32 %v7833, 0.7072136
      %v7875 = vmul.f32 %v7834, 0.7072136
      %v7876 = vmul.f32 %v7835, 0.7072136
      %v7877 = vmul.f32 %v7836, 0.7072136
      %v7878 = vmul.f32 %v7837, 0.7072136
      %v7879 = vmul.f32 %v7838, 0.7072136
      %v7880 = vmul.f32 %v7839, 0.7072136
      %v7881 = vmul.f32 %v7840, 0.7072136
      %v7882 = vmul.f32 %v7841, 0.7072136
      %v7883 = vmul.f32 %v7842, 0.7072136
      %v7884 = vmul.f32 %v7843, 0.7072136
      %v7885 = vmul.f32 %v7844, 0.7072136
      %v7886 = vmul.f32 %v7845, 0.7072136
      %v7887 = vmul.f32 %v7846, 0.7072136
      %v7888 = vmul.f32 %v7847, 0.7072136
      %v7889 = vmul.f32 %v7848, 0.7072136
      %v7890 = vmul.f32 %v7849, 0.7072136
      %v7891 = vmul.f32 %v7850, 0.7072136
      %v7892 = vmul.f32 %v7851, 0.7072136
      %v7893 = vmul.f32 %v7852, 0.7072136
      %v7894 = vmul.f32 %v7853, 0.7072136
      %v7895 = vmul.f32 %v7854, 0.7072136
      %v7896 = vmul.f32 %v7855, 0.7072136
      %v7897 = vmul.f32 %v7856, 0.7072136
      %7898 = vst [vmem:[%s251] sm:$0xff] %v7857
      %7899 = vst [vmem:[%s251 + $0x8] sm:$0xff] %v7858
      %7900 = vst [vmem:[%s251 + $0x10] sm:$0xff] %v7859
      %7901 = vst [vmem:[%s251 + $0x18] sm:$0xff] %v7860
      %7902 = vst [vmem:[%s251 + $0x20] sm:$0xff] %v7861
      %7903 = vst [vmem:[%s251 + $0x28] sm:$0xff] %v7862
      %7904 = vst [vmem:[%s251 + $0x30] sm:$0xff] %v7863
      %7905 = vst [vmem:[%s251 + $0x38] sm:$0xff] %v7864
      %7906 = vst [vmem:[%s251 + $0x40] sm:$0xff] %v7865
      %7907 = vst [vmem:[%s251 + $0x48] sm:$0xff] %v7866
      %7908 = vst [vmem:[%s251 + $0x50] sm:$0xff] %v7867
      %7909 = vst [vmem:[%s251 + $0x58] sm:$0xff] %v7868
      %7910 = vst [vmem:[%s251 + $0x60] sm:$0xff] %v7869
      %7911 = vst [vmem:[%s251 + $0x68] sm:$0xff] %v7870
      %7912 = vst [vmem:[%s251 + $0x70] sm:$0xff] %v7871
      %7913 = vst [vmem:[%s251 + $0x78] sm:$0xff] %v7872
      %7914 = vst [vmem:[%s251 + $0x80] sm:$0xff] %v7873
      %7915 = vst [vmem:[%s251 + $0x88] sm:$0xff] %v7874
      %7916 = vst [vmem:[%s251 + $0x90] sm:$0xff] %v7875
      %7917 = vst [vmem:[%s251 + $0x98] sm:$0xff] %v7876
      %7918 = vst [vmem:[%s251 + $0xa0] sm:$0xff] %v7877
      %7919 = vst [vmem:[%s251 + $0xa8] sm:$0xff] %v7878
      %7920 = vst [vmem:[%s251 + $0xb0] sm:$0xff] %v7879
      %7921 = vst [vmem:[%s251 + $0xb8] sm:$0xff] %v7880
      %7922 = vst [vmem:[%s251 + $0xc0] sm:$0xff] %v7881
      %7923 = vst [vmem:[%s251 + $0xc8] sm:$0xff] %v7882
      %7924 = vst [vmem:[%s251 + $0xd0] sm:$0xff] %v7883
      %7925 = vst [vmem:[%s251 + $0xd8] sm:$0xff] %v7884
      %7926 = vst [vmem:[%s251 + $0xe0] sm:$0xff] %v7885
      %7927 = vst [vmem:[%s251 + $0xe8] sm:$0xff] %v7886
      %7928 = vst [vmem:[%s251 + $0xf0] sm:$0xff] %v7887
      %7929 = vst [vmem:[%s251 + $0xf8] sm:$0xff] %v7888
      %7930 = vst [vmem:[%s251 + $0x100] sm:$0xff] %v7889
      %7931 = vst [vmem:[%s251 + $0x108] sm:$0xff] %v7890
      %7932 = vst [vmem:[%s251 + $0x110] sm:$0xff] %v7891
      %7933 = vst [vmem:[%s251 + $0x118] sm:$0xff] %v7892
      %7934 = vst [vmem:[%s251 + $0x120] sm:$0xff] %v7893
      %7935 = vst [vmem:[%s251 + $0x128] sm:$0xff] %v7894
      %7936 = vst [vmem:[%s251 + $0x130] sm:$0xff] %v7895
      %7937 = vst [vmem:[%s251 + $0x138] sm:$0xff] %v7896
      %7938 = vst [vmem:[%s251 + $0x140] sm:$0xff] %v7897
      %p7939 = scmp.lt.s32.totalorder %s17, 1
      %s7940 = scalar_select %p7939, %s17, 1
      %s7941 = smul.addr %s7940, 41
      %s7942 = smul.addr %s7941, 8
      %s7943 = scalar_lea.vmem %s6, %s7942
      // Predicated region
      $region45: #{residual_conv_block.1} parent=43 // pred_check
        %p7944 = pneg %p166
      $region46: #{residual_conv_block.1} parent=43 // pred_check_branch
        %7946 = sbr.rel (%p7944) target = $region48
      $region47: #{residual_conv_block.1} parent=43 // pred_region
        _
      $region48: #{residual_conv_block.1} parent=43 // pred_fallthru
        _
    $region44: #{residual_conv_block.1} parent=5 // pred_fallthru
      _
    %p7947 = scmp.le.s32.totalorder 2, %s12
    // Predicated region
    $region49: #{residual_conv_block.1} parent=5 // pred_check
      %p7948 = pneg %p7947
    $region50: #{residual_conv_block.1} parent=5 // pred_check_branch
      %7950 = sbr.rel (%p7948) target = $region52
    $region51: #{residual_conv_block.1} parent=5 // pred_region
      %s7951 = ssub.s32 %s12, 2
      // Predicated region
      $region53: #{residual_conv_block.1} parent=51 // pred_check
        %p7952 = pneg %p172
      $region54: #{residual_conv_block.1} parent=51 // pred_check_branch
        %7954 = sbr.rel (%p7952) target = $region56
      $region55: #{residual_conv_block.1} parent=51 // pred_region
        %p7955 = scmp.lt.s32.totalorder %s18, 1
        %s7956 = scalar_select %p7955, %s18, 1
        %s7957 = smul.addr %s7956, 41
        %s7958 = smul.addr %s7957, 8
        %s7959 = scalar_lea.vmem %s6, %s7958
      $region56: #{residual_conv_block.1} parent=51 // pred_fallthru
        _
    $region52: #{residual_conv_block.1} parent=5 // pred_fallthru
      _
  $region6: #{residual_conv_block.1} parent=0 // loop_footer
    %s16 = sadd.s32 1, %s12
  $region7: #{residual_conv_block.1} parent=0 // loop_footer_branch
    %11 = sbr.rel target = $region3
  $region8: #{residual_conv_block.1} parent=0 // loop_exit
    _

</llo_original>
